<compile_context>
chip_gen: v6e
topology: v6e:2x2x1
jax: 0.10.0
libtpu: 0.0.40
codegen_flags: <defaults>
</compile_context>

<pallas_src>
import numpy as np

import jax
import jax.numpy as jnp
from jax.experimental import pallas as pl
from jax.experimental.pallas import tpu as pltpu

FFT_SIZE = 1024
HOP = 120                      # shift_size
WIN_LENGTH = 600
N_FREQ = FFT_SIZE // 2 + 1     # 513 (onesided)
NF_PAD = 640                   # 513 padded up to a multiple of 128 (lane-dense)
VMEM_LIMIT = 32 * 1024 * 1024  # explicit scoped-VMEM budget (safe on v5e/v6e/v7x)


# ----------------------------------------------------------------------------
# small helpers
# ----------------------------------------------------------------------------
def _round_up(x, m):
    return ((x + m - 1) // m) * m


def _tile_rows(m):
    """Row tile: 256 when there is enough work (MXU fill), else pad to 8."""
    return 256 if m >= 256 else _round_up(m, 8)


def _mosaic_params():
    return pltpu.CompilerParams(dimension_semantics=("parallel",),
                                vmem_limit_bytes=VMEM_LIMIT)


# ----------------------------------------------------------------------------
# Pallas kernels
# ----------------------------------------------------------------------------
def _linear_kernel(x_ref, w_ref, b_ref, o_ref):
    """Frame-wise dense layer (stand-in for model_me / model_cs): tanh(x@W+b)."""
    y = jnp.dot(x_ref[...], w_ref[...], preferred_element_type=jnp.float32)
    o_ref[...] = jnp.tanh(y + b_ref[...])


def _stft_phase_kernel(frames_ref, win_ref, dftf_ref, cosp_ref, sinp_ref):
    """Window + fused DFT matmul -> cos/sin of the phase (Decouple, phase head)."""
    xw = (frames_ref[...] * win_ref[...]).astype(jnp.bfloat16)
    y = jnp.dot(xw, dftf_ref[...], preferred_element_type=jnp.float32)  # (tm, 2*NF_PAD)
    real = y[:, :NF_PAD]
    imag = y[:, NF_PAD:]
    # EUP rsqrt; clamp the *denominator* so silence maps to cos=sin=0.
    inv = jax.lax.rsqrt(jnp.maximum(real * real + imag * imag, 1e-12))
    cosp_ref[...] = real * inv
    sinp_ref[...] = imag * inv


def _stft_mag_kernel(frames_ref, win_ref, dftf_ref, mag_ref):
    """Window + fused DFT matmul -> magnitude (Decouple, magnitude head)."""
    xw = (frames_ref[...] * win_ref[...]).astype(jnp.bfloat16)
    y = jnp.dot(xw, dftf_ref[...], preferred_element_type=jnp.float32)
    real = y[:, :NF_PAD]
    imag = y[:, NF_PAD:]
    mag_ref[...] = jnp.sqrt(jnp.maximum(real * real + imag * imag, 1e-7))


def _couple_kernel(mag_ref, cosp_ref, sinp_ref, idftf_ref, win_ref, wf_ref):
    """mag*(cos,sin) -> fused iDFT matmul -> synthesis window (Couple hot path)."""
    real = (mag_ref[...] * cosp_ref[...]).astype(jnp.bfloat16)
    imag = (mag_ref[...] * sinp_ref[...]).astype(jnp.bfloat16)
    ri = jnp.concatenate([real, imag], axis=1)                 # (tm, 2*NF_PAD), lane-aligned
    ft = jnp.dot(ri, idftf_ref[...], preferred_element_type=jnp.float32)  # (tm, FFT)
    wf_ref[...] = ft * win_ref[...]
    # Overlap-add + envelope normalization happen in XLA glue (no unaligned RMW here).


# ----------------------------------------------------------------------------
# pallas_call wrappers
# ----------------------------------------------------------------------------
def _block_linear(x2d, w, b):
    M, C = x2d.shape
    tile = _tile_rows(M)
    Mp = _round_up(M, tile)
    if Mp != M:
        x2d = jnp.pad(x2d, ((0, Mp - M), (0, 0)))
    out = pl.pallas_call(
        _linear_kernel,
        out_shape=jax.ShapeDtypeStruct((Mp, C), jnp.float32),
        grid=(Mp // tile,),
        in_specs=[pl.BlockSpec((tile, C), lambda i: (i, 0)),
                  pl.BlockSpec((C, C), lambda i: (0, 0)),
                  pl.BlockSpec((1, C), lambda i: (0, 0))],
        out_specs=pl.BlockSpec((tile, C), lambda i: (i, 0)),
        compiler_params=_mosaic_params(),
    )(x2d, w, b)
    return out[:M]


def _frame_signal(x):
    """torch.stft(center=True) framing: reflect-pad + strided gather."""
    B, T = x.shape
    pad = FFT_SIZE // 2
    xp = jnp.pad(x, ((0, 0), (pad, pad)), mode="reflect")
    n_frames = 1 + (T + 2 * pad - FFT_SIZE) // HOP
    idx = np.arange(n_frames)[:, None] * HOP + np.arange(FFT_SIZE)[None, :]
    # TODO(synk): framing still materializes a (B*F, FFT) slab in HBM (~8.5x
    # expansion vs the waveform); an in-kernel pl.ANY + manual-DMA framing
    # would remove that traffic for long audio.
    frames = xp[:, idx].reshape(B * n_frames, FFT_SIZE)
    return frames, n_frames


def _pad_rows(frames):
    M = frames.shape[0]
    tile = _tile_rows(M)
    Mp = _round_up(M, tile)
    if Mp != M:
        frames = jnp.pad(frames, ((0, Mp - M), (0, 0)))
    return frames, tile, Mp


def decouple_phase(x, consts):
    """Decouple, phase head: returns cos(phase), sin(phase) as (Mp, NF_PAD) slabs."""
    frames, n_frames = _frame_signal(x)
    frames, tile, Mp = _pad_rows(frames)
    cosp, sinp = pl.pallas_call(
        _stft_phase_kernel,
        out_shape=(jax.ShapeDtypeStruct((Mp, NF_PAD), jnp.float32),) * 2,
        grid=(Mp // tile,),
        in_specs=[pl.BlockSpec((tile, FFT_SIZE), lambda i: (i, 0)),
                  pl.BlockSpec((1, FFT_SIZE), lambda i: (0, 0)),
                  pl.BlockSpec((FFT_SIZE, 2 * NF_PAD), lambda i: (0, 0))],
        out_specs=(pl.BlockSpec((tile, NF_PAD), lambda i: (i, 0)),) * 2,
        compiler_params=_mosaic_params(),
    )(frames, consts["win"], consts["dft_fused"])
    return cosp, sinp, n_frames


def decouple_mag(x, consts):
    """Decouple, magnitude head: returns mag as an (Mp, NF_PAD) slab."""
    frames, n_frames = _frame_signal(x)
    frames, tile, Mp = _pad_rows(frames)
    mag = pl.pallas_call(
        _stft_mag_kernel,
        out_shape=jax.ShapeDtypeStruct((Mp, NF_PAD), jnp.float32),
        grid=(Mp // tile,),
        in_specs=[pl.BlockSpec((tile, FFT_SIZE), lambda i: (i, 0)),
                  pl.BlockSpec((1, FFT_SIZE), lambda i: (0, 0)),
                  pl.BlockSpec((FFT_SIZE, 2 * NF_PAD), lambda i: (0, 0))],
        out_specs=pl.BlockSpec((tile, NF_PAD), lambda i: (i, 0)),
        compiler_params=_mosaic_params(),
    )(frames, consts["win"], consts["dft_fused"])
    return mag, n_frames


def couple(mag, cosp, sinp, batch, n_frames, consts):
    """iSTFT of mag * e^{i*phase}: fused iDFT kernel + OLA/normalize in glue."""
    Mp = mag.shape[0]
    tile = _tile_rows(Mp)
    wf = pl.pallas_call(
        _couple_kernel,
        out_shape=jax.ShapeDtypeStruct((Mp, FFT_SIZE), jnp.float32),
        grid=(Mp // tile,),
        in_specs=[pl.BlockSpec((tile, NF_PAD), lambda i: (i, 0)),
                  pl.BlockSpec((tile, NF_PAD), lambda i: (i, 0)),
                  pl.BlockSpec((tile, NF_PAD), lambda i: (i, 0)),
                  pl.BlockSpec((2 * NF_PAD, FFT_SIZE), lambda i: (0, 0)),
                  pl.BlockSpec((1, FFT_SIZE), lambda i: (0, 0))],
        out_specs=pl.BlockSpec((tile, FFT_SIZE), lambda i: (i, 0)),
        compiler_params=_mosaic_params(),
    )(mag, cosp, sinp, consts["idft_fused"], consts["win"])

    M = batch * n_frames
    wf = wf[:M].reshape(batch, n_frames, FFT_SIZE)

    # Overlap-add in XLA glue (scatter-add), then multiply by the precomputed
    # reciprocal window-square envelope and center-trim like torch.istft.
    t_full = FFT_SIZE + HOP * (n_frames - 1)
    idx = np.arange(n_frames)[:, None] * HOP + np.arange(FFT_SIZE)[None, :]
    y = jnp.zeros((batch, t_full), jnp.float32).at[:, idx].add(wf)
    y = y * _make_inv_env(consts["wpad_np"], n_frames)
    pad = FFT_SIZE // 2
    return y[:, pad:t_full - pad]


# ----------------------------------------------------------------------------
# Constants (hann window, fused bf16 DFT / iDFT matrices, OLA envelope)
# ----------------------------------------------------------------------------
def build_consts():
    n = np.arange(FFT_SIZE)
    k = np.arange(N_FREQ)

    # Forward DFT, fused [cos | -sin], freq axis zero-padded to NF_PAD lanes.
    ang = 2.0 * np.pi * np.outer(n, k) / FFT_SIZE                  # (FFT, N_FREQ)
    dft_cos = np.zeros((FFT_SIZE, NF_PAD), np.float32)
    dft_cos[:, :N_FREQ] = np.cos(ang)
    dft_msin = np.zeros((FFT_SIZE, NF_PAD), np.float32)
    dft_msin[:, :N_FREQ] = -np.sin(ang)
    dft_fused = np.concatenate([dft_cos, dft_msin], axis=1)        # (FFT, 2*NF_PAD)

    # Onesided inverse DFT, fused [icos ; isin] along K (padded rows are zero).
    wk = np.full((N_FREQ,), 2.0, np.float64)
    wk[0] = 1.0
    wk[-1] = 1.0
    ang2 = 2.0 * np.pi * np.outer(k, n) / FFT_SIZE                 # (N_FREQ, FFT)
    idft_cos = np.zeros((NF_PAD, FFT_SIZE), np.float32)
    idft_cos[:N_FREQ] = (wk[:, None] * np.cos(ang2) / FFT_SIZE)
    idft_sin = np.zeros((NF_PAD, FFT_SIZE), np.float32)
    idft_sin[:N_FREQ] = (-wk[:, None] * np.sin(ang2) / FFT_SIZE)
    idft_fused = np.concatenate([idft_cos, idft_sin], axis=0)      # (2*NF_PAD, FFT)

    # torch.hann_window(600), centered in the 1024-point FFT frame.
    m = np.arange(WIN_LENGTH)
    hann = 0.5 - 0.5 * np.cos(2.0 * np.pi * m / WIN_LENGTH)
    lpad = (FFT_SIZE - WIN_LENGTH) // 2
    wpad = np.zeros(FFT_SIZE, np.float32)
    wpad[lpad:lpad + WIN_LENGTH] = hann.astype(np.float32)

    return dict(
        dft_fused=jnp.asarray(dft_fused, jnp.bfloat16),    # bf16 MXU weights
        idft_fused=jnp.asarray(idft_fused, jnp.bfloat16),
        win=jnp.asarray(wpad[None, :]),                    # f32 windowing
        wpad_np=wpad,
    )


def _make_inv_env(wpad_np, n_frames):
    """Precomputed 1 / sum_f window^2 envelope (multiply instead of divide)."""
    t_full = FFT_SIZE + HOP * (n_frames - 1)
    env = np.zeros(t_full, np.float64)
    w2 = wpad_np.astype(np.float64) ** 2
    for f in range(n_frames):
        env[f * HOP: f * HOP + FFT_SIZE] += w2
    inv = 1.0 / np.maximum(env, 1e-11)
    return jnp.asarray(inv[None, :].astype(np.float32))


# ----------------------------------------------------------------------------
# Synthetic enhancement sub-models (deterministic init): frame-wise linear+tanh
# (padded to a 128-lane-aligned feature width)
# ----------------------------------------------------------------------------
def make_linear_model(chunk, key):
    c_pad = _round_up(chunk, 128)
    k1, k2 = jax.random.split(key)
    w = (0.7 * jnp.eye(chunk, dtype=jnp.float32)
         + 0.05 * jax.random.normal(k1, (chunk, chunk), jnp.float32))
    b = 0.01 * jax.random.normal(k2, (1, chunk), jnp.float32)
    w_pad = jnp.zeros((c_pad, c_pad), jnp.float32).at[:chunk, :chunk].set(w)
    b_pad = jnp.zeros((1, c_pad), jnp.float32).at[:, :chunk].set(b)

    def model(x):
        B, T = x.shape
        n = T // chunk
        x2 = x.reshape(B * n, chunk)
        if c_pad != chunk:
            x2 = jnp.pad(x2, ((0, 0), (0, c_pad - chunk)))
        y2 = _block_linear(x2, w_pad, b_pad)          # (B*n, c_pad)
        return y2[:, :chunk].reshape(B, T)

    return model


# ----------------------------------------------------------------------------
# TwoHead forward
# ----------------------------------------------------------------------------
def two_head_forward(x, model_me, model_cs, consts):
    B = x.shape[0]
    me_waveform = model_me(x)                               # (B, T)
    cosp, sinp, n_frames = decouple_phase(x, consts)        # phase of the noisy input
    me_mag, _ = decouple_mag(me_waveform, consts)           # enhanced magnitude
    # TODO(synk): original code mixes layouts (mag transposed, phase not) and feeds an
    # invalid cat(dim=1) to torch.istft; we recouple consistently as istft(mag*e^{i*phase}).
    coupled = couple(me_mag, cosp, sinp, B, n_frames, consts)   # (B, (F-1)*HOP)
    cs_waveform = model_cs(coupled)
    # TODO(synk): original forward returns an undefined `output`; return cs_waveform.
    return cs_waveform


# ----------------------------------------------------------------------------
if __name__ == "__main__":
    consts = build_consts()

    B, T = 2, 1280                         # small demo shapes; T -> 11 STFT frames
    key = jax.random.PRNGKey(0)
    k_x, k_me, k_cs = jax.random.split(key, 3)
    x = 0.1 * jax.random.normal(k_x, (B, T), jnp.float32)

    model_me = make_linear_model(128, k_me)        # operates on (B, 1280)
    model_cs = make_linear_model(120, k_cs)        # operates on coupled (B, 1200)

    fwd = jax.jit(lambda inp: two_head_forward(inp, model_me, model_cs, consts))
    out = fwd(x)
    out = jax.block_until_ready(out)

    assert out.shape == (B, (11 - 1) * HOP), out.shape
    assert bool(jnp.all(jnp.isfinite(out)))
    print("KERNEL_OK")
</pallas_src>

<mosaic_0001>
module attributes {stable_mosaic.version = 11 : i64} {
  func.func @_linear_kernel(%arg0: i32, %arg1: memref<24x128xf32, #tpu.memory_space<vmem>>, %arg2: memref<128x128xf32, #tpu.memory_space<vmem>>, %arg3: memref<1x128xf32, #tpu.memory_space<vmem>>, %arg4: memref<24x128xf32, #tpu.memory_space<vmem>>) attributes {dimension_semantics = [#tpu.dimension_semantics<parallel>], iteration_bounds = array<i64: 1>, scalar_prefetch = 0 : i64, scratch_operands = 0 : i64, tpu.core_type = #tpu.core_type<tc>, window_params = [{transform_indices = @transform_0, window_bounds = array<i64: 24, 128>}, {pipeline_mode = #tpu.pipeline_mode<synchronous>, transform_indices = @transform_1, window_bounds = array<i64: 128, 128>}, {pipeline_mode = #tpu.pipeline_mode<synchronous>, transform_indices = @transform_2, window_bounds = array<i64: 1, 128>}, {transform_indices = @transform_3, window_bounds = array<i64: 24, 128>}]} {
    %c0 = arith.constant 0 : index
    %c0_0 = arith.constant 0 : index
    %0 = vector.load %arg1[%c0, %c0_0] : memref<24x128xf32, #tpu.memory_space<vmem>>, vector<24x128xf32>
    %c0_1 = arith.constant 0 : index
    %c0_2 = arith.constant 0 : index
    %1 = vector.load %arg2[%c0_1, %c0_2] : memref<128x128xf32, #tpu.memory_space<vmem>>, vector<128x128xf32>
    %cst = arith.constant dense<0.000000e+00> : vector<24x128xf32>
    %2 = tpu.matmul %0, %1, %cst {dimension_numbers = #tpu.dot_dimension_numbers<[1], [0], [0], [1], [0, 0, 1, 1], [], []>} : vector<24x128xf32>, vector<128x128xf32>, vector<24x128xf32> -> vector<24x128xf32>
    %c0_3 = arith.constant 0 : index
    %c0_4 = arith.constant 0 : index
    %3 = vector.load %arg3[%c0_3, %c0_4] : memref<1x128xf32, #tpu.memory_space<vmem>>, vector<1x128xf32>
    %4 = vector.broadcast %3 : vector<1x128xf32> to vector<24x128xf32>
    %5 = arith.addf %2, %4 : vector<24x128xf32>
    %6 = math.tanh %5 : vector<24x128xf32>
    %c0_5 = arith.constant 0 : index
    %c0_6 = arith.constant 0 : index
    %7 = vector.load %arg4[%c0_5, %c0_6] : memref<24x128xf32, #tpu.memory_space<vmem>>, vector<24x128xf32>
    tpu.vector_store %arg4[%c0_5, %c0_6], %6 {strides = array<i32>} : memref<24x128xf32, #tpu.memory_space<vmem>>, vector<24x128xf32>,
    return
  }
  func.func @transform_0(%arg0: i32) -> (i32, i32) {
    %c0_i32 = arith.constant 0 : i32
    %c0_i32_0 = arith.constant 0 : i32
    return %arg0, %c0_i32 : i32, i32
  }
  func.func @transform_1(%arg0: i32) -> (i32, i32) {
    %c0_i32 = arith.constant 0 : i32
    %c0_i32_0 = arith.constant 0 : i32
    %c0_i32_1 = arith.constant 0 : i32
    return %c0_i32, %c0_i32_0 : i32, i32
  }
  func.func @transform_2(%arg0: i32) -> (i32, i32) {
    %c0_i32 = arith.constant 0 : i32
    %c0_i32_0 = arith.constant 0 : i32
    %c0_i32_1 = arith.constant 0 : i32
    return %c0_i32, %c0_i32_0 : i32, i32
  }
  func.func @transform_3(%arg0: i32) -> (i32, i32) {
    %c0_i32 = arith.constant 0 : i32
    %c0_i32_0 = arith.constant 0 : i32
    return %arg0, %c0_i32 : i32, i32
  }
}

module attributes {stable_mosaic.version = 11 : i64} {
  func.func @_stft_mag_kernel(%arg0: i32, %arg1: memref<24x1024xf32, #tpu.memory_space<vmem>>, %arg2: memref<1x1024xf32, #tpu.memory_space<vmem>>, %arg3: memref<1024x1280xbf16, #tpu.memory_space<vmem>>, %arg4: memref<24x640xf32, #tpu.memory_space<vmem>>) attributes {dimension_semantics = [#tpu.dimension_semantics<parallel>], iteration_bounds = array<i64: 1>, scalar_prefetch = 0 : i64, scratch_operands = 0 : i64, tpu.core_type = #tpu.core_type<tc>, window_params = [{transform_indices = @transform_0, window_bounds = array<i64: 24, 1024>}, {pipeline_mode = #tpu.pipeline_mode<synchronous>, transform_indices = @transform_1, window_bounds = array<i64: 1, 1024>}, {pipeline_mode = #tpu.pipeline_mode<synchronous>, transform_indices = @transform_2, window_bounds = array<i64: 1024, 1280>}, {transform_indices = @transform_3, window_bounds = array<i64: 24, 640>}]} {
    %c0 = arith.constant 0 : index
    %c0_0 = arith.constant 0 : index
    %0 = vector.load %arg1[%c0, %c0_0] : memref<24x1024xf32, #tpu.memory_space<vmem>>, vector<24x1024xf32>
    %c0_1 = arith.constant 0 : index
    %c0_2 = arith.constant 0 : index
    %1 = vector.load %arg2[%c0_1, %c0_2] : memref<1x1024xf32, #tpu.memory_space<vmem>>, vector<1x1024xf32>
    %2 = vector.broadcast %1 : vector<1x1024xf32> to vector<24x1024xf32>
    %3 = arith.mulf %0, %2 : vector<24x1024xf32>
    %4 = arith.truncf %3 : vector<24x1024xf32> to vector<24x1024xbf16>
    %c0_3 = arith.constant 0 : index
    %c0_4 = arith.constant 0 : index
    %5 = vector.load %arg3[%c0_3, %c0_4] : memref<1024x1280xbf16, #tpu.memory_space<vmem>>, vector<1024x1280xbf16>
    %cst = arith.constant dense<0.000000e+00> : vector<24x1280xf32>
    %6 = tpu.matmul %4, %5, %cst {dimension_numbers = #tpu.dot_dimension_numbers<[1], [0], [0], [1], [0, 0, 1, 1], [], []>} : vector<24x1024xbf16>, vector<1024x1280xbf16>, vector<24x1280xf32> -> vector<24x1280xf32>
    %7 = vector.extract_strided_slice %6 {offsets = [0, 0], sizes = [24, 640], strides = [1, 1]} : vector<24x1280xf32> to vector<24x640xf32>
    %8 = vector.extract_strided_slice %6 {offsets = [0, 640], sizes = [24, 640], strides = [1, 1]} : vector<24x1280xf32> to vector<24x640xf32>
    %9 = arith.mulf %7, %7 : vector<24x640xf32>
    %10 = arith.mulf %8, %8 : vector<24x640xf32>
    %11 = arith.addf %9, %10 : vector<24x640xf32>
    %cst_5 = arith.constant 1.000000e-07 : f32
    %12 = vector.broadcast %cst_5 : f32 to vector<24x640xf32>
    %13 = arith.maximumf %11, %12 : vector<24x640xf32>
    %14 = math.sqrt %13 : vector<24x640xf32>
    %c0_6 = arith.constant 0 : index
    %c0_7 = arith.constant 0 : index
    %15 = vector.load %arg4[%c0_6, %c0_7] : memref<24x640xf32, #tpu.memory_space<vmem>>, vector<24x640xf32>
    tpu.vector_store %arg4[%c0_6, %c0_7], %14 {strides = array<i32>} : memref<24x640xf32, #tpu.memory_space<vmem>>, vector<24x640xf32>,
    return
  }
  func.func @transform_0(%arg0: i32) -> (i32, i32) {
    %c0_i32 = arith.constant 0 : i32
    %c0_i32_0 = arith.constant 0 : i32
    return %arg0, %c0_i32 : i32, i32
  }
  func.func @transform_1(%arg0: i32) -> (i32, i32) {
    %c0_i32 = arith.constant 0 : i32
    %c0_i32_0 = arith.constant 0 : i32
    %c0_i32_1 = arith.constant 0 : i32
    return %c0_i32, %c0_i32_0 : i32, i32
  }
  func.func @transform_2(%arg0: i32) -> (i32, i32) {
    %c0_i32 = arith.constant 0 : i32
    %c0_i32_0 = arith.constant 0 : i32
    %c0_i32_1 = arith.constant 0 : i32
    return %c0_i32, %c0_i32_0 : i32, i32
  }
  func.func @transform_3(%arg0: i32) -> (i32, i32) {
    %c0_i32 = arith.constant 0 : i32
    %c0_i32_0 = arith.constant 0 : i32
    return %arg0, %c0_i32 : i32, i32
  }
}

module attributes {stable_mosaic.version = 11 : i64} {
  func.func @_stft_phase_kernel(%arg0: i32, %arg1: memref<24x1024xf32, #tpu.memory_space<vmem>>, %arg2: memref<1x1024xf32, #tpu.memory_space<vmem>>, %arg3: memref<1024x1280xbf16, #tpu.memory_space<vmem>>, %arg4: memref<24x640xf32, #tpu.memory_space<vmem>>, %arg5: memref<24x640xf32, #tpu.memory_space<vmem>>) attributes {dimension_semantics = [#tpu.dimension_semantics<parallel>], iteration_bounds = array<i64: 1>, scalar_prefetch = 0 : i64, scratch_operands = 0 : i64, tpu.core_type = #tpu.core_type<tc>, window_params = [{transform_indices = @transform_0, window_bounds = array<i64: 24, 1024>}, {pipeline_mode = #tpu.pipeline_mode<synchronous>, transform_indices = @transform_1, window_bounds = array<i64: 1, 1024>}, {pipeline_mode = #tpu.pipeline_mode<synchronous>, transform_indices = @transform_2, window_bounds = array<i64: 1024, 1280>}, {transform_indices = @transform_3, window_bounds = array<i64: 24, 640>}, {transform_indices = @transform_4, window_bounds = array<i64: 24, 640>}]} {
    %c0 = arith.constant 0 : index
    %c0_0 = arith.constant 0 : index
    %0 = vector.load %arg1[%c0, %c0_0] : memref<24x1024xf32, #tpu.memory_space<vmem>>, vector<24x1024xf32>
    %c0_1 = arith.constant 0 : index
    %c0_2 = arith.constant 0 : index
    %1 = vector.load %arg2[%c0_1, %c0_2] : memref<1x1024xf32, #tpu.memory_space<vmem>>, vector<1x1024xf32>
    %2 = vector.broadcast %1 : vector<1x1024xf32> to vector<24x1024xf32>
    %3 = arith.mulf %0, %2 : vector<24x1024xf32>
    %4 = arith.truncf %3 : vector<24x1024xf32> to vector<24x1024xbf16>
    %c0_3 = arith.constant 0 : index
    %c0_4 = arith.constant 0 : index
    %5 = vector.load %arg3[%c0_3, %c0_4] : memref<1024x1280xbf16, #tpu.memory_space<vmem>>, vector<1024x1280xbf16>
    %cst = arith.constant dense<0.000000e+00> : vector<24x1280xf32>
    %6 = tpu.matmul %4, %5, %cst {dimension_numbers = #tpu.dot_dimension_numbers<[1], [0], [0], [1], [0, 0, 1, 1], [], []>} : vector<24x1024xbf16>, vector<1024x1280xbf16>, vector<24x1280xf32> -> vector<24x1280xf32>
    %7 = vector.extract_strided_slice %6 {offsets = [0, 0], sizes = [24, 640], strides = [1, 1]} : vector<24x1280xf32> to vector<24x640xf32>
    %8 = vector.extract_strided_slice %6 {offsets = [0, 640], sizes = [24, 640], strides = [1, 1]} : vector<24x1280xf32> to vector<24x640xf32>
    %9 = arith.mulf %7, %7 : vector<24x640xf32>
    %10 = arith.mulf %8, %8 : vector<24x640xf32>
    %11 = arith.addf %9, %10 : vector<24x640xf32>
    %cst_5 = arith.constant 9.99999996E-13 : f32
    %12 = vector.broadcast %cst_5 : f32 to vector<24x640xf32>
    %13 = arith.maximumf %11, %12 : vector<24x640xf32>
    %14 = math.rsqrt %13 : vector<24x640xf32>
    %15 = arith.mulf %7, %14 : vector<24x640xf32>
    %c0_6 = arith.constant 0 : index
    %c0_7 = arith.constant 0 : index
    %16 = vector.load %arg4[%c0_6, %c0_7] : memref<24x640xf32, #tpu.memory_space<vmem>>, vector<24x640xf32>
    tpu.vector_store %arg4[%c0_6, %c0_7], %15 {strides = array<i32>} : memref<24x640xf32, #tpu.memory_space<vmem>>, vector<24x640xf32>,
    %17 = arith.mulf %8, %14 : vector<24x640xf32>
    %c0_8 = arith.constant 0 : index
    %c0_9 = arith.constant 0 : index
    %18 = vector.load %arg5[%c0_8, %c0_9] : memref<24x640xf32, #tpu.memory_space<vmem>>, vector<24x640xf32>
    tpu.vector_store %arg5[%c0_8, %c0_9], %17 {strides = array<i32>} : memref<24x640xf32, #tpu.memory_space<vmem>>, vector<24x640xf32>,
    return
  }
  func.func @transform_0(%arg0: i32) -> (i32, i32) {
    %c0_i32 = arith.constant 0 : i32
    %c0_i32_0 = arith.constant 0 : i32
    return %arg0, %c0_i32 : i32, i32
  }
  func.func @transform_1(%arg0: i32) -> (i32, i32) {
    %c0_i32 = arith.constant 0 : i32
    %c0_i32_0 = arith.constant 0 : i32
    %c0_i32_1 = arith.constant 0 : i32
    return %c0_i32, %c0_i32_0 : i32, i32
  }
  func.func @transform_2(%arg0: i32) -> (i32, i32) {
    %c0_i32 = arith.constant 0 : i32
    %c0_i32_0 = arith.constant 0 : i32
    %c0_i32_1 = arith.constant 0 : i32
    return %c0_i32, %c0_i32_0 : i32, i32
  }
  func.func @transform_3(%arg0: i32) -> (i32, i32) {
    %c0_i32 = arith.constant 0 : i32
    %c0_i32_0 = arith.constant 0 : i32
    return %arg0, %c0_i32 : i32, i32
  }
  func.func @transform_4(%arg0: i32) -> (i32, i32) {
    %c0_i32 = arith.constant 0 : i32
    %c0_i32_0 = arith.constant 0 : i32
    return %arg0, %c0_i32 : i32, i32
  }
}

module attributes {stable_mosaic.version = 11 : i64} {
  func.func @_couple_kernel(%arg0: i32, %arg1: memref<24x640xf32, #tpu.memory_space<vmem>>, %arg2: memref<24x640xf32, #tpu.memory_space<vmem>>, %arg3: memref<24x640xf32, #tpu.memory_space<vmem>>, %arg4: memref<1280x1024xbf16, #tpu.memory_space<vmem>>, %arg5: memref<1x1024xf32, #tpu.memory_space<vmem>>, %arg6: memref<24x1024xf32, #tpu.memory_space<vmem>>) attributes {dimension_semantics = [#tpu.dimension_semantics<parallel>], iteration_bounds = array<i64: 1>, scalar_prefetch = 0 : i64, scratch_operands = 0 : i64, tpu.core_type = #tpu.core_type<tc>, window_params = [{transform_indices = @transform_0, window_bounds = array<i64: 24, 640>}, {transform_indices = @transform_1, window_bounds = array<i64: 24, 640>}, {transform_indices = @transform_2, window_bounds = array<i64: 24, 640>}, {pipeline_mode = #tpu.pipeline_mode<synchronous>, transform_indices = @transform_3, window_bounds = array<i64: 1280, 1024>}, {pipeline_mode = #tpu.pipeline_mode<synchronous>, transform_indices = @transform_4, window_bounds = array<i64: 1, 1024>}, {transform_indices = @transform_5, window_bounds = array<i64: 24, 1024>}]} {
    %c0 = arith.constant 0 : index
    %c0_0 = arith.constant 0 : index
    %0 = vector.load %arg1[%c0, %c0_0] : memref<24x640xf32, #tpu.memory_space<vmem>>, vector<24x640xf32>
    %c0_1 = arith.constant 0 : index
    %c0_2 = arith.constant 0 : index
    %1 = vector.load %arg2[%c0_1, %c0_2] : memref<24x640xf32, #tpu.memory_space<vmem>>, vector<24x640xf32>
    %2 = arith.mulf %0, %1 : vector<24x640xf32>
    %3 = arith.truncf %2 : vector<24x640xf32> to vector<24x640xbf16>
    %c0_3 = arith.constant 0 : index
    %c0_4 = arith.constant 0 : index
    %4 = vector.load %arg1[%c0_3, %c0_4] : memref<24x640xf32, #tpu.memory_space<vmem>>, vector<24x640xf32>
    %c0_5 = arith.constant 0 : index
    %c0_6 = arith.constant 0 : index
    %5 = vector.load %arg3[%c0_5, %c0_6] : memref<24x640xf32, #tpu.memory_space<vmem>>, vector<24x640xf32>
    %6 = arith.mulf %4, %5 : vector<24x640xf32>
    %7 = arith.truncf %6 : vector<24x640xf32> to vector<24x640xbf16>
    %8 = tpu.concatenate %3, %7 in 1 : vector<24x640xbf16>, vector<24x640xbf16> -> vector<24x1280xbf16>
    %c0_7 = arith.constant 0 : index
    %c0_8 = arith.constant 0 : index
    %9 = vector.load %arg4[%c0_7, %c0_8] : memref<1280x1024xbf16, #tpu.memory_space<vmem>>, vector<1280x1024xbf16>
    %cst = arith.constant dense<0.000000e+00> : vector<24x1024xf32>
    %10 = tpu.matmul %8, %9, %cst {dimension_numbers = #tpu.dot_dimension_numbers<[1], [0], [0], [1], [0, 0, 1, 1], [], []>} : vector<24x1280xbf16>, vector<1280x1024xbf16>, vector<24x1024xf32> -> vector<24x1024xf32>
    %c0_9 = arith.constant 0 : index
    %c0_10 = arith.constant 0 : index
    %11 = vector.load %arg5[%c0_9, %c0_10] : memref<1x1024xf32, #tpu.memory_space<vmem>>, vector<1x1024xf32>
    %12 = vector.broadcast %11 : vector<1x1024xf32> to vector<24x1024xf32>
    %13 = arith.mulf %10, %12 : vector<24x1024xf32>
    %c0_11 = arith.constant 0 : index
    %c0_12 = arith.constant 0 : index
    %14 = vector.load %arg6[%c0_11, %c0_12] : memref<24x1024xf32, #tpu.memory_space<vmem>>, vector<24x1024xf32>
    tpu.vector_store %arg6[%c0_11, %c0_12], %13 {strides = array<i32>} : memref<24x1024xf32, #tpu.memory_space<vmem>>, vector<24x1024xf32>,
    return
  }
  func.func @transform_0(%arg0: i32) -> (i32, i32) {
    %c0_i32 = arith.constant 0 : i32
    %c0_i32_0 = arith.constant 0 : i32
    return %arg0, %c0_i32 : i32, i32
  }
  func.func @transform_1(%arg0: i32) -> (i32, i32) {
    %c0_i32 = arith.constant 0 : i32
    %c0_i32_0 = arith.constant 0 : i32
    return %arg0, %c0_i32 : i32, i32
  }
  func.func @transform_2(%arg0: i32) -> (i32, i32) {
    %c0_i32 = arith.constant 0 : i32
    %c0_i32_0 = arith.constant 0 : i32
    return %arg0, %c0_i32 : i32, i32
  }
  func.func @transform_3(%arg0: i32) -> (i32, i32) {
    %c0_i32 = arith.constant 0 : i32
    %c0_i32_0 = arith.constant 0 : i32
    %c0_i32_1 = arith.constant 0 : i32
    return %c0_i32, %c0_i32_0 : i32, i32
  }
  func.func @transform_4(%arg0: i32) -> (i32, i32) {
    %c0_i32 = arith.constant 0 : i32
    %c0_i32_0 = arith.constant 0 : i32
    %c0_i32_1 = arith.constant 0 : i32
    return %c0_i32, %c0_i32_0 : i32, i32
  }
  func.func @transform_5(%arg0: i32) -> (i32, i32) {
    %c0_i32 = arith.constant 0 : i32
    %c0_i32_0 = arith.constant 0 : i32
    return %arg0, %c0_i32 : i32, i32
  }
}

module attributes {stable_mosaic.version = 11 : i64} {
  func.func @_linear_kernel(%arg0: i32, %arg1: memref<24x128xf32, #tpu.memory_space<vmem>>, %arg2: memref<128x128xf32, #tpu.memory_space<vmem>>, %arg3: memref<1x128xf32, #tpu.memory_space<vmem>>, %arg4: memref<24x128xf32, #tpu.memory_space<vmem>>) attributes {dimension_semantics = [#tpu.dimension_semantics<parallel>], iteration_bounds = array<i64: 1>, scalar_prefetch = 0 : i64, scratch_operands = 0 : i64, tpu.core_type = #tpu.core_type<tc>, window_params = [{transform_indices = @transform_0, window_bounds = array<i64: 24, 128>}, {pipeline_mode = #tpu.pipeline_mode<synchronous>, transform_indices = @transform_1, window_bounds = array<i64: 128, 128>}, {pipeline_mode = #tpu.pipeline_mode<synchronous>, transform_indices = @transform_2, window_bounds = array<i64: 1, 128>}, {transform_indices = @transform_3, window_bounds = array<i64: 24, 128>}]} {
    %c0 = arith.constant 0 : index
    %c0_0 = arith.constant 0 : index
    %0 = vector.load %arg1[%c0, %c0_0] : memref<24x128xf32, #tpu.memory_space<vmem>>, vector<24x128xf32>
    %c0_1 = arith.constant 0 : index
    %c0_2 = arith.constant 0 : index
    %1 = vector.load %arg2[%c0_1, %c0_2] : memref<128x128xf32, #tpu.memory_space<vmem>>, vector<128x128xf32>
    %cst = arith.constant dense<0.000000e+00> : vector<24x128xf32>
    %2 = tpu.matmul %0, %1, %cst {dimension_numbers = #tpu.dot_dimension_numbers<[1], [0], [0], [1], [0, 0, 1, 1], [], []>} : vector<24x128xf32>, vector<128x128xf32>, vector<24x128xf32> -> vector<24x128xf32>
    %c0_3 = arith.constant 0 : index
    %c0_4 = arith.constant 0 : index
    %3 = vector.load %arg3[%c0_3, %c0_4] : memref<1x128xf32, #tpu.memory_space<vmem>>, vector<1x128xf32>
    %4 = vector.broadcast %3 : vector<1x128xf32> to vector<24x128xf32>
    %5 = arith.addf %2, %4 : vector<24x128xf32>
    %6 = math.tanh %5 : vector<24x128xf32>
    %c0_5 = arith.constant 0 : index
    %c0_6 = arith.constant 0 : index
    %7 = vector.load %arg4[%c0_5, %c0_6] : memref<24x128xf32, #tpu.memory_space<vmem>>, vector<24x128xf32>
    tpu.vector_store %arg4[%c0_5, %c0_6], %6 {strides = array<i32>} : memref<24x128xf32, #tpu.memory_space<vmem>>, vector<24x128xf32>,
    return
  }
  func.func @transform_0(%arg0: i32) -> (i32, i32) {
    %c0_i32 = arith.constant 0 : i32
    %c0_i32_0 = arith.constant 0 : i32
    return %arg0, %c0_i32 : i32, i32
  }
  func.func @transform_1(%arg0: i32) -> (i32, i32) {
    %c0_i32 = arith.constant 0 : i32
    %c0_i32_0 = arith.constant 0 : i32
    %c0_i32_1 = arith.constant 0 : i32
    return %c0_i32, %c0_i32_0 : i32, i32
  }
  func.func @transform_2(%arg0: i32) -> (i32, i32) {
    %c0_i32 = arith.constant 0 : i32
    %c0_i32_0 = arith.constant 0 : i32
    %c0_i32_1 = arith.constant 0 : i32
    return %c0_i32, %c0_i32_0 : i32, i32
  }
  func.func @transform_3(%arg0: i32) -> (i32, i32) {
    %c0_i32 = arith.constant 0 : i32
    %c0_i32_0 = arith.constant 0 : i32
    return %arg0, %c0_i32 : i32, i32
  }
}

</mosaic_0001>

<llo_original>
// kernel: _lambda_.5
$region0: #{_lambda_.5}
  #allocation0 [shape = 'u32[]', space=smem, size = 0x4, offset = 0x4, fixed_abs, tag = 'smem constant byte address 0x4 - core index']
  #allocation1 [shape = 'u32[144,128]{1,0:T(1,128)}', space=vmem, size = 0x12000, scoped, tag = 'internal scratch']
  %s0 = inlined_call_operand.vmem [shape: f32[24,128], index: 0, kind: input, shape index: {}]
  %s1 = inlined_call_operand.hbm [shape: f32[128,128], index: 1, kind: input, shape index: {}]
  %s2 = inlined_call_operand.hbm [shape: f32[1,128], index: 2, kind: input, shape index: {}]
  %s3 = inlined_call_operand.vmem [shape: f32[24,128], index: 3, kind: output, shape index: {}]
  %s4 = sld [smem:[#allocation0]]
  $region30: #{_lambda_.5} parent=0
    _
  %s6 = ssub.s32 1, %s4
  %s7 = scalar_select 0, %s6, %s4
  $region1: #{_lambda_.5} parent=0
    #allocation2 [shape = 'u8[65536]{0}', space=vmem, size = 0x10000, scoped, tag = 'input window, operand 1, single buffered']
    #allocation3 [shape = 's32[1]{0}', space=sflag, size = 0x4, scoped, tag = 'scoped memory for _lambda_.5']
    #allocation4 [shape = 'u8[512]{0}', space=vmem, size = 0x400, scoped, tag = 'input window, operand 2, single buffered']
    #allocation5 [shape = 's32[1]{0}', space=sflag, size = 0x4, scoped, tag = 'scoped memory for _lambda_.5']
    %8 = vsyncpa [#allocation3], 0
    %9 = vsyncpa [#allocation5], 0
    // Predicated region
    $region2: #{_lambda_.5} parent=1 // pred_check
      _
    $region3: #{_lambda_.5} parent=1 // pred_check_branch
      %11 = sbr.rel (0) target = $region5
    $region4: #{_lambda_.5} parent=1 // pred_region
      _
    $region5: #{_lambda_.5} parent=1 // pred_fallthru
      _
    // Predicated region
    $region6: #{_lambda_.5} parent=1 // pred_check
      _
    $region7: #{_lambda_.5} parent=1 // pred_check_branch
      %13 = sbr.rel (0) target = $region9
    $region8: #{_lambda_.5} parent=1 // pred_region
      %s15 = ssub.s32 2048, 2048
      %16 = vsyncadd [#allocation3], %s15
      %s17 = sshll.u32 [#allocation2], 4
      %s18 = int_to_ptr.vmem [resolvable:$true] %s17
      %23 = dma.hbm_to_vmem [thread:$0]  %s1, 2048, %s18, [#allocation3], 128, 128, 8
    $region9: #{_lambda_.5} parent=1 // pred_fallthru
      _
    // Predicated region
    $region10: #{_lambda_.5} parent=1 // pred_check
      _
    $region11: #{_lambda_.5} parent=1 // pred_check_branch
      %25 = sbr.rel (0) target = $region13
    $region12: #{_lambda_.5} parent=1 // pred_region
      %s27 = ssub.s32 16, 16
      %28 = vsyncadd [#allocation5], %s27
      %s30 = sshll.u32 [#allocation4], 4
      %s31 = int_to_ptr.vmem [resolvable:$true] %s30
      %33 = dma.hbm_to_vmem [thread:$0]  %s2, 16, %s31, [#allocation5]
    $region13: #{_lambda_.5} parent=1 // pred_fallthru
      _
    // Predicated region
    $region14: #{_lambda_.5} parent=1 // pred_check
      _
    $region15: #{_lambda_.5} parent=1 // pred_check_branch
      %35 = sbr.rel (0) target = $region17
    $region16: #{_lambda_.5} parent=1 // pred_region
      %36 = dma.done [#allocation3], 2048
    $region17: #{_lambda_.5} parent=1 // pred_fallthru
      _
    // Predicated region
    $region18: #{_lambda_.5} parent=1 // pred_check
      _
    $region19: #{_lambda_.5} parent=1 // pred_check_branch
      %38 = sbr.rel (0) target = $region21
    $region20: #{_lambda_.5} parent=1 // pred_region
      %39 = dma.done [#allocation5], 16
    $region21: #{_lambda_.5} parent=1 // pred_fallthru
      _
    %v40 = vld [vmem:[%s0] sm:$0xff]
    %v41 = vld [vmem:[%s0 + $0x8] sm:$0xff]
    %v42 = vld [vmem:[%s0 + $0x10] sm:$0xff]
    %v43 = vld [vmem:[#allocation2] sm:$0xff]
    %v44 = vld [vmem:[#allocation2 + $0x8] sm:$0xff]
    %v45 = vld [vmem:[#allocation2 + $0x10] sm:$0xff]
    %v46 = vld [vmem:[#allocation2 + $0x18] sm:$0xff]
    %v47 = vld [vmem:[#allocation2 + $0x20] sm:$0xff]
    %v48 = vld [vmem:[#allocation2 + $0x28] sm:$0xff]
    %v49 = vld [vmem:[#allocation2 + $0x30] sm:$0xff]
    %v50 = vld [vmem:[#allocation2 + $0x38] sm:$0xff]
    %v51 = vld [vmem:[#allocation2 + $0x40] sm:$0xff]
    %v52 = vld [vmem:[#allocation2 + $0x48] sm:$0xff]
    %v53 = vld [vmem:[#allocation2 + $0x50] sm:$0xff]
    %v54 = vld [vmem:[#allocation2 + $0x58] sm:$0xff]
    %v55 = vld [vmem:[#allocation2 + $0x60] sm:$0xff]
    %v56 = vld [vmem:[#allocation2 + $0x68] sm:$0xff]
    %v57 = vld [vmem:[#allocation2 + $0x70] sm:$0xff]
    %v58 = vld [vmem:[#allocation2 + $0x78] sm:$0xff]
    %v59 = vld [vmem:[#allocation4] sm:$0x1]
    %v61 = vlaneseq
    %v62 = vshrl.u32 %v61, 7
    %v63 = vsub.s32 0, %v62
    %v64 = vrot.slane %v59, %v63
    %66 = vmatprep.subr.mxu0 0.0
    %67 = vmatpush1.msra.mxu0 %v58
    %68 = vmatprep.subr.mxu0 0.0
    %69 = vmatpush1.msra.mxu0 %v57
    %70 = vmatprep.subr.mxu0 0.0
    %71 = vmatpush1.msra.mxu0 %v56
    %72 = vmatprep.subr.mxu0 0.0
    %73 = vmatpush1.msra.mxu0 %v55
    %74 = vmatprep.subr.mxu0 0.0
    %75 = vmatpush1.msra.mxu0 %v54
    %76 = vmatprep.subr.mxu0 0.0
    %77 = vmatpush1.msra.mxu0 %v53
    %78 = vmatprep.subr.mxu0 0.0
    %79 = vmatpush1.msra.mxu0 %v52
    %80 = vmatprep.subr.mxu0 0.0
    %81 = vmatpush1.msra.mxu0 %v51
    %82 = vmatprep.subr.mxu0 0.0
    %83 = vmatpush1.msra.mxu0 %v50
    %84 = vmatprep.subr.mxu0 0.0
    %85 = vmatpush1.msra.mxu0 %v49
    %86 = vmatprep.subr.mxu0 0.0
    %87 = vmatpush1.msra.mxu0 %v48
    %88 = vmatprep.subr.mxu0 0.0
    %89 = vmatpush1.msra.mxu0 %v47
    %90 = vmatprep.subr.mxu0 0.0
    %91 = vmatpush1.msra.mxu0 %v46
    %92 = vmatprep.subr.mxu0 0.0
    %93 = vmatpush1.msra.mxu0 %v45
    %94 = vmatprep.subr.mxu0 0.0
    %95 = vmatpush1.msra.mxu0 %v44
    %96 = vmatprep.subr.mxu0 0.0
    %97 = vmatpush1.msra.mxu0 %v43
    %98 = vmatprep.subr.mxu0 0.0
    %99 = vmatpush2.msra.mxu0 0.0
    %100 = vmatprep.subr.mxu0 0.0
    %101 = vmatpush2.msra.mxu0 0.0
    %102 = vmatprep.subr.mxu0 0.0
    %103 = vmatpush2.msra.mxu0 0.0
    %104 = vmatprep.subr.mxu0 0.0
    %105 = vmatpush2.msra.mxu0 0.0
    %106 = vmatprep.subr.mxu0 0.0
    %107 = vmatpush2.msra.mxu0 0.0
    %108 = vmatprep.subr.mxu0 0.0
    %109 = vmatpush2.msra.mxu0 0.0
    %110 = vmatprep.subr.mxu0 0.0
    %111 = vmatpush2.msra.mxu0 0.0
    %112 = vmatprep.subr.mxu0 0.0
    %113 = vmatpush2.msra.mxu0 0.0
    %114 = vmatprep.subr.mxu0 0.0
    %115 = vmatpush2.msra.mxu0 0.0
    %116 = vmatprep.subr.mxu0 0.0
    %117 = vmatpush2.msra.mxu0 0.0
    %118 = vmatprep.subr.mxu0 0.0
    %119 = vmatpush2.msra.mxu0 0.0
    %120 = vmatprep.subr.mxu0 0.0
    %121 = vmatpush2.msra.mxu0 0.0
    %122 = vmatprep.subr.mxu0 0.0
    %123 = vmatpush2.msra.mxu0 0.0
    %124 = vmatprep.subr.mxu0 0.0
    %125 = vmatpush2.msra.mxu0 0.0
    %126 = vmatprep.subr.mxu0 0.0
    %127 = vmatpush2.msra.mxu0 0.0
    %128 = vmatprep.subr.mxu0 0.0
    %129 = vmatpush2.msra.mxu0 0.0
    %130 = vmatprep.mubr.f32.mxu0 0.0
    %131 = vmatmul.mubr.f32.gmra.mxu0 %v40
    %v132 = vpop.f32.mrf.mxu0
    %v133 = vadd.f32 %v64, %v132
    %v134 = vpop.f32.mrf.mxu0
    %135 = vmatprep.mubr.f32.mxu0 0.0
    %136 = vmatmul.mubr.f32.gmra.mxu0 %v41
    %v137 = vpop.f32.mrf.mxu0
    %v138 = vadd.f32 %v64, %v137
    %v139 = vpop.f32.mrf.mxu0
    %140 = vmatprep.mubr.f32.mxu0 0.0
    %141 = vmatmul.mubr.f32.gmra.mxu0 %v42
    %v142 = vpop.f32.mrf.mxu0
    %v143 = vadd.f32 %v64, %v142
    %v144 = vpop.f32.mrf.mxu0
    %145 = vdwg.mxu0
    %v146 = vtanh.pop %v133
    %v147 = vtanh.pop %v138
    %v148 = vtanh.pop %v143
    %149 = vst [vmem:[%s3] sm:$0xff] %v146
    %150 = vst [vmem:[%s3 + $0x8] sm:$0xff] %v147
    %151 = vst [vmem:[%s3 + $0x10] sm:$0xff] %v148
    // Predicated region
    $region22: #{_lambda_.5} parent=1 // pred_check
      _
    $region23: #{_lambda_.5} parent=1 // pred_check_branch
      %153 = sbr.rel (0) target = $region25
    $region24: #{_lambda_.5} parent=1 // pred_region
      _
    $region25: #{_lambda_.5} parent=1 // pred_fallthru
      _
    // Predicated region
    $region26: #{_lambda_.5} parent=1 // pred_check
      _
    $region27: #{_lambda_.5} parent=1 // pred_check_branch
      %155 = sbr.rel (0) target = $region29
    $region28: #{_lambda_.5} parent=1 // pred_region
      _
    $region29: #{_lambda_.5} parent=1 // pred_fallthru
      _
    %156 = vsyncpa [#allocation3], 1
    %157 = vsyncpa [#allocation5], 1

// kernel: _lambda_.7
$region0: #{_lambda_.7}
  #allocation0 [shape = 'u32[]', space=smem, size = 0x4, offset = 0x4, fixed_abs, tag = 'smem constant byte address 0x4 - core index']
  #allocation1 [shape = 'u32[144,128]{1,0:T(1,128)}', space=vmem, size = 0x12000, scoped, tag = 'internal scratch']
  %s0 = inlined_call_operand.vmem [shape: f32[24,1024], index: 0, kind: input, shape index: {}]
  %s1 = inlined_call_operand.vmem [shape: f32[1,1024], index: 1, kind: input, shape index: {}]
  %s2 = inlined_call_operand.vmem [shape: bf16[1024,1280], index: 2, kind: input, shape index: {}]
  %s3 = inlined_call_operand.vmem [shape: f32[24,640], index: 3, kind: output, shape index: {}]
  %s4 = sld [smem:[#allocation0]]
  $region22: #{_lambda_.7} parent=0
    _
  %s6 = ssub.s32 1, %s4
  %s7 = scalar_select 0, %s6, %s4
  // Predicated region
  $region2: #{_lambda_.7} parent=0 // pred_check
    _
  $region3: #{_lambda_.7} parent=0 // pred_check_branch
    %9 = sbr.rel (0) target = $region5
  $region4: #{_lambda_.7} parent=0 // pred_region
    _
  $region5: #{_lambda_.7} parent=0 // pred_fallthru
    _
  // Predicated region
  $region6: #{_lambda_.7} parent=0 // pred_check
    _
  $region7: #{_lambda_.7} parent=0 // pred_check_branch
    %11 = sbr.rel (0) target = $region9
  $region8: #{_lambda_.7} parent=0 // pred_region
    _
  $region9: #{_lambda_.7} parent=0 // pred_fallthru
    _
  // Predicated region
  $region10: #{_lambda_.7} parent=0 // pred_check
    _
  $region11: #{_lambda_.7} parent=0 // pred_check_branch
    %13 = sbr.rel (0) target = $region13
  $region12: #{_lambda_.7} parent=0 // pred_region
    _
  $region13: #{_lambda_.7} parent=0 // pred_fallthru
    _
  %v14 = vld [vmem:[%s0] sm:$0xff]
  %v15 = vld [vmem:[%s0 + $0x8] sm:$0xff]
  %v16 = vld [vmem:[%s0 + $0x10] sm:$0xff]
  %v17 = vld [vmem:[%s0 + $0x18] sm:$0xff]
  %v18 = vld [vmem:[%s0 + $0x20] sm:$0xff]
  %v19 = vld [vmem:[%s0 + $0x28] sm:$0xff]
  %v20 = vld [vmem:[%s0 + $0x30] sm:$0xff]
  %v21 = vld [vmem:[%s0 + $0x38] sm:$0xff]
  %v22 = vld [vmem:[%s0 + $0x40] sm:$0xff]
  %v23 = vld [vmem:[%s0 + $0x48] sm:$0xff]
  %v24 = vld [vmem:[%s0 + $0x50] sm:$0xff]
  %v25 = vld [vmem:[%s0 + $0x58] sm:$0xff]
  %v26 = vld [vmem:[%s0 + $0x60] sm:$0xff]
  %v27 = vld [vmem:[%s0 + $0x68] sm:$0xff]
  %v28 = vld [vmem:[%s0 + $0x70] sm:$0xff]
  %v29 = vld [vmem:[%s0 + $0x78] sm:$0xff]
  %v30 = vld [vmem:[%s0 + $0x80] sm:$0xff]
  %v31 = vld [vmem:[%s0 + $0x88] sm:$0xff]
  %v32 = vld [vmem:[%s0 + $0x90] sm:$0xff]
  %v33 = vld [vmem:[%s0 + $0x98] sm:$0xff]
  %v34 = vld [vmem:[%s0 + $0xa0] sm:$0xff]
  %v35 = vld [vmem:[%s0 + $0xa8] sm:$0xff]
  %v36 = vld [vmem:[%s0 + $0xb0] sm:$0xff]
  %v37 = vld [vmem:[%s0 + $0xb8] sm:$0xff]
  %v38 = vld [vmem:[%s1] sm:$0xff]
  %v40 = vlaneseq
  %v41 = vshrl.u32 %v40, 7
  %v42 = vsub.s32 0, %v41
  %v43 = vrot.slane %v38, %v42
  %v44 = vlaneseq
  %v45 = vshrl.u32 %v44, 7
  %v46 = vsub.s32 1, %v45
  %v47 = vrot.slane %v38, %v46
  %v48 = vlaneseq
  %v49 = vshrl.u32 %v48, 7
  %v50 = vsub.s32 2, %v49
  %v51 = vrot.slane %v38, %v50
  %v52 = vlaneseq
  %v53 = vshrl.u32 %v52, 7
  %v54 = vsub.s32 3, %v53
  %v55 = vrot.slane %v38, %v54
  %v56 = vlaneseq
  %v57 = vshrl.u32 %v56, 7
  %v58 = vsub.s32 4, %v57
  %v59 = vrot.slane %v38, %v58
  %v60 = vlaneseq
  %v61 = vshrl.u32 %v60, 7
  %v62 = vsub.s32 5, %v61
  %v63 = vrot.slane %v38, %v62
  %v64 = vlaneseq
  %v65 = vshrl.u32 %v64, 7
  %v66 = vsub.s32 6, %v65
  %v67 = vrot.slane %v38, %v66
  %v68 = vlaneseq
  %v69 = vshrl.u32 %v68, 7
  %v70 = vsub.s32 7, %v69
  %v71 = vrot.slane %v38, %v70
  %v80 = vmul.f32 %v14, %v43
  %v81 = vmul.f32 %v15, %v47
  %v82 = vmul.f32 %v16, %v51
  %v83 = vmul.f32 %v17, %v55
  %v84 = vmul.f32 %v18, %v59
  %v85 = vmul.f32 %v19, %v63
  %v86 = vmul.f32 %v20, %v67
  %v87 = vmul.f32 %v21, %v71
  %v88 = vmul.f32 %v22, %v43
  %v89 = vmul.f32 %v23, %v47
  %v90 = vmul.f32 %v24, %v51
  %v91 = vmul.f32 %v25, %v55
  %v92 = vmul.f32 %v26, %v59
  %v93 = vmul.f32 %v27, %v63
  %v94 = vmul.f32 %v28, %v67
  %v95 = vmul.f32 %v29, %v71
  %v96 = vmul.f32 %v30, %v43
  %v97 = vmul.f32 %v31, %v47
  %v98 = vmul.f32 %v32, %v51
  %v99 = vmul.f32 %v33, %v55
  %v100 = vmul.f32 %v34, %v59
  %v101 = vmul.f32 %v35, %v63
  %v102 = vmul.f32 %v36, %v67
  %v103 = vmul.f32 %v37, %v71
  %v104 = vpack.c.bf16 %v88, %v80
  %v105 = vpack.c.bf16 %v89, %v81
  %v106 = vpack.c.bf16 %v90, %v82
  %v107 = vpack.c.bf16 %v91, %v83
  %v108 = vpack.c.bf16 %v92, %v84
  %v109 = vpack.c.bf16 %v93, %v85
  %v110 = vpack.c.bf16 %v94, %v86
  %v111 = vpack.c.bf16 %v95, %v87
  %v112 = vpack.c.bf16 %v96, %v96
  %v113 = vpack.c.bf16 %v97, %v97
  %v114 = vpack.c.bf16 %v98, %v98
  %v115 = vpack.c.bf16 %v99, %v99
  %v116 = vpack.c.bf16 %v100, %v100
  %v117 = vpack.c.bf16 %v101, %v101
  %v118 = vpack.c.bf16 %v102, %v102
  %v119 = vpack.c.bf16 %v103, %v103
  %v120 = vld [vmem:[%s2] sm:$0xff]
  %v121 = vld [vmem:[%s2 + $0x8] sm:$0xff]
  %v122 = vld [vmem:[%s2 + $0x10] sm:$0xff]
  %v123 = vld [vmem:[%s2 + $0x18] sm:$0xff]
  %v124 = vld [vmem:[%s2 + $0x20] sm:$0xff]
  %v125 = vld [vmem:[%s2 + $0x28] sm:$0xff]
  %v126 = vld [vmem:[%s2 + $0x30] sm:$0xff]
  %v127 = vld [vmem:[%s2 + $0x38] sm:$0xff]
  %v128 = vld [vmem:[%s2 + $0x40] sm:$0xff]
  %v129 = vld [vmem:[%s2 + $0x48] sm:$0xff]
  %v130 = vld [vmem:[%s2 + $0x50] sm:$0xff]
  %v131 = vld [vmem:[%s2 + $0x58] sm:$0xff]
  %v132 = vld [vmem:[%s2 + $0x60] sm:$0xff]
  %v133 = vld [vmem:[%s2 + $0x68] sm:$0xff]
  %v134 = vld [vmem:[%s2 + $0x70] sm:$0xff]
  %v135 = vld [vmem:[%s2 + $0x78] sm:$0xff]
  %v136 = vld [vmem:[%s2 + $0x80] sm:$0xff]
  %v137 = vld [vmem:[%s2 + $0x88] sm:$0xff]
  %v138 = vld [vmem:[%s2 + $0x90] sm:$0xff]
  %v139 = vld [vmem:[%s2 + $0x98] sm:$0xff]
  %v140 = vld [vmem:[%s2 + $0xa0] sm:$0xff]
  %v141 = vld [vmem:[%s2 + $0xa8] sm:$0xff]
  %v142 = vld [vmem:[%s2 + $0xb0] sm:$0xff]
  %v143 = vld [vmem:[%s2 + $0xb8] sm:$0xff]
  %v144 = vld [vmem:[%s2 + $0xc0] sm:$0xff]
  %v145 = vld [vmem:[%s2 + $0xc8] sm:$0xff]
  %v146 = vld [vmem:[%s2 + $0xd0] sm:$0xff]
  %v147 = vld [vmem:[%s2 + $0xd8] sm:$0xff]
  %v148 = vld [vmem:[%s2 + $0xe0] sm:$0xff]
  %v149 = vld [vmem:[%s2 + $0xe8] sm:$0xff]
  %v150 = vld [vmem:[%s2 + $0xf0] sm:$0xff]
  %v151 = vld [vmem:[%s2 + $0xf8] sm:$0xff]
  %v152 = vld [vmem:[%s2 + $0x100] sm:$0xff]
  %v153 = vld [vmem:[%s2 + $0x108] sm:$0xff]
  %v154 = vld [vmem:[%s2 + $0x110] sm:$0xff]
  %v155 = vld [vmem:[%s2 + $0x118] sm:$0xff]
  %v156 = vld [vmem:[%s2 + $0x120] sm:$0xff]
  %v157 = vld [vmem:[%s2 + $0x128] sm:$0xff]
  %v158 = vld [vmem:[%s2 + $0x130] sm:$0xff]
  %v159 = vld [vmem:[%s2 + $0x138] sm:$0xff]
  %v160 = vld [vmem:[%s2 + $0x140] sm:$0xff]
  %v161 = vld [vmem:[%s2 + $0x148] sm:$0xff]
  %v162 = vld [vmem:[%s2 + $0x150] sm:$0xff]
  %v163 = vld [vmem:[%s2 + $0x158] sm:$0xff]
  %v164 = vld [vmem:[%s2 + $0x160] sm:$0xff]
  %v165 = vld [vmem:[%s2 + $0x168] sm:$0xff]
  %v166 = vld [vmem:[%s2 + $0x170] sm:$0xff]
  %v167 = vld [vmem:[%s2 + $0x178] sm:$0xff]
  %v168 = vld [vmem:[%s2 + $0x180] sm:$0xff]
  %v169 = vld [vmem:[%s2 + $0x188] sm:$0xff]
  %v170 = vld [vmem:[%s2 + $0x190] sm:$0xff]
  %v171 = vld [vmem:[%s2 + $0x198] sm:$0xff]
  %v172 = vld [vmem:[%s2 + $0x1a0] sm:$0xff]
  %v173 = vld [vmem:[%s2 + $0x1a8] sm:$0xff]
  %v174 = vld [vmem:[%s2 + $0x1b0] sm:$0xff]
  %v175 = vld [vmem:[%s2 + $0x1b8] sm:$0xff]
  %v176 = vld [vmem:[%s2 + $0x1c0] sm:$0xff]
  %v177 = vld [vmem:[%s2 + $0x1c8] sm:$0xff]
  %v178 = vld [vmem:[%s2 + $0x1d0] sm:$0xff]
  %v179 = vld [vmem:[%s2 + $0x1d8] sm:$0xff]
  %v180 = vld [vmem:[%s2 + $0x1e0] sm:$0xff]
  %v181 = vld [vmem:[%s2 + $0x1e8] sm:$0xff]
  %v182 = vld [vmem:[%s2 + $0x1f0] sm:$0xff]
  %v183 = vld [vmem:[%s2 + $0x1f8] sm:$0xff]
  %v184 = vld [vmem:[%s2 + $0x200] sm:$0xff]
  %v185 = vld [vmem:[%s2 + $0x208] sm:$0xff]
  %v186 = vld [vmem:[%s2 + $0x210] sm:$0xff]
  %v187 = vld [vmem:[%s2 + $0x218] sm:$0xff]
  %v188 = vld [vmem:[%s2 + $0x220] sm:$0xff]
  %v189 = vld [vmem:[%s2 + $0x228] sm:$0xff]
  %v190 = vld [vmem:[%s2 + $0x230] sm:$0xff]
  %v191 = vld [vmem:[%s2 + $0x238] sm:$0xff]
  %v192 = vld [vmem:[%s2 + $0x240] sm:$0xff]
  %v193 = vld [vmem:[%s2 + $0x248] sm:$0xff]
  %v194 = vld [vmem:[%s2 + $0x250] sm:$0xff]
  %v195 = vld [vmem:[%s2 + $0x258] sm:$0xff]
  %v196 = vld [vmem:[%s2 + $0x260] sm:$0xff]
  %v197 = vld [vmem:[%s2 + $0x268] sm:$0xff]
  %v198 = vld [vmem:[%s2 + $0x270] sm:$0xff]
  %v199 = vld [vmem:[%s2 + $0x278] sm:$0xff]
  %v200 = vld [vmem:[%s2 + $0x280] sm:$0xff]
  %v201 = vld [vmem:[%s2 + $0x288] sm:$0xff]
  %v202 = vld [vmem:[%s2 + $0x290] sm:$0xff]
  %v203 = vld [vmem:[%s2 + $0x298] sm:$0xff]
  %v204 = vld [vmem:[%s2 + $0x2a0] sm:$0xff]
  %v205 = vld [vmem:[%s2 + $0x2a8] sm:$0xff]
  %v206 = vld [vmem:[%s2 + $0x2b0] sm:$0xff]
  %v207 = vld [vmem:[%s2 + $0x2b8] sm:$0xff]
  %v208 = vld [vmem:[%s2 + $0x2c0] sm:$0xff]
  %v209 = vld [vmem:[%s2 + $0x2c8] sm:$0xff]
  %v210 = vld [vmem:[%s2 + $0x2d0] sm:$0xff]
  %v211 = vld [vmem:[%s2 + $0x2d8] sm:$0xff]
  %v212 = vld [vmem:[%s2 + $0x2e0] sm:$0xff]
  %v213 = vld [vmem:[%s2 + $0x2e8] sm:$0xff]
  %v214 = vld [vmem:[%s2 + $0x2f0] sm:$0xff]
  %v215 = vld [vmem:[%s2 + $0x2f8] sm:$0xff]
  %v216 = vld [vmem:[%s2 + $0x300] sm:$0xff]
  %v217 = vld [vmem:[%s2 + $0x308] sm:$0xff]
  %v218 = vld [vmem:[%s2 + $0x310] sm:$0xff]
  %v219 = vld [vmem:[%s2 + $0x318] sm:$0xff]
  %v220 = vld [vmem:[%s2 + $0x320] sm:$0xff]
  %v221 = vld [vmem:[%s2 + $0x328] sm:$0xff]
  %v222 = vld [vmem:[%s2 + $0x330] sm:$0xff]
  %v223 = vld [vmem:[%s2 + $0x338] sm:$0xff]
  %v224 = vld [vmem:[%s2 + $0x340] sm:$0xff]
  %v225 = vld [vmem:[%s2 + $0x348] sm:$0xff]
  %v226 = vld [vmem:[%s2 + $0x350] sm:$0xff]
  %v227 = vld [vmem:[%s2 + $0x358] sm:$0xff]
  %v228 = vld [vmem:[%s2 + $0x360] sm:$0xff]
  %v229 = vld [vmem:[%s2 + $0x368] sm:$0xff]
  %v230 = vld [vmem:[%s2 + $0x370] sm:$0xff]
  %v231 = vld [vmem:[%s2 + $0x378] sm:$0xff]
  %v232 = vld [vmem:[%s2 + $0x380] sm:$0xff]
  %v233 = vld [vmem:[%s2 + $0x388] sm:$0xff]
  %v234 = vld [vmem:[%s2 + $0x390] sm:$0xff]
  %v235 = vld [vmem:[%s2 + $0x398] sm:$0xff]
  %v236 = vld [vmem:[%s2 + $0x3a0] sm:$0xff]
  %v237 = vld [vmem:[%s2 + $0x3a8] sm:$0xff]
  %v238 = vld [vmem:[%s2 + $0x3b0] sm:$0xff]
  %v239 = vld [vmem:[%s2 + $0x3b8] sm:$0xff]
  %v240 = vld [vmem:[%s2 + $0x3c0] sm:$0xff]
  %v241 = vld [vmem:[%s2 + $0x3c8] sm:$0xff]
  %v242 = vld [vmem:[%s2 + $0x3d0] sm:$0xff]
  %v243 = vld [vmem:[%s2 + $0x3d8] sm:$0xff]
  %v244 = vld [vmem:[%s2 + $0x3e0] sm:$0xff]
  %v245 = vld [vmem:[%s2 + $0x3e8] sm:$0xff]
  %v246 = vld [vmem:[%s2 + $0x3f0] sm:$0xff]
  %v247 = vld [vmem:[%s2 + $0x3f8] sm:$0xff]
  %v248 = vld [vmem:[%s2 + $0x400] sm:$0xff]
  %v249 = vld [vmem:[%s2 + $0x408] sm:$0xff]
  %v250 = vld [vmem:[%s2 + $0x410] sm:$0xff]
  %v251 = vld [vmem:[%s2 + $0x418] sm:$0xff]
  %v252 = vld [vmem:[%s2 + $0x420] sm:$0xff]
  %v253 = vld [vmem:[%s2 + $0x428] sm:$0xff]
  %v254 = vld [vmem:[%s2 + $0x430] sm:$0xff]
  %v255 = vld [vmem:[%s2 + $0x438] sm:$0xff]
  %v256 = vld [vmem:[%s2 + $0x440] sm:$0xff]
  %v257 = vld [vmem:[%s2 + $0x448] sm:$0xff]
  %v258 = vld [vmem:[%s2 + $0x450] sm:$0xff]
  %v259 = vld [vmem:[%s2 + $0x458] sm:$0xff]
  %v260 = vld [vmem:[%s2 + $0x460] sm:$0xff]
  %v261 = vld [vmem:[%s2 + $0x468] sm:$0xff]
  %v262 = vld [vmem:[%s2 + $0x470] sm:$0xff]
  %v263 = vld [vmem:[%s2 + $0x478] sm:$0xff]
  %v264 = vld [vmem:[%s2 + $0x480] sm:$0xff]
  %v265 = vld [vmem:[%s2 + $0x488] sm:$0xff]
  %v266 = vld [vmem:[%s2 + $0x490] sm:$0xff]
  %v267 = vld [vmem:[%s2 + $0x498] sm:$0xff]
  %v268 = vld [vmem:[%s2 + $0x4a0] sm:$0xff]
  %v269 = vld [vmem:[%s2 + $0x4a8] sm:$0xff]
  %v270 = vld [vmem:[%s2 + $0x4b0] sm:$0xff]
  %v271 = vld [vmem:[%s2 + $0x4b8] sm:$0xff]
  %v272 = vld [vmem:[%s2 + $0x4c0] sm:$0xff]
  %v273 = vld [vmem:[%s2 + $0x4c8] sm:$0xff]
  %v274 = vld [vmem:[%s2 + $0x4d0] sm:$0xff]
  %v275 = vld [vmem:[%s2 + $0x4d8] sm:$0xff]
  %v276 = vld [vmem:[%s2 + $0x4e0] sm:$0xff]
  %v277 = vld [vmem:[%s2 + $0x4e8] sm:$0xff]
  %v278 = vld [vmem:[%s2 + $0x4f0] sm:$0xff]
  %v279 = vld [vmem:[%s2 + $0x4f8] sm:$0xff]
  %v280 = vld [vmem:[%s2 + $0x500] sm:$0xff]
  %v281 = vld [vmem:[%s2 + $0x508] sm:$0xff]
  %v282 = vld [vmem:[%s2 + $0x510] sm:$0xff]
  %v283 = vld [vmem:[%s2 + $0x518] sm:$0xff]
  %v284 = vld [vmem:[%s2 + $0x520] sm:$0xff]
  %v285 = vld [vmem:[%s2 + $0x528] sm:$0xff]
  %v286 = vld [vmem:[%s2 + $0x530] sm:$0xff]
  %v287 = vld [vmem:[%s2 + $0x538] sm:$0xff]
  %v288 = vld [vmem:[%s2 + $0x540] sm:$0xff]
  %v289 = vld [vmem:[%s2 + $0x548] sm:$0xff]
  %v290 = vld [vmem:[%s2 + $0x550] sm:$0xff]
  %v291 = vld [vmem:[%s2 + $0x558] sm:$0xff]
  %v292 = vld [vmem:[%s2 + $0x560] sm:$0xff]
  %v293 = vld [vmem:[%s2 + $0x568] sm:$0xff]
  %v294 = vld [vmem:[%s2 + $0x570] sm:$0xff]
  %v295 = vld [vmem:[%s2 + $0x578] sm:$0xff]
  %v296 = vld [vmem:[%s2 + $0x580] sm:$0xff]
  %v297 = vld [vmem:[%s2 + $0x588] sm:$0xff]
  %v298 = vld [vmem:[%s2 + $0x590] sm:$0xff]
  %v299 = vld [vmem:[%s2 + $0x598] sm:$0xff]
  %v300 = vld [vmem:[%s2 + $0x5a0] sm:$0xff]
  %v301 = vld [vmem:[%s2 + $0x5a8] sm:$0xff]
  %v302 = vld [vmem:[%s2 + $0x5b0] sm:$0xff]
  %v303 = vld [vmem:[%s2 + $0x5b8] sm:$0xff]
  %v304 = vld [vmem:[%s2 + $0x5c0] sm:$0xff]
  %v305 = vld [vmem:[%s2 + $0x5c8] sm:$0xff]
  %v306 = vld [vmem:[%s2 + $0x5d0] sm:$0xff]
  %v307 = vld [vmem:[%s2 + $0x5d8] sm:$0xff]
  %v308 = vld [vmem:[%s2 + $0x5e0] sm:$0xff]
  %v309 = vld [vmem:[%s2 + $0x5e8] sm:$0xff]
  %v310 = vld [vmem:[%s2 + $0x5f0] sm:$0xff]
  %v311 = vld [vmem:[%s2 + $0x5f8] sm:$0xff]
  %v312 = vld [vmem:[%s2 + $0x600] sm:$0xff]
  %v313 = vld [vmem:[%s2 + $0x608] sm:$0xff]
  %v314 = vld [vmem:[%s2 + $0x610] sm:$0xff]
  %v315 = vld [vmem:[%s2 + $0x618] sm:$0xff]
  %v316 = vld [vmem:[%s2 + $0x620] sm:$0xff]
  %v317 = vld [vmem:[%s2 + $0x628] sm:$0xff]
  %v318 = vld [vmem:[%s2 + $0x630] sm:$0xff]
  %v319 = vld [vmem:[%s2 + $0x638] sm:$0xff]
  %v320 = vld [vmem:[%s2 + $0x640] sm:$0xff]
  %v321 = vld [vmem:[%s2 + $0x648] sm:$0xff]
  %v322 = vld [vmem:[%s2 + $0x650] sm:$0xff]
  %v323 = vld [vmem:[%s2 + $0x658] sm:$0xff]
  %v324 = vld [vmem:[%s2 + $0x660] sm:$0xff]
  %v325 = vld [vmem:[%s2 + $0x668] sm:$0xff]
  %v326 = vld [vmem:[%s2 + $0x670] sm:$0xff]
  %v327 = vld [vmem:[%s2 + $0x678] sm:$0xff]
  %v328 = vld [vmem:[%s2 + $0x680] sm:$0xff]
  %v329 = vld [vmem:[%s2 + $0x688] sm:$0xff]
  %v330 = vld [vmem:[%s2 + $0x690] sm:$0xff]
  %v331 = vld [vmem:[%s2 + $0x698] sm:$0xff]
  %v332 = vld [vmem:[%s2 + $0x6a0] sm:$0xff]
  %v333 = vld [vmem:[%s2 + $0x6a8] sm:$0xff]
  %v334 = vld [vmem:[%s2 + $0x6b0] sm:$0xff]
  %v335 = vld [vmem:[%s2 + $0x6b8] sm:$0xff]
  %v336 = vld [vmem:[%s2 + $0x6c0] sm:$0xff]
  %v337 = vld [vmem:[%s2 + $0x6c8] sm:$0xff]
  %v338 = vld [vmem:[%s2 + $0x6d0] sm:$0xff]
  %v339 = vld [vmem:[%s2 + $0x6d8] sm:$0xff]
  %v340 = vld [vmem:[%s2 + $0x6e0] sm:$0xff]
  %v341 = vld [vmem:[%s2 + $0x6e8] sm:$0xff]
  %v342 = vld [vmem:[%s2 + $0x6f0] sm:$0xff]
  %v343 = vld [vmem:[%s2 + $0x6f8] sm:$0xff]
  %v344 = vld [vmem:[%s2 + $0x700] sm:$0xff]
  %v345 = vld [vmem:[%s2 + $0x708] sm:$0xff]
  %v346 = vld [vmem:[%s2 + $0x710] sm:$0xff]
  %v347 = vld [vmem:[%s2 + $0x718] sm:$0xff]
  %v348 = vld [vmem:[%s2 + $0x720] sm:$0xff]
  %v349 = vld [vmem:[%s2 + $0x728] sm:$0xff]
  %v350 = vld [vmem:[%s2 + $0x730] sm:$0xff]
  %v351 = vld [vmem:[%s2 + $0x738] sm:$0xff]
  %v352 = vld [vmem:[%s2 + $0x740] sm:$0xff]
  %v353 = vld [vmem:[%s2 + $0x748] sm:$0xff]
  %v354 = vld [vmem:[%s2 + $0x750] sm:$0xff]
  %v355 = vld [vmem:[%s2 + $0x758] sm:$0xff]
  %v356 = vld [vmem:[%s2 + $0x760] sm:$0xff]
  %v357 = vld [vmem:[%s2 + $0x768] sm:$0xff]
  %v358 = vld [vmem:[%s2 + $0x770] sm:$0xff]
  %v359 = vld [vmem:[%s2 + $0x778] sm:$0xff]
  %v360 = vld [vmem:[%s2 + $0x780] sm:$0xff]
  %v361 = vld [vmem:[%s2 + $0x788] sm:$0xff]
  %v362 = vld [vmem:[%s2 + $0x790] sm:$0xff]
  %v363 = vld [vmem:[%s2 + $0x798] sm:$0xff]
  %v364 = vld [vmem:[%s2 + $0x7a0] sm:$0xff]
  %v365 = vld [vmem:[%s2 + $0x7a8] sm:$0xff]
  %v366 = vld [vmem:[%s2 + $0x7b0] sm:$0xff]
  %v367 = vld [vmem:[%s2 + $0x7b8] sm:$0xff]
  %v368 = vld [vmem:[%s2 + $0x7c0] sm:$0xff]
  %v369 = vld [vmem:[%s2 + $0x7c8] sm:$0xff]
  %v370 = vld [vmem:[%s2 + $0x7d0] sm:$0xff]
  %v371 = vld [vmem:[%s2 + $0x7d8] sm:$0xff]
  %v372 = vld [vmem:[%s2 + $0x7e0] sm:$0xff]
  %v373 = vld [vmem:[%s2 + $0x7e8] sm:$0xff]
  %v374 = vld [vmem:[%s2 + $0x7f0] sm:$0xff]
  %v375 = vld [vmem:[%s2 + $0x7f8] sm:$0xff]
  %v376 = vld [vmem:[%s2 + $0x800] sm:$0xff]
  %v377 = vld [vmem:[%s2 + $0x808] sm:$0xff]
  %v378 = vld [vmem:[%s2 + $0x810] sm:$0xff]
  %v379 = vld [vmem:[%s2 + $0x818] sm:$0xff]
  %v380 = vld [vmem:[%s2 + $0x820] sm:$0xff]
  %v381 = vld [vmem:[%s2 + $0x828] sm:$0xff]
  %v382 = vld [vmem:[%s2 + $0x830] sm:$0xff]
  %v383 = vld [vmem:[%s2 + $0x838] sm:$0xff]
  %v384 = vld [vmem:[%s2 + $0x840] sm:$0xff]
  %v385 = vld [vmem:[%s2 + $0x848] sm:$0xff]
  %v386 = vld [vmem:[%s2 + $0x850] sm:$0xff]
  %v387 = vld [vmem:[%s2 + $0x858] sm:$0xff]
  %v388 = vld [vmem:[%s2 + $0x860] sm:$0xff]
  %v389 = vld [vmem:[%s2 + $0x868] sm:$0xff]
  %v390 = vld [vmem:[%s2 + $0x870] sm:$0xff]
  %v391 = vld [vmem:[%s2 + $0x878] sm:$0xff]
  %v392 = vld [vmem:[%s2 + $0x880] sm:$0xff]
  %v393 = vld [vmem:[%s2 + $0x888] sm:$0xff]
  %v394 = vld [vmem:[%s2 + $0x890] sm:$0xff]
  %v395 = vld [vmem:[%s2 + $0x898] sm:$0xff]
  %v396 = vld [vmem:[%s2 + $0x8a0] sm:$0xff]
  %v397 = vld [vmem:[%s2 + $0x8a8] sm:$0xff]
  %v398 = vld [vmem:[%s2 + $0x8b0] sm:$0xff]
  %v399 = vld [vmem:[%s2 + $0x8b8] sm:$0xff]
  %v400 = vld [vmem:[%s2 + $0x8c0] sm:$0xff]
  %v401 = vld [vmem:[%s2 + $0x8c8] sm:$0xff]
  %v402 = vld [vmem:[%s2 + $0x8d0] sm:$0xff]
  %v403 = vld [vmem:[%s2 + $0x8d8] sm:$0xff]
  %v404 = vld [vmem:[%s2 + $0x8e0] sm:$0xff]
  %v405 = vld [vmem:[%s2 + $0x8e8] sm:$0xff]
  %v406 = vld [vmem:[%s2 + $0x8f0] sm:$0xff]
  %v407 = vld [vmem:[%s2 + $0x8f8] sm:$0xff]
  %v408 = vld [vmem:[%s2 + $0x900] sm:$0xff]
  %v409 = vld [vmem:[%s2 + $0x908] sm:$0xff]
  %v410 = vld [vmem:[%s2 + $0x910] sm:$0xff]
  %v411 = vld [vmem:[%s2 + $0x918] sm:$0xff]
  %v412 = vld [vmem:[%s2 + $0x920] sm:$0xff]
  %v413 = vld [vmem:[%s2 + $0x928] sm:$0xff]
  %v414 = vld [vmem:[%s2 + $0x930] sm:$0xff]
  %v415 = vld [vmem:[%s2 + $0x938] sm:$0xff]
  %v416 = vld [vmem:[%s2 + $0x940] sm:$0xff]
  %v417 = vld [vmem:[%s2 + $0x948] sm:$0xff]
  %v418 = vld [vmem:[%s2 + $0x950] sm:$0xff]
  %v419 = vld [vmem:[%s2 + $0x958] sm:$0xff]
  %v420 = vld [vmem:[%s2 + $0x960] sm:$0xff]
  %v421 = vld [vmem:[%s2 + $0x968] sm:$0xff]
  %v422 = vld [vmem:[%s2 + $0x970] sm:$0xff]
  %v423 = vld [vmem:[%s2 + $0x978] sm:$0xff]
  %v424 = vld [vmem:[%s2 + $0x980] sm:$0xff]
  %v425 = vld [vmem:[%s2 + $0x988] sm:$0xff]
  %v426 = vld [vmem:[%s2 + $0x990] sm:$0xff]
  %v427 = vld [vmem:[%s2 + $0x998] sm:$0xff]
  %v428 = vld [vmem:[%s2 + $0x9a0] sm:$0xff]
  %v429 = vld [vmem:[%s2 + $0x9a8] sm:$0xff]
  %v430 = vld [vmem:[%s2 + $0x9b0] sm:$0xff]
  %v431 = vld [vmem:[%s2 + $0x9b8] sm:$0xff]
  %v432 = vld [vmem:[%s2 + $0x9c0] sm:$0xff]
  %v433 = vld [vmem:[%s2 + $0x9c8] sm:$0xff]
  %v434 = vld [vmem:[%s2 + $0x9d0] sm:$0xff]
  %v435 = vld [vmem:[%s2 + $0x9d8] sm:$0xff]
  %v436 = vld [vmem:[%s2 + $0x9e0] sm:$0xff]
  %v437 = vld [vmem:[%s2 + $0x9e8] sm:$0xff]
  %v438 = vld [vmem:[%s2 + $0x9f0] sm:$0xff]
  %v439 = vld [vmem:[%s2 + $0x9f8] sm:$0xff]
  %v440 = vld [vmem:[%s2 + $0xa00] sm:$0xff]
  %v441 = vld [vmem:[%s2 + $0xa08] sm:$0xff]
  %v442 = vld [vmem:[%s2 + $0xa10] sm:$0xff]
  %v443 = vld [vmem:[%s2 + $0xa18] sm:$0xff]
  %v444 = vld [vmem:[%s2 + $0xa20] sm:$0xff]
  %v445 = vld [vmem:[%s2 + $0xa28] sm:$0xff]
  %v446 = vld [vmem:[%s2 + $0xa30] sm:$0xff]
  %v447 = vld [vmem:[%s2 + $0xa38] sm:$0xff]
  %v448 = vld [vmem:[%s2 + $0xa40] sm:$0xff]
  %v449 = vld [vmem:[%s2 + $0xa48] sm:$0xff]
  %v450 = vld [vmem:[%s2 + $0xa50] sm:$0xff]
  %v451 = vld [vmem:[%s2 + $0xa58] sm:$0xff]
  %v452 = vld [vmem:[%s2 + $0xa60] sm:$0xff]
  %v453 = vld [vmem:[%s2 + $0xa68] sm:$0xff]
  %v454 = vld [vmem:[%s2 + $0xa70] sm:$0xff]
  %v455 = vld [vmem:[%s2 + $0xa78] sm:$0xff]
  %v456 = vld [vmem:[%s2 + $0xa80] sm:$0xff]
  %v457 = vld [vmem:[%s2 + $0xa88] sm:$0xff]
  %v458 = vld [vmem:[%s2 + $0xa90] sm:$0xff]
  %v459 = vld [vmem:[%s2 + $0xa98] sm:$0xff]
  %v460 = vld [vmem:[%s2 + $0xaa0] sm:$0xff]
  %v461 = vld [vmem:[%s2 + $0xaa8] sm:$0xff]
  %v462 = vld [vmem:[%s2 + $0xab0] sm:$0xff]
  %v463 = vld [vmem:[%s2 + $0xab8] sm:$0xff]
  %v464 = vld [vmem:[%s2 + $0xac0] sm:$0xff]
  %v465 = vld [vmem:[%s2 + $0xac8] sm:$0xff]
  %v466 = vld [vmem:[%s2 + $0xad0] sm:$0xff]
  %v467 = vld [vmem:[%s2 + $0xad8] sm:$0xff]
  %v468 = vld [vmem:[%s2 + $0xae0] sm:$0xff]
  %v469 = vld [vmem:[%s2 + $0xae8] sm:$0xff]
  %v470 = vld [vmem:[%s2 + $0xaf0] sm:$0xff]
  %v471 = vld [vmem:[%s2 + $0xaf8] sm:$0xff]
  %v472 = vld [vmem:[%s2 + $0xb00] sm:$0xff]
  %v473 = vld [vmem:[%s2 + $0xb08] sm:$0xff]
  %v474 = vld [vmem:[%s2 + $0xb10] sm:$0xff]
  %v475 = vld [vmem:[%s2 + $0xb18] sm:$0xff]
  %v476 = vld [vmem:[%s2 + $0xb20] sm:$0xff]
  %v477 = vld [vmem:[%s2 + $0xb28] sm:$0xff]
  %v478 = vld [vmem:[%s2 + $0xb30] sm:$0xff]
  %v479 = vld [vmem:[%s2 + $0xb38] sm:$0xff]
  %v480 = vld [vmem:[%s2 + $0xb40] sm:$0xff]
  %v481 = vld [vmem:[%s2 + $0xb48] sm:$0xff]
  %v482 = vld [vmem:[%s2 + $0xb50] sm:$0xff]
  %v483 = vld [vmem:[%s2 + $0xb58] sm:$0xff]
  %v484 = vld [vmem:[%s2 + $0xb60] sm:$0xff]
  %v485 = vld [vmem:[%s2 + $0xb68] sm:$0xff]
  %v486 = vld [vmem:[%s2 + $0xb70] sm:$0xff]
  %v487 = vld [vmem:[%s2 + $0xb78] sm:$0xff]
  %v488 = vld [vmem:[%s2 + $0xb80] sm:$0xff]
  %v489 = vld [vmem:[%s2 + $0xb88] sm:$0xff]
  %v490 = vld [vmem:[%s2 + $0xb90] sm:$0xff]
  %v491 = vld [vmem:[%s2 + $0xb98] sm:$0xff]
  %v492 = vld [vmem:[%s2 + $0xba0] sm:$0xff]
  %v493 = vld [vmem:[%s2 + $0xba8] sm:$0xff]
  %v494 = vld [vmem:[%s2 + $0xbb0] sm:$0xff]
  %v495 = vld [vmem:[%s2 + $0xbb8] sm:$0xff]
  %v496 = vld [vmem:[%s2 + $0xbc0] sm:$0xff]
  %v497 = vld [vmem:[%s2 + $0xbc8] sm:$0xff]
  %v498 = vld [vmem:[%s2 + $0xbd0] sm:$0xff]
  %v499 = vld [vmem:[%s2 + $0xbd8] sm:$0xff]
  %v500 = vld [vmem:[%s2 + $0xbe0] sm:$0xff]
  %v501 = vld [vmem:[%s2 + $0xbe8] sm:$0xff]
  %v502 = vld [vmem:[%s2 + $0xbf0] sm:$0xff]
  %v503 = vld [vmem:[%s2 + $0xbf8] sm:$0xff]
  %v504 = vld [vmem:[%s2 + $0xc00] sm:$0xff]
  %v505 = vld [vmem:[%s2 + $0xc08] sm:$0xff]
  %v506 = vld [vmem:[%s2 + $0xc10] sm:$0xff]
  %v507 = vld [vmem:[%s2 + $0xc18] sm:$0xff]
  %v508 = vld [vmem:[%s2 + $0xc20] sm:$0xff]
  %v509 = vld [vmem:[%s2 + $0xc28] sm:$0xff]
  %v510 = vld [vmem:[%s2 + $0xc30] sm:$0xff]
  %v511 = vld [vmem:[%s2 + $0xc38] sm:$0xff]
  %v512 = vld [vmem:[%s2 + $0xc40] sm:$0xff]
  %v513 = vld [vmem:[%s2 + $0xc48] sm:$0xff]
  %v514 = vld [vmem:[%s2 + $0xc50] sm:$0xff]
  %v515 = vld [vmem:[%s2 + $0xc58] sm:$0xff]
  %v516 = vld [vmem:[%s2 + $0xc60] sm:$0xff]
  %v517 = vld [vmem:[%s2 + $0xc68] sm:$0xff]
  %v518 = vld [vmem:[%s2 + $0xc70] sm:$0xff]
  %v519 = vld [vmem:[%s2 + $0xc78] sm:$0xff]
  %v520 = vld [vmem:[%s2 + $0xc80] sm:$0xff]
  %v521 = vld [vmem:[%s2 + $0xc88] sm:$0xff]
  %v522 = vld [vmem:[%s2 + $0xc90] sm:$0xff]
  %v523 = vld [vmem:[%s2 + $0xc98] sm:$0xff]
  %v524 = vld [vmem:[%s2 + $0xca0] sm:$0xff]
  %v525 = vld [vmem:[%s2 + $0xca8] sm:$0xff]
  %v526 = vld [vmem:[%s2 + $0xcb0] sm:$0xff]
  %v527 = vld [vmem:[%s2 + $0xcb8] sm:$0xff]
  %v528 = vld [vmem:[%s2 + $0xcc0] sm:$0xff]
  %v529 = vld [vmem:[%s2 + $0xcc8] sm:$0xff]
  %v530 = vld [vmem:[%s2 + $0xcd0] sm:$0xff]
  %v531 = vld [vmem:[%s2 + $0xcd8] sm:$0xff]
  %v532 = vld [vmem:[%s2 + $0xce0] sm:$0xff]
  %v533 = vld [vmem:[%s2 + $0xce8] sm:$0xff]
  %v534 = vld [vmem:[%s2 + $0xcf0] sm:$0xff]
  %v535 = vld [vmem:[%s2 + $0xcf8] sm:$0xff]
  %v536 = vld [vmem:[%s2 + $0xd00] sm:$0xff]
  %v537 = vld [vmem:[%s2 + $0xd08] sm:$0xff]
  %v538 = vld [vmem:[%s2 + $0xd10] sm:$0xff]
  %v539 = vld [vmem:[%s2 + $0xd18] sm:$0xff]
  %v540 = vld [vmem:[%s2 + $0xd20] sm:$0xff]
  %v541 = vld [vmem:[%s2 + $0xd28] sm:$0xff]
  %v542 = vld [vmem:[%s2 + $0xd30] sm:$0xff]
  %v543 = vld [vmem:[%s2 + $0xd38] sm:$0xff]
  %v544 = vld [vmem:[%s2 + $0xd40] sm:$0xff]
  %v545 = vld [vmem:[%s2 + $0xd48] sm:$0xff]
  %v546 = vld [vmem:[%s2 + $0xd50] sm:$0xff]
  %v547 = vld [vmem:[%s2 + $0xd58] sm:$0xff]
  %v548 = vld [vmem:[%s2 + $0xd60] sm:$0xff]
  %v549 = vld [vmem:[%s2 + $0xd68] sm:$0xff]
  %v550 = vld [vmem:[%s2 + $0xd70] sm:$0xff]
  %v551 = vld [vmem:[%s2 + $0xd78] sm:$0xff]
  %v552 = vld [vmem:[%s2 + $0xd80] sm:$0xff]
  %v553 = vld [vmem:[%s2 + $0xd88] sm:$0xff]
  %v554 = vld [vmem:[%s2 + $0xd90] sm:$0xff]
  %v555 = vld [vmem:[%s2 + $0xd98] sm:$0xff]
  %v556 = vld [vmem:[%s2 + $0xda0] sm:$0xff]
  %v557 = vld [vmem:[%s2 + $0xda8] sm:$0xff]
  %v558 = vld [vmem:[%s2 + $0xdb0] sm:$0xff]
  %v559 = vld [vmem:[%s2 + $0xdb8] sm:$0xff]
  %v560 = vld [vmem:[%s2 + $0xdc0] sm:$0xff]
  %v561 = vld [vmem:[%s2 + $0xdc8] sm:$0xff]
  %v562 = vld [vmem:[%s2 + $0xdd0] sm:$0xff]
  %v563 = vld [vmem:[%s2 + $0xdd8] sm:$0xff]
  %v564 = vld [vmem:[%s2 + $0xde0] sm:$0xff]
  %v565 = vld [vmem:[%s2 + $0xde8] sm:$0xff]
  %v566 = vld [vmem:[%s2 + $0xdf0] sm:$0xff]
  %v567 = vld [vmem:[%s2 + $0xdf8] sm:$0xff]
  %v568 = vld [vmem:[%s2 + $0xe00] sm:$0xff]
  %v569 = vld [vmem:[%s2 + $0xe08] sm:$0xff]
  %v570 = vld [vmem:[%s2 + $0xe10] sm:$0xff]
  %v571 = vld [vmem:[%s2 + $0xe18] sm:$0xff]
  %v572 = vld [vmem:[%s2 + $0xe20] sm:$0xff]
  %v573 = vld [vmem:[%s2 + $0xe28] sm:$0xff]
  %v574 = vld [vmem:[%s2 + $0xe30] sm:$0xff]
  %v575 = vld [vmem:[%s2 + $0xe38] sm:$0xff]
  %v576 = vld [vmem:[%s2 + $0xe40] sm:$0xff]
  %v577 = vld [vmem:[%s2 + $0xe48] sm:$0xff]
  %v578 = vld [vmem:[%s2 + $0xe50] sm:$0xff]
  %v579 = vld [vmem:[%s2 + $0xe58] sm:$0xff]
  %v580 = vld [vmem:[%s2 + $0xe60] sm:$0xff]
  %v581 = vld [vmem:[%s2 + $0xe68] sm:$0xff]
  %v582 = vld [vmem:[%s2 + $0xe70] sm:$0xff]
  %v583 = vld [vmem:[%s2 + $0xe78] sm:$0xff]
  %v584 = vld [vmem:[%s2 + $0xe80] sm:$0xff]
  %v585 = vld [vmem:[%s2 + $0xe88] sm:$0xff]
  %v586 = vld [vmem:[%s2 + $0xe90] sm:$0xff]
  %v587 = vld [vmem:[%s2 + $0xe98] sm:$0xff]
  %v588 = vld [vmem:[%s2 + $0xea0] sm:$0xff]
  %v589 = vld [vmem:[%s2 + $0xea8] sm:$0xff]
  %v590 = vld [vmem:[%s2 + $0xeb0] sm:$0xff]
  %v591 = vld [vmem:[%s2 + $0xeb8] sm:$0xff]
  %v592 = vld [vmem:[%s2 + $0xec0] sm:$0xff]
  %v593 = vld [vmem:[%s2 + $0xec8] sm:$0xff]
  %v594 = vld [vmem:[%s2 + $0xed0] sm:$0xff]
  %v595 = vld [vmem:[%s2 + $0xed8] sm:$0xff]
  %v596 = vld [vmem:[%s2 + $0xee0] sm:$0xff]
  %v597 = vld [vmem:[%s2 + $0xee8] sm:$0xff]
  %v598 = vld [vmem:[%s2 + $0xef0] sm:$0xff]
  %v599 = vld [vmem:[%s2 + $0xef8] sm:$0xff]
  %v600 = vld [vmem:[%s2 + $0xf00] sm:$0xff]
  %v601 = vld [vmem:[%s2 + $0xf08] sm:$0xff]
  %v602 = vld [vmem:[%s2 + $0xf10] sm:$0xff]
  %v603 = vld [vmem:[%s2 + $0xf18] sm:$0xff]
  %v604 = vld [vmem:[%s2 + $0xf20] sm:$0xff]
  %v605 = vld [vmem:[%s2 + $0xf28] sm:$0xff]
  %v606 = vld [vmem:[%s2 + $0xf30] sm:$0xff]
  %v607 = vld [vmem:[%s2 + $0xf38] sm:$0xff]
  %v608 = vld [vmem:[%s2 + $0xf40] sm:$0xff]
  %v609 = vld [vmem:[%s2 + $0xf48] sm:$0xff]
  %v610 = vld [vmem:[%s2 + $0xf50] sm:$0xff]
  %v611 = vld [vmem:[%s2 + $0xf58] sm:$0xff]
  %v612 = vld [vmem:[%s2 + $0xf60] sm:$0xff]
  %v613 = vld [vmem:[%s2 + $0xf68] sm:$0xff]
  %v614 = vld [vmem:[%s2 + $0xf70] sm:$0xff]
  %v615 = vld [vmem:[%s2 + $0xf78] sm:$0xff]
  %v616 = vld [vmem:[%s2 + $0xf80] sm:$0xff]
  %v617 = vld [vmem:[%s2 + $0xf88] sm:$0xff]
  %v618 = vld [vmem:[%s2 + $0xf90] sm:$0xff]
  %v619 = vld [vmem:[%s2 + $0xf98] sm:$0xff]
  %v620 = vld [vmem:[%s2 + $0xfa0] sm:$0xff]
  %v621 = vld [vmem:[%s2 + $0xfa8] sm:$0xff]
  %v622 = vld [vmem:[%s2 + $0xfb0] sm:$0xff]
  %v623 = vld [vmem:[%s2 + $0xfb8] sm:$0xff]
  %v624 = vld [vmem:[%s2 + $0xfc0] sm:$0xff]
  %v625 = vld [vmem:[%s2 + $0xfc8] sm:$0xff]
  %v626 = vld [vmem:[%s2 + $0xfd0] sm:$0xff]
  %v627 = vld [vmem:[%s2 + $0xfd8] sm:$0xff]
  %v628 = vld [vmem:[%s2 + $0xfe0] sm:$0xff]
  %v629 = vld [vmem:[%s2 + $0xfe8] sm:$0xff]
  %v630 = vld [vmem:[%s2 + $0xff0] sm:$0xff]
  %v631 = vld [vmem:[%s2 + $0xff8] sm:$0xff]
  %v632 = vld [vmem:[%s2 + $0x1000] sm:$0xff]
  %v633 = vld [vmem:[%s2 + $0x1008] sm:$0xff]
  %v634 = vld [vmem:[%s2 + $0x1010] sm:$0xff]
  %v635 = vld [vmem:[%s2 + $0x1018] sm:$0xff]
  %v636 = vld [vmem:[%s2 + $0x1020] sm:$0xff]
  %v637 = vld [vmem:[%s2 + $0x1028] sm:$0xff]
  %v638 = vld [vmem:[%s2 + $0x1030] sm:$0xff]
  %v639 = vld [vmem:[%s2 + $0x1038] sm:$0xff]
  %v640 = vld [vmem:[%s2 + $0x1040] sm:$0xff]
  %v641 = vld [vmem:[%s2 + $0x1048] sm:$0xff]
  %v642 = vld [vmem:[%s2 + $0x1050] sm:$0xff]
  %v643 = vld [vmem:[%s2 + $0x1058] sm:$0xff]
  %v644 = vld [vmem:[%s2 + $0x1060] sm:$0xff]
  %v645 = vld [vmem:[%s2 + $0x1068] sm:$0xff]
  %v646 = vld [vmem:[%s2 + $0x1070] sm:$0xff]
  %v647 = vld [vmem:[%s2 + $0x1078] sm:$0xff]
  %v648 = vld [vmem:[%s2 + $0x1080] sm:$0xff]
  %v649 = vld [vmem:[%s2 + $0x1088] sm:$0xff]
  %v650 = vld [vmem:[%s2 + $0x1090] sm:$0xff]
  %v651 = vld [vmem:[%s2 + $0x1098] sm:$0xff]
  %v652 = vld [vmem:[%s2 + $0x10a0] sm:$0xff]
  %v653 = vld [vmem:[%s2 + $0x10a8] sm:$0xff]
  %v654 = vld [vmem:[%s2 + $0x10b0] sm:$0xff]
  %v655 = vld [vmem:[%s2 + $0x10b8] sm:$0xff]
  %v656 = vld [vmem:[%s2 + $0x10c0] sm:$0xff]
  %v657 = vld [vmem:[%s2 + $0x10c8] sm:$0xff]
  %v658 = vld [vmem:[%s2 + $0x10d0] sm:$0xff]
  %v659 = vld [vmem:[%s2 + $0x10d8] sm:$0xff]
  %v660 = vld [vmem:[%s2 + $0x10e0] sm:$0xff]
  %v661 = vld [vmem:[%s2 + $0x10e8] sm:$0xff]
  %v662 = vld [vmem:[%s2 + $0x10f0] sm:$0xff]
  %v663 = vld [vmem:[%s2 + $0x10f8] sm:$0xff]
  %v664 = vld [vmem:[%s2 + $0x1100] sm:$0xff]
  %v665 = vld [vmem:[%s2 + $0x1108] sm:$0xff]
  %v666 = vld [vmem:[%s2 + $0x1110] sm:$0xff]
  %v667 = vld [vmem:[%s2 + $0x1118] sm:$0xff]
  %v668 = vld [vmem:[%s2 + $0x1120] sm:$0xff]
  %v669 = vld [vmem:[%s2 + $0x1128] sm:$0xff]
  %v670 = vld [vmem:[%s2 + $0x1130] sm:$0xff]
  %v671 = vld [vmem:[%s2 + $0x1138] sm:$0xff]
  %v672 = vld [vmem:[%s2 + $0x1140] sm:$0xff]
  %v673 = vld [vmem:[%s2 + $0x1148] sm:$0xff]
  %v674 = vld [vmem:[%s2 + $0x1150] sm:$0xff]
  %v675 = vld [vmem:[%s2 + $0x1158] sm:$0xff]
  %v676 = vld [vmem:[%s2 + $0x1160] sm:$0xff]
  %v677 = vld [vmem:[%s2 + $0x1168] sm:$0xff]
  %v678 = vld [vmem:[%s2 + $0x1170] sm:$0xff]
  %v679 = vld [vmem:[%s2 + $0x1178] sm:$0xff]
  %v680 = vld [vmem:[%s2 + $0x1180] sm:$0xff]
  %v681 = vld [vmem:[%s2 + $0x1188] sm:$0xff]
  %v682 = vld [vmem:[%s2 + $0x1190] sm:$0xff]
  %v683 = vld [vmem:[%s2 + $0x1198] sm:$0xff]
  %v684 = vld [vmem:[%s2 + $0x11a0] sm:$0xff]
  %v685 = vld [vmem:[%s2 + $0x11a8] sm:$0xff]
  %v686 = vld [vmem:[%s2 + $0x11b0] sm:$0xff]
  %v687 = vld [vmem:[%s2 + $0x11b8] sm:$0xff]
  %v688 = vld [vmem:[%s2 + $0x11c0] sm:$0xff]
  %v689 = vld [vmem:[%s2 + $0x11c8] sm:$0xff]
  %v690 = vld [vmem:[%s2 + $0x11d0] sm:$0xff]
  %v691 = vld [vmem:[%s2 + $0x11d8] sm:$0xff]
  %v692 = vld [vmem:[%s2 + $0x11e0] sm:$0xff]
  %v693 = vld [vmem:[%s2 + $0x11e8] sm:$0xff]
  %v694 = vld [vmem:[%s2 + $0x11f0] sm:$0xff]
  %v695 = vld [vmem:[%s2 + $0x11f8] sm:$0xff]
  %v696 = vld [vmem:[%s2 + $0x1200] sm:$0xff]
  %v697 = vld [vmem:[%s2 + $0x1208] sm:$0xff]
  %v698 = vld [vmem:[%s2 + $0x1210] sm:$0xff]
  %v699 = vld [vmem:[%s2 + $0x1218] sm:$0xff]
  %v700 = vld [vmem:[%s2 + $0x1220] sm:$0xff]
  %v701 = vld [vmem:[%s2 + $0x1228] sm:$0xff]
  %v702 = vld [vmem:[%s2 + $0x1230] sm:$0xff]
  %v703 = vld [vmem:[%s2 + $0x1238] sm:$0xff]
  %v704 = vld [vmem:[%s2 + $0x1240] sm:$0xff]
  %v705 = vld [vmem:[%s2 + $0x1248] sm:$0xff]
  %v706 = vld [vmem:[%s2 + $0x1250] sm:$0xff]
  %v707 = vld [vmem:[%s2 + $0x1258] sm:$0xff]
  %v708 = vld [vmem:[%s2 + $0x1260] sm:$0xff]
  %v709 = vld [vmem:[%s2 + $0x1268] sm:$0xff]
  %v710 = vld [vmem:[%s2 + $0x1270] sm:$0xff]
  %v711 = vld [vmem:[%s2 + $0x1278] sm:$0xff]
  %v712 = vld [vmem:[%s2 + $0x1280] sm:$0xff]
  %v713 = vld [vmem:[%s2 + $0x1288] sm:$0xff]
  %v714 = vld [vmem:[%s2 + $0x1290] sm:$0xff]
  %v715 = vld [vmem:[%s2 + $0x1298] sm:$0xff]
  %v716 = vld [vmem:[%s2 + $0x12a0] sm:$0xff]
  %v717 = vld [vmem:[%s2 + $0x12a8] sm:$0xff]
  %v718 = vld [vmem:[%s2 + $0x12b0] sm:$0xff]
  %v719 = vld [vmem:[%s2 + $0x12b8] sm:$0xff]
  %v720 = vld [vmem:[%s2 + $0x12c0] sm:$0xff]
  %v721 = vld [vmem:[%s2 + $0x12c8] sm:$0xff]
  %v722 = vld [vmem:[%s2 + $0x12d0] sm:$0xff]
  %v723 = vld [vmem:[%s2 + $0x12d8] sm:$0xff]
  %v724 = vld [vmem:[%s2 + $0x12e0] sm:$0xff]
  %v725 = vld [vmem:[%s2 + $0x12e8] sm:$0xff]
  %v726 = vld [vmem:[%s2 + $0x12f0] sm:$0xff]
  %v727 = vld [vmem:[%s2 + $0x12f8] sm:$0xff]
  %v728 = vld [vmem:[%s2 + $0x1300] sm:$0xff]
  %v729 = vld [vmem:[%s2 + $0x1308] sm:$0xff]
  %v730 = vld [vmem:[%s2 + $0x1310] sm:$0xff]
  %v731 = vld [vmem:[%s2 + $0x1318] sm:$0xff]
  %v732 = vld [vmem:[%s2 + $0x1320] sm:$0xff]
  %v733 = vld [vmem:[%s2 + $0x1328] sm:$0xff]
  %v734 = vld [vmem:[%s2 + $0x1330] sm:$0xff]
  %v735 = vld [vmem:[%s2 + $0x1338] sm:$0xff]
  %v736 = vld [vmem:[%s2 + $0x1340] sm:$0xff]
  %v737 = vld [vmem:[%s2 + $0x1348] sm:$0xff]
  %v738 = vld [vmem:[%s2 + $0x1350] sm:$0xff]
  %v739 = vld [vmem:[%s2 + $0x1358] sm:$0xff]
  %v740 = vld [vmem:[%s2 + $0x1360] sm:$0xff]
  %v741 = vld [vmem:[%s2 + $0x1368] sm:$0xff]
  %v742 = vld [vmem:[%s2 + $0x1370] sm:$0xff]
  %v743 = vld [vmem:[%s2 + $0x1378] sm:$0xff]
  %v744 = vld [vmem:[%s2 + $0x1380] sm:$0xff]
  %v745 = vld [vmem:[%s2 + $0x1388] sm:$0xff]
  %v746 = vld [vmem:[%s2 + $0x1390] sm:$0xff]
  %v747 = vld [vmem:[%s2 + $0x1398] sm:$0xff]
  %v748 = vld [vmem:[%s2 + $0x13a0] sm:$0xff]
  %v749 = vld [vmem:[%s2 + $0x13a8] sm:$0xff]
  %v750 = vld [vmem:[%s2 + $0x13b0] sm:$0xff]
  %v751 = vld [vmem:[%s2 + $0x13b8] sm:$0xff]
  %v752 = vld [vmem:[%s2 + $0x13c0] sm:$0xff]
  %v753 = vld [vmem:[%s2 + $0x13c8] sm:$0xff]
  %v754 = vld [vmem:[%s2 + $0x13d0] sm:$0xff]
  %v755 = vld [vmem:[%s2 + $0x13d8] sm:$0xff]
  %v756 = vld [vmem:[%s2 + $0x13e0] sm:$0xff]
  %v757 = vld [vmem:[%s2 + $0x13e8] sm:$0xff]
  %v758 = vld [vmem:[%s2 + $0x13f0] sm:$0xff]
  %v759 = vld [vmem:[%s2 + $0x13f8] sm:$0xff]
  %v1400 = vunpack.c.l.b16 %v120
  %v1401 = vunpack.c.h.b16 %v120
  %v1402 = vunpack.c.l.b16 %v121
  %v1403 = vunpack.c.h.b16 %v121
  %v1404 = vunpack.c.l.b16 %v122
  %v1405 = vunpack.c.h.b16 %v122
  %v1406 = vunpack.c.l.b16 %v123
  %v1407 = vunpack.c.h.b16 %v123
  %v1408 = vunpack.c.l.b16 %v124
  %v1409 = vunpack.c.h.b16 %v124
  %v1410 = vunpack.c.l.b16 %v125
  %v1411 = vunpack.c.h.b16 %v125
  %v1412 = vunpack.c.l.b16 %v126
  %v1413 = vunpack.c.h.b16 %v126
  %v1414 = vunpack.c.l.b16 %v127
  %v1415 = vunpack.c.h.b16 %v127
  %v1416 = vunpack.c.l.b16 %v128
  %v1417 = vunpack.c.h.b16 %v128
  %v1418 = vunpack.c.l.b16 %v129
  %v1419 = vunpack.c.h.b16 %v129
  %v1420 = vunpack.c.l.b16 %v130
  %v1421 = vunpack.c.h.b16 %v130
  %v1422 = vunpack.c.l.b16 %v131
  %v1423 = vunpack.c.h.b16 %v131
  %v1424 = vunpack.c.l.b16 %v132
  %v1425 = vunpack.c.h.b16 %v132
  %v1426 = vunpack.c.l.b16 %v133
  %v1427 = vunpack.c.h.b16 %v133
  %v1428 = vunpack.c.l.b16 %v134
  %v1429 = vunpack.c.h.b16 %v134
  %v1430 = vunpack.c.l.b16 %v135
  %v1431 = vunpack.c.h.b16 %v135
  %v1432 = vunpack.c.l.b16 %v136
  %v1433 = vunpack.c.h.b16 %v136
  %v1434 = vunpack.c.l.b16 %v137
  %v1435 = vunpack.c.h.b16 %v137
  %v1436 = vunpack.c.l.b16 %v138
  %v1437 = vunpack.c.h.b16 %v138
  %v1438 = vunpack.c.l.b16 %v139
  %v1439 = vunpack.c.h.b16 %v139
  %v1440 = vunpack.c.l.b16 %v140
  %v1441 = vunpack.c.h.b16 %v140
  %v1442 = vunpack.c.l.b16 %v141
  %v1443 = vunpack.c.h.b16 %v141
  %v1444 = vunpack.c.l.b16 %v142
  %v1445 = vunpack.c.h.b16 %v142
  %v1446 = vunpack.c.l.b16 %v143
  %v1447 = vunpack.c.h.b16 %v143
  %v1448 = vunpack.c.l.b16 %v144
  %v1449 = vunpack.c.h.b16 %v144
  %v1450 = vunpack.c.l.b16 %v145
  %v1451 = vunpack.c.h.b16 %v145
  %v1452 = vunpack.c.l.b16 %v146
  %v1453 = vunpack.c.h.b16 %v146
  %v1454 = vunpack.c.l.b16 %v147
  %v1455 = vunpack.c.h.b16 %v147
  %v1456 = vunpack.c.l.b16 %v148
  %v1457 = vunpack.c.h.b16 %v148
  %v1458 = vunpack.c.l.b16 %v149
  %v1459 = vunpack.c.h.b16 %v149
  %v1460 = vunpack.c.l.b16 %v150
  %v1461 = vunpack.c.h.b16 %v150
  %v1462 = vunpack.c.l.b16 %v151
  %v1463 = vunpack.c.h.b16 %v151
  %v1464 = vunpack.c.l.b16 %v152
  %v1465 = vunpack.c.h.b16 %v152
  %v1466 = vunpack.c.l.b16 %v153
  %v1467 = vunpack.c.h.b16 %v153
  %v1468 = vunpack.c.l.b16 %v154
  %v1469 = vunpack.c.h.b16 %v154
  %v1470 = vunpack.c.l.b16 %v155
  %v1471 = vunpack.c.h.b16 %v155
  %v1472 = vunpack.c.l.b16 %v156
  %v1473 = vunpack.c.h.b16 %v156
  %v1474 = vunpack.c.l.b16 %v157
  %v1475 = vunpack.c.h.b16 %v157
  %v1476 = vunpack.c.l.b16 %v158
  %v1477 = vunpack.c.h.b16 %v158
  %v1478 = vunpack.c.l.b16 %v159
  %v1479 = vunpack.c.h.b16 %v159
  %v1480 = vunpack.c.l.b16 %v160
  %v1481 = vunpack.c.h.b16 %v160
  %v1482 = vunpack.c.l.b16 %v161
  %v1483 = vunpack.c.h.b16 %v161
  %v1484 = vunpack.c.l.b16 %v162
  %v1485 = vunpack.c.h.b16 %v162
  %v1486 = vunpack.c.l.b16 %v163
  %v1487 = vunpack.c.h.b16 %v163
  %v1488 = vunpack.c.l.b16 %v164
  %v1489 = vunpack.c.h.b16 %v164
  %v1490 = vunpack.c.l.b16 %v165
  %v1491 = vunpack.c.h.b16 %v165
  %v1492 = vunpack.c.l.b16 %v166
  %v1493 = vunpack.c.h.b16 %v166
  %v1494 = vunpack.c.l.b16 %v167
  %v1495 = vunpack.c.h.b16 %v167
  %v1496 = vunpack.c.l.b16 %v168
  %v1497 = vunpack.c.h.b16 %v168
  %v1498 = vunpack.c.l.b16 %v169
  %v1499 = vunpack.c.h.b16 %v169
  %v1500 = vunpack.c.l.b16 %v170
  %v1501 = vunpack.c.h.b16 %v170
  %v1502 = vunpack.c.l.b16 %v171
  %v1503 = vunpack.c.h.b16 %v171
  %v1504 = vunpack.c.l.b16 %v172
  %v1505 = vunpack.c.h.b16 %v172
  %v1506 = vunpack.c.l.b16 %v173
  %v1507 = vunpack.c.h.b16 %v173
  %v1508 = vunpack.c.l.b16 %v174
  %v1509 = vunpack.c.h.b16 %v174
  %v1510 = vunpack.c.l.b16 %v175
  %v1511 = vunpack.c.h.b16 %v175
  %v1512 = vunpack.c.l.b16 %v176
  %v1513 = vunpack.c.h.b16 %v176
  %v1514 = vunpack.c.l.b16 %v177
  %v1515 = vunpack.c.h.b16 %v177
  %v1516 = vunpack.c.l.b16 %v178
  %v1517 = vunpack.c.h.b16 %v178
  %v1518 = vunpack.c.l.b16 %v179
  %v1519 = vunpack.c.h.b16 %v179
  %v1520 = vunpack.c.l.b16 %v180
  %v1521 = vunpack.c.h.b16 %v180
  %v1522 = vunpack.c.l.b16 %v181
  %v1523 = vunpack.c.h.b16 %v181
  %v1524 = vunpack.c.l.b16 %v182
  %v1525 = vunpack.c.h.b16 %v182
  %v1526 = vunpack.c.l.b16 %v183
  %v1527 = vunpack.c.h.b16 %v183
  %v1528 = vunpack.c.l.b16 %v184
  %v1529 = vunpack.c.h.b16 %v184
  %v1530 = vunpack.c.l.b16 %v185
  %v1531 = vunpack.c.h.b16 %v185
  %v1532 = vunpack.c.l.b16 %v186
  %v1533 = vunpack.c.h.b16 %v186
  %v1534 = vunpack.c.l.b16 %v187
  %v1535 = vunpack.c.h.b16 %v187
  %v1536 = vunpack.c.l.b16 %v188
  %v1537 = vunpack.c.h.b16 %v188
  %v1538 = vunpack.c.l.b16 %v189
  %v1539 = vunpack.c.h.b16 %v189
  %v1540 = vunpack.c.l.b16 %v190
  %v1541 = vunpack.c.h.b16 %v190
  %v1542 = vunpack.c.l.b16 %v191
  %v1543 = vunpack.c.h.b16 %v191
  %v1544 = vunpack.c.l.b16 %v192
  %v1545 = vunpack.c.h.b16 %v192
  %v1546 = vunpack.c.l.b16 %v193
  %v1547 = vunpack.c.h.b16 %v193
  %v1548 = vunpack.c.l.b16 %v194
  %v1549 = vunpack.c.h.b16 %v194
  %v1550 = vunpack.c.l.b16 %v195
  %v1551 = vunpack.c.h.b16 %v195
  %v1552 = vunpack.c.l.b16 %v196
  %v1553 = vunpack.c.h.b16 %v196
  %v1554 = vunpack.c.l.b16 %v197
  %v1555 = vunpack.c.h.b16 %v197
  %v1556 = vunpack.c.l.b16 %v198
  %v1557 = vunpack.c.h.b16 %v198
  %v1558 = vunpack.c.l.b16 %v199
  %v1559 = vunpack.c.h.b16 %v199
  %v1560 = vunpack.c.l.b16 %v200
  %v1561 = vunpack.c.h.b16 %v200
  %v1562 = vunpack.c.l.b16 %v201
  %v1563 = vunpack.c.h.b16 %v201
  %v1564 = vunpack.c.l.b16 %v202
  %v1565 = vunpack.c.h.b16 %v202
  %v1566 = vunpack.c.l.b16 %v203
  %v1567 = vunpack.c.h.b16 %v203
  %v1568 = vunpack.c.l.b16 %v204
  %v1569 = vunpack.c.h.b16 %v204
  %v1570 = vunpack.c.l.b16 %v205
  %v1571 = vunpack.c.h.b16 %v205
  %v1572 = vunpack.c.l.b16 %v206
  %v1573 = vunpack.c.h.b16 %v206
  %v1574 = vunpack.c.l.b16 %v207
  %v1575 = vunpack.c.h.b16 %v207
  %v1576 = vunpack.c.l.b16 %v208
  %v1577 = vunpack.c.h.b16 %v208
  %v1578 = vunpack.c.l.b16 %v209
  %v1579 = vunpack.c.h.b16 %v209
  %v1580 = vunpack.c.l.b16 %v210
  %v1581 = vunpack.c.h.b16 %v210
  %v1582 = vunpack.c.l.b16 %v211
  %v1583 = vunpack.c.h.b16 %v211
  %v1584 = vunpack.c.l.b16 %v212
  %v1585 = vunpack.c.h.b16 %v212
  %v1586 = vunpack.c.l.b16 %v213
  %v1587 = vunpack.c.h.b16 %v213
  %v1588 = vunpack.c.l.b16 %v214
  %v1589 = vunpack.c.h.b16 %v214
  %v1590 = vunpack.c.l.b16 %v215
  %v1591 = vunpack.c.h.b16 %v215
  %v1592 = vunpack.c.l.b16 %v216
  %v1593 = vunpack.c.h.b16 %v216
  %v1594 = vunpack.c.l.b16 %v217
  %v1595 = vunpack.c.h.b16 %v217
  %v1596 = vunpack.c.l.b16 %v218
  %v1597 = vunpack.c.h.b16 %v218
  %v1598 = vunpack.c.l.b16 %v219
  %v1599 = vunpack.c.h.b16 %v219
  %v1600 = vunpack.c.l.b16 %v220
  %v1601 = vunpack.c.h.b16 %v220
  %v1602 = vunpack.c.l.b16 %v221
  %v1603 = vunpack.c.h.b16 %v221
  %v1604 = vunpack.c.l.b16 %v222
  %v1605 = vunpack.c.h.b16 %v222
  %v1606 = vunpack.c.l.b16 %v223
  %v1607 = vunpack.c.h.b16 %v223
  %v1608 = vunpack.c.l.b16 %v224
  %v1609 = vunpack.c.h.b16 %v224
  %v1610 = vunpack.c.l.b16 %v225
  %v1611 = vunpack.c.h.b16 %v225
  %v1612 = vunpack.c.l.b16 %v226
  %v1613 = vunpack.c.h.b16 %v226
  %v1614 = vunpack.c.l.b16 %v227
  %v1615 = vunpack.c.h.b16 %v227
  %v1616 = vunpack.c.l.b16 %v228
  %v1617 = vunpack.c.h.b16 %v228
  %v1618 = vunpack.c.l.b16 %v229
  %v1619 = vunpack.c.h.b16 %v229
  %v1620 = vunpack.c.l.b16 %v230
  %v1621 = vunpack.c.h.b16 %v230
  %v1622 = vunpack.c.l.b16 %v231
  %v1623 = vunpack.c.h.b16 %v231
  %v1624 = vunpack.c.l.b16 %v232
  %v1625 = vunpack.c.h.b16 %v232
  %v1626 = vunpack.c.l.b16 %v233
  %v1627 = vunpack.c.h.b16 %v233
  %v1628 = vunpack.c.l.b16 %v234
  %v1629 = vunpack.c.h.b16 %v234
  %v1630 = vunpack.c.l.b16 %v235
  %v1631 = vunpack.c.h.b16 %v235
  %v1632 = vunpack.c.l.b16 %v236
  %v1633 = vunpack.c.h.b16 %v236
  %v1634 = vunpack.c.l.b16 %v237
  %v1635 = vunpack.c.h.b16 %v237
  %v1636 = vunpack.c.l.b16 %v238
  %v1637 = vunpack.c.h.b16 %v238
  %v1638 = vunpack.c.l.b16 %v239
  %v1639 = vunpack.c.h.b16 %v239
  %v1640 = vunpack.c.l.b16 %v240
  %v1641 = vunpack.c.h.b16 %v240
  %v1642 = vunpack.c.l.b16 %v241
  %v1643 = vunpack.c.h.b16 %v241
  %v1644 = vunpack.c.l.b16 %v242
  %v1645 = vunpack.c.h.b16 %v242
  %v1646 = vunpack.c.l.b16 %v243
  %v1647 = vunpack.c.h.b16 %v243
  %v1648 = vunpack.c.l.b16 %v244
  %v1649 = vunpack.c.h.b16 %v244
  %v1650 = vunpack.c.l.b16 %v245
  %v1651 = vunpack.c.h.b16 %v245
  %v1652 = vunpack.c.l.b16 %v246
  %v1653 = vunpack.c.h.b16 %v246
  %v1654 = vunpack.c.l.b16 %v247
  %v1655 = vunpack.c.h.b16 %v247
  %v1656 = vunpack.c.l.b16 %v248
  %v1657 = vunpack.c.h.b16 %v248
  %v1658 = vunpack.c.l.b16 %v249
  %v1659 = vunpack.c.h.b16 %v249
  %v1660 = vunpack.c.l.b16 %v250
  %v1661 = vunpack.c.h.b16 %v250
  %v1662 = vunpack.c.l.b16 %v251
  %v1663 = vunpack.c.h.b16 %v251
  %v1664 = vunpack.c.l.b16 %v252
  %v1665 = vunpack.c.h.b16 %v252
  %v1666 = vunpack.c.l.b16 %v253
  %v1667 = vunpack.c.h.b16 %v253
  %v1668 = vunpack.c.l.b16 %v254
  %v1669 = vunpack.c.h.b16 %v254
  %v1670 = vunpack.c.l.b16 %v255
  %v1671 = vunpack.c.h.b16 %v255
  %v1672 = vunpack.c.l.b16 %v256
  %v1673 = vunpack.c.h.b16 %v256
  %v1674 = vunpack.c.l.b16 %v257
  %v1675 = vunpack.c.h.b16 %v257
  %v1676 = vunpack.c.l.b16 %v258
  %v1677 = vunpack.c.h.b16 %v258
  %v1678 = vunpack.c.l.b16 %v259
  %v1679 = vunpack.c.h.b16 %v259
  %v1680 = vunpack.c.l.b16 %v260
  %v1681 = vunpack.c.h.b16 %v260
  %v1682 = vunpack.c.l.b16 %v261
  %v1683 = vunpack.c.h.b16 %v261
  %v1684 = vunpack.c.l.b16 %v262
  %v1685 = vunpack.c.h.b16 %v262
  %v1686 = vunpack.c.l.b16 %v263
  %v1687 = vunpack.c.h.b16 %v263
  %v1688 = vunpack.c.l.b16 %v264
  %v1689 = vunpack.c.h.b16 %v264
  %v1690 = vunpack.c.l.b16 %v265
  %v1691 = vunpack.c.h.b16 %v265
  %v1692 = vunpack.c.l.b16 %v266
  %v1693 = vunpack.c.h.b16 %v266
  %v1694 = vunpack.c.l.b16 %v267
  %v1695 = vunpack.c.h.b16 %v267
  %v1696 = vunpack.c.l.b16 %v268
  %v1697 = vunpack.c.h.b16 %v268
  %v1698 = vunpack.c.l.b16 %v269
  %v1699 = vunpack.c.h.b16 %v269
  %v1700 = vunpack.c.l.b16 %v270
  %v1701 = vunpack.c.h.b16 %v270
  %v1702 = vunpack.c.l.b16 %v271
  %v1703 = vunpack.c.h.b16 %v271
  %v1704 = vunpack.c.l.b16 %v272
  %v1705 = vunpack.c.h.b16 %v272
  %v1706 = vunpack.c.l.b16 %v273
  %v1707 = vunpack.c.h.b16 %v273
  %v1708 = vunpack.c.l.b16 %v274
  %v1709 = vunpack.c.h.b16 %v274
  %v1710 = vunpack.c.l.b16 %v275
  %v1711 = vunpack.c.h.b16 %v275
  %v1712 = vunpack.c.l.b16 %v276
  %v1713 = vunpack.c.h.b16 %v276
  %v1714 = vunpack.c.l.b16 %v277
  %v1715 = vunpack.c.h.b16 %v277
  %v1716 = vunpack.c.l.b16 %v278
  %v1717 = vunpack.c.h.b16 %v278
  %v1718 = vunpack.c.l.b16 %v279
  %v1719 = vunpack.c.h.b16 %v279
  %v1720 = vunpack.c.l.b16 %v280
  %v1721 = vunpack.c.h.b16 %v280
  %v1722 = vunpack.c.l.b16 %v281
  %v1723 = vunpack.c.h.b16 %v281
  %v1724 = vunpack.c.l.b16 %v282
  %v1725 = vunpack.c.h.b16 %v282
  %v1726 = vunpack.c.l.b16 %v283
  %v1727 = vunpack.c.h.b16 %v283
  %v1728 = vunpack.c.l.b16 %v284
  %v1729 = vunpack.c.h.b16 %v284
  %v1730 = vunpack.c.l.b16 %v285
  %v1731 = vunpack.c.h.b16 %v285
  %v1732 = vunpack.c.l.b16 %v286
  %v1733 = vunpack.c.h.b16 %v286
  %v1734 = vunpack.c.l.b16 %v287
  %v1735 = vunpack.c.h.b16 %v287
  %v1736 = vunpack.c.l.b16 %v288
  %v1737 = vunpack.c.h.b16 %v288
  %v1738 = vunpack.c.l.b16 %v289
  %v1739 = vunpack.c.h.b16 %v289
  %v1740 = vunpack.c.l.b16 %v290
  %v1741 = vunpack.c.h.b16 %v290
  %v1742 = vunpack.c.l.b16 %v291
  %v1743 = vunpack.c.h.b16 %v291
  %v1744 = vunpack.c.l.b16 %v292
  %v1745 = vunpack.c.h.b16 %v292
  %v1746 = vunpack.c.l.b16 %v293
  %v1747 = vunpack.c.h.b16 %v293
  %v1748 = vunpack.c.l.b16 %v294
  %v1749 = vunpack.c.h.b16 %v294
  %v1750 = vunpack.c.l.b16 %v295
  %v1751 = vunpack.c.h.b16 %v295
  %v1752 = vunpack.c.l.b16 %v296
  %v1753 = vunpack.c.h.b16 %v296
  %v1754 = vunpack.c.l.b16 %v297
  %v1755 = vunpack.c.h.b16 %v297
  %v1756 = vunpack.c.l.b16 %v298
  %v1757 = vunpack.c.h.b16 %v298
  %v1758 = vunpack.c.l.b16 %v299
  %v1759 = vunpack.c.h.b16 %v299
  %v1760 = vunpack.c.l.b16 %v300
  %v1761 = vunpack.c.h.b16 %v300
  %v1762 = vunpack.c.l.b16 %v301
  %v1763 = vunpack.c.h.b16 %v301
  %v1764 = vunpack.c.l.b16 %v302
  %v1765 = vunpack.c.h.b16 %v302
  %v1766 = vunpack.c.l.b16 %v303
  %v1767 = vunpack.c.h.b16 %v303
  %v1768 = vunpack.c.l.b16 %v304
  %v1769 = vunpack.c.h.b16 %v304
  %v1770 = vunpack.c.l.b16 %v305
  %v1771 = vunpack.c.h.b16 %v305
  %v1772 = vunpack.c.l.b16 %v306
  %v1773 = vunpack.c.h.b16 %v306
  %v1774 = vunpack.c.l.b16 %v307
  %v1775 = vunpack.c.h.b16 %v307
  %v1776 = vunpack.c.l.b16 %v308
  %v1777 = vunpack.c.h.b16 %v308
  %v1778 = vunpack.c.l.b16 %v309
  %v1779 = vunpack.c.h.b16 %v309
  %v1780 = vunpack.c.l.b16 %v310
  %v1781 = vunpack.c.h.b16 %v310
  %v1782 = vunpack.c.l.b16 %v311
  %v1783 = vunpack.c.h.b16 %v311
  %v1784 = vunpack.c.l.b16 %v312
  %v1785 = vunpack.c.h.b16 %v312
  %v1786 = vunpack.c.l.b16 %v313
  %v1787 = vunpack.c.h.b16 %v313
  %v1788 = vunpack.c.l.b16 %v314
  %v1789 = vunpack.c.h.b16 %v314
  %v1790 = vunpack.c.l.b16 %v315
  %v1791 = vunpack.c.h.b16 %v315
  %v1792 = vunpack.c.l.b16 %v316
  %v1793 = vunpack.c.h.b16 %v316
  %v1794 = vunpack.c.l.b16 %v317
  %v1795 = vunpack.c.h.b16 %v317
  %v1796 = vunpack.c.l.b16 %v318
  %v1797 = vunpack.c.h.b16 %v318
  %v1798 = vunpack.c.l.b16 %v319
  %v1799 = vunpack.c.h.b16 %v319
  %v1800 = vunpack.c.l.b16 %v320
  %v1801 = vunpack.c.h.b16 %v320
  %v1802 = vunpack.c.l.b16 %v321
  %v1803 = vunpack.c.h.b16 %v321
  %v1804 = vunpack.c.l.b16 %v322
  %v1805 = vunpack.c.h.b16 %v322
  %v1806 = vunpack.c.l.b16 %v323
  %v1807 = vunpack.c.h.b16 %v323
  %v1808 = vunpack.c.l.b16 %v324
  %v1809 = vunpack.c.h.b16 %v324
  %v1810 = vunpack.c.l.b16 %v325
  %v1811 = vunpack.c.h.b16 %v325
  %v1812 = vunpack.c.l.b16 %v326
  %v1813 = vunpack.c.h.b16 %v326
  %v1814 = vunpack.c.l.b16 %v327
  %v1815 = vunpack.c.h.b16 %v327
  %v1816 = vunpack.c.l.b16 %v328
  %v1817 = vunpack.c.h.b16 %v328
  %v1818 = vunpack.c.l.b16 %v329
  %v1819 = vunpack.c.h.b16 %v329
  %v1820 = vunpack.c.l.b16 %v330
  %v1821 = vunpack.c.h.b16 %v330
  %v1822 = vunpack.c.l.b16 %v331
  %v1823 = vunpack.c.h.b16 %v331
  %v1824 = vunpack.c.l.b16 %v332
  %v1825 = vunpack.c.h.b16 %v332
  %v1826 = vunpack.c.l.b16 %v333
  %v1827 = vunpack.c.h.b16 %v333
  %v1828 = vunpack.c.l.b16 %v334
  %v1829 = vunpack.c.h.b16 %v334
  %v1830 = vunpack.c.l.b16 %v335
  %v1831 = vunpack.c.h.b16 %v335
  %v1832 = vunpack.c.l.b16 %v336
  %v1833 = vunpack.c.h.b16 %v336
  %v1834 = vunpack.c.l.b16 %v337
  %v1835 = vunpack.c.h.b16 %v337
  %v1836 = vunpack.c.l.b16 %v338
  %v1837 = vunpack.c.h.b16 %v338
  %v1838 = vunpack.c.l.b16 %v339
  %v1839 = vunpack.c.h.b16 %v339
  %v1840 = vunpack.c.l.b16 %v340
  %v1841 = vunpack.c.h.b16 %v340
  %v1842 = vunpack.c.l.b16 %v341
  %v1843 = vunpack.c.h.b16 %v341
  %v1844 = vunpack.c.l.b16 %v342
  %v1845 = vunpack.c.h.b16 %v342
  %v1846 = vunpack.c.l.b16 %v343
  %v1847 = vunpack.c.h.b16 %v343
  %v1848 = vunpack.c.l.b16 %v344
  %v1849 = vunpack.c.h.b16 %v344
  %v1850 = vunpack.c.l.b16 %v345
  %v1851 = vunpack.c.h.b16 %v345
  %v1852 = vunpack.c.l.b16 %v346
  %v1853 = vunpack.c.h.b16 %v346
  %v1854 = vunpack.c.l.b16 %v347
  %v1855 = vunpack.c.h.b16 %v347
  %v1856 = vunpack.c.l.b16 %v348
  %v1857 = vunpack.c.h.b16 %v348
  %v1858 = vunpack.c.l.b16 %v349
  %v1859 = vunpack.c.h.b16 %v349
  %v1860 = vunpack.c.l.b16 %v350
  %v1861 = vunpack.c.h.b16 %v350
  %v1862 = vunpack.c.l.b16 %v351
  %v1863 = vunpack.c.h.b16 %v351
  %v1864 = vunpack.c.l.b16 %v352
  %v1865 = vunpack.c.h.b16 %v352
  %v1866 = vunpack.c.l.b16 %v353
  %v1867 = vunpack.c.h.b16 %v353
  %v1868 = vunpack.c.l.b16 %v354
  %v1869 = vunpack.c.h.b16 %v354
  %v1870 = vunpack.c.l.b16 %v355
  %v1871 = vunpack.c.h.b16 %v355
  %v1872 = vunpack.c.l.b16 %v356
  %v1873 = vunpack.c.h.b16 %v356
  %v1874 = vunpack.c.l.b16 %v357
  %v1875 = vunpack.c.h.b16 %v357
  %v1876 = vunpack.c.l.b16 %v358
  %v1877 = vunpack.c.h.b16 %v358
  %v1878 = vunpack.c.l.b16 %v359
  %v1879 = vunpack.c.h.b16 %v359
  %v1880 = vunpack.c.l.b16 %v360
  %v1881 = vunpack.c.h.b16 %v360
  %v1882 = vunpack.c.l.b16 %v361
  %v1883 = vunpack.c.h.b16 %v361
  %v1884 = vunpack.c.l.b16 %v362
  %v1885 = vunpack.c.h.b16 %v362
  %v1886 = vunpack.c.l.b16 %v363
  %v1887 = vunpack.c.h.b16 %v363
  %v1888 = vunpack.c.l.b16 %v364
  %v1889 = vunpack.c.h.b16 %v364
  %v1890 = vunpack.c.l.b16 %v365
  %v1891 = vunpack.c.h.b16 %v365
  %v1892 = vunpack.c.l.b16 %v366
  %v1893 = vunpack.c.h.b16 %v366
  %v1894 = vunpack.c.l.b16 %v367
  %v1895 = vunpack.c.h.b16 %v367
  %v1896 = vunpack.c.l.b16 %v368
  %v1897 = vunpack.c.h.b16 %v368
  %v1898 = vunpack.c.l.b16 %v369
  %v1899 = vunpack.c.h.b16 %v369
  %v1900 = vunpack.c.l.b16 %v370
  %v1901 = vunpack.c.h.b16 %v370
  %v1902 = vunpack.c.l.b16 %v371
  %v1903 = vunpack.c.h.b16 %v371
  %v1904 = vunpack.c.l.b16 %v372
  %v1905 = vunpack.c.h.b16 %v372
  %v1906 = vunpack.c.l.b16 %v373
  %v1907 = vunpack.c.h.b16 %v373
  %v1908 = vunpack.c.l.b16 %v374
  %v1909 = vunpack.c.h.b16 %v374
  %v1910 = vunpack.c.l.b16 %v375
  %v1911 = vunpack.c.h.b16 %v375
  %v1912 = vunpack.c.l.b16 %v376
  %v1913 = vunpack.c.h.b16 %v376
  %v1914 = vunpack.c.l.b16 %v377
  %v1915 = vunpack.c.h.b16 %v377
  %v1916 = vunpack.c.l.b16 %v378
  %v1917 = vunpack.c.h.b16 %v378
  %v1918 = vunpack.c.l.b16 %v379
  %v1919 = vunpack.c.h.b16 %v379
  %v1920 = vunpack.c.l.b16 %v380
  %v1921 = vunpack.c.h.b16 %v380
  %v1922 = vunpack.c.l.b16 %v381
  %v1923 = vunpack.c.h.b16 %v381
  %v1924 = vunpack.c.l.b16 %v382
  %v1925 = vunpack.c.h.b16 %v382
  %v1926 = vunpack.c.l.b16 %v383
  %v1927 = vunpack.c.h.b16 %v383
  %v1928 = vunpack.c.l.b16 %v384
  %v1929 = vunpack.c.h.b16 %v384
  %v1930 = vunpack.c.l.b16 %v385
  %v1931 = vunpack.c.h.b16 %v385
  %v1932 = vunpack.c.l.b16 %v386
  %v1933 = vunpack.c.h.b16 %v386
  %v1934 = vunpack.c.l.b16 %v387
  %v1935 = vunpack.c.h.b16 %v387
  %v1936 = vunpack.c.l.b16 %v388
  %v1937 = vunpack.c.h.b16 %v388
  %v1938 = vunpack.c.l.b16 %v389
  %v1939 = vunpack.c.h.b16 %v389
  %v1940 = vunpack.c.l.b16 %v390
  %v1941 = vunpack.c.h.b16 %v390
  %v1942 = vunpack.c.l.b16 %v391
  %v1943 = vunpack.c.h.b16 %v391
  %v1944 = vunpack.c.l.b16 %v392
  %v1945 = vunpack.c.h.b16 %v392
  %v1946 = vunpack.c.l.b16 %v393
  %v1947 = vunpack.c.h.b16 %v393
  %v1948 = vunpack.c.l.b16 %v394
  %v1949 = vunpack.c.h.b16 %v394
  %v1950 = vunpack.c.l.b16 %v395
  %v1951 = vunpack.c.h.b16 %v395
  %v1952 = vunpack.c.l.b16 %v396
  %v1953 = vunpack.c.h.b16 %v396
  %v1954 = vunpack.c.l.b16 %v397
  %v1955 = vunpack.c.h.b16 %v397
  %v1956 = vunpack.c.l.b16 %v398
  %v1957 = vunpack.c.h.b16 %v398
  %v1958 = vunpack.c.l.b16 %v399
  %v1959 = vunpack.c.h.b16 %v399
  %v1960 = vunpack.c.l.b16 %v400
  %v1961 = vunpack.c.h.b16 %v400
  %v1962 = vunpack.c.l.b16 %v401
  %v1963 = vunpack.c.h.b16 %v401
  %v1964 = vunpack.c.l.b16 %v402
  %v1965 = vunpack.c.h.b16 %v402
  %v1966 = vunpack.c.l.b16 %v403
  %v1967 = vunpack.c.h.b16 %v403
  %v1968 = vunpack.c.l.b16 %v404
  %v1969 = vunpack.c.h.b16 %v404
  %v1970 = vunpack.c.l.b16 %v405
  %v1971 = vunpack.c.h.b16 %v405
  %v1972 = vunpack.c.l.b16 %v406
  %v1973 = vunpack.c.h.b16 %v406
  %v1974 = vunpack.c.l.b16 %v407
  %v1975 = vunpack.c.h.b16 %v407
  %v1976 = vunpack.c.l.b16 %v408
  %v1977 = vunpack.c.h.b16 %v408
  %v1978 = vunpack.c.l.b16 %v409
  %v1979 = vunpack.c.h.b16 %v409
  %v1980 = vunpack.c.l.b16 %v410
  %v1981 = vunpack.c.h.b16 %v410
  %v1982 = vunpack.c.l.b16 %v411
  %v1983 = vunpack.c.h.b16 %v411
  %v1984 = vunpack.c.l.b16 %v412
  %v1985 = vunpack.c.h.b16 %v412
  %v1986 = vunpack.c.l.b16 %v413
  %v1987 = vunpack.c.h.b16 %v413
  %v1988 = vunpack.c.l.b16 %v414
  %v1989 = vunpack.c.h.b16 %v414
  %v1990 = vunpack.c.l.b16 %v415
  %v1991 = vunpack.c.h.b16 %v415
  %v1992 = vunpack.c.l.b16 %v416
  %v1993 = vunpack.c.h.b16 %v416
  %v1994 = vunpack.c.l.b16 %v417
  %v1995 = vunpack.c.h.b16 %v417
  %v1996 = vunpack.c.l.b16 %v418
  %v1997 = vunpack.c.h.b16 %v418
  %v1998 = vunpack.c.l.b16 %v419
  %v1999 = vunpack.c.h.b16 %v419
  %v2000 = vunpack.c.l.b16 %v420
  %v2001 = vunpack.c.h.b16 %v420
  %v2002 = vunpack.c.l.b16 %v421
  %v2003 = vunpack.c.h.b16 %v421
  %v2004 = vunpack.c.l.b16 %v422
  %v2005 = vunpack.c.h.b16 %v422
  %v2006 = vunpack.c.l.b16 %v423
  %v2007 = vunpack.c.h.b16 %v423
  %v2008 = vunpack.c.l.b16 %v424
  %v2009 = vunpack.c.h.b16 %v424
  %v2010 = vunpack.c.l.b16 %v425
  %v2011 = vunpack.c.h.b16 %v425
  %v2012 = vunpack.c.l.b16 %v426
  %v2013 = vunpack.c.h.b16 %v426
  %v2014 = vunpack.c.l.b16 %v427
  %v2015 = vunpack.c.h.b16 %v427
  %v2016 = vunpack.c.l.b16 %v428
  %v2017 = vunpack.c.h.b16 %v428
  %v2018 = vunpack.c.l.b16 %v429
  %v2019 = vunpack.c.h.b16 %v429
  %v2020 = vunpack.c.l.b16 %v430
  %v2021 = vunpack.c.h.b16 %v430
  %v2022 = vunpack.c.l.b16 %v431
  %v2023 = vunpack.c.h.b16 %v431
  %v2024 = vunpack.c.l.b16 %v432
  %v2025 = vunpack.c.h.b16 %v432
  %v2026 = vunpack.c.l.b16 %v433
  %v2027 = vunpack.c.h.b16 %v433
  %v2028 = vunpack.c.l.b16 %v434
  %v2029 = vunpack.c.h.b16 %v434
  %v2030 = vunpack.c.l.b16 %v435
  %v2031 = vunpack.c.h.b16 %v435
  %v2032 = vunpack.c.l.b16 %v436
  %v2033 = vunpack.c.h.b16 %v436
  %v2034 = vunpack.c.l.b16 %v437
  %v2035 = vunpack.c.h.b16 %v437
  %v2036 = vunpack.c.l.b16 %v438
  %v2037 = vunpack.c.h.b16 %v438
  %v2038 = vunpack.c.l.b16 %v439
  %v2039 = vunpack.c.h.b16 %v439
  %v2040 = vunpack.c.l.b16 %v440
  %v2041 = vunpack.c.h.b16 %v440
  %v2042 = vunpack.c.l.b16 %v441
  %v2043 = vunpack.c.h.b16 %v441
  %v2044 = vunpack.c.l.b16 %v442
  %v2045 = vunpack.c.h.b16 %v442
  %v2046 = vunpack.c.l.b16 %v443
  %v2047 = vunpack.c.h.b16 %v443
  %v2048 = vunpack.c.l.b16 %v444
  %v2049 = vunpack.c.h.b16 %v444
  %v2050 = vunpack.c.l.b16 %v445
  %v2051 = vunpack.c.h.b16 %v445
  %v2052 = vunpack.c.l.b16 %v446
  %v2053 = vunpack.c.h.b16 %v446
  %v2054 = vunpack.c.l.b16 %v447
  %v2055 = vunpack.c.h.b16 %v447
  %v2056 = vunpack.c.l.b16 %v448
  %v2057 = vunpack.c.h.b16 %v448
  %v2058 = vunpack.c.l.b16 %v449
  %v2059 = vunpack.c.h.b16 %v449
  %v2060 = vunpack.c.l.b16 %v450
  %v2061 = vunpack.c.h.b16 %v450
  %v2062 = vunpack.c.l.b16 %v451
  %v2063 = vunpack.c.h.b16 %v451
  %v2064 = vunpack.c.l.b16 %v452
  %v2065 = vunpack.c.h.b16 %v452
  %v2066 = vunpack.c.l.b16 %v453
  %v2067 = vunpack.c.h.b16 %v453
  %v2068 = vunpack.c.l.b16 %v454
  %v2069 = vunpack.c.h.b16 %v454
  %v2070 = vunpack.c.l.b16 %v455
  %v2071 = vunpack.c.h.b16 %v455
  %v2072 = vunpack.c.l.b16 %v456
  %v2073 = vunpack.c.h.b16 %v456
  %v2074 = vunpack.c.l.b16 %v457
  %v2075 = vunpack.c.h.b16 %v457
  %v2076 = vunpack.c.l.b16 %v458
  %v2077 = vunpack.c.h.b16 %v458
  %v2078 = vunpack.c.l.b16 %v459
  %v2079 = vunpack.c.h.b16 %v459
  %v2080 = vunpack.c.l.b16 %v460
  %v2081 = vunpack.c.h.b16 %v460
  %v2082 = vunpack.c.l.b16 %v461
  %v2083 = vunpack.c.h.b16 %v461
  %v2084 = vunpack.c.l.b16 %v462
  %v2085 = vunpack.c.h.b16 %v462
  %v2086 = vunpack.c.l.b16 %v463
  %v2087 = vunpack.c.h.b16 %v463
  %v2088 = vunpack.c.l.b16 %v464
  %v2089 = vunpack.c.h.b16 %v464
  %v2090 = vunpack.c.l.b16 %v465
  %v2091 = vunpack.c.h.b16 %v465
  %v2092 = vunpack.c.l.b16 %v466
  %v2093 = vunpack.c.h.b16 %v466
  %v2094 = vunpack.c.l.b16 %v467
  %v2095 = vunpack.c.h.b16 %v467
  %v2096 = vunpack.c.l.b16 %v468
  %v2097 = vunpack.c.h.b16 %v468
  %v2098 = vunpack.c.l.b16 %v469
  %v2099 = vunpack.c.h.b16 %v469
  %v2100 = vunpack.c.l.b16 %v470
  %v2101 = vunpack.c.h.b16 %v470
  %v2102 = vunpack.c.l.b16 %v471
  %v2103 = vunpack.c.h.b16 %v471
  %v2104 = vunpack.c.l.b16 %v472
  %v2105 = vunpack.c.h.b16 %v472
  %v2106 = vunpack.c.l.b16 %v473
  %v2107 = vunpack.c.h.b16 %v473
  %v2108 = vunpack.c.l.b16 %v474
  %v2109 = vunpack.c.h.b16 %v474
  %v2110 = vunpack.c.l.b16 %v475
  %v2111 = vunpack.c.h.b16 %v475
  %v2112 = vunpack.c.l.b16 %v476
  %v2113 = vunpack.c.h.b16 %v476
  %v2114 = vunpack.c.l.b16 %v477
  %v2115 = vunpack.c.h.b16 %v477
  %v2116 = vunpack.c.l.b16 %v478
  %v2117 = vunpack.c.h.b16 %v478
  %v2118 = vunpack.c.l.b16 %v479
  %v2119 = vunpack.c.h.b16 %v479
  %v2120 = vunpack.c.l.b16 %v480
  %v2121 = vunpack.c.h.b16 %v480
  %v2122 = vunpack.c.l.b16 %v481
  %v2123 = vunpack.c.h.b16 %v481
  %v2124 = vunpack.c.l.b16 %v482
  %v2125 = vunpack.c.h.b16 %v482
  %v2126 = vunpack.c.l.b16 %v483
  %v2127 = vunpack.c.h.b16 %v483
  %v2128 = vunpack.c.l.b16 %v484
  %v2129 = vunpack.c.h.b16 %v484
  %v2130 = vunpack.c.l.b16 %v485
  %v2131 = vunpack.c.h.b16 %v485
  %v2132 = vunpack.c.l.b16 %v486
  %v2133 = vunpack.c.h.b16 %v486
  %v2134 = vunpack.c.l.b16 %v487
  %v2135 = vunpack.c.h.b16 %v487
  %v2136 = vunpack.c.l.b16 %v488
  %v2137 = vunpack.c.h.b16 %v488
  %v2138 = vunpack.c.l.b16 %v489
  %v2139 = vunpack.c.h.b16 %v489
  %v2140 = vunpack.c.l.b16 %v490
  %v2141 = vunpack.c.h.b16 %v490
  %v2142 = vunpack.c.l.b16 %v491
  %v2143 = vunpack.c.h.b16 %v491
  %v2144 = vunpack.c.l.b16 %v492
  %v2145 = vunpack.c.h.b16 %v492
  %v2146 = vunpack.c.l.b16 %v493
  %v2147 = vunpack.c.h.b16 %v493
  %v2148 = vunpack.c.l.b16 %v494
  %v2149 = vunpack.c.h.b16 %v494
  %v2150 = vunpack.c.l.b16 %v495
  %v2151 = vunpack.c.h.b16 %v495
  %v2152 = vunpack.c.l.b16 %v496
  %v2153 = vunpack.c.h.b16 %v496
  %v2154 = vunpack.c.l.b16 %v497
  %v2155 = vunpack.c.h.b16 %v497
  %v2156 = vunpack.c.l.b16 %v498
  %v2157 = vunpack.c.h.b16 %v498
  %v2158 = vunpack.c.l.b16 %v499
  %v2159 = vunpack.c.h.b16 %v499
  %v2160 = vunpack.c.l.b16 %v500
  %v2161 = vunpack.c.h.b16 %v500
  %v2162 = vunpack.c.l.b16 %v501
  %v2163 = vunpack.c.h.b16 %v501
  %v2164 = vunpack.c.l.b16 %v502
  %v2165 = vunpack.c.h.b16 %v502
  %v2166 = vunpack.c.l.b16 %v503
  %v2167 = vunpack.c.h.b16 %v503
  %v2168 = vunpack.c.l.b16 %v504
  %v2169 = vunpack.c.h.b16 %v504
  %v2170 = vunpack.c.l.b16 %v505
  %v2171 = vunpack.c.h.b16 %v505
  %v2172 = vunpack.c.l.b16 %v506
  %v2173 = vunpack.c.h.b16 %v506
  %v2174 = vunpack.c.l.b16 %v507
  %v2175 = vunpack.c.h.b16 %v507
  %v2176 = vunpack.c.l.b16 %v508
  %v2177 = vunpack.c.h.b16 %v508
  %v2178 = vunpack.c.l.b16 %v509
  %v2179 = vunpack.c.h.b16 %v509
  %v2180 = vunpack.c.l.b16 %v510
  %v2181 = vunpack.c.h.b16 %v510
  %v2182 = vunpack.c.l.b16 %v511
  %v2183 = vunpack.c.h.b16 %v511
  %v2184 = vunpack.c.l.b16 %v512
  %v2185 = vunpack.c.h.b16 %v512
  %v2186 = vunpack.c.l.b16 %v513
  %v2187 = vunpack.c.h.b16 %v513
  %v2188 = vunpack.c.l.b16 %v514
  %v2189 = vunpack.c.h.b16 %v514
  %v2190 = vunpack.c.l.b16 %v515
  %v2191 = vunpack.c.h.b16 %v515
  %v2192 = vunpack.c.l.b16 %v516
  %v2193 = vunpack.c.h.b16 %v516
  %v2194 = vunpack.c.l.b16 %v517
  %v2195 = vunpack.c.h.b16 %v517
  %v2196 = vunpack.c.l.b16 %v518
  %v2197 = vunpack.c.h.b16 %v518
  %v2198 = vunpack.c.l.b16 %v519
  %v2199 = vunpack.c.h.b16 %v519
  %v2200 = vunpack.c.l.b16 %v520
  %v2201 = vunpack.c.h.b16 %v520
  %v2202 = vunpack.c.l.b16 %v521
  %v2203 = vunpack.c.h.b16 %v521
  %v2204 = vunpack.c.l.b16 %v522
  %v2205 = vunpack.c.h.b16 %v522
  %v2206 = vunpack.c.l.b16 %v523
  %v2207 = vunpack.c.h.b16 %v523
  %v2208 = vunpack.c.l.b16 %v524
  %v2209 = vunpack.c.h.b16 %v524
  %v2210 = vunpack.c.l.b16 %v525
  %v2211 = vunpack.c.h.b16 %v525
  %v2212 = vunpack.c.l.b16 %v526
  %v2213 = vunpack.c.h.b16 %v526
  %v2214 = vunpack.c.l.b16 %v527
  %v2215 = vunpack.c.h.b16 %v527
  %v2216 = vunpack.c.l.b16 %v528
  %v2217 = vunpack.c.h.b16 %v528
  %v2218 = vunpack.c.l.b16 %v529
  %v2219 = vunpack.c.h.b16 %v529
  %v2220 = vunpack.c.l.b16 %v530
  %v2221 = vunpack.c.h.b16 %v530
  %v2222 = vunpack.c.l.b16 %v531
  %v2223 = vunpack.c.h.b16 %v531
  %v2224 = vunpack.c.l.b16 %v532
  %v2225 = vunpack.c.h.b16 %v532
  %v2226 = vunpack.c.l.b16 %v533
  %v2227 = vunpack.c.h.b16 %v533
  %v2228 = vunpack.c.l.b16 %v534
  %v2229 = vunpack.c.h.b16 %v534
  %v2230 = vunpack.c.l.b16 %v535
  %v2231 = vunpack.c.h.b16 %v535
  %v2232 = vunpack.c.l.b16 %v536
  %v2233 = vunpack.c.h.b16 %v536
  %v2234 = vunpack.c.l.b16 %v537
  %v2235 = vunpack.c.h.b16 %v537
  %v2236 = vunpack.c.l.b16 %v538
  %v2237 = vunpack.c.h.b16 %v538
  %v2238 = vunpack.c.l.b16 %v539
  %v2239 = vunpack.c.h.b16 %v539
  %v2240 = vunpack.c.l.b16 %v540
  %v2241 = vunpack.c.h.b16 %v540
  %v2242 = vunpack.c.l.b16 %v541
  %v2243 = vunpack.c.h.b16 %v541
  %v2244 = vunpack.c.l.b16 %v542
  %v2245 = vunpack.c.h.b16 %v542
  %v2246 = vunpack.c.l.b16 %v543
  %v2247 = vunpack.c.h.b16 %v543
  %v2248 = vunpack.c.l.b16 %v544
  %v2249 = vunpack.c.h.b16 %v544
  %v2250 = vunpack.c.l.b16 %v545
  %v2251 = vunpack.c.h.b16 %v545
  %v2252 = vunpack.c.l.b16 %v546
  %v2253 = vunpack.c.h.b16 %v546
  %v2254 = vunpack.c.l.b16 %v547
  %v2255 = vunpack.c.h.b16 %v547
  %v2256 = vunpack.c.l.b16 %v548
  %v2257 = vunpack.c.h.b16 %v548
  %v2258 = vunpack.c.l.b16 %v549
  %v2259 = vunpack.c.h.b16 %v549
  %v2260 = vunpack.c.l.b16 %v550
  %v2261 = vunpack.c.h.b16 %v550
  %v2262 = vunpack.c.l.b16 %v551
  %v2263 = vunpack.c.h.b16 %v551
  %v2264 = vunpack.c.l.b16 %v552
  %v2265 = vunpack.c.h.b16 %v552
  %v2266 = vunpack.c.l.b16 %v553
  %v2267 = vunpack.c.h.b16 %v553
  %v2268 = vunpack.c.l.b16 %v554
  %v2269 = vunpack.c.h.b16 %v554
  %v2270 = vunpack.c.l.b16 %v555
  %v2271 = vunpack.c.h.b16 %v555
  %v2272 = vunpack.c.l.b16 %v556
  %v2273 = vunpack.c.h.b16 %v556
  %v2274 = vunpack.c.l.b16 %v557
  %v2275 = vunpack.c.h.b16 %v557
  %v2276 = vunpack.c.l.b16 %v558
  %v2277 = vunpack.c.h.b16 %v558
  %v2278 = vunpack.c.l.b16 %v559
  %v2279 = vunpack.c.h.b16 %v559
  %v2280 = vunpack.c.l.b16 %v560
  %v2281 = vunpack.c.h.b16 %v560
  %v2282 = vunpack.c.l.b16 %v561
  %v2283 = vunpack.c.h.b16 %v561
  %v2284 = vunpack.c.l.b16 %v562
  %v2285 = vunpack.c.h.b16 %v562
  %v2286 = vunpack.c.l.b16 %v563
  %v2287 = vunpack.c.h.b16 %v563
  %v2288 = vunpack.c.l.b16 %v564
  %v2289 = vunpack.c.h.b16 %v564
  %v2290 = vunpack.c.l.b16 %v565
  %v2291 = vunpack.c.h.b16 %v565
  %v2292 = vunpack.c.l.b16 %v566
  %v2293 = vunpack.c.h.b16 %v566
  %v2294 = vunpack.c.l.b16 %v567
  %v2295 = vunpack.c.h.b16 %v567
  %v2296 = vunpack.c.l.b16 %v568
  %v2297 = vunpack.c.h.b16 %v568
  %v2298 = vunpack.c.l.b16 %v569
  %v2299 = vunpack.c.h.b16 %v569
  %v2300 = vunpack.c.l.b16 %v570
  %v2301 = vunpack.c.h.b16 %v570
  %v2302 = vunpack.c.l.b16 %v571
  %v2303 = vunpack.c.h.b16 %v571
  %v2304 = vunpack.c.l.b16 %v572
  %v2305 = vunpack.c.h.b16 %v572
  %v2306 = vunpack.c.l.b16 %v573
  %v2307 = vunpack.c.h.b16 %v573
  %v2308 = vunpack.c.l.b16 %v574
  %v2309 = vunpack.c.h.b16 %v574
  %v2310 = vunpack.c.l.b16 %v575
  %v2311 = vunpack.c.h.b16 %v575
  %v2312 = vunpack.c.l.b16 %v576
  %v2313 = vunpack.c.h.b16 %v576
  %v2314 = vunpack.c.l.b16 %v577
  %v2315 = vunpack.c.h.b16 %v577
  %v2316 = vunpack.c.l.b16 %v578
  %v2317 = vunpack.c.h.b16 %v578
  %v2318 = vunpack.c.l.b16 %v579
  %v2319 = vunpack.c.h.b16 %v579
  %v2320 = vunpack.c.l.b16 %v580
  %v2321 = vunpack.c.h.b16 %v580
  %v2322 = vunpack.c.l.b16 %v581
  %v2323 = vunpack.c.h.b16 %v581
  %v2324 = vunpack.c.l.b16 %v582
  %v2325 = vunpack.c.h.b16 %v582
  %v2326 = vunpack.c.l.b16 %v583
  %v2327 = vunpack.c.h.b16 %v583
  %v2328 = vunpack.c.l.b16 %v584
  %v2329 = vunpack.c.h.b16 %v584
  %v2330 = vunpack.c.l.b16 %v585
  %v2331 = vunpack.c.h.b16 %v585
  %v2332 = vunpack.c.l.b16 %v586
  %v2333 = vunpack.c.h.b16 %v586
  %v2334 = vunpack.c.l.b16 %v587
  %v2335 = vunpack.c.h.b16 %v587
  %v2336 = vunpack.c.l.b16 %v588
  %v2337 = vunpack.c.h.b16 %v588
  %v2338 = vunpack.c.l.b16 %v589
  %v2339 = vunpack.c.h.b16 %v589
  %v2340 = vunpack.c.l.b16 %v590
  %v2341 = vunpack.c.h.b16 %v590
  %v2342 = vunpack.c.l.b16 %v591
  %v2343 = vunpack.c.h.b16 %v591
  %v2344 = vunpack.c.l.b16 %v592
  %v2345 = vunpack.c.h.b16 %v592
  %v2346 = vunpack.c.l.b16 %v593
  %v2347 = vunpack.c.h.b16 %v593
  %v2348 = vunpack.c.l.b16 %v594
  %v2349 = vunpack.c.h.b16 %v594
  %v2350 = vunpack.c.l.b16 %v595
  %v2351 = vunpack.c.h.b16 %v595
  %v2352 = vunpack.c.l.b16 %v596
  %v2353 = vunpack.c.h.b16 %v596
  %v2354 = vunpack.c.l.b16 %v597
  %v2355 = vunpack.c.h.b16 %v597
  %v2356 = vunpack.c.l.b16 %v598
  %v2357 = vunpack.c.h.b16 %v598
  %v2358 = vunpack.c.l.b16 %v599
  %v2359 = vunpack.c.h.b16 %v599
  %v2360 = vunpack.c.l.b16 %v600
  %v2361 = vunpack.c.h.b16 %v600
  %v2362 = vunpack.c.l.b16 %v601
  %v2363 = vunpack.c.h.b16 %v601
  %v2364 = vunpack.c.l.b16 %v602
  %v2365 = vunpack.c.h.b16 %v602
  %v2366 = vunpack.c.l.b16 %v603
  %v2367 = vunpack.c.h.b16 %v603
  %v2368 = vunpack.c.l.b16 %v604
  %v2369 = vunpack.c.h.b16 %v604
  %v2370 = vunpack.c.l.b16 %v605
  %v2371 = vunpack.c.h.b16 %v605
  %v2372 = vunpack.c.l.b16 %v606
  %v2373 = vunpack.c.h.b16 %v606
  %v2374 = vunpack.c.l.b16 %v607
  %v2375 = vunpack.c.h.b16 %v607
  %v2376 = vunpack.c.l.b16 %v608
  %v2377 = vunpack.c.h.b16 %v608
  %v2378 = vunpack.c.l.b16 %v609
  %v2379 = vunpack.c.h.b16 %v609
  %v2380 = vunpack.c.l.b16 %v610
  %v2381 = vunpack.c.h.b16 %v610
  %v2382 = vunpack.c.l.b16 %v611
  %v2383 = vunpack.c.h.b16 %v611
  %v2384 = vunpack.c.l.b16 %v612
  %v2385 = vunpack.c.h.b16 %v612
  %v2386 = vunpack.c.l.b16 %v613
  %v2387 = vunpack.c.h.b16 %v613
  %v2388 = vunpack.c.l.b16 %v614
  %v2389 = vunpack.c.h.b16 %v614
  %v2390 = vunpack.c.l.b16 %v615
  %v2391 = vunpack.c.h.b16 %v615
  %v2392 = vunpack.c.l.b16 %v616
  %v2393 = vunpack.c.h.b16 %v616
  %v2394 = vunpack.c.l.b16 %v617
  %v2395 = vunpack.c.h.b16 %v617
  %v2396 = vunpack.c.l.b16 %v618
  %v2397 = vunpack.c.h.b16 %v618
  %v2398 = vunpack.c.l.b16 %v619
  %v2399 = vunpack.c.h.b16 %v619
  %v2400 = vunpack.c.l.b16 %v620
  %v2401 = vunpack.c.h.b16 %v620
  %v2402 = vunpack.c.l.b16 %v621
  %v2403 = vunpack.c.h.b16 %v621
  %v2404 = vunpack.c.l.b16 %v622
  %v2405 = vunpack.c.h.b16 %v622
  %v2406 = vunpack.c.l.b16 %v623
  %v2407 = vunpack.c.h.b16 %v623
  %v2408 = vunpack.c.l.b16 %v624
  %v2409 = vunpack.c.h.b16 %v624
  %v2410 = vunpack.c.l.b16 %v625
  %v2411 = vunpack.c.h.b16 %v625
  %v2412 = vunpack.c.l.b16 %v626
  %v2413 = vunpack.c.h.b16 %v626
  %v2414 = vunpack.c.l.b16 %v627
  %v2415 = vunpack.c.h.b16 %v627
  %v2416 = vunpack.c.l.b16 %v628
  %v2417 = vunpack.c.h.b16 %v628
  %v2418 = vunpack.c.l.b16 %v629
  %v2419 = vunpack.c.h.b16 %v629
  %v2420 = vunpack.c.l.b16 %v630
  %v2421 = vunpack.c.h.b16 %v630
  %v2422 = vunpack.c.l.b16 %v631
  %v2423 = vunpack.c.h.b16 %v631
  %v2424 = vunpack.c.l.b16 %v632
  %v2425 = vunpack.c.h.b16 %v632
  %v2426 = vunpack.c.l.b16 %v633
  %v2427 = vunpack.c.h.b16 %v633
  %v2428 = vunpack.c.l.b16 %v634
  %v2429 = vunpack.c.h.b16 %v634
  %v2430 = vunpack.c.l.b16 %v635
  %v2431 = vunpack.c.h.b16 %v635
  %v2432 = vunpack.c.l.b16 %v636
  %v2433 = vunpack.c.h.b16 %v636
  %v2434 = vunpack.c.l.b16 %v637
  %v2435 = vunpack.c.h.b16 %v637
  %v2436 = vunpack.c.l.b16 %v638
  %v2437 = vunpack.c.h.b16 %v638
  %v2438 = vunpack.c.l.b16 %v639
  %v2439 = vunpack.c.h.b16 %v639
  %v2440 = vunpack.c.l.b16 %v640
  %v2441 = vunpack.c.h.b16 %v640
  %v2442 = vunpack.c.l.b16 %v641
  %v2443 = vunpack.c.h.b16 %v641
  %v2444 = vunpack.c.l.b16 %v642
  %v2445 = vunpack.c.h.b16 %v642
  %v2446 = vunpack.c.l.b16 %v643
  %v2447 = vunpack.c.h.b16 %v643
  %v2448 = vunpack.c.l.b16 %v644
  %v2449 = vunpack.c.h.b16 %v644
  %v2450 = vunpack.c.l.b16 %v645
  %v2451 = vunpack.c.h.b16 %v645
  %v2452 = vunpack.c.l.b16 %v646
  %v2453 = vunpack.c.h.b16 %v646
  %v2454 = vunpack.c.l.b16 %v647
  %v2455 = vunpack.c.h.b16 %v647
  %v2456 = vunpack.c.l.b16 %v648
  %v2457 = vunpack.c.h.b16 %v648
  %v2458 = vunpack.c.l.b16 %v649
  %v2459 = vunpack.c.h.b16 %v649
  %v2460 = vunpack.c.l.b16 %v650
  %v2461 = vunpack.c.h.b16 %v650
  %v2462 = vunpack.c.l.b16 %v651
  %v2463 = vunpack.c.h.b16 %v651
  %v2464 = vunpack.c.l.b16 %v652
  %v2465 = vunpack.c.h.b16 %v652
  %v2466 = vunpack.c.l.b16 %v653
  %v2467 = vunpack.c.h.b16 %v653
  %v2468 = vunpack.c.l.b16 %v654
  %v2469 = vunpack.c.h.b16 %v654
  %v2470 = vunpack.c.l.b16 %v655
  %v2471 = vunpack.c.h.b16 %v655
  %v2472 = vunpack.c.l.b16 %v656
  %v2473 = vunpack.c.h.b16 %v656
  %v2474 = vunpack.c.l.b16 %v657
  %v2475 = vunpack.c.h.b16 %v657
  %v2476 = vunpack.c.l.b16 %v658
  %v2477 = vunpack.c.h.b16 %v658
  %v2478 = vunpack.c.l.b16 %v659
  %v2479 = vunpack.c.h.b16 %v659
  %v2480 = vunpack.c.l.b16 %v660
  %v2481 = vunpack.c.h.b16 %v660
  %v2482 = vunpack.c.l.b16 %v661
  %v2483 = vunpack.c.h.b16 %v661
  %v2484 = vunpack.c.l.b16 %v662
  %v2485 = vunpack.c.h.b16 %v662
  %v2486 = vunpack.c.l.b16 %v663
  %v2487 = vunpack.c.h.b16 %v663
  %v2488 = vunpack.c.l.b16 %v664
  %v2489 = vunpack.c.h.b16 %v664
  %v2490 = vunpack.c.l.b16 %v665
  %v2491 = vunpack.c.h.b16 %v665
  %v2492 = vunpack.c.l.b16 %v666
  %v2493 = vunpack.c.h.b16 %v666
  %v2494 = vunpack.c.l.b16 %v667
  %v2495 = vunpack.c.h.b16 %v667
  %v2496 = vunpack.c.l.b16 %v668
  %v2497 = vunpack.c.h.b16 %v668
  %v2498 = vunpack.c.l.b16 %v669
  %v2499 = vunpack.c.h.b16 %v669
  %v2500 = vunpack.c.l.b16 %v670
  %v2501 = vunpack.c.h.b16 %v670
  %v2502 = vunpack.c.l.b16 %v671
  %v2503 = vunpack.c.h.b16 %v671
  %v2504 = vunpack.c.l.b16 %v672
  %v2505 = vunpack.c.h.b16 %v672
  %v2506 = vunpack.c.l.b16 %v673
  %v2507 = vunpack.c.h.b16 %v673
  %v2508 = vunpack.c.l.b16 %v674
  %v2509 = vunpack.c.h.b16 %v674
  %v2510 = vunpack.c.l.b16 %v675
  %v2511 = vunpack.c.h.b16 %v675
  %v2512 = vunpack.c.l.b16 %v676
  %v2513 = vunpack.c.h.b16 %v676
  %v2514 = vunpack.c.l.b16 %v677
  %v2515 = vunpack.c.h.b16 %v677
  %v2516 = vunpack.c.l.b16 %v678
  %v2517 = vunpack.c.h.b16 %v678
  %v2518 = vunpack.c.l.b16 %v679
  %v2519 = vunpack.c.h.b16 %v679
  %v2520 = vunpack.c.l.b16 %v680
  %v2521 = vunpack.c.h.b16 %v680
  %v2522 = vunpack.c.l.b16 %v681
  %v2523 = vunpack.c.h.b16 %v681
  %v2524 = vunpack.c.l.b16 %v682
  %v2525 = vunpack.c.h.b16 %v682
  %v2526 = vunpack.c.l.b16 %v683
  %v2527 = vunpack.c.h.b16 %v683
  %v2528 = vunpack.c.l.b16 %v684
  %v2529 = vunpack.c.h.b16 %v684
  %v2530 = vunpack.c.l.b16 %v685
  %v2531 = vunpack.c.h.b16 %v685
  %v2532 = vunpack.c.l.b16 %v686
  %v2533 = vunpack.c.h.b16 %v686
  %v2534 = vunpack.c.l.b16 %v687
  %v2535 = vunpack.c.h.b16 %v687
  %v2536 = vunpack.c.l.b16 %v688
  %v2537 = vunpack.c.h.b16 %v688
  %v2538 = vunpack.c.l.b16 %v689
  %v2539 = vunpack.c.h.b16 %v689
  %v2540 = vunpack.c.l.b16 %v690
  %v2541 = vunpack.c.h.b16 %v690
  %v2542 = vunpack.c.l.b16 %v691
  %v2543 = vunpack.c.h.b16 %v691
  %v2544 = vunpack.c.l.b16 %v692
  %v2545 = vunpack.c.h.b16 %v692
  %v2546 = vunpack.c.l.b16 %v693
  %v2547 = vunpack.c.h.b16 %v693
  %v2548 = vunpack.c.l.b16 %v694
  %v2549 = vunpack.c.h.b16 %v694
  %v2550 = vunpack.c.l.b16 %v695
  %v2551 = vunpack.c.h.b16 %v695
  %v2552 = vunpack.c.l.b16 %v696
  %v2553 = vunpack.c.h.b16 %v696
  %v2554 = vunpack.c.l.b16 %v697
  %v2555 = vunpack.c.h.b16 %v697
  %v2556 = vunpack.c.l.b16 %v698
  %v2557 = vunpack.c.h.b16 %v698
  %v2558 = vunpack.c.l.b16 %v699
  %v2559 = vunpack.c.h.b16 %v699
  %v2560 = vunpack.c.l.b16 %v700
  %v2561 = vunpack.c.h.b16 %v700
  %v2562 = vunpack.c.l.b16 %v701
  %v2563 = vunpack.c.h.b16 %v701
  %v2564 = vunpack.c.l.b16 %v702
  %v2565 = vunpack.c.h.b16 %v702
  %v2566 = vunpack.c.l.b16 %v703
  %v2567 = vunpack.c.h.b16 %v703
  %v2568 = vunpack.c.l.b16 %v704
  %v2569 = vunpack.c.h.b16 %v704
  %v2570 = vunpack.c.l.b16 %v705
  %v2571 = vunpack.c.h.b16 %v705
  %v2572 = vunpack.c.l.b16 %v706
  %v2573 = vunpack.c.h.b16 %v706
  %v2574 = vunpack.c.l.b16 %v707
  %v2575 = vunpack.c.h.b16 %v707
  %v2576 = vunpack.c.l.b16 %v708
  %v2577 = vunpack.c.h.b16 %v708
  %v2578 = vunpack.c.l.b16 %v709
  %v2579 = vunpack.c.h.b16 %v709
  %v2580 = vunpack.c.l.b16 %v710
  %v2581 = vunpack.c.h.b16 %v710
  %v2582 = vunpack.c.l.b16 %v711
  %v2583 = vunpack.c.h.b16 %v711
  %v2584 = vunpack.c.l.b16 %v712
  %v2585 = vunpack.c.h.b16 %v712
  %v2586 = vunpack.c.l.b16 %v713
  %v2587 = vunpack.c.h.b16 %v713
  %v2588 = vunpack.c.l.b16 %v714
  %v2589 = vunpack.c.h.b16 %v714
  %v2590 = vunpack.c.l.b16 %v715
  %v2591 = vunpack.c.h.b16 %v715
  %v2592 = vunpack.c.l.b16 %v716
  %v2593 = vunpack.c.h.b16 %v716
  %v2594 = vunpack.c.l.b16 %v717
  %v2595 = vunpack.c.h.b16 %v717
  %v2596 = vunpack.c.l.b16 %v718
  %v2597 = vunpack.c.h.b16 %v718
  %v2598 = vunpack.c.l.b16 %v719
  %v2599 = vunpack.c.h.b16 %v719
  %v2600 = vunpack.c.l.b16 %v720
  %v2601 = vunpack.c.h.b16 %v720
  %v2602 = vunpack.c.l.b16 %v721
  %v2603 = vunpack.c.h.b16 %v721
  %v2604 = vunpack.c.l.b16 %v722
  %v2605 = vunpack.c.h.b16 %v722
  %v2606 = vunpack.c.l.b16 %v723
  %v2607 = vunpack.c.h.b16 %v723
  %v2608 = vunpack.c.l.b16 %v724
  %v2609 = vunpack.c.h.b16 %v724
  %v2610 = vunpack.c.l.b16 %v725
  %v2611 = vunpack.c.h.b16 %v725
  %v2612 = vunpack.c.l.b16 %v726
  %v2613 = vunpack.c.h.b16 %v726
  %v2614 = vunpack.c.l.b16 %v727
  %v2615 = vunpack.c.h.b16 %v727
  %v2616 = vunpack.c.l.b16 %v728
  %v2617 = vunpack.c.h.b16 %v728
  %v2618 = vunpack.c.l.b16 %v729
  %v2619 = vunpack.c.h.b16 %v729
  %v2620 = vunpack.c.l.b16 %v730
  %v2621 = vunpack.c.h.b16 %v730
  %v2622 = vunpack.c.l.b16 %v731
  %v2623 = vunpack.c.h.b16 %v731
  %v2624 = vunpack.c.l.b16 %v732
  %v2625 = vunpack.c.h.b16 %v732
  %v2626 = vunpack.c.l.b16 %v733
  %v2627 = vunpack.c.h.b16 %v733
  %v2628 = vunpack.c.l.b16 %v734
  %v2629 = vunpack.c.h.b16 %v734
  %v2630 = vunpack.c.l.b16 %v735
  %v2631 = vunpack.c.h.b16 %v735
  %v2632 = vunpack.c.l.b16 %v736
  %v2633 = vunpack.c.h.b16 %v736
  %v2634 = vunpack.c.l.b16 %v737
  %v2635 = vunpack.c.h.b16 %v737
  %v2636 = vunpack.c.l.b16 %v738
  %v2637 = vunpack.c.h.b16 %v738
  %v2638 = vunpack.c.l.b16 %v739
  %v2639 = vunpack.c.h.b16 %v739
  %v2640 = vunpack.c.l.b16 %v740
  %v2641 = vunpack.c.h.b16 %v740
  %v2642 = vunpack.c.l.b16 %v741
  %v2643 = vunpack.c.h.b16 %v741
  %v2644 = vunpack.c.l.b16 %v742
  %v2645 = vunpack.c.h.b16 %v742
  %v2646 = vunpack.c.l.b16 %v743
  %v2647 = vunpack.c.h.b16 %v743
  %v2648 = vunpack.c.l.b16 %v744
  %v2649 = vunpack.c.h.b16 %v744
  %v2650 = vunpack.c.l.b16 %v745
  %v2651 = vunpack.c.h.b16 %v745
  %v2652 = vunpack.c.l.b16 %v746
  %v2653 = vunpack.c.h.b16 %v746
  %v2654 = vunpack.c.l.b16 %v747
  %v2655 = vunpack.c.h.b16 %v747
  %v2656 = vunpack.c.l.b16 %v748
  %v2657 = vunpack.c.h.b16 %v748
  %v2658 = vunpack.c.l.b16 %v749
  %v2659 = vunpack.c.h.b16 %v749
  %v2660 = vunpack.c.l.b16 %v750
  %v2661 = vunpack.c.h.b16 %v750
  %v2662 = vunpack.c.l.b16 %v751
  %v2663 = vunpack.c.h.b16 %v751
  %v2664 = vunpack.c.l.b16 %v752
  %v2665 = vunpack.c.h.b16 %v752
  %v2666 = vunpack.c.l.b16 %v753
  %v2667 = vunpack.c.h.b16 %v753
  %v2668 = vunpack.c.l.b16 %v754
  %v2669 = vunpack.c.h.b16 %v754
  %v2670 = vunpack.c.l.b16 %v755
  %v2671 = vunpack.c.h.b16 %v755
  %v2672 = vunpack.c.l.b16 %v756
  %v2673 = vunpack.c.h.b16 %v756
  %v2674 = vunpack.c.l.b16 %v757
  %v2675 = vunpack.c.h.b16 %v757
  %v2676 = vunpack.c.l.b16 %v758
  %v2677 = vunpack.c.h.b16 %v758
  %v2678 = vunpack.c.l.b16 %v759
  %v2679 = vunpack.c.h.b16 %v759
  %v2680 = vpack.c.b16 %v1410, %v1400
  %v2681 = vpack.c.b16 %v1411, %v1401
  %v2682 = vpack.c.b16 %v1412, %v1402
  %v2683 = vpack.c.b16 %v1413, %v1403
  %v2684 = vpack.c.b16 %v1414, %v1404
  %v2685 = vpack.c.b16 %v1415, %v1405
  %v2686 = vpack.c.b16 %v1416, %v1406
  %v2687 = vpack.c.b16 %v1417, %v1407
  %v2688 = vpack.c.b16 %v1418, %v1408
  %v2689 = vpack.c.b16 %v1419, %v1409
  %v2690 = vpack.c.b16 %v1430, %v1420
  %v2691 = vpack.c.b16 %v1431, %v1421
  %v2692 = vpack.c.b16 %v1432, %v1422
  %v2693 = vpack.c.b16 %v1433, %v1423
  %v2694 = vpack.c.b16 %v1434, %v1424
  %v2695 = vpack.c.b16 %v1435, %v1425
  %v2696 = vpack.c.b16 %v1436, %v1426
  %v2697 = vpack.c.b16 %v1437, %v1427
  %v2698 = vpack.c.b16 %v1438, %v1428
  %v2699 = vpack.c.b16 %v1439, %v1429
  %v2700 = vpack.c.b16 %v1450, %v1440
  %v2701 = vpack.c.b16 %v1451, %v1441
  %v2702 = vpack.c.b16 %v1452, %v1442
  %v2703 = vpack.c.b16 %v1453, %v1443
  %v2704 = vpack.c.b16 %v1454, %v1444
  %v2705 = vpack.c.b16 %v1455, %v1445
  %v2706 = vpack.c.b16 %v1456, %v1446
  %v2707 = vpack.c.b16 %v1457, %v1447
  %v2708 = vpack.c.b16 %v1458, %v1448
  %v2709 = vpack.c.b16 %v1459, %v1449
  %v2710 = vpack.c.b16 %v1470, %v1460
  %v2711 = vpack.c.b16 %v1471, %v1461
  %v2712 = vpack.c.b16 %v1472, %v1462
  %v2713 = vpack.c.b16 %v1473, %v1463
  %v2714 = vpack.c.b16 %v1474, %v1464
  %v2715 = vpack.c.b16 %v1475, %v1465
  %v2716 = vpack.c.b16 %v1476, %v1466
  %v2717 = vpack.c.b16 %v1477, %v1467
  %v2718 = vpack.c.b16 %v1478, %v1468
  %v2719 = vpack.c.b16 %v1479, %v1469
  %v2720 = vpack.c.b16 %v1490, %v1480
  %v2721 = vpack.c.b16 %v1491, %v1481
  %v2722 = vpack.c.b16 %v1492, %v1482
  %v2723 = vpack.c.b16 %v1493, %v1483
  %v2724 = vpack.c.b16 %v1494, %v1484
  %v2725 = vpack.c.b16 %v1495, %v1485
  %v2726 = vpack.c.b16 %v1496, %v1486
  %v2727 = vpack.c.b16 %v1497, %v1487
  %v2728 = vpack.c.b16 %v1498, %v1488
  %v2729 = vpack.c.b16 %v1499, %v1489
  %v2730 = vpack.c.b16 %v1510, %v1500
  %v2731 = vpack.c.b16 %v1511, %v1501
  %v2732 = vpack.c.b16 %v1512, %v1502
  %v2733 = vpack.c.b16 %v1513, %v1503
  %v2734 = vpack.c.b16 %v1514, %v1504
  %v2735 = vpack.c.b16 %v1515, %v1505
  %v2736 = vpack.c.b16 %v1516, %v1506
  %v2737 = vpack.c.b16 %v1517, %v1507
  %v2738 = vpack.c.b16 %v1518, %v1508
  %v2739 = vpack.c.b16 %v1519, %v1509
  %v2740 = vpack.c.b16 %v1530, %v1520
  %v2741 = vpack.c.b16 %v1531, %v1521
  %v2742 = vpack.c.b16 %v1532, %v1522
  %v2743 = vpack.c.b16 %v1533, %v1523
  %v2744 = vpack.c.b16 %v1534, %v1524
  %v2745 = vpack.c.b16 %v1535, %v1525
  %v2746 = vpack.c.b16 %v1536, %v1526
  %v2747 = vpack.c.b16 %v1537, %v1527
  %v2748 = vpack.c.b16 %v1538, %v1528
  %v2749 = vpack.c.b16 %v1539, %v1529
  %v2750 = vpack.c.b16 %v1550, %v1540
  %v2751 = vpack.c.b16 %v1551, %v1541
  %v2752 = vpack.c.b16 %v1552, %v1542
  %v2753 = vpack.c.b16 %v1553, %v1543
  %v2754 = vpack.c.b16 %v1554, %v1544
  %v2755 = vpack.c.b16 %v1555, %v1545
  %v2756 = vpack.c.b16 %v1556, %v1546
  %v2757 = vpack.c.b16 %v1557, %v1547
  %v2758 = vpack.c.b16 %v1558, %v1548
  %v2759 = vpack.c.b16 %v1559, %v1549
  %v2760 = vpack.c.b16 %v1570, %v1560
  %v2761 = vpack.c.b16 %v1571, %v1561
  %v2762 = vpack.c.b16 %v1572, %v1562
  %v2763 = vpack.c.b16 %v1573, %v1563
  %v2764 = vpack.c.b16 %v1574, %v1564
  %v2765 = vpack.c.b16 %v1575, %v1565
  %v2766 = vpack.c.b16 %v1576, %v1566
  %v2767 = vpack.c.b16 %v1577, %v1567
  %v2768 = vpack.c.b16 %v1578, %v1568
  %v2769 = vpack.c.b16 %v1579, %v1569
  %v2770 = vpack.c.b16 %v1590, %v1580
  %v2771 = vpack.c.b16 %v1591, %v1581
  %v2772 = vpack.c.b16 %v1592, %v1582
  %v2773 = vpack.c.b16 %v1593, %v1583
  %v2774 = vpack.c.b16 %v1594, %v1584
  %v2775 = vpack.c.b16 %v1595, %v1585
  %v2776 = vpack.c.b16 %v1596, %v1586
  %v2777 = vpack.c.b16 %v1597, %v1587
  %v2778 = vpack.c.b16 %v1598, %v1588
  %v2779 = vpack.c.b16 %v1599, %v1589
  %v2780 = vpack.c.b16 %v1610, %v1600
  %v2781 = vpack.c.b16 %v1611, %v1601
  %v2782 = vpack.c.b16 %v1612, %v1602
  %v2783 = vpack.c.b16 %v1613, %v1603
  %v2784 = vpack.c.b16 %v1614, %v1604
  %v2785 = vpack.c.b16 %v1615, %v1605
  %v2786 = vpack.c.b16 %v1616, %v1606
  %v2787 = vpack.c.b16 %v1617, %v1607
  %v2788 = vpack.c.b16 %v1618, %v1608
  %v2789 = vpack.c.b16 %v1619, %v1609
  %v2790 = vpack.c.b16 %v1630, %v1620
  %v2791 = vpack.c.b16 %v1631, %v1621
  %v2792 = vpack.c.b16 %v1632, %v1622
  %v2793 = vpack.c.b16 %v1633, %v1623
  %v2794 = vpack.c.b16 %v1634, %v1624
  %v2795 = vpack.c.b16 %v1635, %v1625
  %v2796 = vpack.c.b16 %v1636, %v1626
  %v2797 = vpack.c.b16 %v1637, %v1627
  %v2798 = vpack.c.b16 %v1638, %v1628
  %v2799 = vpack.c.b16 %v1639, %v1629
  %v2800 = vpack.c.b16 %v1650, %v1640
  %v2801 = vpack.c.b16 %v1651, %v1641
  %v2802 = vpack.c.b16 %v1652, %v1642
  %v2803 = vpack.c.b16 %v1653, %v1643
  %v2804 = vpack.c.b16 %v1654, %v1644
  %v2805 = vpack.c.b16 %v1655, %v1645
  %v2806 = vpack.c.b16 %v1656, %v1646
  %v2807 = vpack.c.b16 %v1657, %v1647
  %v2808 = vpack.c.b16 %v1658, %v1648
  %v2809 = vpack.c.b16 %v1659, %v1649
  %v2810 = vpack.c.b16 %v1670, %v1660
  %v2811 = vpack.c.b16 %v1671, %v1661
  %v2812 = vpack.c.b16 %v1672, %v1662
  %v2813 = vpack.c.b16 %v1673, %v1663
  %v2814 = vpack.c.b16 %v1674, %v1664
  %v2815 = vpack.c.b16 %v1675, %v1665
  %v2816 = vpack.c.b16 %v1676, %v1666
  %v2817 = vpack.c.b16 %v1677, %v1667
  %v2818 = vpack.c.b16 %v1678, %v1668
  %v2819 = vpack.c.b16 %v1679, %v1669
  %v2820 = vpack.c.b16 %v1690, %v1680
  %v2821 = vpack.c.b16 %v1691, %v1681
  %v2822 = vpack.c.b16 %v1692, %v1682
  %v2823 = vpack.c.b16 %v1693, %v1683
  %v2824 = vpack.c.b16 %v1694, %v1684
  %v2825 = vpack.c.b16 %v1695, %v1685
  %v2826 = vpack.c.b16 %v1696, %v1686
  %v2827 = vpack.c.b16 %v1697, %v1687
  %v2828 = vpack.c.b16 %v1698, %v1688
  %v2829 = vpack.c.b16 %v1699, %v1689
  %v2830 = vpack.c.b16 %v1710, %v1700
  %v2831 = vpack.c.b16 %v1711, %v1701
  %v2832 = vpack.c.b16 %v1712, %v1702
  %v2833 = vpack.c.b16 %v1713, %v1703
  %v2834 = vpack.c.b16 %v1714, %v1704
  %v2835 = vpack.c.b16 %v1715, %v1705
  %v2836 = vpack.c.b16 %v1716, %v1706
  %v2837 = vpack.c.b16 %v1717, %v1707
  %v2838 = vpack.c.b16 %v1718, %v1708
  %v2839 = vpack.c.b16 %v1719, %v1709
  %v2840 = vpack.c.b16 %v1730, %v1720
  %v2841 = vpack.c.b16 %v1731, %v1721
  %v2842 = vpack.c.b16 %v1732, %v1722
  %v2843 = vpack.c.b16 %v1733, %v1723
  %v2844 = vpack.c.b16 %v1734, %v1724
  %v2845 = vpack.c.b16 %v1735, %v1725
  %v2846 = vpack.c.b16 %v1736, %v1726
  %v2847 = vpack.c.b16 %v1737, %v1727
  %v2848 = vpack.c.b16 %v1738, %v1728
  %v2849 = vpack.c.b16 %v1739, %v1729
  %v2850 = vpack.c.b16 %v1750, %v1740
  %v2851 = vpack.c.b16 %v1751, %v1741
  %v2852 = vpack.c.b16 %v1752, %v1742
  %v2853 = vpack.c.b16 %v1753, %v1743
  %v2854 = vpack.c.b16 %v1754, %v1744
  %v2855 = vpack.c.b16 %v1755, %v1745
  %v2856 = vpack.c.b16 %v1756, %v1746
  %v2857 = vpack.c.b16 %v1757, %v1747
  %v2858 = vpack.c.b16 %v1758, %v1748
  %v2859 = vpack.c.b16 %v1759, %v1749
  %v2860 = vpack.c.b16 %v1770, %v1760
  %v2861 = vpack.c.b16 %v1771, %v1761
  %v2862 = vpack.c.b16 %v1772, %v1762
  %v2863 = vpack.c.b16 %v1773, %v1763
  %v2864 = vpack.c.b16 %v1774, %v1764
  %v2865 = vpack.c.b16 %v1775, %v1765
  %v2866 = vpack.c.b16 %v1776, %v1766
  %v2867 = vpack.c.b16 %v1777, %v1767
  %v2868 = vpack.c.b16 %v1778, %v1768
  %v2869 = vpack.c.b16 %v1779, %v1769
  %v2870 = vpack.c.b16 %v1790, %v1780
  %v2871 = vpack.c.b16 %v1791, %v1781
  %v2872 = vpack.c.b16 %v1792, %v1782
  %v2873 = vpack.c.b16 %v1793, %v1783
  %v2874 = vpack.c.b16 %v1794, %v1784
  %v2875 = vpack.c.b16 %v1795, %v1785
  %v2876 = vpack.c.b16 %v1796, %v1786
  %v2877 = vpack.c.b16 %v1797, %v1787
  %v2878 = vpack.c.b16 %v1798, %v1788
  %v2879 = vpack.c.b16 %v1799, %v1789
  %v2880 = vpack.c.b16 %v1810, %v1800
  %v2881 = vpack.c.b16 %v1811, %v1801
  %v2882 = vpack.c.b16 %v1812, %v1802
  %v2883 = vpack.c.b16 %v1813, %v1803
  %v2884 = vpack.c.b16 %v1814, %v1804
  %v2885 = vpack.c.b16 %v1815, %v1805
  %v2886 = vpack.c.b16 %v1816, %v1806
  %v2887 = vpack.c.b16 %v1817, %v1807
  %v2888 = vpack.c.b16 %v1818, %v1808
  %v2889 = vpack.c.b16 %v1819, %v1809
  %v2890 = vpack.c.b16 %v1830, %v1820
  %v2891 = vpack.c.b16 %v1831, %v1821
  %v2892 = vpack.c.b16 %v1832, %v1822
  %v2893 = vpack.c.b16 %v1833, %v1823
  %v2894 = vpack.c.b16 %v1834, %v1824
  %v2895 = vpack.c.b16 %v1835, %v1825
  %v2896 = vpack.c.b16 %v1836, %v1826
  %v2897 = vpack.c.b16 %v1837, %v1827
  %v2898 = vpack.c.b16 %v1838, %v1828
  %v2899 = vpack.c.b16 %v1839, %v1829
  %v2900 = vpack.c.b16 %v1850, %v1840
  %v2901 = vpack.c.b16 %v1851, %v1841
  %v2902 = vpack.c.b16 %v1852, %v1842
  %v2903 = vpack.c.b16 %v1853, %v1843
  %v2904 = vpack.c.b16 %v1854, %v1844
  %v2905 = vpack.c.b16 %v1855, %v1845
  %v2906 = vpack.c.b16 %v1856, %v1846
  %v2907 = vpack.c.b16 %v1857, %v1847
  %v2908 = vpack.c.b16 %v1858, %v1848
  %v2909 = vpack.c.b16 %v1859, %v1849
  %v2910 = vpack.c.b16 %v1870, %v1860
  %v2911 = vpack.c.b16 %v1871, %v1861
  %v2912 = vpack.c.b16 %v1872, %v1862
  %v2913 = vpack.c.b16 %v1873, %v1863
  %v2914 = vpack.c.b16 %v1874, %v1864
  %v2915 = vpack.c.b16 %v1875, %v1865
  %v2916 = vpack.c.b16 %v1876, %v1866
  %v2917 = vpack.c.b16 %v1877, %v1867
  %v2918 = vpack.c.b16 %v1878, %v1868
  %v2919 = vpack.c.b16 %v1879, %v1869
  %v2920 = vpack.c.b16 %v1890, %v1880
  %v2921 = vpack.c.b16 %v1891, %v1881
  %v2922 = vpack.c.b16 %v1892, %v1882
  %v2923 = vpack.c.b16 %v1893, %v1883
  %v2924 = vpack.c.b16 %v1894, %v1884
  %v2925 = vpack.c.b16 %v1895, %v1885
  %v2926 = vpack.c.b16 %v1896, %v1886
  %v2927 = vpack.c.b16 %v1897, %v1887
  %v2928 = vpack.c.b16 %v1898, %v1888
  %v2929 = vpack.c.b16 %v1899, %v1889
  %v2930 = vpack.c.b16 %v1910, %v1900
  %v2931 = vpack.c.b16 %v1911, %v1901
  %v2932 = vpack.c.b16 %v1912, %v1902
  %v2933 = vpack.c.b16 %v1913, %v1903
  %v2934 = vpack.c.b16 %v1914, %v1904
  %v2935 = vpack.c.b16 %v1915, %v1905
  %v2936 = vpack.c.b16 %v1916, %v1906
  %v2937 = vpack.c.b16 %v1917, %v1907
  %v2938 = vpack.c.b16 %v1918, %v1908
  %v2939 = vpack.c.b16 %v1919, %v1909
  %v2940 = vpack.c.b16 %v1930, %v1920
  %v2941 = vpack.c.b16 %v1931, %v1921
  %v2942 = vpack.c.b16 %v1932, %v1922
  %v2943 = vpack.c.b16 %v1933, %v1923
  %v2944 = vpack.c.b16 %v1934, %v1924
  %v2945 = vpack.c.b16 %v1935, %v1925
  %v2946 = vpack.c.b16 %v1936, %v1926
  %v2947 = vpack.c.b16 %v1937, %v1927
  %v2948 = vpack.c.b16 %v1938, %v1928
  %v2949 = vpack.c.b16 %v1939, %v1929
  %v2950 = vpack.c.b16 %v1950, %v1940
  %v2951 = vpack.c.b16 %v1951, %v1941
  %v2952 = vpack.c.b16 %v1952, %v1942
  %v2953 = vpack.c.b16 %v1953, %v1943
  %v2954 = vpack.c.b16 %v1954, %v1944
  %v2955 = vpack.c.b16 %v1955, %v1945
  %v2956 = vpack.c.b16 %v1956, %v1946
  %v2957 = vpack.c.b16 %v1957, %v1947
  %v2958 = vpack.c.b16 %v1958, %v1948
  %v2959 = vpack.c.b16 %v1959, %v1949
  %v2960 = vpack.c.b16 %v1970, %v1960
  %v2961 = vpack.c.b16 %v1971, %v1961
  %v2962 = vpack.c.b16 %v1972, %v1962
  %v2963 = vpack.c.b16 %v1973, %v1963
  %v2964 = vpack.c.b16 %v1974, %v1964
  %v2965 = vpack.c.b16 %v1975, %v1965
  %v2966 = vpack.c.b16 %v1976, %v1966
  %v2967 = vpack.c.b16 %v1977, %v1967
  %v2968 = vpack.c.b16 %v1978, %v1968
  %v2969 = vpack.c.b16 %v1979, %v1969
  %v2970 = vpack.c.b16 %v1990, %v1980
  %v2971 = vpack.c.b16 %v1991, %v1981
  %v2972 = vpack.c.b16 %v1992, %v1982
  %v2973 = vpack.c.b16 %v1993, %v1983
  %v2974 = vpack.c.b16 %v1994, %v1984
  %v2975 = vpack.c.b16 %v1995, %v1985
  %v2976 = vpack.c.b16 %v1996, %v1986
  %v2977 = vpack.c.b16 %v1997, %v1987
  %v2978 = vpack.c.b16 %v1998, %v1988
  %v2979 = vpack.c.b16 %v1999, %v1989
  %v2980 = vpack.c.b16 %v2010, %v2000
  %v2981 = vpack.c.b16 %v2011, %v2001
  %v2982 = vpack.c.b16 %v2012, %v2002
  %v2983 = vpack.c.b16 %v2013, %v2003
  %v2984 = vpack.c.b16 %v2014, %v2004
  %v2985 = vpack.c.b16 %v2015, %v2005
  %v2986 = vpack.c.b16 %v2016, %v2006
  %v2987 = vpack.c.b16 %v2017, %v2007
  %v2988 = vpack.c.b16 %v2018, %v2008
  %v2989 = vpack.c.b16 %v2019, %v2009
  %v2990 = vpack.c.b16 %v2030, %v2020
  %v2991 = vpack.c.b16 %v2031, %v2021
  %v2992 = vpack.c.b16 %v2032, %v2022
  %v2993 = vpack.c.b16 %v2033, %v2023
  %v2994 = vpack.c.b16 %v2034, %v2024
  %v2995 = vpack.c.b16 %v2035, %v2025
  %v2996 = vpack.c.b16 %v2036, %v2026
  %v2997 = vpack.c.b16 %v2037, %v2027
  %v2998 = vpack.c.b16 %v2038, %v2028
  %v2999 = vpack.c.b16 %v2039, %v2029
  %v3000 = vpack.c.b16 %v2050, %v2040
  %v3001 = vpack.c.b16 %v2051, %v2041
  %v3002 = vpack.c.b16 %v2052, %v2042
  %v3003 = vpack.c.b16 %v2053, %v2043
  %v3004 = vpack.c.b16 %v2054, %v2044
  %v3005 = vpack.c.b16 %v2055, %v2045
  %v3006 = vpack.c.b16 %v2056, %v2046
  %v3007 = vpack.c.b16 %v2057, %v2047
  %v3008 = vpack.c.b16 %v2058, %v2048
  %v3009 = vpack.c.b16 %v2059, %v2049
  %v3010 = vpack.c.b16 %v2070, %v2060
  %v3011 = vpack.c.b16 %v2071, %v2061
  %v3012 = vpack.c.b16 %v2072, %v2062
  %v3013 = vpack.c.b16 %v2073, %v2063
  %v3014 = vpack.c.b16 %v2074, %v2064
  %v3015 = vpack.c.b16 %v2075, %v2065
  %v3016 = vpack.c.b16 %v2076, %v2066
  %v3017 = vpack.c.b16 %v2077, %v2067
  %v3018 = vpack.c.b16 %v2078, %v2068
  %v3019 = vpack.c.b16 %v2079, %v2069
  %v3020 = vpack.c.b16 %v2090, %v2080
  %v3021 = vpack.c.b16 %v2091, %v2081
  %v3022 = vpack.c.b16 %v2092, %v2082
  %v3023 = vpack.c.b16 %v2093, %v2083
  %v3024 = vpack.c.b16 %v2094, %v2084
  %v3025 = vpack.c.b16 %v2095, %v2085
  %v3026 = vpack.c.b16 %v2096, %v2086
  %v3027 = vpack.c.b16 %v2097, %v2087
  %v3028 = vpack.c.b16 %v2098, %v2088
  %v3029 = vpack.c.b16 %v2099, %v2089
  %v3030 = vpack.c.b16 %v2110, %v2100
  %v3031 = vpack.c.b16 %v2111, %v2101
  %v3032 = vpack.c.b16 %v2112, %v2102
  %v3033 = vpack.c.b16 %v2113, %v2103
  %v3034 = vpack.c.b16 %v2114, %v2104
  %v3035 = vpack.c.b16 %v2115, %v2105
  %v3036 = vpack.c.b16 %v2116, %v2106
  %v3037 = vpack.c.b16 %v2117, %v2107
  %v3038 = vpack.c.b16 %v2118, %v2108
  %v3039 = vpack.c.b16 %v2119, %v2109
  %v3040 = vpack.c.b16 %v2130, %v2120
  %v3041 = vpack.c.b16 %v2131, %v2121
  %v3042 = vpack.c.b16 %v2132, %v2122
  %v3043 = vpack.c.b16 %v2133, %v2123
  %v3044 = vpack.c.b16 %v2134, %v2124
  %v3045 = vpack.c.b16 %v2135, %v2125
  %v3046 = vpack.c.b16 %v2136, %v2126
  %v3047 = vpack.c.b16 %v2137, %v2127
  %v3048 = vpack.c.b16 %v2138, %v2128
  %v3049 = vpack.c.b16 %v2139, %v2129
  %v3050 = vpack.c.b16 %v2150, %v2140
  %v3051 = vpack.c.b16 %v2151, %v2141
  %v3052 = vpack.c.b16 %v2152, %v2142
  %v3053 = vpack.c.b16 %v2153, %v2143
  %v3054 = vpack.c.b16 %v2154, %v2144
  %v3055 = vpack.c.b16 %v2155, %v2145
  %v3056 = vpack.c.b16 %v2156, %v2146
  %v3057 = vpack.c.b16 %v2157, %v2147
  %v3058 = vpack.c.b16 %v2158, %v2148
  %v3059 = vpack.c.b16 %v2159, %v2149
  %v3060 = vpack.c.b16 %v2170, %v2160
  %v3061 = vpack.c.b16 %v2171, %v2161
  %v3062 = vpack.c.b16 %v2172, %v2162
  %v3063 = vpack.c.b16 %v2173, %v2163
  %v3064 = vpack.c.b16 %v2174, %v2164
  %v3065 = vpack.c.b16 %v2175, %v2165
  %v3066 = vpack.c.b16 %v2176, %v2166
  %v3067 = vpack.c.b16 %v2177, %v2167
  %v3068 = vpack.c.b16 %v2178, %v2168
  %v3069 = vpack.c.b16 %v2179, %v2169
  %v3070 = vpack.c.b16 %v2190, %v2180
  %v3071 = vpack.c.b16 %v2191, %v2181
  %v3072 = vpack.c.b16 %v2192, %v2182
  %v3073 = vpack.c.b16 %v2193, %v2183
  %v3074 = vpack.c.b16 %v2194, %v2184
  %v3075 = vpack.c.b16 %v2195, %v2185
  %v3076 = vpack.c.b16 %v2196, %v2186
  %v3077 = vpack.c.b16 %v2197, %v2187
  %v3078 = vpack.c.b16 %v2198, %v2188
  %v3079 = vpack.c.b16 %v2199, %v2189
  %v3080 = vpack.c.b16 %v2210, %v2200
  %v3081 = vpack.c.b16 %v2211, %v2201
  %v3082 = vpack.c.b16 %v2212, %v2202
  %v3083 = vpack.c.b16 %v2213, %v2203
  %v3084 = vpack.c.b16 %v2214, %v2204
  %v3085 = vpack.c.b16 %v2215, %v2205
  %v3086 = vpack.c.b16 %v2216, %v2206
  %v3087 = vpack.c.b16 %v2217, %v2207
  %v3088 = vpack.c.b16 %v2218, %v2208
  %v3089 = vpack.c.b16 %v2219, %v2209
  %v3090 = vpack.c.b16 %v2230, %v2220
  %v3091 = vpack.c.b16 %v2231, %v2221
  %v3092 = vpack.c.b16 %v2232, %v2222
  %v3093 = vpack.c.b16 %v2233, %v2223
  %v3094 = vpack.c.b16 %v2234, %v2224
  %v3095 = vpack.c.b16 %v2235, %v2225
  %v3096 = vpack.c.b16 %v2236, %v2226
  %v3097 = vpack.c.b16 %v2237, %v2227
  %v3098 = vpack.c.b16 %v2238, %v2228
  %v3099 = vpack.c.b16 %v2239, %v2229
  %v3100 = vpack.c.b16 %v2250, %v2240
  %v3101 = vpack.c.b16 %v2251, %v2241
  %v3102 = vpack.c.b16 %v2252, %v2242
  %v3103 = vpack.c.b16 %v2253, %v2243
  %v3104 = vpack.c.b16 %v2254, %v2244
  %v3105 = vpack.c.b16 %v2255, %v2245
  %v3106 = vpack.c.b16 %v2256, %v2246
  %v3107 = vpack.c.b16 %v2257, %v2247
  %v3108 = vpack.c.b16 %v2258, %v2248
  %v3109 = vpack.c.b16 %v2259, %v2249
  %v3110 = vpack.c.b16 %v2270, %v2260
  %v3111 = vpack.c.b16 %v2271, %v2261
  %v3112 = vpack.c.b16 %v2272, %v2262
  %v3113 = vpack.c.b16 %v2273, %v2263
  %v3114 = vpack.c.b16 %v2274, %v2264
  %v3115 = vpack.c.b16 %v2275, %v2265
  %v3116 = vpack.c.b16 %v2276, %v2266
  %v3117 = vpack.c.b16 %v2277, %v2267
  %v3118 = vpack.c.b16 %v2278, %v2268
  %v3119 = vpack.c.b16 %v2279, %v2269
  %v3120 = vpack.c.b16 %v2290, %v2280
  %v3121 = vpack.c.b16 %v2291, %v2281
  %v3122 = vpack.c.b16 %v2292, %v2282
  %v3123 = vpack.c.b16 %v2293, %v2283
  %v3124 = vpack.c.b16 %v2294, %v2284
  %v3125 = vpack.c.b16 %v2295, %v2285
  %v3126 = vpack.c.b16 %v2296, %v2286
  %v3127 = vpack.c.b16 %v2297, %v2287
  %v3128 = vpack.c.b16 %v2298, %v2288
  %v3129 = vpack.c.b16 %v2299, %v2289
  %v3130 = vpack.c.b16 %v2310, %v2300
  %v3131 = vpack.c.b16 %v2311, %v2301
  %v3132 = vpack.c.b16 %v2312, %v2302
  %v3133 = vpack.c.b16 %v2313, %v2303
  %v3134 = vpack.c.b16 %v2314, %v2304
  %v3135 = vpack.c.b16 %v2315, %v2305
  %v3136 = vpack.c.b16 %v2316, %v2306
  %v3137 = vpack.c.b16 %v2317, %v2307
  %v3138 = vpack.c.b16 %v2318, %v2308
  %v3139 = vpack.c.b16 %v2319, %v2309
  %v3140 = vpack.c.b16 %v2330, %v2320
  %v3141 = vpack.c.b16 %v2331, %v2321
  %v3142 = vpack.c.b16 %v2332, %v2322
  %v3143 = vpack.c.b16 %v2333, %v2323
  %v3144 = vpack.c.b16 %v2334, %v2324
  %v3145 = vpack.c.b16 %v2335, %v2325
  %v3146 = vpack.c.b16 %v2336, %v2326
  %v3147 = vpack.c.b16 %v2337, %v2327
  %v3148 = vpack.c.b16 %v2338, %v2328
  %v3149 = vpack.c.b16 %v2339, %v2329
  %v3150 = vpack.c.b16 %v2350, %v2340
  %v3151 = vpack.c.b16 %v2351, %v2341
  %v3152 = vpack.c.b16 %v2352, %v2342
  %v3153 = vpack.c.b16 %v2353, %v2343
  %v3154 = vpack.c.b16 %v2354, %v2344
  %v3155 = vpack.c.b16 %v2355, %v2345
  %v3156 = vpack.c.b16 %v2356, %v2346
  %v3157 = vpack.c.b16 %v2357, %v2347
  %v3158 = vpack.c.b16 %v2358, %v2348
  %v3159 = vpack.c.b16 %v2359, %v2349
  %v3160 = vpack.c.b16 %v2370, %v2360
  %v3161 = vpack.c.b16 %v2371, %v2361
  %v3162 = vpack.c.b16 %v2372, %v2362
  %v3163 = vpack.c.b16 %v2373, %v2363
  %v3164 = vpack.c.b16 %v2374, %v2364
  %v3165 = vpack.c.b16 %v2375, %v2365
  %v3166 = vpack.c.b16 %v2376, %v2366
  %v3167 = vpack.c.b16 %v2377, %v2367
  %v3168 = vpack.c.b16 %v2378, %v2368
  %v3169 = vpack.c.b16 %v2379, %v2369
  %v3170 = vpack.c.b16 %v2390, %v2380
  %v3171 = vpack.c.b16 %v2391, %v2381
  %v3172 = vpack.c.b16 %v2392, %v2382
  %v3173 = vpack.c.b16 %v2393, %v2383
  %v3174 = vpack.c.b16 %v2394, %v2384
  %v3175 = vpack.c.b16 %v2395, %v2385
  %v3176 = vpack.c.b16 %v2396, %v2386
  %v3177 = vpack.c.b16 %v2397, %v2387
  %v3178 = vpack.c.b16 %v2398, %v2388
  %v3179 = vpack.c.b16 %v2399, %v2389
  %v3180 = vpack.c.b16 %v2410, %v2400
  %v3181 = vpack.c.b16 %v2411, %v2401
  %v3182 = vpack.c.b16 %v2412, %v2402
  %v3183 = vpack.c.b16 %v2413, %v2403
  %v3184 = vpack.c.b16 %v2414, %v2404
  %v3185 = vpack.c.b16 %v2415, %v2405
  %v3186 = vpack.c.b16 %v2416, %v2406
  %v3187 = vpack.c.b16 %v2417, %v2407
  %v3188 = vpack.c.b16 %v2418, %v2408
  %v3189 = vpack.c.b16 %v2419, %v2409
  %v3190 = vpack.c.b16 %v2430, %v2420
  %v3191 = vpack.c.b16 %v2431, %v2421
  %v3192 = vpack.c.b16 %v2432, %v2422
  %v3193 = vpack.c.b16 %v2433, %v2423
  %v3194 = vpack.c.b16 %v2434, %v2424
  %v3195 = vpack.c.b16 %v2435, %v2425
  %v3196 = vpack.c.b16 %v2436, %v2426
  %v3197 = vpack.c.b16 %v2437, %v2427
  %v3198 = vpack.c.b16 %v2438, %v2428
  %v3199 = vpack.c.b16 %v2439, %v2429
  %v3200 = vpack.c.b16 %v2450, %v2440
  %v3201 = vpack.c.b16 %v2451, %v2441
  %v3202 = vpack.c.b16 %v2452, %v2442
  %v3203 = vpack.c.b16 %v2453, %v2443
  %v3204 = vpack.c.b16 %v2454, %v2444
  %v3205 = vpack.c.b16 %v2455, %v2445
  %v3206 = vpack.c.b16 %v2456, %v2446
  %v3207 = vpack.c.b16 %v2457, %v2447
  %v3208 = vpack.c.b16 %v2458, %v2448
  %v3209 = vpack.c.b16 %v2459, %v2449
  %v3210 = vpack.c.b16 %v2470, %v2460
  %v3211 = vpack.c.b16 %v2471, %v2461
  %v3212 = vpack.c.b16 %v2472, %v2462
  %v3213 = vpack.c.b16 %v2473, %v2463
  %v3214 = vpack.c.b16 %v2474, %v2464
  %v3215 = vpack.c.b16 %v2475, %v2465
  %v3216 = vpack.c.b16 %v2476, %v2466
  %v3217 = vpack.c.b16 %v2477, %v2467
  %v3218 = vpack.c.b16 %v2478, %v2468
  %v3219 = vpack.c.b16 %v2479, %v2469
  %v3220 = vpack.c.b16 %v2490, %v2480
  %v3221 = vpack.c.b16 %v2491, %v2481
  %v3222 = vpack.c.b16 %v2492, %v2482
  %v3223 = vpack.c.b16 %v2493, %v2483
  %v3224 = vpack.c.b16 %v2494, %v2484
  %v3225 = vpack.c.b16 %v2495, %v2485
  %v3226 = vpack.c.b16 %v2496, %v2486
  %v3227 = vpack.c.b16 %v2497, %v2487
  %v3228 = vpack.c.b16 %v2498, %v2488
  %v3229 = vpack.c.b16 %v2499, %v2489
  %v3230 = vpack.c.b16 %v2510, %v2500
  %v3231 = vpack.c.b16 %v2511, %v2501
  %v3232 = vpack.c.b16 %v2512, %v2502
  %v3233 = vpack.c.b16 %v2513, %v2503
  %v3234 = vpack.c.b16 %v2514, %v2504
  %v3235 = vpack.c.b16 %v2515, %v2505
  %v3236 = vpack.c.b16 %v2516, %v2506
  %v3237 = vpack.c.b16 %v2517, %v2507
  %v3238 = vpack.c.b16 %v2518, %v2508
  %v3239 = vpack.c.b16 %v2519, %v2509
  %v3240 = vpack.c.b16 %v2530, %v2520
  %v3241 = vpack.c.b16 %v2531, %v2521
  %v3242 = vpack.c.b16 %v2532, %v2522
  %v3243 = vpack.c.b16 %v2533, %v2523
  %v3244 = vpack.c.b16 %v2534, %v2524
  %v3245 = vpack.c.b16 %v2535, %v2525
  %v3246 = vpack.c.b16 %v2536, %v2526
  %v3247 = vpack.c.b16 %v2537, %v2527
  %v3248 = vpack.c.b16 %v2538, %v2528
  %v3249 = vpack.c.b16 %v2539, %v2529
  %v3250 = vpack.c.b16 %v2550, %v2540
  %v3251 = vpack.c.b16 %v2551, %v2541
  %v3252 = vpack.c.b16 %v2552, %v2542
  %v3253 = vpack.c.b16 %v2553, %v2543
  %v3254 = vpack.c.b16 %v2554, %v2544
  %v3255 = vpack.c.b16 %v2555, %v2545
  %v3256 = vpack.c.b16 %v2556, %v2546
  %v3257 = vpack.c.b16 %v2557, %v2547
  %v3258 = vpack.c.b16 %v2558, %v2548
  %v3259 = vpack.c.b16 %v2559, %v2549
  %v3260 = vpack.c.b16 %v2570, %v2560
  %v3261 = vpack.c.b16 %v2571, %v2561
  %v3262 = vpack.c.b16 %v2572, %v2562
  %v3263 = vpack.c.b16 %v2573, %v2563
  %v3264 = vpack.c.b16 %v2574, %v2564
  %v3265 = vpack.c.b16 %v2575, %v2565
  %v3266 = vpack.c.b16 %v2576, %v2566
  %v3267 = vpack.c.b16 %v2577, %v2567
  %v3268 = vpack.c.b16 %v2578, %v2568
  %v3269 = vpack.c.b16 %v2579, %v2569
  %v3270 = vpack.c.b16 %v2590, %v2580
  %v3271 = vpack.c.b16 %v2591, %v2581
  %v3272 = vpack.c.b16 %v2592, %v2582
  %v3273 = vpack.c.b16 %v2593, %v2583
  %v3274 = vpack.c.b16 %v2594, %v2584
  %v3275 = vpack.c.b16 %v2595, %v2585
  %v3276 = vpack.c.b16 %v2596, %v2586
  %v3277 = vpack.c.b16 %v2597, %v2587
  %v3278 = vpack.c.b16 %v2598, %v2588
  %v3279 = vpack.c.b16 %v2599, %v2589
  %v3280 = vpack.c.b16 %v2610, %v2600
  %v3281 = vpack.c.b16 %v2611, %v2601
  %v3282 = vpack.c.b16 %v2612, %v2602
  %v3283 = vpack.c.b16 %v2613, %v2603
  %v3284 = vpack.c.b16 %v2614, %v2604
  %v3285 = vpack.c.b16 %v2615, %v2605
  %v3286 = vpack.c.b16 %v2616, %v2606
  %v3287 = vpack.c.b16 %v2617, %v2607
  %v3288 = vpack.c.b16 %v2618, %v2608
  %v3289 = vpack.c.b16 %v2619, %v2609
  %v3290 = vpack.c.b16 %v2630, %v2620
  %v3291 = vpack.c.b16 %v2631, %v2621
  %v3292 = vpack.c.b16 %v2632, %v2622
  %v3293 = vpack.c.b16 %v2633, %v2623
  %v3294 = vpack.c.b16 %v2634, %v2624
  %v3295 = vpack.c.b16 %v2635, %v2625
  %v3296 = vpack.c.b16 %v2636, %v2626
  %v3297 = vpack.c.b16 %v2637, %v2627
  %v3298 = vpack.c.b16 %v2638, %v2628
  %v3299 = vpack.c.b16 %v2639, %v2629
  %v3300 = vpack.c.b16 %v2650, %v2640
  %v3301 = vpack.c.b16 %v2651, %v2641
  %v3302 = vpack.c.b16 %v2652, %v2642
  %v3303 = vpack.c.b16 %v2653, %v2643
  %v3304 = vpack.c.b16 %v2654, %v2644
  %v3305 = vpack.c.b16 %v2655, %v2645
  %v3306 = vpack.c.b16 %v2656, %v2646
  %v3307 = vpack.c.b16 %v2657, %v2647
  %v3308 = vpack.c.b16 %v2658, %v2648
  %v3309 = vpack.c.b16 %v2659, %v2649
  %v3310 = vpack.c.b16 %v2670, %v2660
  %v3311 = vpack.c.b16 %v2671, %v2661
  %v3312 = vpack.c.b16 %v2672, %v2662
  %v3313 = vpack.c.b16 %v2673, %v2663
  %v3314 = vpack.c.b16 %v2674, %v2664
  %v3315 = vpack.c.b16 %v2675, %v2665
  %v3316 = vpack.c.b16 %v2676, %v2666
  %v3317 = vpack.c.b16 %v2677, %v2667
  %v3318 = vpack.c.b16 %v2678, %v2668
  %v3319 = vpack.c.b16 %v2679, %v2669
  %3960 = vmatprep.subr.bf16.mxu0 %v2751
  %3961 = vmatpush1.bf16.msra.mxu0 %v2750
  %3962 = vmatprep.subr.bf16.mxu0 %v2741
  %3963 = vmatpush1.bf16.msra.mxu0 %v2740
  %3964 = vmatprep.subr.bf16.mxu0 %v2731
  %3965 = vmatpush1.bf16.msra.mxu0 %v2730
  %3966 = vmatprep.subr.bf16.mxu0 %v2721
  %3967 = vmatpush1.bf16.msra.mxu0 %v2720
  %3968 = vmatprep.subr.bf16.mxu0 %v2711
  %3969 = vmatpush1.bf16.msra.mxu0 %v2710
  %3970 = vmatprep.subr.bf16.mxu0 %v2701
  %3971 = vmatpush1.bf16.msra.mxu0 %v2700
  %3972 = vmatprep.subr.bf16.mxu0 %v2691
  %3973 = vmatpush1.bf16.msra.mxu0 %v2690
  %3974 = vmatprep.subr.bf16.mxu0 %v2681
  %3975 = vmatpush1.bf16.msra.mxu0 %v2680
  %3976 = vmatprep.subr.bf16.mxu0 %v2831
  %3977 = vmatpush2.bf16.msra.mxu0 %v2830
  %3978 = vmatprep.subr.bf16.mxu0 %v2821
  %3979 = vmatpush2.bf16.msra.mxu0 %v2820
  %3980 = vmatprep.subr.bf16.mxu0 %v2811
  %3981 = vmatpush2.bf16.msra.mxu0 %v2810
  %3982 = vmatprep.subr.bf16.mxu0 %v2801
  %3983 = vmatpush2.bf16.msra.mxu0 %v2800
  %3984 = vmatprep.subr.bf16.mxu0 %v2791
  %3985 = vmatpush2.bf16.msra.mxu0 %v2790
  %3986 = vmatprep.subr.bf16.mxu0 %v2781
  %3987 = vmatpush2.bf16.msra.mxu0 %v2780
  %3988 = vmatprep.subr.bf16.mxu0 %v2771
  %3989 = vmatpush2.bf16.msra.mxu0 %v2770
  %3990 = vmatprep.subr.bf16.mxu0 %v2761
  %3991 = vmatpush2.bf16.msra.mxu0 %v2760
  %3992 = vmatprep.mubr.bf16.mxu0 %v105
  %3993 = vmatmul.mubr.bf16.gmra.mxu0 %v104
  %v3994 = vpop.f32.mrf.mxu0
  %v3995 = vadd.f32 0.0, %v3994
  %v3996 = vpop.f32.mrf.mxu0
  %v3997 = vadd.f32 0.0, %v3996
  %v3998 = vpop.f32.mrf.mxu0
  %v3999 = vadd.f32 0.0, %v3998
  %v4000 = vpop.f32.mrf.mxu0
  %v4001 = vadd.f32 0.0, %v4000
  %4002 = vmatprep.mubr.bf16.mxu0 %v113
  %4003 = vmatmul.mubr.bf16.gmra.mxu0 %v112
  %v4004 = vpop.f32.mrf.mxu0
  %v4005 = vadd.f32 0.0, %v4004
  %v4006 = vpop.f32.mrf.mxu0
  %v4007 = vadd.f32 0.0, %v4006
  %v4008 = vpop.f32.mrf.mxu0
  %v4009 = vpop.f32.mrf.mxu0
  %4010 = vdwg.mxu0
  %4011 = vmatprep.subr.bf16.mxu0 %v2911
  %4012 = vmatpush1.bf16.msra.mxu0 %v2910
  %4013 = vmatprep.subr.bf16.mxu0 %v2901
  %4014 = vmatpush1.bf16.msra.mxu0 %v2900
  %4015 = vmatprep.subr.bf16.mxu0 %v2891
  %4016 = vmatpush1.bf16.msra.mxu0 %v2890
  %4017 = vmatprep.subr.bf16.mxu0 %v2881
  %4018 = vmatpush1.bf16.msra.mxu0 %v2880
  %4019 = vmatprep.subr.bf16.mxu0 %v2871
  %4020 = vmatpush1.bf16.msra.mxu0 %v2870
  %4021 = vmatprep.subr.bf16.mxu0 %v2861
  %4022 = vmatpush1.bf16.msra.mxu0 %v2860
  %4023 = vmatprep.subr.bf16.mxu0 %v2851
  %4024 = vmatpush1.bf16.msra.mxu0 %v2850
  %4025 = vmatprep.subr.bf16.mxu0 %v2841
  %4026 = vmatpush1.bf16.msra.mxu0 %v2840
  %4027 = vmatprep.subr.bf16.mxu0 %v2991
  %4028 = vmatpush2.bf16.msra.mxu0 %v2990
  %4029 = vmatprep.subr.bf16.mxu0 %v2981
  %4030 = vmatpush2.bf16.msra.mxu0 %v2980
  %4031 = vmatprep.subr.bf16.mxu0 %v2971
  %4032 = vmatpush2.bf16.msra.mxu0 %v2970
  %4033 = vmatprep.subr.bf16.mxu0 %v2961
  %4034 = vmatpush2.bf16.msra.mxu0 %v2960
  %4035 = vmatprep.subr.bf16.mxu0 %v2951
  %4036 = vmatpush2.bf16.msra.mxu0 %v2950
  %4037 = vmatprep.subr.bf16.mxu0 %v2941
  %4038 = vmatpush2.bf16.msra.mxu0 %v2940
  %4039 = vmatprep.subr.bf16.mxu0 %v2931
  %4040 = vmatpush2.bf16.msra.mxu0 %v2930
  %4041 = vmatprep.subr.bf16.mxu0 %v2921
  %4042 = vmatpush2.bf16.msra.mxu0 %v2920
  %4043 = vmatprep.mubr.bf16.mxu0 %v107
  %4044 = vmatmul.mubr.bf16.gmra.mxu0 %v106
  %v4045 = vpop.f32.mrf.mxu0
  %v4046 = vadd.f32 %v3995, %v4045
  %v4047 = vpop.f32.mrf.mxu0
  %v4048 = vadd.f32 %v3997, %v4047
  %v4049 = vpop.f32.mrf.mxu0
  %v4050 = vadd.f32 %v3999, %v4049
  %v4051 = vpop.f32.mrf.mxu0
  %v4052 = vadd.f32 %v4001, %v4051
  %4053 = vmatprep.mubr.bf16.mxu0 %v115
  %4054 = vmatmul.mubr.bf16.gmra.mxu0 %v114
  %v4055 = vpop.f32.mrf.mxu0
  %v4056 = vadd.f32 %v4005, %v4055
  %v4057 = vpop.f32.mrf.mxu0
  %v4058 = vadd.f32 %v4007, %v4057
  %v4059 = vpop.f32.mrf.mxu0
  %v4060 = vpop.f32.mrf.mxu0
  %4061 = vdwg.mxu0
  %4062 = vmatprep.subr.bf16.mxu0 %v3071
  %4063 = vmatpush1.bf16.msra.mxu0 %v3070
  %4064 = vmatprep.subr.bf16.mxu0 %v3061
  %4065 = vmatpush1.bf16.msra.mxu0 %v3060
  %4066 = vmatprep.subr.bf16.mxu0 %v3051
  %4067 = vmatpush1.bf16.msra.mxu0 %v3050
  %4068 = vmatprep.subr.bf16.mxu0 %v3041
  %4069 = vmatpush1.bf16.msra.mxu0 %v3040
  %4070 = vmatprep.subr.bf16.mxu0 %v3031
  %4071 = vmatpush1.bf16.msra.mxu0 %v3030
  %4072 = vmatprep.subr.bf16.mxu0 %v3021
  %4073 = vmatpush1.bf16.msra.mxu0 %v3020
  %4074 = vmatprep.subr.bf16.mxu0 %v3011
  %4075 = vmatpush1.bf16.msra.mxu0 %v3010
  %4076 = vmatprep.subr.bf16.mxu0 %v3001
  %4077 = vmatpush1.bf16.msra.mxu0 %v3000
  %4078 = vmatprep.subr.bf16.mxu0 %v3151
  %4079 = vmatpush2.bf16.msra.mxu0 %v3150
  %4080 = vmatprep.subr.bf16.mxu0 %v3141
  %4081 = vmatpush2.bf16.msra.mxu0 %v3140
  %4082 = vmatprep.subr.bf16.mxu0 %v3131
  %4083 = vmatpush2.bf16.msra.mxu0 %v3130
  %4084 = vmatprep.subr.bf16.mxu0 %v3121
  %4085 = vmatpush2.bf16.msra.mxu0 %v3120
  %4086 = vmatprep.subr.bf16.mxu0 %v3111
  %4087 = vmatpush2.bf16.msra.mxu0 %v3110
  %4088 = vmatprep.subr.bf16.mxu0 %v3101
  %4089 = vmatpush2.bf16.msra.mxu0 %v3100
  %4090 = vmatprep.subr.bf16.mxu0 %v3091
  %4091 = vmatpush2.bf16.msra.mxu0 %v3090
  %4092 = vmatprep.subr.bf16.mxu0 %v3081
  %4093 = vmatpush2.bf16.msra.mxu0 %v3080
  %4094 = vmatprep.mubr.bf16.mxu0 %v109
  %4095 = vmatmul.mubr.bf16.gmra.mxu0 %v108
  %v4096 = vpop.f32.mrf.mxu0
  %v4097 = vadd.f32 %v4046, %v4096
  %v4098 = vpop.f32.mrf.mxu0
  %v4099 = vadd.f32 %v4048, %v4098
  %v4100 = vpop.f32.mrf.mxu0
  %v4101 = vadd.f32 %v4050, %v4100
  %v4102 = vpop.f32.mrf.mxu0
  %v4103 = vadd.f32 %v4052, %v4102
  %4104 = vmatprep.mubr.bf16.mxu0 %v117
  %4105 = vmatmul.mubr.bf16.gmra.mxu0 %v116
  %v4106 = vpop.f32.mrf.mxu0
  %v4107 = vadd.f32 %v4056, %v4106
  %v4108 = vpop.f32.mrf.mxu0
  %v4109 = vadd.f32 %v4058, %v4108
  %v4110 = vpop.f32.mrf.mxu0
  %v4111 = vpop.f32.mrf.mxu0
  %4112 = vdwg.mxu0
  %4113 = vmatprep.subr.bf16.mxu0 %v3231
  %4114 = vmatpush1.bf16.msra.mxu0 %v3230
  %4115 = vmatprep.subr.bf16.mxu0 %v3221
  %4116 = vmatpush1.bf16.msra.mxu0 %v3220
  %4117 = vmatprep.subr.bf16.mxu0 %v3211
  %4118 = vmatpush1.bf16.msra.mxu0 %v3210
  %4119 = vmatprep.subr.bf16.mxu0 %v3201
  %4120 = vmatpush1.bf16.msra.mxu0 %v3200
  %4121 = vmatprep.subr.bf16.mxu0 %v3191
  %4122 = vmatpush1.bf16.msra.mxu0 %v3190
  %4123 = vmatprep.subr.bf16.mxu0 %v3181
  %4124 = vmatpush1.bf16.msra.mxu0 %v3180
  %4125 = vmatprep.subr.bf16.mxu0 %v3171
  %4126 = vmatpush1.bf16.msra.mxu0 %v3170
  %4127 = vmatprep.subr.bf16.mxu0 %v3161
  %4128 = vmatpush1.bf16.msra.mxu0 %v3160
  %4129 = vmatprep.subr.bf16.mxu0 %v3311
  %4130 = vmatpush2.bf16.msra.mxu0 %v3310
  %4131 = vmatprep.subr.bf16.mxu0 %v3301
  %4132 = vmatpush2.bf16.msra.mxu0 %v3300
  %4133 = vmatprep.subr.bf16.mxu0 %v3291
  %4134 = vmatpush2.bf16.msra.mxu0 %v3290
  %4135 = vmatprep.subr.bf16.mxu0 %v3281
  %4136 = vmatpush2.bf16.msra.mxu0 %v3280
  %4137 = vmatprep.subr.bf16.mxu0 %v3271
  %4138 = vmatpush2.bf16.msra.mxu0 %v3270
  %4139 = vmatprep.subr.bf16.mxu0 %v3261
  %4140 = vmatpush2.bf16.msra.mxu0 %v3260
  %4141 = vmatprep.subr.bf16.mxu0 %v3251
  %4142 = vmatpush2.bf16.msra.mxu0 %v3250
  %4143 = vmatprep.subr.bf16.mxu0 %v3241
  %4144 = vmatpush2.bf16.msra.mxu0 %v3240
  %4145 = vmatprep.mubr.bf16.mxu0 %v111
  %4146 = vmatmul.mubr.bf16.gmra.mxu0 %v110
  %v4147 = vpop.f32.mrf.mxu0
  %v4148 = vadd.f32 %v4097, %v4147
  %v4149 = vpop.f32.mrf.mxu0
  %v4150 = vadd.f32 %v4099, %v4149
  %v4151 = vpop.f32.mrf.mxu0
  %v4152 = vadd.f32 %v4101, %v4151
  %v4153 = vpop.f32.mrf.mxu0
  %v4154 = vadd.f32 %v4103, %v4153
  %4155 = vmatprep.mubr.bf16.mxu0 %v119
  %4156 = vmatmul.mubr.bf16.gmra.mxu0 %v118
  %v4157 = vpop.f32.mrf.mxu0
  %v4158 = vadd.f32 %v4107, %v4157
  %v4159 = vpop.f32.mrf.mxu0
  %v4160 = vadd.f32 %v4109, %v4159
  %v4161 = vpop.f32.mrf.mxu0
  %v4162 = vpop.f32.mrf.mxu0
  %4163 = vdwg.mxu0
  %4164 = vmatprep.subr.bf16.mxu0 %v2753
  %4165 = vmatpush1.bf16.msra.mxu0 %v2752
  %4166 = vmatprep.subr.bf16.mxu0 %v2743
  %4167 = vmatpush1.bf16.msra.mxu0 %v2742
  %4168 = vmatprep.subr.bf16.mxu0 %v2733
  %4169 = vmatpush1.bf16.msra.mxu0 %v2732
  %4170 = vmatprep.subr.bf16.mxu0 %v2723
  %4171 = vmatpush1.bf16.msra.mxu0 %v2722
  %4172 = vmatprep.subr.bf16.mxu0 %v2713
  %4173 = vmatpush1.bf16.msra.mxu0 %v2712
  %4174 = vmatprep.subr.bf16.mxu0 %v2703
  %4175 = vmatpush1.bf16.msra.mxu0 %v2702
  %4176 = vmatprep.subr.bf16.mxu0 %v2693
  %4177 = vmatpush1.bf16.msra.mxu0 %v2692
  %4178 = vmatprep.subr.bf16.mxu0 %v2683
  %4179 = vmatpush1.bf16.msra.mxu0 %v2682
  %4180 = vmatprep.subr.bf16.mxu0 %v2833
  %4181 = vmatpush2.bf16.msra.mxu0 %v2832
  %4182 = vmatprep.subr.bf16.mxu0 %v2823
  %4183 = vmatpush2.bf16.msra.mxu0 %v2822
  %4184 = vmatprep.subr.bf16.mxu0 %v2813
  %4185 = vmatpush2.bf16.msra.mxu0 %v2812
  %4186 = vmatprep.subr.bf16.mxu0 %v2803
  %4187 = vmatpush2.bf16.msra.mxu0 %v2802
  %4188 = vmatprep.subr.bf16.mxu0 %v2793
  %4189 = vmatpush2.bf16.msra.mxu0 %v2792
  %4190 = vmatprep.subr.bf16.mxu0 %v2783
  %4191 = vmatpush2.bf16.msra.mxu0 %v2782
  %4192 = vmatprep.subr.bf16.mxu0 %v2773
  %4193 = vmatpush2.bf16.msra.mxu0 %v2772
  %4194 = vmatprep.subr.bf16.mxu0 %v2763
  %4195 = vmatpush2.bf16.msra.mxu0 %v2762
  %4196 = vmatprep.mubr.bf16.mxu0 %v105
  %4197 = vmatmul.mubr.bf16.gmra.mxu0 %v104
  %v4198 = vpop.f32.mrf.mxu0
  %v4199 = vadd.f32 0.0, %v4198
  %v4200 = vpop.f32.mrf.mxu0
  %v4201 = vadd.f32 0.0, %v4200
  %v4202 = vpop.f32.mrf.mxu0
  %v4203 = vadd.f32 0.0, %v4202
  %v4204 = vpop.f32.mrf.mxu0
  %v4205 = vadd.f32 0.0, %v4204
  %4206 = vmatprep.mubr.bf16.mxu0 %v113
  %4207 = vmatmul.mubr.bf16.gmra.mxu0 %v112
  %v4208 = vpop.f32.mrf.mxu0
  %v4209 = vadd.f32 0.0, %v4208
  %v4210 = vpop.f32.mrf.mxu0
  %v4211 = vadd.f32 0.0, %v4210
  %v4212 = vpop.f32.mrf.mxu0
  %v4213 = vpop.f32.mrf.mxu0
  %4214 = vdwg.mxu0
  %4215 = vmatprep.subr.bf16.mxu0 %v2913
  %4216 = vmatpush1.bf16.msra.mxu0 %v2912
  %4217 = vmatprep.subr.bf16.mxu0 %v2903
  %4218 = vmatpush1.bf16.msra.mxu0 %v2902
  %4219 = vmatprep.subr.bf16.mxu0 %v2893
  %4220 = vmatpush1.bf16.msra.mxu0 %v2892
  %4221 = vmatprep.subr.bf16.mxu0 %v2883
  %4222 = vmatpush1.bf16.msra.mxu0 %v2882
  %4223 = vmatprep.subr.bf16.mxu0 %v2873
  %4224 = vmatpush1.bf16.msra.mxu0 %v2872
  %4225 = vmatprep.subr.bf16.mxu0 %v2863
  %4226 = vmatpush1.bf16.msra.mxu0 %v2862
  %4227 = vmatprep.subr.bf16.mxu0 %v2853
  %4228 = vmatpush1.bf16.msra.mxu0 %v2852
  %4229 = vmatprep.subr.bf16.mxu0 %v2843
  %4230 = vmatpush1.bf16.msra.mxu0 %v2842
  %4231 = vmatprep.subr.bf16.mxu0 %v2993
  %4232 = vmatpush2.bf16.msra.mxu0 %v2992
  %4233 = vmatprep.subr.bf16.mxu0 %v2983
  %4234 = vmatpush2.bf16.msra.mxu0 %v2982
  %4235 = vmatprep.subr.bf16.mxu0 %v2973
  %4236 = vmatpush2.bf16.msra.mxu0 %v2972
  %4237 = vmatprep.subr.bf16.mxu0 %v2963
  %4238 = vmatpush2.bf16.msra.mxu0 %v2962
  %4239 = vmatprep.subr.bf16.mxu0 %v2953
  %4240 = vmatpush2.bf16.msra.mxu0 %v2952
  %4241 = vmatprep.subr.bf16.mxu0 %v2943
  %4242 = vmatpush2.bf16.msra.mxu0 %v2942
  %4243 = vmatprep.subr.bf16.mxu0 %v2933
  %4244 = vmatpush2.bf16.msra.mxu0 %v2932
  %4245 = vmatprep.subr.bf16.mxu0 %v2923
  %4246 = vmatpush2.bf16.msra.mxu0 %v2922
  %4247 = vmatprep.mubr.bf16.mxu0 %v107
  %4248 = vmatmul.mubr.bf16.gmra.mxu0 %v106
  %v4249 = vpop.f32.mrf.mxu0
  %v4250 = vadd.f32 %v4199, %v4249
  %v4251 = vpop.f32.mrf.mxu0
  %v4252 = vadd.f32 %v4201, %v4251
  %v4253 = vpop.f32.mrf.mxu0
  %v4254 = vadd.f32 %v4203, %v4253
  %v4255 = vpop.f32.mrf.mxu0
  %v4256 = vadd.f32 %v4205, %v4255
  %4257 = vmatprep.mubr.bf16.mxu0 %v115
  %4258 = vmatmul.mubr.bf16.gmra.mxu0 %v114
  %v4259 = vpop.f32.mrf.mxu0
  %v4260 = vadd.f32 %v4209, %v4259
  %v4261 = vpop.f32.mrf.mxu0
  %v4262 = vadd.f32 %v4211, %v4261
  %v4263 = vpop.f32.mrf.mxu0
  %v4264 = vpop.f32.mrf.mxu0
  %4265 = vdwg.mxu0
  %4266 = vmatprep.subr.bf16.mxu0 %v3073
  %4267 = vmatpush1.bf16.msra.mxu0 %v3072
  %4268 = vmatprep.subr.bf16.mxu0 %v3063
  %4269 = vmatpush1.bf16.msra.mxu0 %v3062
  %4270 = vmatprep.subr.bf16.mxu0 %v3053
  %4271 = vmatpush1.bf16.msra.mxu0 %v3052
  %4272 = vmatprep.subr.bf16.mxu0 %v3043
  %4273 = vmatpush1.bf16.msra.mxu0 %v3042
  %4274 = vmatprep.subr.bf16.mxu0 %v3033
  %4275 = vmatpush1.bf16.msra.mxu0 %v3032
  %4276 = vmatprep.subr.bf16.mxu0 %v3023
  %4277 = vmatpush1.bf16.msra.mxu0 %v3022
  %4278 = vmatprep.subr.bf16.mxu0 %v3013
  %4279 = vmatpush1.bf16.msra.mxu0 %v3012
  %4280 = vmatprep.subr.bf16.mxu0 %v3003
  %4281 = vmatpush1.bf16.msra.mxu0 %v3002
  %4282 = vmatprep.subr.bf16.mxu0 %v3153
  %4283 = vmatpush2.bf16.msra.mxu0 %v3152
  %4284 = vmatprep.subr.bf16.mxu0 %v3143
  %4285 = vmatpush2.bf16.msra.mxu0 %v3142
  %4286 = vmatprep.subr.bf16.mxu0 %v3133
  %4287 = vmatpush2.bf16.msra.mxu0 %v3132
  %4288 = vmatprep.subr.bf16.mxu0 %v3123
  %4289 = vmatpush2.bf16.msra.mxu0 %v3122
  %4290 = vmatprep.subr.bf16.mxu0 %v3113
  %4291 = vmatpush2.bf16.msra.mxu0 %v3112
  %4292 = vmatprep.subr.bf16.mxu0 %v3103
  %4293 = vmatpush2.bf16.msra.mxu0 %v3102
  %4294 = vmatprep.subr.bf16.mxu0 %v3093
  %4295 = vmatpush2.bf16.msra.mxu0 %v3092
  %4296 = vmatprep.subr.bf16.mxu0 %v3083
  %4297 = vmatpush2.bf16.msra.mxu0 %v3082
  %4298 = vmatprep.mubr.bf16.mxu0 %v109
  %4299 = vmatmul.mubr.bf16.gmra.mxu0 %v108
  %v4300 = vpop.f32.mrf.mxu0
  %v4301 = vadd.f32 %v4250, %v4300
  %v4302 = vpop.f32.mrf.mxu0
  %v4303 = vadd.f32 %v4252, %v4302
  %v4304 = vpop.f32.mrf.mxu0
  %v4305 = vadd.f32 %v4254, %v4304
  %v4306 = vpop.f32.mrf.mxu0
  %v4307 = vadd.f32 %v4256, %v4306
  %4308 = vmatprep.mubr.bf16.mxu0 %v117
  %4309 = vmatmul.mubr.bf16.gmra.mxu0 %v116
  %v4310 = vpop.f32.mrf.mxu0
  %v4311 = vadd.f32 %v4260, %v4310
  %v4312 = vpop.f32.mrf.mxu0
  %v4313 = vadd.f32 %v4262, %v4312
  %v4314 = vpop.f32.mrf.mxu0
  %v4315 = vpop.f32.mrf.mxu0
  %4316 = vdwg.mxu0
  %4317 = vmatprep.subr.bf16.mxu0 %v3233
  %4318 = vmatpush1.bf16.msra.mxu0 %v3232
  %4319 = vmatprep.subr.bf16.mxu0 %v3223
  %4320 = vmatpush1.bf16.msra.mxu0 %v3222
  %4321 = vmatprep.subr.bf16.mxu0 %v3213
  %4322 = vmatpush1.bf16.msra.mxu0 %v3212
  %4323 = vmatprep.subr.bf16.mxu0 %v3203
  %4324 = vmatpush1.bf16.msra.mxu0 %v3202
  %4325 = vmatprep.subr.bf16.mxu0 %v3193
  %4326 = vmatpush1.bf16.msra.mxu0 %v3192
  %4327 = vmatprep.subr.bf16.mxu0 %v3183
  %4328 = vmatpush1.bf16.msra.mxu0 %v3182
  %4329 = vmatprep.subr.bf16.mxu0 %v3173
  %4330 = vmatpush1.bf16.msra.mxu0 %v3172
  %4331 = vmatprep.subr.bf16.mxu0 %v3163
  %4332 = vmatpush1.bf16.msra.mxu0 %v3162
  %4333 = vmatprep.subr.bf16.mxu0 %v3313
  %4334 = vmatpush2.bf16.msra.mxu0 %v3312
  %4335 = vmatprep.subr.bf16.mxu0 %v3303
  %4336 = vmatpush2.bf16.msra.mxu0 %v3302
  %4337 = vmatprep.subr.bf16.mxu0 %v3293
  %4338 = vmatpush2.bf16.msra.mxu0 %v3292
  %4339 = vmatprep.subr.bf16.mxu0 %v3283
  %4340 = vmatpush2.bf16.msra.mxu0 %v3282
  %4341 = vmatprep.subr.bf16.mxu0 %v3273
  %4342 = vmatpush2.bf16.msra.mxu0 %v3272
  %4343 = vmatprep.subr.bf16.mxu0 %v3263
  %4344 = vmatpush2.bf16.msra.mxu0 %v3262
  %4345 = vmatprep.subr.bf16.mxu0 %v3253
  %4346 = vmatpush2.bf16.msra.mxu0 %v3252
  %4347 = vmatprep.subr.bf16.mxu0 %v3243
  %4348 = vmatpush2.bf16.msra.mxu0 %v3242
  %4349 = vmatprep.mubr.bf16.mxu0 %v111
  %4350 = vmatmul.mubr.bf16.gmra.mxu0 %v110
  %v4351 = vpop.f32.mrf.mxu0
  %v4352 = vadd.f32 %v4301, %v4351
  %v4353 = vpop.f32.mrf.mxu0
  %v4354 = vadd.f32 %v4303, %v4353
  %v4355 = vpop.f32.mrf.mxu0
  %v4356 = vadd.f32 %v4305, %v4355
  %v4357 = vpop.f32.mrf.mxu0
  %v4358 = vadd.f32 %v4307, %v4357
  %4359 = vmatprep.mubr.bf16.mxu0 %v119
  %4360 = vmatmul.mubr.bf16.gmra.mxu0 %v118
  %v4361 = vpop.f32.mrf.mxu0
  %v4362 = vadd.f32 %v4311, %v4361
  %v4363 = vpop.f32.mrf.mxu0
  %v4364 = vadd.f32 %v4313, %v4363
  %v4365 = vpop.f32.mrf.mxu0
  %v4366 = vpop.f32.mrf.mxu0
  %4367 = vdwg.mxu0
  %4368 = vmatprep.subr.bf16.mxu0 %v2755
  %4369 = vmatpush1.bf16.msra.mxu0 %v2754
  %4370 = vmatprep.subr.bf16.mxu0 %v2745
  %4371 = vmatpush1.bf16.msra.mxu0 %v2744
  %4372 = vmatprep.subr.bf16.mxu0 %v2735
  %4373 = vmatpush1.bf16.msra.mxu0 %v2734
  %4374 = vmatprep.subr.bf16.mxu0 %v2725
  %4375 = vmatpush1.bf16.msra.mxu0 %v2724
  %4376 = vmatprep.subr.bf16.mxu0 %v2715
  %4377 = vmatpush1.bf16.msra.mxu0 %v2714
  %4378 = vmatprep.subr.bf16.mxu0 %v2705
  %4379 = vmatpush1.bf16.msra.mxu0 %v2704
  %4380 = vmatprep.subr.bf16.mxu0 %v2695
  %4381 = vmatpush1.bf16.msra.mxu0 %v2694
  %4382 = vmatprep.subr.bf16.mxu0 %v2685
  %4383 = vmatpush1.bf16.msra.mxu0 %v2684
  %4384 = vmatprep.subr.bf16.mxu0 %v2835
  %4385 = vmatpush2.bf16.msra.mxu0 %v2834
  %4386 = vmatprep.subr.bf16.mxu0 %v2825
  %4387 = vmatpush2.bf16.msra.mxu0 %v2824
  %4388 = vmatprep.subr.bf16.mxu0 %v2815
  %4389 = vmatpush2.bf16.msra.mxu0 %v2814
  %4390 = vmatprep.subr.bf16.mxu0 %v2805
  %4391 = vmatpush2.bf16.msra.mxu0 %v2804
  %4392 = vmatprep.subr.bf16.mxu0 %v2795
  %4393 = vmatpush2.bf16.msra.mxu0 %v2794
  %4394 = vmatprep.subr.bf16.mxu0 %v2785
  %4395 = vmatpush2.bf16.msra.mxu0 %v2784
  %4396 = vmatprep.subr.bf16.mxu0 %v2775
  %4397 = vmatpush2.bf16.msra.mxu0 %v2774
  %4398 = vmatprep.subr.bf16.mxu0 %v2765
  %4399 = vmatpush2.bf16.msra.mxu0 %v2764
  %4400 = vmatprep.mubr.bf16.mxu0 %v105
  %4401 = vmatmul.mubr.bf16.gmra.mxu0 %v104
  %v4402 = vpop.f32.mrf.mxu0
  %v4403 = vadd.f32 0.0, %v4402
  %v4404 = vpop.f32.mrf.mxu0
  %v4405 = vadd.f32 0.0, %v4404
  %v4406 = vpop.f32.mrf.mxu0
  %v4407 = vadd.f32 0.0, %v4406
  %v4408 = vpop.f32.mrf.mxu0
  %v4409 = vadd.f32 0.0, %v4408
  %4410 = vmatprep.mubr.bf16.mxu0 %v113
  %4411 = vmatmul.mubr.bf16.gmra.mxu0 %v112
  %v4412 = vpop.f32.mrf.mxu0
  %v4413 = vadd.f32 0.0, %v4412
  %v4414 = vpop.f32.mrf.mxu0
  %v4415 = vadd.f32 0.0, %v4414
  %v4416 = vpop.f32.mrf.mxu0
  %v4417 = vpop.f32.mrf.mxu0
  %4418 = vdwg.mxu0
  %4419 = vmatprep.subr.bf16.mxu0 %v2915
  %4420 = vmatpush1.bf16.msra.mxu0 %v2914
  %4421 = vmatprep.subr.bf16.mxu0 %v2905
  %4422 = vmatpush1.bf16.msra.mxu0 %v2904
  %4423 = vmatprep.subr.bf16.mxu0 %v2895
  %4424 = vmatpush1.bf16.msra.mxu0 %v2894
  %4425 = vmatprep.subr.bf16.mxu0 %v2885
  %4426 = vmatpush1.bf16.msra.mxu0 %v2884
  %4427 = vmatprep.subr.bf16.mxu0 %v2875
  %4428 = vmatpush1.bf16.msra.mxu0 %v2874
  %4429 = vmatprep.subr.bf16.mxu0 %v2865
  %4430 = vmatpush1.bf16.msra.mxu0 %v2864
  %4431 = vmatprep.subr.bf16.mxu0 %v2855
  %4432 = vmatpush1.bf16.msra.mxu0 %v2854
  %4433 = vmatprep.subr.bf16.mxu0 %v2845
  %4434 = vmatpush1.bf16.msra.mxu0 %v2844
  %4435 = vmatprep.subr.bf16.mxu0 %v2995
  %4436 = vmatpush2.bf16.msra.mxu0 %v2994
  %4437 = vmatprep.subr.bf16.mxu0 %v2985
  %4438 = vmatpush2.bf16.msra.mxu0 %v2984
  %4439 = vmatprep.subr.bf16.mxu0 %v2975
  %4440 = vmatpush2.bf16.msra.mxu0 %v2974
  %4441 = vmatprep.subr.bf16.mxu0 %v2965
  %4442 = vmatpush2.bf16.msra.mxu0 %v2964
  %4443 = vmatprep.subr.bf16.mxu0 %v2955
  %4444 = vmatpush2.bf16.msra.mxu0 %v2954
  %4445 = vmatprep.subr.bf16.mxu0 %v2945
  %4446 = vmatpush2.bf16.msra.mxu0 %v2944
  %4447 = vmatprep.subr.bf16.mxu0 %v2935
  %4448 = vmatpush2.bf16.msra.mxu0 %v2934
  %4449 = vmatprep.subr.bf16.mxu0 %v2925
  %4450 = vmatpush2.bf16.msra.mxu0 %v2924
  %4451 = vmatprep.mubr.bf16.mxu0 %v107
  %4452 = vmatmul.mubr.bf16.gmra.mxu0 %v106
  %v4453 = vpop.f32.mrf.mxu0
  %v4454 = vadd.f32 %v4403, %v4453
  %v4455 = vpop.f32.mrf.mxu0
  %v4456 = vadd.f32 %v4405, %v4455
  %v4457 = vpop.f32.mrf.mxu0
  %v4458 = vadd.f32 %v4407, %v4457
  %v4459 = vpop.f32.mrf.mxu0
  %v4460 = vadd.f32 %v4409, %v4459
  %4461 = vmatprep.mubr.bf16.mxu0 %v115
  %4462 = vmatmul.mubr.bf16.gmra.mxu0 %v114
  %v4463 = vpop.f32.mrf.mxu0
  %v4464 = vadd.f32 %v4413, %v4463
  %v4465 = vpop.f32.mrf.mxu0
  %v4466 = vadd.f32 %v4415, %v4465
  %v4467 = vpop.f32.mrf.mxu0
  %v4468 = vpop.f32.mrf.mxu0
  %4469 = vdwg.mxu0
  %4470 = vmatprep.subr.bf16.mxu0 %v3075
  %4471 = vmatpush1.bf16.msra.mxu0 %v3074
  %4472 = vmatprep.subr.bf16.mxu0 %v3065
  %4473 = vmatpush1.bf16.msra.mxu0 %v3064
  %4474 = vmatprep.subr.bf16.mxu0 %v3055
  %4475 = vmatpush1.bf16.msra.mxu0 %v3054
  %4476 = vmatprep.subr.bf16.mxu0 %v3045
  %4477 = vmatpush1.bf16.msra.mxu0 %v3044
  %4478 = vmatprep.subr.bf16.mxu0 %v3035
  %4479 = vmatpush1.bf16.msra.mxu0 %v3034
  %4480 = vmatprep.subr.bf16.mxu0 %v3025
  %4481 = vmatpush1.bf16.msra.mxu0 %v3024
  %4482 = vmatprep.subr.bf16.mxu0 %v3015
  %4483 = vmatpush1.bf16.msra.mxu0 %v3014
  %4484 = vmatprep.subr.bf16.mxu0 %v3005
  %4485 = vmatpush1.bf16.msra.mxu0 %v3004
  %4486 = vmatprep.subr.bf16.mxu0 %v3155
  %4487 = vmatpush2.bf16.msra.mxu0 %v3154
  %4488 = vmatprep.subr.bf16.mxu0 %v3145
  %4489 = vmatpush2.bf16.msra.mxu0 %v3144
  %4490 = vmatprep.subr.bf16.mxu0 %v3135
  %4491 = vmatpush2.bf16.msra.mxu0 %v3134
  %4492 = vmatprep.subr.bf16.mxu0 %v3125
  %4493 = vmatpush2.bf16.msra.mxu0 %v3124
  %4494 = vmatprep.subr.bf16.mxu0 %v3115
  %4495 = vmatpush2.bf16.msra.mxu0 %v3114
  %4496 = vmatprep.subr.bf16.mxu0 %v3105
  %4497 = vmatpush2.bf16.msra.mxu0 %v3104
  %4498 = vmatprep.subr.bf16.mxu0 %v3095
  %4499 = vmatpush2.bf16.msra.mxu0 %v3094
  %4500 = vmatprep.subr.bf16.mxu0 %v3085
  %4501 = vmatpush2.bf16.msra.mxu0 %v3084
  %4502 = vmatprep.mubr.bf16.mxu0 %v109
  %4503 = vmatmul.mubr.bf16.gmra.mxu0 %v108
  %v4504 = vpop.f32.mrf.mxu0
  %v4505 = vadd.f32 %v4454, %v4504
  %v4506 = vpop.f32.mrf.mxu0
  %v4507 = vadd.f32 %v4456, %v4506
  %v4508 = vpop.f32.mrf.mxu0
  %v4509 = vadd.f32 %v4458, %v4508
  %v4510 = vpop.f32.mrf.mxu0
  %v4511 = vadd.f32 %v4460, %v4510
  %4512 = vmatprep.mubr.bf16.mxu0 %v117
  %4513 = vmatmul.mubr.bf16.gmra.mxu0 %v116
  %v4514 = vpop.f32.mrf.mxu0
  %v4515 = vadd.f32 %v4464, %v4514
  %v4516 = vpop.f32.mrf.mxu0
  %v4517 = vadd.f32 %v4466, %v4516
  %v4518 = vpop.f32.mrf.mxu0
  %v4519 = vpop.f32.mrf.mxu0
  %4520 = vdwg.mxu0
  %4521 = vmatprep.subr.bf16.mxu0 %v3235
  %4522 = vmatpush1.bf16.msra.mxu0 %v3234
  %4523 = vmatprep.subr.bf16.mxu0 %v3225
  %4524 = vmatpush1.bf16.msra.mxu0 %v3224
  %4525 = vmatprep.subr.bf16.mxu0 %v3215
  %4526 = vmatpush1.bf16.msra.mxu0 %v3214
  %4527 = vmatprep.subr.bf16.mxu0 %v3205
  %4528 = vmatpush1.bf16.msra.mxu0 %v3204
  %4529 = vmatprep.subr.bf16.mxu0 %v3195
  %4530 = vmatpush1.bf16.msra.mxu0 %v3194
  %4531 = vmatprep.subr.bf16.mxu0 %v3185
  %4532 = vmatpush1.bf16.msra.mxu0 %v3184
  %4533 = vmatprep.subr.bf16.mxu0 %v3175
  %4534 = vmatpush1.bf16.msra.mxu0 %v3174
  %4535 = vmatprep.subr.bf16.mxu0 %v3165
  %4536 = vmatpush1.bf16.msra.mxu0 %v3164
  %4537 = vmatprep.subr.bf16.mxu0 %v3315
  %4538 = vmatpush2.bf16.msra.mxu0 %v3314
  %4539 = vmatprep.subr.bf16.mxu0 %v3305
  %4540 = vmatpush2.bf16.msra.mxu0 %v3304
  %4541 = vmatprep.subr.bf16.mxu0 %v3295
  %4542 = vmatpush2.bf16.msra.mxu0 %v3294
  %4543 = vmatprep.subr.bf16.mxu0 %v3285
  %4544 = vmatpush2.bf16.msra.mxu0 %v3284
  %4545 = vmatprep.subr.bf16.mxu0 %v3275
  %4546 = vmatpush2.bf16.msra.mxu0 %v3274
  %4547 = vmatprep.subr.bf16.mxu0 %v3265
  %4548 = vmatpush2.bf16.msra.mxu0 %v3264
  %4549 = vmatprep.subr.bf16.mxu0 %v3255
  %4550 = vmatpush2.bf16.msra.mxu0 %v3254
  %4551 = vmatprep.subr.bf16.mxu0 %v3245
  %4552 = vmatpush2.bf16.msra.mxu0 %v3244
  %4553 = vmatprep.mubr.bf16.mxu0 %v111
  %4554 = vmatmul.mubr.bf16.gmra.mxu0 %v110
  %v4555 = vpop.f32.mrf.mxu0
  %v4556 = vadd.f32 %v4505, %v4555
  %v4557 = vpop.f32.mrf.mxu0
  %v4558 = vadd.f32 %v4507, %v4557
  %v4559 = vpop.f32.mrf.mxu0
  %v4560 = vadd.f32 %v4509, %v4559
  %v4561 = vpop.f32.mrf.mxu0
  %v4562 = vadd.f32 %v4511, %v4561
  %4563 = vmatprep.mubr.bf16.mxu0 %v119
  %4564 = vmatmul.mubr.bf16.gmra.mxu0 %v118
  %v4565 = vpop.f32.mrf.mxu0
  %v4566 = vadd.f32 %v4515, %v4565
  %v4567 = vpop.f32.mrf.mxu0
  %v4568 = vadd.f32 %v4517, %v4567
  %v4569 = vpop.f32.mrf.mxu0
  %v4570 = vpop.f32.mrf.mxu0
  %4571 = vdwg.mxu0
  %4572 = vmatprep.subr.bf16.mxu0 %v2757
  %4573 = vmatpush1.bf16.msra.mxu0 %v2756
  %4574 = vmatprep.subr.bf16.mxu0 %v2747
  %4575 = vmatpush1.bf16.msra.mxu0 %v2746
  %4576 = vmatprep.subr.bf16.mxu0 %v2737
  %4577 = vmatpush1.bf16.msra.mxu0 %v2736
  %4578 = vmatprep.subr.bf16.mxu0 %v2727
  %4579 = vmatpush1.bf16.msra.mxu0 %v2726
  %4580 = vmatprep.subr.bf16.mxu0 %v2717
  %4581 = vmatpush1.bf16.msra.mxu0 %v2716
  %4582 = vmatprep.subr.bf16.mxu0 %v2707
  %4583 = vmatpush1.bf16.msra.mxu0 %v2706
  %4584 = vmatprep.subr.bf16.mxu0 %v2697
  %4585 = vmatpush1.bf16.msra.mxu0 %v2696
  %4586 = vmatprep.subr.bf16.mxu0 %v2687
  %4587 = vmatpush1.bf16.msra.mxu0 %v2686
  %4588 = vmatprep.subr.bf16.mxu0 %v2837
  %4589 = vmatpush2.bf16.msra.mxu0 %v2836
  %4590 = vmatprep.subr.bf16.mxu0 %v2827
  %4591 = vmatpush2.bf16.msra.mxu0 %v2826
  %4592 = vmatprep.subr.bf16.mxu0 %v2817
  %4593 = vmatpush2.bf16.msra.mxu0 %v2816
  %4594 = vmatprep.subr.bf16.mxu0 %v2807
  %4595 = vmatpush2.bf16.msra.mxu0 %v2806
  %4596 = vmatprep.subr.bf16.mxu0 %v2797
  %4597 = vmatpush2.bf16.msra.mxu0 %v2796
  %4598 = vmatprep.subr.bf16.mxu0 %v2787
  %4599 = vmatpush2.bf16.msra.mxu0 %v2786
  %4600 = vmatprep.subr.bf16.mxu0 %v2777
  %4601 = vmatpush2.bf16.msra.mxu0 %v2776
  %4602 = vmatprep.subr.bf16.mxu0 %v2767
  %4603 = vmatpush2.bf16.msra.mxu0 %v2766
  %4604 = vmatprep.mubr.bf16.mxu0 %v105
  %4605 = vmatmul.mubr.bf16.gmra.mxu0 %v104
  %v4606 = vpop.f32.mrf.mxu0
  %v4607 = vadd.f32 0.0, %v4606
  %v4608 = vpop.f32.mrf.mxu0
  %v4609 = vadd.f32 0.0, %v4608
  %v4610 = vpop.f32.mrf.mxu0
  %v4611 = vadd.f32 0.0, %v4610
  %v4612 = vpop.f32.mrf.mxu0
  %v4613 = vadd.f32 0.0, %v4612
  %4614 = vmatprep.mubr.bf16.mxu0 %v113
  %4615 = vmatmul.mubr.bf16.gmra.mxu0 %v112
  %v4616 = vpop.f32.mrf.mxu0
  %v4617 = vadd.f32 0.0, %v4616
  %v4618 = vpop.f32.mrf.mxu0
  %v4619 = vadd.f32 0.0, %v4618
  %v4620 = vpop.f32.mrf.mxu0
  %v4621 = vpop.f32.mrf.mxu0
  %4622 = vdwg.mxu0
  %4623 = vmatprep.subr.bf16.mxu0 %v2917
  %4624 = vmatpush1.bf16.msra.mxu0 %v2916
  %4625 = vmatprep.subr.bf16.mxu0 %v2907
  %4626 = vmatpush1.bf16.msra.mxu0 %v2906
  %4627 = vmatprep.subr.bf16.mxu0 %v2897
  %4628 = vmatpush1.bf16.msra.mxu0 %v2896
  %4629 = vmatprep.subr.bf16.mxu0 %v2887
  %4630 = vmatpush1.bf16.msra.mxu0 %v2886
  %4631 = vmatprep.subr.bf16.mxu0 %v2877
  %4632 = vmatpush1.bf16.msra.mxu0 %v2876
  %4633 = vmatprep.subr.bf16.mxu0 %v2867
  %4634 = vmatpush1.bf16.msra.mxu0 %v2866
  %4635 = vmatprep.subr.bf16.mxu0 %v2857
  %4636 = vmatpush1.bf16.msra.mxu0 %v2856
  %4637 = vmatprep.subr.bf16.mxu0 %v2847
  %4638 = vmatpush1.bf16.msra.mxu0 %v2846
  %4639 = vmatprep.subr.bf16.mxu0 %v2997
  %4640 = vmatpush2.bf16.msra.mxu0 %v2996
  %4641 = vmatprep.subr.bf16.mxu0 %v2987
  %4642 = vmatpush2.bf16.msra.mxu0 %v2986
  %4643 = vmatprep.subr.bf16.mxu0 %v2977
  %4644 = vmatpush2.bf16.msra.mxu0 %v2976
  %4645 = vmatprep.subr.bf16.mxu0 %v2967
  %4646 = vmatpush2.bf16.msra.mxu0 %v2966
  %4647 = vmatprep.subr.bf16.mxu0 %v2957
  %4648 = vmatpush2.bf16.msra.mxu0 %v2956
  %4649 = vmatprep.subr.bf16.mxu0 %v2947
  %4650 = vmatpush2.bf16.msra.mxu0 %v2946
  %4651 = vmatprep.subr.bf16.mxu0 %v2937
  %4652 = vmatpush2.bf16.msra.mxu0 %v2936
  %4653 = vmatprep.subr.bf16.mxu0 %v2927
  %4654 = vmatpush2.bf16.msra.mxu0 %v2926
  %4655 = vmatprep.mubr.bf16.mxu0 %v107
  %4656 = vmatmul.mubr.bf16.gmra.mxu0 %v106
  %v4657 = vpop.f32.mrf.mxu0
  %v4658 = vadd.f32 %v4607, %v4657
  %v4659 = vpop.f32.mrf.mxu0
  %v4660 = vadd.f32 %v4609, %v4659
  %v4661 = vpop.f32.mrf.mxu0
  %v4662 = vadd.f32 %v4611, %v4661
  %v4663 = vpop.f32.mrf.mxu0
  %v4664 = vadd.f32 %v4613, %v4663
  %4665 = vmatprep.mubr.bf16.mxu0 %v115
  %4666 = vmatmul.mubr.bf16.gmra.mxu0 %v114
  %v4667 = vpop.f32.mrf.mxu0
  %v4668 = vadd.f32 %v4617, %v4667
  %v4669 = vpop.f32.mrf.mxu0
  %v4670 = vadd.f32 %v4619, %v4669
  %v4671 = vpop.f32.mrf.mxu0
  %v4672 = vpop.f32.mrf.mxu0
  %4673 = vdwg.mxu0
  %4674 = vmatprep.subr.bf16.mxu0 %v3077
  %4675 = vmatpush1.bf16.msra.mxu0 %v3076
  %4676 = vmatprep.subr.bf16.mxu0 %v3067
  %4677 = vmatpush1.bf16.msra.mxu0 %v3066
  %4678 = vmatprep.subr.bf16.mxu0 %v3057
  %4679 = vmatpush1.bf16.msra.mxu0 %v3056
  %4680 = vmatprep.subr.bf16.mxu0 %v3047
  %4681 = vmatpush1.bf16.msra.mxu0 %v3046
  %4682 = vmatprep.subr.bf16.mxu0 %v3037
  %4683 = vmatpush1.bf16.msra.mxu0 %v3036
  %4684 = vmatprep.subr.bf16.mxu0 %v3027
  %4685 = vmatpush1.bf16.msra.mxu0 %v3026
  %4686 = vmatprep.subr.bf16.mxu0 %v3017
  %4687 = vmatpush1.bf16.msra.mxu0 %v3016
  %4688 = vmatprep.subr.bf16.mxu0 %v3007
  %4689 = vmatpush1.bf16.msra.mxu0 %v3006
  %4690 = vmatprep.subr.bf16.mxu0 %v3157
  %4691 = vmatpush2.bf16.msra.mxu0 %v3156
  %4692 = vmatprep.subr.bf16.mxu0 %v3147
  %4693 = vmatpush2.bf16.msra.mxu0 %v3146
  %4694 = vmatprep.subr.bf16.mxu0 %v3137
  %4695 = vmatpush2.bf16.msra.mxu0 %v3136
  %4696 = vmatprep.subr.bf16.mxu0 %v3127
  %4697 = vmatpush2.bf16.msra.mxu0 %v3126
  %4698 = vmatprep.subr.bf16.mxu0 %v3117
  %4699 = vmatpush2.bf16.msra.mxu0 %v3116
  %4700 = vmatprep.subr.bf16.mxu0 %v3107
  %4701 = vmatpush2.bf16.msra.mxu0 %v3106
  %4702 = vmatprep.subr.bf16.mxu0 %v3097
  %4703 = vmatpush2.bf16.msra.mxu0 %v3096
  %4704 = vmatprep.subr.bf16.mxu0 %v3087
  %4705 = vmatpush2.bf16.msra.mxu0 %v3086
  %4706 = vmatprep.mubr.bf16.mxu0 %v109
  %4707 = vmatmul.mubr.bf16.gmra.mxu0 %v108
  %v4708 = vpop.f32.mrf.mxu0
  %v4709 = vadd.f32 %v4658, %v4708
  %v4710 = vpop.f32.mrf.mxu0
  %v4711 = vadd.f32 %v4660, %v4710
  %v4712 = vpop.f32.mrf.mxu0
  %v4713 = vadd.f32 %v4662, %v4712
  %v4714 = vpop.f32.mrf.mxu0
  %v4715 = vadd.f32 %v4664, %v4714
  %4716 = vmatprep.mubr.bf16.mxu0 %v117
  %4717 = vmatmul.mubr.bf16.gmra.mxu0 %v116
  %v4718 = vpop.f32.mrf.mxu0
  %v4719 = vadd.f32 %v4668, %v4718
  %v4720 = vpop.f32.mrf.mxu0
  %v4721 = vadd.f32 %v4670, %v4720
  %v4722 = vpop.f32.mrf.mxu0
  %v4723 = vpop.f32.mrf.mxu0
  %4724 = vdwg.mxu0
  %4725 = vmatprep.subr.bf16.mxu0 %v3237
  %4726 = vmatpush1.bf16.msra.mxu0 %v3236
  %4727 = vmatprep.subr.bf16.mxu0 %v3227
  %4728 = vmatpush1.bf16.msra.mxu0 %v3226
  %4729 = vmatprep.subr.bf16.mxu0 %v3217
  %4730 = vmatpush1.bf16.msra.mxu0 %v3216
  %4731 = vmatprep.subr.bf16.mxu0 %v3207
  %4732 = vmatpush1.bf16.msra.mxu0 %v3206
  %4733 = vmatprep.subr.bf16.mxu0 %v3197
  %4734 = vmatpush1.bf16.msra.mxu0 %v3196
  %4735 = vmatprep.subr.bf16.mxu0 %v3187
  %4736 = vmatpush1.bf16.msra.mxu0 %v3186
  %4737 = vmatprep.subr.bf16.mxu0 %v3177
  %4738 = vmatpush1.bf16.msra.mxu0 %v3176
  %4739 = vmatprep.subr.bf16.mxu0 %v3167
  %4740 = vmatpush1.bf16.msra.mxu0 %v3166
  %4741 = vmatprep.subr.bf16.mxu0 %v3317
  %4742 = vmatpush2.bf16.msra.mxu0 %v3316
  %4743 = vmatprep.subr.bf16.mxu0 %v3307
  %4744 = vmatpush2.bf16.msra.mxu0 %v3306
  %4745 = vmatprep.subr.bf16.mxu0 %v3297
  %4746 = vmatpush2.bf16.msra.mxu0 %v3296
  %4747 = vmatprep.subr.bf16.mxu0 %v3287
  %4748 = vmatpush2.bf16.msra.mxu0 %v3286
  %4749 = vmatprep.subr.bf16.mxu0 %v3277
  %4750 = vmatpush2.bf16.msra.mxu0 %v3276
  %4751 = vmatprep.subr.bf16.mxu0 %v3267
  %4752 = vmatpush2.bf16.msra.mxu0 %v3266
  %4753 = vmatprep.subr.bf16.mxu0 %v3257
  %4754 = vmatpush2.bf16.msra.mxu0 %v3256
  %4755 = vmatprep.subr.bf16.mxu0 %v3247
  %4756 = vmatpush2.bf16.msra.mxu0 %v3246
  %4757 = vmatprep.mubr.bf16.mxu0 %v111
  %4758 = vmatmul.mubr.bf16.gmra.mxu0 %v110
  %v4759 = vpop.f32.mrf.mxu0
  %v4760 = vadd.f32 %v4709, %v4759
  %v4761 = vpop.f32.mrf.mxu0
  %v4762 = vadd.f32 %v4711, %v4761
  %v4763 = vpop.f32.mrf.mxu0
  %v4764 = vadd.f32 %v4713, %v4763
  %v4765 = vpop.f32.mrf.mxu0
  %v4766 = vadd.f32 %v4715, %v4765
  %4767 = vmatprep.mubr.bf16.mxu0 %v119
  %4768 = vmatmul.mubr.bf16.gmra.mxu0 %v118
  %v4769 = vpop.f32.mrf.mxu0
  %v4770 = vadd.f32 %v4719, %v4769
  %v4771 = vpop.f32.mrf.mxu0
  %v4772 = vadd.f32 %v4721, %v4771
  %v4773 = vpop.f32.mrf.mxu0
  %v4774 = vpop.f32.mrf.mxu0
  %4775 = vdwg.mxu0
  %4776 = vmatprep.subr.bf16.mxu0 %v2759
  %4777 = vmatpush1.bf16.msra.mxu0 %v2758
  %4778 = vmatprep.subr.bf16.mxu0 %v2749
  %4779 = vmatpush1.bf16.msra.mxu0 %v2748
  %4780 = vmatprep.subr.bf16.mxu0 %v2739
  %4781 = vmatpush1.bf16.msra.mxu0 %v2738
  %4782 = vmatprep.subr.bf16.mxu0 %v2729
  %4783 = vmatpush1.bf16.msra.mxu0 %v2728
  %4784 = vmatprep.subr.bf16.mxu0 %v2719
  %4785 = vmatpush1.bf16.msra.mxu0 %v2718
  %4786 = vmatprep.subr.bf16.mxu0 %v2709
  %4787 = vmatpush1.bf16.msra.mxu0 %v2708
  %4788 = vmatprep.subr.bf16.mxu0 %v2699
  %4789 = vmatpush1.bf16.msra.mxu0 %v2698
  %4790 = vmatprep.subr.bf16.mxu0 %v2689
  %4791 = vmatpush1.bf16.msra.mxu0 %v2688
  %4792 = vmatprep.subr.bf16.mxu0 %v2839
  %4793 = vmatpush2.bf16.msra.mxu0 %v2838
  %4794 = vmatprep.subr.bf16.mxu0 %v2829
  %4795 = vmatpush2.bf16.msra.mxu0 %v2828
  %4796 = vmatprep.subr.bf16.mxu0 %v2819
  %4797 = vmatpush2.bf16.msra.mxu0 %v2818
  %4798 = vmatprep.subr.bf16.mxu0 %v2809
  %4799 = vmatpush2.bf16.msra.mxu0 %v2808
  %4800 = vmatprep.subr.bf16.mxu0 %v2799
  %4801 = vmatpush2.bf16.msra.mxu0 %v2798
  %4802 = vmatprep.subr.bf16.mxu0 %v2789
  %4803 = vmatpush2.bf16.msra.mxu0 %v2788
  %4804 = vmatprep.subr.bf16.mxu0 %v2779
  %4805 = vmatpush2.bf16.msra.mxu0 %v2778
  %4806 = vmatprep.subr.bf16.mxu0 %v2769
  %4807 = vmatpush2.bf16.msra.mxu0 %v2768
  %4808 = vmatprep.mubr.bf16.mxu0 %v105
  %4809 = vmatmul.mubr.bf16.gmra.mxu0 %v104
  %v4810 = vpop.f32.mrf.mxu0
  %v4811 = vadd.f32 0.0, %v4810
  %v4812 = vpop.f32.mrf.mxu0
  %v4813 = vadd.f32 0.0, %v4812
  %v4814 = vpop.f32.mrf.mxu0
  %v4815 = vadd.f32 0.0, %v4814
  %v4816 = vpop.f32.mrf.mxu0
  %v4817 = vadd.f32 0.0, %v4816
  %4818 = vmatprep.mubr.bf16.mxu0 %v113
  %4819 = vmatmul.mubr.bf16.gmra.mxu0 %v112
  %v4820 = vpop.f32.mrf.mxu0
  %v4821 = vadd.f32 0.0, %v4820
  %v4822 = vpop.f32.mrf.mxu0
  %v4823 = vadd.f32 0.0, %v4822
  %v4824 = vpop.f32.mrf.mxu0
  %v4825 = vpop.f32.mrf.mxu0
  %4826 = vdwg.mxu0
  %4827 = vmatprep.subr.bf16.mxu0 %v2919
  %4828 = vmatpush1.bf16.msra.mxu0 %v2918
  %4829 = vmatprep.subr.bf16.mxu0 %v2909
  %4830 = vmatpush1.bf16.msra.mxu0 %v2908
  %4831 = vmatprep.subr.bf16.mxu0 %v2899
  %4832 = vmatpush1.bf16.msra.mxu0 %v2898
  %4833 = vmatprep.subr.bf16.mxu0 %v2889
  %4834 = vmatpush1.bf16.msra.mxu0 %v2888
  %4835 = vmatprep.subr.bf16.mxu0 %v2879
  %4836 = vmatpush1.bf16.msra.mxu0 %v2878
  %4837 = vmatprep.subr.bf16.mxu0 %v2869
  %4838 = vmatpush1.bf16.msra.mxu0 %v2868
  %4839 = vmatprep.subr.bf16.mxu0 %v2859
  %4840 = vmatpush1.bf16.msra.mxu0 %v2858
  %4841 = vmatprep.subr.bf16.mxu0 %v2849
  %4842 = vmatpush1.bf16.msra.mxu0 %v2848
  %4843 = vmatprep.subr.bf16.mxu0 %v2999
  %4844 = vmatpush2.bf16.msra.mxu0 %v2998
  %4845 = vmatprep.subr.bf16.mxu0 %v2989
  %4846 = vmatpush2.bf16.msra.mxu0 %v2988
  %4847 = vmatprep.subr.bf16.mxu0 %v2979
  %4848 = vmatpush2.bf16.msra.mxu0 %v2978
  %4849 = vmatprep.subr.bf16.mxu0 %v2969
  %4850 = vmatpush2.bf16.msra.mxu0 %v2968
  %4851 = vmatprep.subr.bf16.mxu0 %v2959
  %4852 = vmatpush2.bf16.msra.mxu0 %v2958
  %4853 = vmatprep.subr.bf16.mxu0 %v2949
  %4854 = vmatpush2.bf16.msra.mxu0 %v2948
  %4855 = vmatprep.subr.bf16.mxu0 %v2939
  %4856 = vmatpush2.bf16.msra.mxu0 %v2938
  %4857 = vmatprep.subr.bf16.mxu0 %v2929
  %4858 = vmatpush2.bf16.msra.mxu0 %v2928
  %4859 = vmatprep.mubr.bf16.mxu0 %v107
  %4860 = vmatmul.mubr.bf16.gmra.mxu0 %v106
  %v4861 = vpop.f32.mrf.mxu0
  %v4862 = vadd.f32 %v4811, %v4861
  %v4863 = vpop.f32.mrf.mxu0
  %v4864 = vadd.f32 %v4813, %v4863
  %v4865 = vpop.f32.mrf.mxu0
  %v4866 = vadd.f32 %v4815, %v4865
  %v4867 = vpop.f32.mrf.mxu0
  %v4868 = vadd.f32 %v4817, %v4867
  %4869 = vmatprep.mubr.bf16.mxu0 %v115
  %4870 = vmatmul.mubr.bf16.gmra.mxu0 %v114
  %v4871 = vpop.f32.mrf.mxu0
  %v4872 = vadd.f32 %v4821, %v4871
  %v4873 = vpop.f32.mrf.mxu0
  %v4874 = vadd.f32 %v4823, %v4873
  %v4875 = vpop.f32.mrf.mxu0
  %v4876 = vpop.f32.mrf.mxu0
  %4877 = vdwg.mxu0
  %4878 = vmatprep.subr.bf16.mxu0 %v3079
  %4879 = vmatpush1.bf16.msra.mxu0 %v3078
  %4880 = vmatprep.subr.bf16.mxu0 %v3069
  %4881 = vmatpush1.bf16.msra.mxu0 %v3068
  %4882 = vmatprep.subr.bf16.mxu0 %v3059
  %4883 = vmatpush1.bf16.msra.mxu0 %v3058
  %4884 = vmatprep.subr.bf16.mxu0 %v3049
  %4885 = vmatpush1.bf16.msra.mxu0 %v3048
  %4886 = vmatprep.subr.bf16.mxu0 %v3039
  %4887 = vmatpush1.bf16.msra.mxu0 %v3038
  %4888 = vmatprep.subr.bf16.mxu0 %v3029
  %4889 = vmatpush1.bf16.msra.mxu0 %v3028
  %4890 = vmatprep.subr.bf16.mxu0 %v3019
  %4891 = vmatpush1.bf16.msra.mxu0 %v3018
  %4892 = vmatprep.subr.bf16.mxu0 %v3009
  %4893 = vmatpush1.bf16.msra.mxu0 %v3008
  %4894 = vmatprep.subr.bf16.mxu0 %v3159
  %4895 = vmatpush2.bf16.msra.mxu0 %v3158
  %4896 = vmatprep.subr.bf16.mxu0 %v3149
  %4897 = vmatpush2.bf16.msra.mxu0 %v3148
  %4898 = vmatprep.subr.bf16.mxu0 %v3139
  %4899 = vmatpush2.bf16.msra.mxu0 %v3138
  %4900 = vmatprep.subr.bf16.mxu0 %v3129
  %4901 = vmatpush2.bf16.msra.mxu0 %v3128
  %4902 = vmatprep.subr.bf16.mxu0 %v3119
  %4903 = vmatpush2.bf16.msra.mxu0 %v3118
  %4904 = vmatprep.subr.bf16.mxu0 %v3109
  %4905 = vmatpush2.bf16.msra.mxu0 %v3108
  %4906 = vmatprep.subr.bf16.mxu0 %v3099
  %4907 = vmatpush2.bf16.msra.mxu0 %v3098
  %4908 = vmatprep.subr.bf16.mxu0 %v3089
  %4909 = vmatpush2.bf16.msra.mxu0 %v3088
  %4910 = vmatprep.mubr.bf16.mxu0 %v109
  %4911 = vmatmul.mubr.bf16.gmra.mxu0 %v108
  %v4912 = vpop.f32.mrf.mxu0
  %v4913 = vadd.f32 %v4862, %v4912
  %v4914 = vpop.f32.mrf.mxu0
  %v4915 = vadd.f32 %v4864, %v4914
  %v4916 = vpop.f32.mrf.mxu0
  %v4917 = vadd.f32 %v4866, %v4916
  %v4918 = vpop.f32.mrf.mxu0
  %v4919 = vadd.f32 %v4868, %v4918
  %4920 = vmatprep.mubr.bf16.mxu0 %v117
  %4921 = vmatmul.mubr.bf16.gmra.mxu0 %v116
  %v4922 = vpop.f32.mrf.mxu0
  %v4923 = vadd.f32 %v4872, %v4922
  %v4924 = vpop.f32.mrf.mxu0
  %v4925 = vadd.f32 %v4874, %v4924
  %v4926 = vpop.f32.mrf.mxu0
  %v4927 = vpop.f32.mrf.mxu0
  %4928 = vdwg.mxu0
  %4929 = vmatprep.subr.bf16.mxu0 %v3239
  %4930 = vmatpush1.bf16.msra.mxu0 %v3238
  %4931 = vmatprep.subr.bf16.mxu0 %v3229
  %4932 = vmatpush1.bf16.msra.mxu0 %v3228
  %4933 = vmatprep.subr.bf16.mxu0 %v3219
  %4934 = vmatpush1.bf16.msra.mxu0 %v3218
  %4935 = vmatprep.subr.bf16.mxu0 %v3209
  %4936 = vmatpush1.bf16.msra.mxu0 %v3208
  %4937 = vmatprep.subr.bf16.mxu0 %v3199
  %4938 = vmatpush1.bf16.msra.mxu0 %v3198
  %4939 = vmatprep.subr.bf16.mxu0 %v3189
  %4940 = vmatpush1.bf16.msra.mxu0 %v3188
  %4941 = vmatprep.subr.bf16.mxu0 %v3179
  %4942 = vmatpush1.bf16.msra.mxu0 %v3178
  %4943 = vmatprep.subr.bf16.mxu0 %v3169
  %4944 = vmatpush1.bf16.msra.mxu0 %v3168
  %4945 = vmatprep.subr.bf16.mxu0 %v3319
  %4946 = vmatpush2.bf16.msra.mxu0 %v3318
  %4947 = vmatprep.subr.bf16.mxu0 %v3309
  %4948 = vmatpush2.bf16.msra.mxu0 %v3308
  %4949 = vmatprep.subr.bf16.mxu0 %v3299
  %4950 = vmatpush2.bf16.msra.mxu0 %v3298
  %4951 = vmatprep.subr.bf16.mxu0 %v3289
  %4952 = vmatpush2.bf16.msra.mxu0 %v3288
  %4953 = vmatprep.subr.bf16.mxu0 %v3279
  %4954 = vmatpush2.bf16.msra.mxu0 %v3278
  %4955 = vmatprep.subr.bf16.mxu0 %v3269
  %4956 = vmatpush2.bf16.msra.mxu0 %v3268
  %4957 = vmatprep.subr.bf16.mxu0 %v3259
  %4958 = vmatpush2.bf16.msra.mxu0 %v3258
  %4959 = vmatprep.subr.bf16.mxu0 %v3249
  %4960 = vmatpush2.bf16.msra.mxu0 %v3248
  %4961 = vmatprep.mubr.bf16.mxu0 %v111
  %4962 = vmatmul.mubr.bf16.gmra.mxu0 %v110
  %v4963 = vpop.f32.mrf.mxu0
  %v4964 = vadd.f32 %v4913, %v4963
  %v4965 = vpop.f32.mrf.mxu0
  %v4966 = vadd.f32 %v4915, %v4965
  %v4967 = vpop.f32.mrf.mxu0
  %v4968 = vadd.f32 %v4917, %v4967
  %v4969 = vpop.f32.mrf.mxu0
  %v4970 = vadd.f32 %v4919, %v4969
  %4971 = vmatprep.mubr.bf16.mxu0 %v119
  %4972 = vmatmul.mubr.bf16.gmra.mxu0 %v118
  %v4973 = vpop.f32.mrf.mxu0
  %v4974 = vadd.f32 %v4923, %v4973
  %v4975 = vpop.f32.mrf.mxu0
  %v4976 = vadd.f32 %v4925, %v4975
  %v4977 = vpop.f32.mrf.mxu0
  %v4978 = vpop.f32.mrf.mxu0
  %4979 = vdwg.mxu0
  %v4980 = vmul.f32 %v4148, %v4148
  %v4981 = vmul.f32 %v4150, %v4150
  %v4982 = vmul.f32 %v4352, %v4352
  %v4983 = vmul.f32 %v4354, %v4354
  %v4984 = vmul.f32 %v4556, %v4556
  %v4985 = vmul.f32 %v4152, %v4152
  %v4986 = vmul.f32 %v4154, %v4154
  %v4987 = vmul.f32 %v4356, %v4356
  %v4988 = vmul.f32 %v4358, %v4358
  %v4989 = vmul.f32 %v4560, %v4560
  %v4990 = vmul.f32 %v4158, %v4158
  %v4991 = vmul.f32 %v4160, %v4160
  %v4992 = vmul.f32 %v4362, %v4362
  %v4993 = vmul.f32 %v4364, %v4364
  %v4994 = vmul.f32 %v4566, %v4566
  %v4995 = vmul.f32 %v4558, %v4558
  %v4996 = vmul.f32 %v4760, %v4760
  %v4997 = vmul.f32 %v4762, %v4762
  %v4998 = vmul.f32 %v4964, %v4964
  %v4999 = vmul.f32 %v4966, %v4966
  %v5000 = vmul.f32 %v4562, %v4562
  %v5001 = vmul.f32 %v4764, %v4764
  %v5002 = vmul.f32 %v4766, %v4766
  %v5003 = vmul.f32 %v4968, %v4968
  %v5004 = vmul.f32 %v4970, %v4970
  %v5005 = vmul.f32 %v4568, %v4568
  %v5006 = vmul.f32 %v4770, %v4770
  %v5007 = vmul.f32 %v4772, %v4772
  %v5008 = vmul.f32 %v4974, %v4974
  %v5009 = vmul.f32 %v4976, %v4976
  %v5010 = vadd.f32 %v4980, %v4995
  %v5011 = vadd.f32 %v4981, %v4996
  %v5012 = vadd.f32 %v4982, %v4997
  %v5013 = vadd.f32 %v4983, %v4998
  %v5014 = vadd.f32 %v4984, %v4999
  %v5015 = vadd.f32 %v4985, %v5000
  %v5016 = vadd.f32 %v4986, %v5001
  %v5017 = vadd.f32 %v4987, %v5002
  %v5018 = vadd.f32 %v4988, %v5003
  %v5019 = vadd.f32 %v4989, %v5004
  %v5020 = vadd.f32 %v4990, %v5005
  %v5021 = vadd.f32 %v4991, %v5006
  %v5022 = vadd.f32 %v4992, %v5007
  %v5023 = vadd.f32 %v4993, %v5008
  %v5024 = vadd.f32 %v4994, %v5009
  %v5025 = vmax.f32 %v5010, 1e-07
  %v5026 = vmax.f32 %v5011, 1e-07
  %v5027 = vmax.f32 %v5012, 1e-07
  %v5028 = vmax.f32 %v5013, 1e-07
  %v5029 = vmax.f32 %v5014, 1e-07
  %v5030 = vmax.f32 %v5015, 1e-07
  %v5031 = vmax.f32 %v5016, 1e-07
  %v5032 = vmax.f32 %v5017, 1e-07
  %v5033 = vmax.f32 %v5018, 1e-07
  %v5034 = vmax.f32 %v5019, 1e-07
  %v5035 = vmax.f32 %v5020, 1e-07
  %v5036 = vmax.f32 %v5021, 1e-07
  %v5037 = vmax.f32 %v5022, 1e-07
  %v5038 = vmax.f32 %v5023, 1e-07
  %v5039 = vmax.f32 %v5024, 1e-07
  %v5040 = vrsqrt.pop %v5025
  %v5041 = vmul.f32 %v5025, %v5040
  %vm5042 = vcmp.eq.f32.partialorder %v5025, inf
  %v5043 = vsel %vm5042, %v5025, %v5041
  %vm5044 = vcmp.eq.f32.partialorder %v5025, 0.0
  %v5045 = vand.u32 %v5025, 2147483648
  %v5046 = vsel %vm5044, %v5045, %v5043
  %v5047 = vrsqrt.pop %v5026
  %v5048 = vmul.f32 %v5026, %v5047
  %vm5049 = vcmp.eq.f32.partialorder %v5026, inf
  %v5050 = vsel %vm5049, %v5026, %v5048
  %vm5051 = vcmp.eq.f32.partialorder %v5026, 0.0
  %v5052 = vand.u32 %v5026, 2147483648
  %v5053 = vsel %vm5051, %v5052, %v5050
  %v5054 = vrsqrt.pop %v5027
  %v5055 = vmul.f32 %v5027, %v5054
  %vm5056 = vcmp.eq.f32.partialorder %v5027, inf
  %v5057 = vsel %vm5056, %v5027, %v5055
  %vm5058 = vcmp.eq.f32.partialorder %v5027, 0.0
  %v5059 = vand.u32 %v5027, 2147483648
  %v5060 = vsel %vm5058, %v5059, %v5057
  %v5061 = vrsqrt.pop %v5028
  %v5062 = vmul.f32 %v5028, %v5061
  %vm5063 = vcmp.eq.f32.partialorder %v5028, inf
  %v5064 = vsel %vm5063, %v5028, %v5062
  %vm5065 = vcmp.eq.f32.partialorder %v5028, 0.0
  %v5066 = vand.u32 %v5028, 2147483648
  %v5067 = vsel %vm5065, %v5066, %v5064
  %v5068 = vrsqrt.pop %v5029
  %v5069 = vmul.f32 %v5029, %v5068
  %vm5070 = vcmp.eq.f32.partialorder %v5029, inf
  %v5071 = vsel %vm5070, %v5029, %v5069
  %vm5072 = vcmp.eq.f32.partialorder %v5029, 0.0
  %v5073 = vand.u32 %v5029, 2147483648
  %v5074 = vsel %vm5072, %v5073, %v5071
  %v5075 = vrsqrt.pop %v5030
  %v5076 = vmul.f32 %v5030, %v5075
  %vm5077 = vcmp.eq.f32.partialorder %v5030, inf
  %v5078 = vsel %vm5077, %v5030, %v5076
  %vm5079 = vcmp.eq.f32.partialorder %v5030, 0.0
  %v5080 = vand.u32 %v5030, 2147483648
  %v5081 = vsel %vm5079, %v5080, %v5078
  %v5082 = vrsqrt.pop %v5031
  %v5083 = vmul.f32 %v5031, %v5082
  %vm5084 = vcmp.eq.f32.partialorder %v5031, inf
  %v5085 = vsel %vm5084, %v5031, %v5083
  %vm5086 = vcmp.eq.f32.partialorder %v5031, 0.0
  %v5087 = vand.u32 %v5031, 2147483648
  %v5088 = vsel %vm5086, %v5087, %v5085
  %v5089 = vrsqrt.pop %v5032
  %v5090 = vmul.f32 %v5032, %v5089
  %vm5091 = vcmp.eq.f32.partialorder %v5032, inf
  %v5092 = vsel %vm5091, %v5032, %v5090
  %vm5093 = vcmp.eq.f32.partialorder %v5032, 0.0
  %v5094 = vand.u32 %v5032, 2147483648
  %v5095 = vsel %vm5093, %v5094, %v5092
  %v5096 = vrsqrt.pop %v5033
  %v5097 = vmul.f32 %v5033, %v5096
  %vm5098 = vcmp.eq.f32.partialorder %v5033, inf
  %v5099 = vsel %vm5098, %v5033, %v5097
  %vm5100 = vcmp.eq.f32.partialorder %v5033, 0.0
  %v5101 = vand.u32 %v5033, 2147483648
  %v5102 = vsel %vm5100, %v5101, %v5099
  %v5103 = vrsqrt.pop %v5034
  %v5104 = vmul.f32 %v5034, %v5103
  %vm5105 = vcmp.eq.f32.partialorder %v5034, inf
  %v5106 = vsel %vm5105, %v5034, %v5104
  %vm5107 = vcmp.eq.f32.partialorder %v5034, 0.0
  %v5108 = vand.u32 %v5034, 2147483648
  %v5109 = vsel %vm5107, %v5108, %v5106
  %v5110 = vrsqrt.pop %v5035
  %v5111 = vmul.f32 %v5035, %v5110
  %vm5112 = vcmp.eq.f32.partialorder %v5035, inf
  %v5113 = vsel %vm5112, %v5035, %v5111
  %vm5114 = vcmp.eq.f32.partialorder %v5035, 0.0
  %v5115 = vand.u32 %v5035, 2147483648
  %v5116 = vsel %vm5114, %v5115, %v5113
  %v5117 = vrsqrt.pop %v5036
  %v5118 = vmul.f32 %v5036, %v5117
  %vm5119 = vcmp.eq.f32.partialorder %v5036, inf
  %v5120 = vsel %vm5119, %v5036, %v5118
  %vm5121 = vcmp.eq.f32.partialorder %v5036, 0.0
  %v5122 = vand.u32 %v5036, 2147483648
  %v5123 = vsel %vm5121, %v5122, %v5120
  %v5124 = vrsqrt.pop %v5037
  %v5125 = vmul.f32 %v5037, %v5124
  %vm5126 = vcmp.eq.f32.partialorder %v5037, inf
  %v5127 = vsel %vm5126, %v5037, %v5125
  %vm5128 = vcmp.eq.f32.partialorder %v5037, 0.0
  %v5129 = vand.u32 %v5037, 2147483648
  %v5130 = vsel %vm5128, %v5129, %v5127
  %v5131 = vrsqrt.pop %v5038
  %v5132 = vmul.f32 %v5038, %v5131
  %vm5133 = vcmp.eq.f32.partialorder %v5038, inf
  %v5134 = vsel %vm5133, %v5038, %v5132
  %vm5135 = vcmp.eq.f32.partialorder %v5038, 0.0
  %v5136 = vand.u32 %v5038, 2147483648
  %v5137 = vsel %vm5135, %v5136, %v5134
  %v5138 = vrsqrt.pop %v5039
  %v5139 = vmul.f32 %v5039, %v5138
  %vm5140 = vcmp.eq.f32.partialorder %v5039, inf
  %v5141 = vsel %vm5140, %v5039, %v5139
  %vm5142 = vcmp.eq.f32.partialorder %v5039, 0.0
  %v5143 = vand.u32 %v5039, 2147483648
  %v5144 = vsel %vm5142, %v5143, %v5141
  %5145 = vst [vmem:[%s3] sm:$0xff] %v5046
  %5146 = vst [vmem:[%s3 + $0x8] sm:$0xff] %v5053
  %5147 = vst [vmem:[%s3 + $0x10] sm:$0xff] %v5060
  %5148 = vst [vmem:[%s3 + $0x18] sm:$0xff] %v5067
  %5149 = vst [vmem:[%s3 + $0x20] sm:$0xff] %v5074
  %5150 = vst [vmem:[%s3 + $0x28] sm:$0xff] %v5081
  %5151 = vst [vmem:[%s3 + $0x30] sm:$0xff] %v5088
  %5152 = vst [vmem:[%s3 + $0x38] sm:$0xff] %v5095
  %5153 = vst [vmem:[%s3 + $0x40] sm:$0xff] %v5102
  %5154 = vst [vmem:[%s3 + $0x48] sm:$0xff] %v5109
  %5155 = vst [vmem:[%s3 + $0x50] sm:$0xff] %v5116
  %5156 = vst [vmem:[%s3 + $0x58] sm:$0xff] %v5123
  %5157 = vst [vmem:[%s3 + $0x60] sm:$0xff] %v5130
  %5158 = vst [vmem:[%s3 + $0x68] sm:$0xff] %v5137
  %5159 = vst [vmem:[%s3 + $0x70] sm:$0xff] %v5144
  // Predicated region
  $region14: #{_lambda_.7} parent=0 // pred_check
    _
  $region15: #{_lambda_.7} parent=0 // pred_check_branch
    %5161 = sbr.rel (0) target = $region17
  $region16: #{_lambda_.7} parent=0 // pred_region
    _
  $region17: #{_lambda_.7} parent=0 // pred_fallthru
    _
  // Predicated region
  $region18: #{_lambda_.7} parent=0 // pred_check
    _
  $region19: #{_lambda_.7} parent=0 // pred_check_branch
    %5163 = sbr.rel (0) target = $region21
  $region20: #{_lambda_.7} parent=0 // pred_region
    _
  $region21: #{_lambda_.7} parent=0 // pred_fallthru
    _

// kernel: _lambda_.8
$region0: #{_lambda_.8}
  #allocation0 [shape = 'u32[]', space=smem, size = 0x4, offset = 0x4, fixed_abs, tag = 'smem constant byte address 0x4 - core index']
  #allocation1 [shape = 'u32[144,128]{1,0:T(1,128)}', space=vmem, size = 0x12000, scoped, tag = 'internal scratch']
  %s0 = inlined_call_operand.vmem [shape: f32[24,640], index: 0, kind: input, shape index: {}]
  %s1 = inlined_call_operand.vmem [shape: f32[24,640], index: 1, kind: input, shape index: {}]
  %s2 = inlined_call_operand.vmem [shape: f32[24,640], index: 2, kind: input, shape index: {}]
  %s3 = inlined_call_operand.vmem [shape: bf16[1280,1024], index: 3, kind: input, shape index: {}]
  %s4 = inlined_call_operand.vmem [shape: f32[1,1024], index: 4, kind: input, shape index: {}]
  %s5 = inlined_call_operand.vmem [shape: f32[24,1024], index: 5, kind: output, shape index: {}]
  %s6 = sld [smem:[#allocation0]]
  $region30: #{_lambda_.8} parent=0
    _
  %s8 = ssub.s32 1, %s6
  %s9 = scalar_select 0, %s8, %s6
  // Predicated region
  $region2: #{_lambda_.8} parent=0 // pred_check
    _
  $region3: #{_lambda_.8} parent=0 // pred_check_branch
    %11 = sbr.rel (0) target = $region5
  $region4: #{_lambda_.8} parent=0 // pred_region
    _
  $region5: #{_lambda_.8} parent=0 // pred_fallthru
    _
  // Predicated region
  $region6: #{_lambda_.8} parent=0 // pred_check
    _
  $region7: #{_lambda_.8} parent=0 // pred_check_branch
    %13 = sbr.rel (0) target = $region9
  $region8: #{_lambda_.8} parent=0 // pred_region
    _
  $region9: #{_lambda_.8} parent=0 // pred_fallthru
    _
  // Predicated region
  $region10: #{_lambda_.8} parent=0 // pred_check
    _
  $region11: #{_lambda_.8} parent=0 // pred_check_branch
    %15 = sbr.rel (0) target = $region13
  $region12: #{_lambda_.8} parent=0 // pred_region
    _
  $region13: #{_lambda_.8} parent=0 // pred_fallthru
    _
  // Predicated region
  $region14: #{_lambda_.8} parent=0 // pred_check
    _
  $region15: #{_lambda_.8} parent=0 // pred_check_branch
    %17 = sbr.rel (0) target = $region17
  $region16: #{_lambda_.8} parent=0 // pred_region
    _
  $region17: #{_lambda_.8} parent=0 // pred_fallthru
    _
  // Predicated region
  $region18: #{_lambda_.8} parent=0 // pred_check
    _
  $region19: #{_lambda_.8} parent=0 // pred_check_branch
    %19 = sbr.rel (0) target = $region21
  $region20: #{_lambda_.8} parent=0 // pred_region
    _
  $region21: #{_lambda_.8} parent=0 // pred_fallthru
    _
  %v20 = vld [vmem:[%s0] sm:$0xff]
  %v21 = vld [vmem:[%s0 + $0x8] sm:$0xff]
  %v22 = vld [vmem:[%s0 + $0x10] sm:$0xff]
  %v23 = vld [vmem:[%s0 + $0x18] sm:$0xff]
  %v24 = vld [vmem:[%s0 + $0x20] sm:$0xff]
  %v25 = vld [vmem:[%s0 + $0x28] sm:$0xff]
  %v26 = vld [vmem:[%s0 + $0x30] sm:$0xff]
  %v27 = vld [vmem:[%s0 + $0x38] sm:$0xff]
  %v28 = vld [vmem:[%s0 + $0x40] sm:$0xff]
  %v29 = vld [vmem:[%s0 + $0x48] sm:$0xff]
  %v30 = vld [vmem:[%s0 + $0x50] sm:$0xff]
  %v31 = vld [vmem:[%s0 + $0x58] sm:$0xff]
  %v32 = vld [vmem:[%s0 + $0x60] sm:$0xff]
  %v33 = vld [vmem:[%s0 + $0x68] sm:$0xff]
  %v34 = vld [vmem:[%s0 + $0x70] sm:$0xff]
  %v35 = vld [vmem:[%s1] sm:$0xff]
  %v36 = vld [vmem:[%s1 + $0x8] sm:$0xff]
  %v37 = vld [vmem:[%s1 + $0x10] sm:$0xff]
  %v38 = vld [vmem:[%s1 + $0x18] sm:$0xff]
  %v39 = vld [vmem:[%s1 + $0x20] sm:$0xff]
  %v40 = vld [vmem:[%s1 + $0x28] sm:$0xff]
  %v41 = vld [vmem:[%s1 + $0x30] sm:$0xff]
  %v42 = vld [vmem:[%s1 + $0x38] sm:$0xff]
  %v43 = vld [vmem:[%s1 + $0x40] sm:$0xff]
  %v44 = vld [vmem:[%s1 + $0x48] sm:$0xff]
  %v45 = vld [vmem:[%s1 + $0x50] sm:$0xff]
  %v46 = vld [vmem:[%s1 + $0x58] sm:$0xff]
  %v47 = vld [vmem:[%s1 + $0x60] sm:$0xff]
  %v48 = vld [vmem:[%s1 + $0x68] sm:$0xff]
  %v49 = vld [vmem:[%s1 + $0x70] sm:$0xff]
  %v50 = vmul.f32 %v20, %v35
  %v51 = vmul.f32 %v21, %v36
  %v52 = vmul.f32 %v22, %v37
  %v53 = vmul.f32 %v23, %v38
  %v54 = vmul.f32 %v24, %v39
  %v55 = vmul.f32 %v25, %v40
  %v56 = vmul.f32 %v26, %v41
  %v57 = vmul.f32 %v27, %v42
  %v58 = vmul.f32 %v28, %v43
  %v59 = vmul.f32 %v29, %v44
  %v60 = vmul.f32 %v30, %v45
  %v61 = vmul.f32 %v31, %v46
  %v62 = vmul.f32 %v32, %v47
  %v63 = vmul.f32 %v33, %v48
  %v64 = vmul.f32 %v34, %v49
  %v65 = vpack.c.bf16 %v55, %v50
  %v66 = vpack.c.bf16 %v56, %v51
  %v67 = vpack.c.bf16 %v57, %v52
  %v68 = vpack.c.bf16 %v58, %v53
  %v69 = vpack.c.bf16 %v59, %v54
  %v70 = vpack.c.bf16 %v60, %v60
  %v71 = vpack.c.bf16 %v61, %v61
  %v72 = vpack.c.bf16 %v62, %v62
  %v73 = vpack.c.bf16 %v63, %v63
  %v74 = vpack.c.bf16 %v64, %v64
  %v75 = vld [vmem:[%s2] sm:$0xff]
  %v76 = vld [vmem:[%s2 + $0x8] sm:$0xff]
  %v77 = vld [vmem:[%s2 + $0x10] sm:$0xff]
  %v78 = vld [vmem:[%s2 + $0x18] sm:$0xff]
  %v79 = vld [vmem:[%s2 + $0x20] sm:$0xff]
  %v80 = vld [vmem:[%s2 + $0x28] sm:$0xff]
  %v81 = vld [vmem:[%s2 + $0x30] sm:$0xff]
  %v82 = vld [vmem:[%s2 + $0x38] sm:$0xff]
  %v83 = vld [vmem:[%s2 + $0x40] sm:$0xff]
  %v84 = vld [vmem:[%s2 + $0x48] sm:$0xff]
  %v85 = vld [vmem:[%s2 + $0x50] sm:$0xff]
  %v86 = vld [vmem:[%s2 + $0x58] sm:$0xff]
  %v87 = vld [vmem:[%s2 + $0x60] sm:$0xff]
  %v88 = vld [vmem:[%s2 + $0x68] sm:$0xff]
  %v89 = vld [vmem:[%s2 + $0x70] sm:$0xff]
  %v90 = vmul.f32 %v20, %v75
  %v91 = vmul.f32 %v21, %v76
  %v92 = vmul.f32 %v22, %v77
  %v93 = vmul.f32 %v23, %v78
  %v94 = vmul.f32 %v24, %v79
  %v95 = vmul.f32 %v25, %v80
  %v96 = vmul.f32 %v26, %v81
  %v97 = vmul.f32 %v27, %v82
  %v98 = vmul.f32 %v28, %v83
  %v99 = vmul.f32 %v29, %v84
  %v100 = vmul.f32 %v30, %v85
  %v101 = vmul.f32 %v31, %v86
  %v102 = vmul.f32 %v32, %v87
  %v103 = vmul.f32 %v33, %v88
  %v104 = vmul.f32 %v34, %v89
  %v105 = vpack.c.bf16 %v95, %v90
  %v106 = vpack.c.bf16 %v96, %v91
  %v107 = vpack.c.bf16 %v97, %v92
  %v108 = vpack.c.bf16 %v98, %v93
  %v109 = vpack.c.bf16 %v99, %v94
  %v110 = vpack.c.bf16 %v100, %v100
  %v111 = vpack.c.bf16 %v101, %v101
  %v112 = vpack.c.bf16 %v102, %v102
  %v113 = vpack.c.bf16 %v103, %v103
  %v114 = vpack.c.bf16 %v104, %v104
  %v115 = vld [vmem:[%s3] sm:$0xff]
  %v116 = vld [vmem:[%s3 + $0x8] sm:$0xff]
  %v117 = vld [vmem:[%s3 + $0x10] sm:$0xff]
  %v118 = vld [vmem:[%s3 + $0x18] sm:$0xff]
  %v119 = vld [vmem:[%s3 + $0x20] sm:$0xff]
  %v120 = vld [vmem:[%s3 + $0x28] sm:$0xff]
  %v121 = vld [vmem:[%s3 + $0x30] sm:$0xff]
  %v122 = vld [vmem:[%s3 + $0x38] sm:$0xff]
  %v123 = vld [vmem:[%s3 + $0x40] sm:$0xff]
  %v124 = vld [vmem:[%s3 + $0x48] sm:$0xff]
  %v125 = vld [vmem:[%s3 + $0x50] sm:$0xff]
  %v126 = vld [vmem:[%s3 + $0x58] sm:$0xff]
  %v127 = vld [vmem:[%s3 + $0x60] sm:$0xff]
  %v128 = vld [vmem:[%s3 + $0x68] sm:$0xff]
  %v129 = vld [vmem:[%s3 + $0x70] sm:$0xff]
  %v130 = vld [vmem:[%s3 + $0x78] sm:$0xff]
  %v131 = vld [vmem:[%s3 + $0x80] sm:$0xff]
  %v132 = vld [vmem:[%s3 + $0x88] sm:$0xff]
  %v133 = vld [vmem:[%s3 + $0x90] sm:$0xff]
  %v134 = vld [vmem:[%s3 + $0x98] sm:$0xff]
  %v135 = vld [vmem:[%s3 + $0xa0] sm:$0xff]
  %v136 = vld [vmem:[%s3 + $0xa8] sm:$0xff]
  %v137 = vld [vmem:[%s3 + $0xb0] sm:$0xff]
  %v138 = vld [vmem:[%s3 + $0xb8] sm:$0xff]
  %v139 = vld [vmem:[%s3 + $0xc0] sm:$0xff]
  %v140 = vld [vmem:[%s3 + $0xc8] sm:$0xff]
  %v141 = vld [vmem:[%s3 + $0xd0] sm:$0xff]
  %v142 = vld [vmem:[%s3 + $0xd8] sm:$0xff]
  %v143 = vld [vmem:[%s3 + $0xe0] sm:$0xff]
  %v144 = vld [vmem:[%s3 + $0xe8] sm:$0xff]
  %v145 = vld [vmem:[%s3 + $0xf0] sm:$0xff]
  %v146 = vld [vmem:[%s3 + $0xf8] sm:$0xff]
  %v147 = vld [vmem:[%s3 + $0x100] sm:$0xff]
  %v148 = vld [vmem:[%s3 + $0x108] sm:$0xff]
  %v149 = vld [vmem:[%s3 + $0x110] sm:$0xff]
  %v150 = vld [vmem:[%s3 + $0x118] sm:$0xff]
  %v151 = vld [vmem:[%s3 + $0x120] sm:$0xff]
  %v152 = vld [vmem:[%s3 + $0x128] sm:$0xff]
  %v153 = vld [vmem:[%s3 + $0x130] sm:$0xff]
  %v154 = vld [vmem:[%s3 + $0x138] sm:$0xff]
  %v155 = vld [vmem:[%s3 + $0x140] sm:$0xff]
  %v156 = vld [vmem:[%s3 + $0x148] sm:$0xff]
  %v157 = vld [vmem:[%s3 + $0x150] sm:$0xff]
  %v158 = vld [vmem:[%s3 + $0x158] sm:$0xff]
  %v159 = vld [vmem:[%s3 + $0x160] sm:$0xff]
  %v160 = vld [vmem:[%s3 + $0x168] sm:$0xff]
  %v161 = vld [vmem:[%s3 + $0x170] sm:$0xff]
  %v162 = vld [vmem:[%s3 + $0x178] sm:$0xff]
  %v163 = vld [vmem:[%s3 + $0x180] sm:$0xff]
  %v164 = vld [vmem:[%s3 + $0x188] sm:$0xff]
  %v165 = vld [vmem:[%s3 + $0x190] sm:$0xff]
  %v166 = vld [vmem:[%s3 + $0x198] sm:$0xff]
  %v167 = vld [vmem:[%s3 + $0x1a0] sm:$0xff]
  %v168 = vld [vmem:[%s3 + $0x1a8] sm:$0xff]
  %v169 = vld [vmem:[%s3 + $0x1b0] sm:$0xff]
  %v170 = vld [vmem:[%s3 + $0x1b8] sm:$0xff]
  %v171 = vld [vmem:[%s3 + $0x1c0] sm:$0xff]
  %v172 = vld [vmem:[%s3 + $0x1c8] sm:$0xff]
  %v173 = vld [vmem:[%s3 + $0x1d0] sm:$0xff]
  %v174 = vld [vmem:[%s3 + $0x1d8] sm:$0xff]
  %v175 = vld [vmem:[%s3 + $0x1e0] sm:$0xff]
  %v176 = vld [vmem:[%s3 + $0x1e8] sm:$0xff]
  %v177 = vld [vmem:[%s3 + $0x1f0] sm:$0xff]
  %v178 = vld [vmem:[%s3 + $0x1f8] sm:$0xff]
  %v179 = vld [vmem:[%s3 + $0x200] sm:$0xff]
  %v180 = vld [vmem:[%s3 + $0x208] sm:$0xff]
  %v181 = vld [vmem:[%s3 + $0x210] sm:$0xff]
  %v182 = vld [vmem:[%s3 + $0x218] sm:$0xff]
  %v183 = vld [vmem:[%s3 + $0x220] sm:$0xff]
  %v184 = vld [vmem:[%s3 + $0x228] sm:$0xff]
  %v185 = vld [vmem:[%s3 + $0x230] sm:$0xff]
  %v186 = vld [vmem:[%s3 + $0x238] sm:$0xff]
  %v187 = vld [vmem:[%s3 + $0x240] sm:$0xff]
  %v188 = vld [vmem:[%s3 + $0x248] sm:$0xff]
  %v189 = vld [vmem:[%s3 + $0x250] sm:$0xff]
  %v190 = vld [vmem:[%s3 + $0x258] sm:$0xff]
  %v191 = vld [vmem:[%s3 + $0x260] sm:$0xff]
  %v192 = vld [vmem:[%s3 + $0x268] sm:$0xff]
  %v193 = vld [vmem:[%s3 + $0x270] sm:$0xff]
  %v194 = vld [vmem:[%s3 + $0x278] sm:$0xff]
  %v195 = vld [vmem:[%s3 + $0x280] sm:$0xff]
  %v196 = vld [vmem:[%s3 + $0x288] sm:$0xff]
  %v197 = vld [vmem:[%s3 + $0x290] sm:$0xff]
  %v198 = vld [vmem:[%s3 + $0x298] sm:$0xff]
  %v199 = vld [vmem:[%s3 + $0x2a0] sm:$0xff]
  %v200 = vld [vmem:[%s3 + $0x2a8] sm:$0xff]
  %v201 = vld [vmem:[%s3 + $0x2b0] sm:$0xff]
  %v202 = vld [vmem:[%s3 + $0x2b8] sm:$0xff]
  %v203 = vld [vmem:[%s3 + $0x2c0] sm:$0xff]
  %v204 = vld [vmem:[%s3 + $0x2c8] sm:$0xff]
  %v205 = vld [vmem:[%s3 + $0x2d0] sm:$0xff]
  %v206 = vld [vmem:[%s3 + $0x2d8] sm:$0xff]
  %v207 = vld [vmem:[%s3 + $0x2e0] sm:$0xff]
  %v208 = vld [vmem:[%s3 + $0x2e8] sm:$0xff]
  %v209 = vld [vmem:[%s3 + $0x2f0] sm:$0xff]
  %v210 = vld [vmem:[%s3 + $0x2f8] sm:$0xff]
  %v211 = vld [vmem:[%s3 + $0x300] sm:$0xff]
  %v212 = vld [vmem:[%s3 + $0x308] sm:$0xff]
  %v213 = vld [vmem:[%s3 + $0x310] sm:$0xff]
  %v214 = vld [vmem:[%s3 + $0x318] sm:$0xff]
  %v215 = vld [vmem:[%s3 + $0x320] sm:$0xff]
  %v216 = vld [vmem:[%s3 + $0x328] sm:$0xff]
  %v217 = vld [vmem:[%s3 + $0x330] sm:$0xff]
  %v218 = vld [vmem:[%s3 + $0x338] sm:$0xff]
  %v219 = vld [vmem:[%s3 + $0x340] sm:$0xff]
  %v220 = vld [vmem:[%s3 + $0x348] sm:$0xff]
  %v221 = vld [vmem:[%s3 + $0x350] sm:$0xff]
  %v222 = vld [vmem:[%s3 + $0x358] sm:$0xff]
  %v223 = vld [vmem:[%s3 + $0x360] sm:$0xff]
  %v224 = vld [vmem:[%s3 + $0x368] sm:$0xff]
  %v225 = vld [vmem:[%s3 + $0x370] sm:$0xff]
  %v226 = vld [vmem:[%s3 + $0x378] sm:$0xff]
  %v227 = vld [vmem:[%s3 + $0x380] sm:$0xff]
  %v228 = vld [vmem:[%s3 + $0x388] sm:$0xff]
  %v229 = vld [vmem:[%s3 + $0x390] sm:$0xff]
  %v230 = vld [vmem:[%s3 + $0x398] sm:$0xff]
  %v231 = vld [vmem:[%s3 + $0x3a0] sm:$0xff]
  %v232 = vld [vmem:[%s3 + $0x3a8] sm:$0xff]
  %v233 = vld [vmem:[%s3 + $0x3b0] sm:$0xff]
  %v234 = vld [vmem:[%s3 + $0x3b8] sm:$0xff]
  %v235 = vld [vmem:[%s3 + $0x3c0] sm:$0xff]
  %v236 = vld [vmem:[%s3 + $0x3c8] sm:$0xff]
  %v237 = vld [vmem:[%s3 + $0x3d0] sm:$0xff]
  %v238 = vld [vmem:[%s3 + $0x3d8] sm:$0xff]
  %v239 = vld [vmem:[%s3 + $0x3e0] sm:$0xff]
  %v240 = vld [vmem:[%s3 + $0x3e8] sm:$0xff]
  %v241 = vld [vmem:[%s3 + $0x3f0] sm:$0xff]
  %v242 = vld [vmem:[%s3 + $0x3f8] sm:$0xff]
  %v243 = vld [vmem:[%s3 + $0x400] sm:$0xff]
  %v244 = vld [vmem:[%s3 + $0x408] sm:$0xff]
  %v245 = vld [vmem:[%s3 + $0x410] sm:$0xff]
  %v246 = vld [vmem:[%s3 + $0x418] sm:$0xff]
  %v247 = vld [vmem:[%s3 + $0x420] sm:$0xff]
  %v248 = vld [vmem:[%s3 + $0x428] sm:$0xff]
  %v249 = vld [vmem:[%s3 + $0x430] sm:$0xff]
  %v250 = vld [vmem:[%s3 + $0x438] sm:$0xff]
  %v251 = vld [vmem:[%s3 + $0x440] sm:$0xff]
  %v252 = vld [vmem:[%s3 + $0x448] sm:$0xff]
  %v253 = vld [vmem:[%s3 + $0x450] sm:$0xff]
  %v254 = vld [vmem:[%s3 + $0x458] sm:$0xff]
  %v255 = vld [vmem:[%s3 + $0x460] sm:$0xff]
  %v256 = vld [vmem:[%s3 + $0x468] sm:$0xff]
  %v257 = vld [vmem:[%s3 + $0x470] sm:$0xff]
  %v258 = vld [vmem:[%s3 + $0x478] sm:$0xff]
  %v259 = vld [vmem:[%s3 + $0x480] sm:$0xff]
  %v260 = vld [vmem:[%s3 + $0x488] sm:$0xff]
  %v261 = vld [vmem:[%s3 + $0x490] sm:$0xff]
  %v262 = vld [vmem:[%s3 + $0x498] sm:$0xff]
  %v263 = vld [vmem:[%s3 + $0x4a0] sm:$0xff]
  %v264 = vld [vmem:[%s3 + $0x4a8] sm:$0xff]
  %v265 = vld [vmem:[%s3 + $0x4b0] sm:$0xff]
  %v266 = vld [vmem:[%s3 + $0x4b8] sm:$0xff]
  %v267 = vld [vmem:[%s3 + $0x4c0] sm:$0xff]
  %v268 = vld [vmem:[%s3 + $0x4c8] sm:$0xff]
  %v269 = vld [vmem:[%s3 + $0x4d0] sm:$0xff]
  %v270 = vld [vmem:[%s3 + $0x4d8] sm:$0xff]
  %v271 = vld [vmem:[%s3 + $0x4e0] sm:$0xff]
  %v272 = vld [vmem:[%s3 + $0x4e8] sm:$0xff]
  %v273 = vld [vmem:[%s3 + $0x4f0] sm:$0xff]
  %v274 = vld [vmem:[%s3 + $0x4f8] sm:$0xff]
  %v275 = vld [vmem:[%s3 + $0x500] sm:$0xff]
  %v276 = vld [vmem:[%s3 + $0x508] sm:$0xff]
  %v277 = vld [vmem:[%s3 + $0x510] sm:$0xff]
  %v278 = vld [vmem:[%s3 + $0x518] sm:$0xff]
  %v279 = vld [vmem:[%s3 + $0x520] sm:$0xff]
  %v280 = vld [vmem:[%s3 + $0x528] sm:$0xff]
  %v281 = vld [vmem:[%s3 + $0x530] sm:$0xff]
  %v282 = vld [vmem:[%s3 + $0x538] sm:$0xff]
  %v283 = vld [vmem:[%s3 + $0x540] sm:$0xff]
  %v284 = vld [vmem:[%s3 + $0x548] sm:$0xff]
  %v285 = vld [vmem:[%s3 + $0x550] sm:$0xff]
  %v286 = vld [vmem:[%s3 + $0x558] sm:$0xff]
  %v287 = vld [vmem:[%s3 + $0x560] sm:$0xff]
  %v288 = vld [vmem:[%s3 + $0x568] sm:$0xff]
  %v289 = vld [vmem:[%s3 + $0x570] sm:$0xff]
  %v290 = vld [vmem:[%s3 + $0x578] sm:$0xff]
  %v291 = vld [vmem:[%s3 + $0x580] sm:$0xff]
  %v292 = vld [vmem:[%s3 + $0x588] sm:$0xff]
  %v293 = vld [vmem:[%s3 + $0x590] sm:$0xff]
  %v294 = vld [vmem:[%s3 + $0x598] sm:$0xff]
  %v295 = vld [vmem:[%s3 + $0x5a0] sm:$0xff]
  %v296 = vld [vmem:[%s3 + $0x5a8] sm:$0xff]
  %v297 = vld [vmem:[%s3 + $0x5b0] sm:$0xff]
  %v298 = vld [vmem:[%s3 + $0x5b8] sm:$0xff]
  %v299 = vld [vmem:[%s3 + $0x5c0] sm:$0xff]
  %v300 = vld [vmem:[%s3 + $0x5c8] sm:$0xff]
  %v301 = vld [vmem:[%s3 + $0x5d0] sm:$0xff]
  %v302 = vld [vmem:[%s3 + $0x5d8] sm:$0xff]
  %v303 = vld [vmem:[%s3 + $0x5e0] sm:$0xff]
  %v304 = vld [vmem:[%s3 + $0x5e8] sm:$0xff]
  %v305 = vld [vmem:[%s3 + $0x5f0] sm:$0xff]
  %v306 = vld [vmem:[%s3 + $0x5f8] sm:$0xff]
  %v307 = vld [vmem:[%s3 + $0x600] sm:$0xff]
  %v308 = vld [vmem:[%s3 + $0x608] sm:$0xff]
  %v309 = vld [vmem:[%s3 + $0x610] sm:$0xff]
  %v310 = vld [vmem:[%s3 + $0x618] sm:$0xff]
  %v311 = vld [vmem:[%s3 + $0x620] sm:$0xff]
  %v312 = vld [vmem:[%s3 + $0x628] sm:$0xff]
  %v313 = vld [vmem:[%s3 + $0x630] sm:$0xff]
  %v314 = vld [vmem:[%s3 + $0x638] sm:$0xff]
  %v315 = vld [vmem:[%s3 + $0x640] sm:$0xff]
  %v316 = vld [vmem:[%s3 + $0x648] sm:$0xff]
  %v317 = vld [vmem:[%s3 + $0x650] sm:$0xff]
  %v318 = vld [vmem:[%s3 + $0x658] sm:$0xff]
  %v319 = vld [vmem:[%s3 + $0x660] sm:$0xff]
  %v320 = vld [vmem:[%s3 + $0x668] sm:$0xff]
  %v321 = vld [vmem:[%s3 + $0x670] sm:$0xff]
  %v322 = vld [vmem:[%s3 + $0x678] sm:$0xff]
  %v323 = vld [vmem:[%s3 + $0x680] sm:$0xff]
  %v324 = vld [vmem:[%s3 + $0x688] sm:$0xff]
  %v325 = vld [vmem:[%s3 + $0x690] sm:$0xff]
  %v326 = vld [vmem:[%s3 + $0x698] sm:$0xff]
  %v327 = vld [vmem:[%s3 + $0x6a0] sm:$0xff]
  %v328 = vld [vmem:[%s3 + $0x6a8] sm:$0xff]
  %v329 = vld [vmem:[%s3 + $0x6b0] sm:$0xff]
  %v330 = vld [vmem:[%s3 + $0x6b8] sm:$0xff]
  %v331 = vld [vmem:[%s3 + $0x6c0] sm:$0xff]
  %v332 = vld [vmem:[%s3 + $0x6c8] sm:$0xff]
  %v333 = vld [vmem:[%s3 + $0x6d0] sm:$0xff]
  %v334 = vld [vmem:[%s3 + $0x6d8] sm:$0xff]
  %v335 = vld [vmem:[%s3 + $0x6e0] sm:$0xff]
  %v336 = vld [vmem:[%s3 + $0x6e8] sm:$0xff]
  %v337 = vld [vmem:[%s3 + $0x6f0] sm:$0xff]
  %v338 = vld [vmem:[%s3 + $0x6f8] sm:$0xff]
  %v339 = vld [vmem:[%s3 + $0x700] sm:$0xff]
  %v340 = vld [vmem:[%s3 + $0x708] sm:$0xff]
  %v341 = vld [vmem:[%s3 + $0x710] sm:$0xff]
  %v342 = vld [vmem:[%s3 + $0x718] sm:$0xff]
  %v343 = vld [vmem:[%s3 + $0x720] sm:$0xff]
  %v344 = vld [vmem:[%s3 + $0x728] sm:$0xff]
  %v345 = vld [vmem:[%s3 + $0x730] sm:$0xff]
  %v346 = vld [vmem:[%s3 + $0x738] sm:$0xff]
  %v347 = vld [vmem:[%s3 + $0x740] sm:$0xff]
  %v348 = vld [vmem:[%s3 + $0x748] sm:$0xff]
  %v349 = vld [vmem:[%s3 + $0x750] sm:$0xff]
  %v350 = vld [vmem:[%s3 + $0x758] sm:$0xff]
  %v351 = vld [vmem:[%s3 + $0x760] sm:$0xff]
  %v352 = vld [vmem:[%s3 + $0x768] sm:$0xff]
  %v353 = vld [vmem:[%s3 + $0x770] sm:$0xff]
  %v354 = vld [vmem:[%s3 + $0x778] sm:$0xff]
  %v355 = vld [vmem:[%s3 + $0x780] sm:$0xff]
  %v356 = vld [vmem:[%s3 + $0x788] sm:$0xff]
  %v357 = vld [vmem:[%s3 + $0x790] sm:$0xff]
  %v358 = vld [vmem:[%s3 + $0x798] sm:$0xff]
  %v359 = vld [vmem:[%s3 + $0x7a0] sm:$0xff]
  %v360 = vld [vmem:[%s3 + $0x7a8] sm:$0xff]
  %v361 = vld [vmem:[%s3 + $0x7b0] sm:$0xff]
  %v362 = vld [vmem:[%s3 + $0x7b8] sm:$0xff]
  %v363 = vld [vmem:[%s3 + $0x7c0] sm:$0xff]
  %v364 = vld [vmem:[%s3 + $0x7c8] sm:$0xff]
  %v365 = vld [vmem:[%s3 + $0x7d0] sm:$0xff]
  %v366 = vld [vmem:[%s3 + $0x7d8] sm:$0xff]
  %v367 = vld [vmem:[%s3 + $0x7e0] sm:$0xff]
  %v368 = vld [vmem:[%s3 + $0x7e8] sm:$0xff]
  %v369 = vld [vmem:[%s3 + $0x7f0] sm:$0xff]
  %v370 = vld [vmem:[%s3 + $0x7f8] sm:$0xff]
  %v371 = vld [vmem:[%s3 + $0x800] sm:$0xff]
  %v372 = vld [vmem:[%s3 + $0x808] sm:$0xff]
  %v373 = vld [vmem:[%s3 + $0x810] sm:$0xff]
  %v374 = vld [vmem:[%s3 + $0x818] sm:$0xff]
  %v375 = vld [vmem:[%s3 + $0x820] sm:$0xff]
  %v376 = vld [vmem:[%s3 + $0x828] sm:$0xff]
  %v377 = vld [vmem:[%s3 + $0x830] sm:$0xff]
  %v378 = vld [vmem:[%s3 + $0x838] sm:$0xff]
  %v379 = vld [vmem:[%s3 + $0x840] sm:$0xff]
  %v380 = vld [vmem:[%s3 + $0x848] sm:$0xff]
  %v381 = vld [vmem:[%s3 + $0x850] sm:$0xff]
  %v382 = vld [vmem:[%s3 + $0x858] sm:$0xff]
  %v383 = vld [vmem:[%s3 + $0x860] sm:$0xff]
  %v384 = vld [vmem:[%s3 + $0x868] sm:$0xff]
  %v385 = vld [vmem:[%s3 + $0x870] sm:$0xff]
  %v386 = vld [vmem:[%s3 + $0x878] sm:$0xff]
  %v387 = vld [vmem:[%s3 + $0x880] sm:$0xff]
  %v388 = vld [vmem:[%s3 + $0x888] sm:$0xff]
  %v389 = vld [vmem:[%s3 + $0x890] sm:$0xff]
  %v390 = vld [vmem:[%s3 + $0x898] sm:$0xff]
  %v391 = vld [vmem:[%s3 + $0x8a0] sm:$0xff]
  %v392 = vld [vmem:[%s3 + $0x8a8] sm:$0xff]
  %v393 = vld [vmem:[%s3 + $0x8b0] sm:$0xff]
  %v394 = vld [vmem:[%s3 + $0x8b8] sm:$0xff]
  %v395 = vld [vmem:[%s3 + $0x8c0] sm:$0xff]
  %v396 = vld [vmem:[%s3 + $0x8c8] sm:$0xff]
  %v397 = vld [vmem:[%s3 + $0x8d0] sm:$0xff]
  %v398 = vld [vmem:[%s3 + $0x8d8] sm:$0xff]
  %v399 = vld [vmem:[%s3 + $0x8e0] sm:$0xff]
  %v400 = vld [vmem:[%s3 + $0x8e8] sm:$0xff]
  %v401 = vld [vmem:[%s3 + $0x8f0] sm:$0xff]
  %v402 = vld [vmem:[%s3 + $0x8f8] sm:$0xff]
  %v403 = vld [vmem:[%s3 + $0x900] sm:$0xff]
  %v404 = vld [vmem:[%s3 + $0x908] sm:$0xff]
  %v405 = vld [vmem:[%s3 + $0x910] sm:$0xff]
  %v406 = vld [vmem:[%s3 + $0x918] sm:$0xff]
  %v407 = vld [vmem:[%s3 + $0x920] sm:$0xff]
  %v408 = vld [vmem:[%s3 + $0x928] sm:$0xff]
  %v409 = vld [vmem:[%s3 + $0x930] sm:$0xff]
  %v410 = vld [vmem:[%s3 + $0x938] sm:$0xff]
  %v411 = vld [vmem:[%s3 + $0x940] sm:$0xff]
  %v412 = vld [vmem:[%s3 + $0x948] sm:$0xff]
  %v413 = vld [vmem:[%s3 + $0x950] sm:$0xff]
  %v414 = vld [vmem:[%s3 + $0x958] sm:$0xff]
  %v415 = vld [vmem:[%s3 + $0x960] sm:$0xff]
  %v416 = vld [vmem:[%s3 + $0x968] sm:$0xff]
  %v417 = vld [vmem:[%s3 + $0x970] sm:$0xff]
  %v418 = vld [vmem:[%s3 + $0x978] sm:$0xff]
  %v419 = vld [vmem:[%s3 + $0x980] sm:$0xff]
  %v420 = vld [vmem:[%s3 + $0x988] sm:$0xff]
  %v421 = vld [vmem:[%s3 + $0x990] sm:$0xff]
  %v422 = vld [vmem:[%s3 + $0x998] sm:$0xff]
  %v423 = vld [vmem:[%s3 + $0x9a0] sm:$0xff]
  %v424 = vld [vmem:[%s3 + $0x9a8] sm:$0xff]
  %v425 = vld [vmem:[%s3 + $0x9b0] sm:$0xff]
  %v426 = vld [vmem:[%s3 + $0x9b8] sm:$0xff]
  %v427 = vld [vmem:[%s3 + $0x9c0] sm:$0xff]
  %v428 = vld [vmem:[%s3 + $0x9c8] sm:$0xff]
  %v429 = vld [vmem:[%s3 + $0x9d0] sm:$0xff]
  %v430 = vld [vmem:[%s3 + $0x9d8] sm:$0xff]
  %v431 = vld [vmem:[%s3 + $0x9e0] sm:$0xff]
  %v432 = vld [vmem:[%s3 + $0x9e8] sm:$0xff]
  %v433 = vld [vmem:[%s3 + $0x9f0] sm:$0xff]
  %v434 = vld [vmem:[%s3 + $0x9f8] sm:$0xff]
  %v435 = vld [vmem:[%s3 + $0xa00] sm:$0xff]
  %v436 = vld [vmem:[%s3 + $0xa08] sm:$0xff]
  %v437 = vld [vmem:[%s3 + $0xa10] sm:$0xff]
  %v438 = vld [vmem:[%s3 + $0xa18] sm:$0xff]
  %v439 = vld [vmem:[%s3 + $0xa20] sm:$0xff]
  %v440 = vld [vmem:[%s3 + $0xa28] sm:$0xff]
  %v441 = vld [vmem:[%s3 + $0xa30] sm:$0xff]
  %v442 = vld [vmem:[%s3 + $0xa38] sm:$0xff]
  %v443 = vld [vmem:[%s3 + $0xa40] sm:$0xff]
  %v444 = vld [vmem:[%s3 + $0xa48] sm:$0xff]
  %v445 = vld [vmem:[%s3 + $0xa50] sm:$0xff]
  %v446 = vld [vmem:[%s3 + $0xa58] sm:$0xff]
  %v447 = vld [vmem:[%s3 + $0xa60] sm:$0xff]
  %v448 = vld [vmem:[%s3 + $0xa68] sm:$0xff]
  %v449 = vld [vmem:[%s3 + $0xa70] sm:$0xff]
  %v450 = vld [vmem:[%s3 + $0xa78] sm:$0xff]
  %v451 = vld [vmem:[%s3 + $0xa80] sm:$0xff]
  %v452 = vld [vmem:[%s3 + $0xa88] sm:$0xff]
  %v453 = vld [vmem:[%s3 + $0xa90] sm:$0xff]
  %v454 = vld [vmem:[%s3 + $0xa98] sm:$0xff]
  %v455 = vld [vmem:[%s3 + $0xaa0] sm:$0xff]
  %v456 = vld [vmem:[%s3 + $0xaa8] sm:$0xff]
  %v457 = vld [vmem:[%s3 + $0xab0] sm:$0xff]
  %v458 = vld [vmem:[%s3 + $0xab8] sm:$0xff]
  %v459 = vld [vmem:[%s3 + $0xac0] sm:$0xff]
  %v460 = vld [vmem:[%s3 + $0xac8] sm:$0xff]
  %v461 = vld [vmem:[%s3 + $0xad0] sm:$0xff]
  %v462 = vld [vmem:[%s3 + $0xad8] sm:$0xff]
  %v463 = vld [vmem:[%s3 + $0xae0] sm:$0xff]
  %v464 = vld [vmem:[%s3 + $0xae8] sm:$0xff]
  %v465 = vld [vmem:[%s3 + $0xaf0] sm:$0xff]
  %v466 = vld [vmem:[%s3 + $0xaf8] sm:$0xff]
  %v467 = vld [vmem:[%s3 + $0xb00] sm:$0xff]
  %v468 = vld [vmem:[%s3 + $0xb08] sm:$0xff]
  %v469 = vld [vmem:[%s3 + $0xb10] sm:$0xff]
  %v470 = vld [vmem:[%s3 + $0xb18] sm:$0xff]
  %v471 = vld [vmem:[%s3 + $0xb20] sm:$0xff]
  %v472 = vld [vmem:[%s3 + $0xb28] sm:$0xff]
  %v473 = vld [vmem:[%s3 + $0xb30] sm:$0xff]
  %v474 = vld [vmem:[%s3 + $0xb38] sm:$0xff]
  %v475 = vld [vmem:[%s3 + $0xb40] sm:$0xff]
  %v476 = vld [vmem:[%s3 + $0xb48] sm:$0xff]
  %v477 = vld [vmem:[%s3 + $0xb50] sm:$0xff]
  %v478 = vld [vmem:[%s3 + $0xb58] sm:$0xff]
  %v479 = vld [vmem:[%s3 + $0xb60] sm:$0xff]
  %v480 = vld [vmem:[%s3 + $0xb68] sm:$0xff]
  %v481 = vld [vmem:[%s3 + $0xb70] sm:$0xff]
  %v482 = vld [vmem:[%s3 + $0xb78] sm:$0xff]
  %v483 = vld [vmem:[%s3 + $0xb80] sm:$0xff]
  %v484 = vld [vmem:[%s3 + $0xb88] sm:$0xff]
  %v485 = vld [vmem:[%s3 + $0xb90] sm:$0xff]
  %v486 = vld [vmem:[%s3 + $0xb98] sm:$0xff]
  %v487 = vld [vmem:[%s3 + $0xba0] sm:$0xff]
  %v488 = vld [vmem:[%s3 + $0xba8] sm:$0xff]
  %v489 = vld [vmem:[%s3 + $0xbb0] sm:$0xff]
  %v490 = vld [vmem:[%s3 + $0xbb8] sm:$0xff]
  %v491 = vld [vmem:[%s3 + $0xbc0] sm:$0xff]
  %v492 = vld [vmem:[%s3 + $0xbc8] sm:$0xff]
  %v493 = vld [vmem:[%s3 + $0xbd0] sm:$0xff]
  %v494 = vld [vmem:[%s3 + $0xbd8] sm:$0xff]
  %v495 = vld [vmem:[%s3 + $0xbe0] sm:$0xff]
  %v496 = vld [vmem:[%s3 + $0xbe8] sm:$0xff]
  %v497 = vld [vmem:[%s3 + $0xbf0] sm:$0xff]
  %v498 = vld [vmem:[%s3 + $0xbf8] sm:$0xff]
  %v499 = vld [vmem:[%s3 + $0xc00] sm:$0xff]
  %v500 = vld [vmem:[%s3 + $0xc08] sm:$0xff]
  %v501 = vld [vmem:[%s3 + $0xc10] sm:$0xff]
  %v502 = vld [vmem:[%s3 + $0xc18] sm:$0xff]
  %v503 = vld [vmem:[%s3 + $0xc20] sm:$0xff]
  %v504 = vld [vmem:[%s3 + $0xc28] sm:$0xff]
  %v505 = vld [vmem:[%s3 + $0xc30] sm:$0xff]
  %v506 = vld [vmem:[%s3 + $0xc38] sm:$0xff]
  %v507 = vld [vmem:[%s3 + $0xc40] sm:$0xff]
  %v508 = vld [vmem:[%s3 + $0xc48] sm:$0xff]
  %v509 = vld [vmem:[%s3 + $0xc50] sm:$0xff]
  %v510 = vld [vmem:[%s3 + $0xc58] sm:$0xff]
  %v511 = vld [vmem:[%s3 + $0xc60] sm:$0xff]
  %v512 = vld [vmem:[%s3 + $0xc68] sm:$0xff]
  %v513 = vld [vmem:[%s3 + $0xc70] sm:$0xff]
  %v514 = vld [vmem:[%s3 + $0xc78] sm:$0xff]
  %v515 = vld [vmem:[%s3 + $0xc80] sm:$0xff]
  %v516 = vld [vmem:[%s3 + $0xc88] sm:$0xff]
  %v517 = vld [vmem:[%s3 + $0xc90] sm:$0xff]
  %v518 = vld [vmem:[%s3 + $0xc98] sm:$0xff]
  %v519 = vld [vmem:[%s3 + $0xca0] sm:$0xff]
  %v520 = vld [vmem:[%s3 + $0xca8] sm:$0xff]
  %v521 = vld [vmem:[%s3 + $0xcb0] sm:$0xff]
  %v522 = vld [vmem:[%s3 + $0xcb8] sm:$0xff]
  %v523 = vld [vmem:[%s3 + $0xcc0] sm:$0xff]
  %v524 = vld [vmem:[%s3 + $0xcc8] sm:$0xff]
  %v525 = vld [vmem:[%s3 + $0xcd0] sm:$0xff]
  %v526 = vld [vmem:[%s3 + $0xcd8] sm:$0xff]
  %v527 = vld [vmem:[%s3 + $0xce0] sm:$0xff]
  %v528 = vld [vmem:[%s3 + $0xce8] sm:$0xff]
  %v529 = vld [vmem:[%s3 + $0xcf0] sm:$0xff]
  %v530 = vld [vmem:[%s3 + $0xcf8] sm:$0xff]
  %v531 = vld [vmem:[%s3 + $0xd00] sm:$0xff]
  %v532 = vld [vmem:[%s3 + $0xd08] sm:$0xff]
  %v533 = vld [vmem:[%s3 + $0xd10] sm:$0xff]
  %v534 = vld [vmem:[%s3 + $0xd18] sm:$0xff]
  %v535 = vld [vmem:[%s3 + $0xd20] sm:$0xff]
  %v536 = vld [vmem:[%s3 + $0xd28] sm:$0xff]
  %v537 = vld [vmem:[%s3 + $0xd30] sm:$0xff]
  %v538 = vld [vmem:[%s3 + $0xd38] sm:$0xff]
  %v539 = vld [vmem:[%s3 + $0xd40] sm:$0xff]
  %v540 = vld [vmem:[%s3 + $0xd48] sm:$0xff]
  %v541 = vld [vmem:[%s3 + $0xd50] sm:$0xff]
  %v542 = vld [vmem:[%s3 + $0xd58] sm:$0xff]
  %v543 = vld [vmem:[%s3 + $0xd60] sm:$0xff]
  %v544 = vld [vmem:[%s3 + $0xd68] sm:$0xff]
  %v545 = vld [vmem:[%s3 + $0xd70] sm:$0xff]
  %v546 = vld [vmem:[%s3 + $0xd78] sm:$0xff]
  %v547 = vld [vmem:[%s3 + $0xd80] sm:$0xff]
  %v548 = vld [vmem:[%s3 + $0xd88] sm:$0xff]
  %v549 = vld [vmem:[%s3 + $0xd90] sm:$0xff]
  %v550 = vld [vmem:[%s3 + $0xd98] sm:$0xff]
  %v551 = vld [vmem:[%s3 + $0xda0] sm:$0xff]
  %v552 = vld [vmem:[%s3 + $0xda8] sm:$0xff]
  %v553 = vld [vmem:[%s3 + $0xdb0] sm:$0xff]
  %v554 = vld [vmem:[%s3 + $0xdb8] sm:$0xff]
  %v555 = vld [vmem:[%s3 + $0xdc0] sm:$0xff]
  %v556 = vld [vmem:[%s3 + $0xdc8] sm:$0xff]
  %v557 = vld [vmem:[%s3 + $0xdd0] sm:$0xff]
  %v558 = vld [vmem:[%s3 + $0xdd8] sm:$0xff]
  %v559 = vld [vmem:[%s3 + $0xde0] sm:$0xff]
  %v560 = vld [vmem:[%s3 + $0xde8] sm:$0xff]
  %v561 = vld [vmem:[%s3 + $0xdf0] sm:$0xff]
  %v562 = vld [vmem:[%s3 + $0xdf8] sm:$0xff]
  %v563 = vld [vmem:[%s3 + $0xe00] sm:$0xff]
  %v564 = vld [vmem:[%s3 + $0xe08] sm:$0xff]
  %v565 = vld [vmem:[%s3 + $0xe10] sm:$0xff]
  %v566 = vld [vmem:[%s3 + $0xe18] sm:$0xff]
  %v567 = vld [vmem:[%s3 + $0xe20] sm:$0xff]
  %v568 = vld [vmem:[%s3 + $0xe28] sm:$0xff]
  %v569 = vld [vmem:[%s3 + $0xe30] sm:$0xff]
  %v570 = vld [vmem:[%s3 + $0xe38] sm:$0xff]
  %v571 = vld [vmem:[%s3 + $0xe40] sm:$0xff]
  %v572 = vld [vmem:[%s3 + $0xe48] sm:$0xff]
  %v573 = vld [vmem:[%s3 + $0xe50] sm:$0xff]
  %v574 = vld [vmem:[%s3 + $0xe58] sm:$0xff]
  %v575 = vld [vmem:[%s3 + $0xe60] sm:$0xff]
  %v576 = vld [vmem:[%s3 + $0xe68] sm:$0xff]
  %v577 = vld [vmem:[%s3 + $0xe70] sm:$0xff]
  %v578 = vld [vmem:[%s3 + $0xe78] sm:$0xff]
  %v579 = vld [vmem:[%s3 + $0xe80] sm:$0xff]
  %v580 = vld [vmem:[%s3 + $0xe88] sm:$0xff]
  %v581 = vld [vmem:[%s3 + $0xe90] sm:$0xff]
  %v582 = vld [vmem:[%s3 + $0xe98] sm:$0xff]
  %v583 = vld [vmem:[%s3 + $0xea0] sm:$0xff]
  %v584 = vld [vmem:[%s3 + $0xea8] sm:$0xff]
  %v585 = vld [vmem:[%s3 + $0xeb0] sm:$0xff]
  %v586 = vld [vmem:[%s3 + $0xeb8] sm:$0xff]
  %v587 = vld [vmem:[%s3 + $0xec0] sm:$0xff]
  %v588 = vld [vmem:[%s3 + $0xec8] sm:$0xff]
  %v589 = vld [vmem:[%s3 + $0xed0] sm:$0xff]
  %v590 = vld [vmem:[%s3 + $0xed8] sm:$0xff]
  %v591 = vld [vmem:[%s3 + $0xee0] sm:$0xff]
  %v592 = vld [vmem:[%s3 + $0xee8] sm:$0xff]
  %v593 = vld [vmem:[%s3 + $0xef0] sm:$0xff]
  %v594 = vld [vmem:[%s3 + $0xef8] sm:$0xff]
  %v595 = vld [vmem:[%s3 + $0xf00] sm:$0xff]
  %v596 = vld [vmem:[%s3 + $0xf08] sm:$0xff]
  %v597 = vld [vmem:[%s3 + $0xf10] sm:$0xff]
  %v598 = vld [vmem:[%s3 + $0xf18] sm:$0xff]
  %v599 = vld [vmem:[%s3 + $0xf20] sm:$0xff]
  %v600 = vld [vmem:[%s3 + $0xf28] sm:$0xff]
  %v601 = vld [vmem:[%s3 + $0xf30] sm:$0xff]
  %v602 = vld [vmem:[%s3 + $0xf38] sm:$0xff]
  %v603 = vld [vmem:[%s3 + $0xf40] sm:$0xff]
  %v604 = vld [vmem:[%s3 + $0xf48] sm:$0xff]
  %v605 = vld [vmem:[%s3 + $0xf50] sm:$0xff]
  %v606 = vld [vmem:[%s3 + $0xf58] sm:$0xff]
  %v607 = vld [vmem:[%s3 + $0xf60] sm:$0xff]
  %v608 = vld [vmem:[%s3 + $0xf68] sm:$0xff]
  %v609 = vld [vmem:[%s3 + $0xf70] sm:$0xff]
  %v610 = vld [vmem:[%s3 + $0xf78] sm:$0xff]
  %v611 = vld [vmem:[%s3 + $0xf80] sm:$0xff]
  %v612 = vld [vmem:[%s3 + $0xf88] sm:$0xff]
  %v613 = vld [vmem:[%s3 + $0xf90] sm:$0xff]
  %v614 = vld [vmem:[%s3 + $0xf98] sm:$0xff]
  %v615 = vld [vmem:[%s3 + $0xfa0] sm:$0xff]
  %v616 = vld [vmem:[%s3 + $0xfa8] sm:$0xff]
  %v617 = vld [vmem:[%s3 + $0xfb0] sm:$0xff]
  %v618 = vld [vmem:[%s3 + $0xfb8] sm:$0xff]
  %v619 = vld [vmem:[%s3 + $0xfc0] sm:$0xff]
  %v620 = vld [vmem:[%s3 + $0xfc8] sm:$0xff]
  %v621 = vld [vmem:[%s3 + $0xfd0] sm:$0xff]
  %v622 = vld [vmem:[%s3 + $0xfd8] sm:$0xff]
  %v623 = vld [vmem:[%s3 + $0xfe0] sm:$0xff]
  %v624 = vld [vmem:[%s3 + $0xfe8] sm:$0xff]
  %v625 = vld [vmem:[%s3 + $0xff0] sm:$0xff]
  %v626 = vld [vmem:[%s3 + $0xff8] sm:$0xff]
  %v627 = vld [vmem:[%s3 + $0x1000] sm:$0xff]
  %v628 = vld [vmem:[%s3 + $0x1008] sm:$0xff]
  %v629 = vld [vmem:[%s3 + $0x1010] sm:$0xff]
  %v630 = vld [vmem:[%s3 + $0x1018] sm:$0xff]
  %v631 = vld [vmem:[%s3 + $0x1020] sm:$0xff]
  %v632 = vld [vmem:[%s3 + $0x1028] sm:$0xff]
  %v633 = vld [vmem:[%s3 + $0x1030] sm:$0xff]
  %v634 = vld [vmem:[%s3 + $0x1038] sm:$0xff]
  %v635 = vld [vmem:[%s3 + $0x1040] sm:$0xff]
  %v636 = vld [vmem:[%s3 + $0x1048] sm:$0xff]
  %v637 = vld [vmem:[%s3 + $0x1050] sm:$0xff]
  %v638 = vld [vmem:[%s3 + $0x1058] sm:$0xff]
  %v639 = vld [vmem:[%s3 + $0x1060] sm:$0xff]
  %v640 = vld [vmem:[%s3 + $0x1068] sm:$0xff]
  %v641 = vld [vmem:[%s3 + $0x1070] sm:$0xff]
  %v642 = vld [vmem:[%s3 + $0x1078] sm:$0xff]
  %v643 = vld [vmem:[%s3 + $0x1080] sm:$0xff]
  %v644 = vld [vmem:[%s3 + $0x1088] sm:$0xff]
  %v645 = vld [vmem:[%s3 + $0x1090] sm:$0xff]
  %v646 = vld [vmem:[%s3 + $0x1098] sm:$0xff]
  %v647 = vld [vmem:[%s3 + $0x10a0] sm:$0xff]
  %v648 = vld [vmem:[%s3 + $0x10a8] sm:$0xff]
  %v649 = vld [vmem:[%s3 + $0x10b0] sm:$0xff]
  %v650 = vld [vmem:[%s3 + $0x10b8] sm:$0xff]
  %v651 = vld [vmem:[%s3 + $0x10c0] sm:$0xff]
  %v652 = vld [vmem:[%s3 + $0x10c8] sm:$0xff]
  %v653 = vld [vmem:[%s3 + $0x10d0] sm:$0xff]
  %v654 = vld [vmem:[%s3 + $0x10d8] sm:$0xff]
  %v655 = vld [vmem:[%s3 + $0x10e0] sm:$0xff]
  %v656 = vld [vmem:[%s3 + $0x10e8] sm:$0xff]
  %v657 = vld [vmem:[%s3 + $0x10f0] sm:$0xff]
  %v658 = vld [vmem:[%s3 + $0x10f8] sm:$0xff]
  %v659 = vld [vmem:[%s3 + $0x1100] sm:$0xff]
  %v660 = vld [vmem:[%s3 + $0x1108] sm:$0xff]
  %v661 = vld [vmem:[%s3 + $0x1110] sm:$0xff]
  %v662 = vld [vmem:[%s3 + $0x1118] sm:$0xff]
  %v663 = vld [vmem:[%s3 + $0x1120] sm:$0xff]
  %v664 = vld [vmem:[%s3 + $0x1128] sm:$0xff]
  %v665 = vld [vmem:[%s3 + $0x1130] sm:$0xff]
  %v666 = vld [vmem:[%s3 + $0x1138] sm:$0xff]
  %v667 = vld [vmem:[%s3 + $0x1140] sm:$0xff]
  %v668 = vld [vmem:[%s3 + $0x1148] sm:$0xff]
  %v669 = vld [vmem:[%s3 + $0x1150] sm:$0xff]
  %v670 = vld [vmem:[%s3 + $0x1158] sm:$0xff]
  %v671 = vld [vmem:[%s3 + $0x1160] sm:$0xff]
  %v672 = vld [vmem:[%s3 + $0x1168] sm:$0xff]
  %v673 = vld [vmem:[%s3 + $0x1170] sm:$0xff]
  %v674 = vld [vmem:[%s3 + $0x1178] sm:$0xff]
  %v675 = vld [vmem:[%s3 + $0x1180] sm:$0xff]
  %v676 = vld [vmem:[%s3 + $0x1188] sm:$0xff]
  %v677 = vld [vmem:[%s3 + $0x1190] sm:$0xff]
  %v678 = vld [vmem:[%s3 + $0x1198] sm:$0xff]
  %v679 = vld [vmem:[%s3 + $0x11a0] sm:$0xff]
  %v680 = vld [vmem:[%s3 + $0x11a8] sm:$0xff]
  %v681 = vld [vmem:[%s3 + $0x11b0] sm:$0xff]
  %v682 = vld [vmem:[%s3 + $0x11b8] sm:$0xff]
  %v683 = vld [vmem:[%s3 + $0x11c0] sm:$0xff]
  %v684 = vld [vmem:[%s3 + $0x11c8] sm:$0xff]
  %v685 = vld [vmem:[%s3 + $0x11d0] sm:$0xff]
  %v686 = vld [vmem:[%s3 + $0x11d8] sm:$0xff]
  %v687 = vld [vmem:[%s3 + $0x11e0] sm:$0xff]
  %v688 = vld [vmem:[%s3 + $0x11e8] sm:$0xff]
  %v689 = vld [vmem:[%s3 + $0x11f0] sm:$0xff]
  %v690 = vld [vmem:[%s3 + $0x11f8] sm:$0xff]
  %v691 = vld [vmem:[%s3 + $0x1200] sm:$0xff]
  %v692 = vld [vmem:[%s3 + $0x1208] sm:$0xff]
  %v693 = vld [vmem:[%s3 + $0x1210] sm:$0xff]
  %v694 = vld [vmem:[%s3 + $0x1218] sm:$0xff]
  %v695 = vld [vmem:[%s3 + $0x1220] sm:$0xff]
  %v696 = vld [vmem:[%s3 + $0x1228] sm:$0xff]
  %v697 = vld [vmem:[%s3 + $0x1230] sm:$0xff]
  %v698 = vld [vmem:[%s3 + $0x1238] sm:$0xff]
  %v699 = vld [vmem:[%s3 + $0x1240] sm:$0xff]
  %v700 = vld [vmem:[%s3 + $0x1248] sm:$0xff]
  %v701 = vld [vmem:[%s3 + $0x1250] sm:$0xff]
  %v702 = vld [vmem:[%s3 + $0x1258] sm:$0xff]
  %v703 = vld [vmem:[%s3 + $0x1260] sm:$0xff]
  %v704 = vld [vmem:[%s3 + $0x1268] sm:$0xff]
  %v705 = vld [vmem:[%s3 + $0x1270] sm:$0xff]
  %v706 = vld [vmem:[%s3 + $0x1278] sm:$0xff]
  %v707 = vld [vmem:[%s3 + $0x1280] sm:$0xff]
  %v708 = vld [vmem:[%s3 + $0x1288] sm:$0xff]
  %v709 = vld [vmem:[%s3 + $0x1290] sm:$0xff]
  %v710 = vld [vmem:[%s3 + $0x1298] sm:$0xff]
  %v711 = vld [vmem:[%s3 + $0x12a0] sm:$0xff]
  %v712 = vld [vmem:[%s3 + $0x12a8] sm:$0xff]
  %v713 = vld [vmem:[%s3 + $0x12b0] sm:$0xff]
  %v714 = vld [vmem:[%s3 + $0x12b8] sm:$0xff]
  %v715 = vld [vmem:[%s3 + $0x12c0] sm:$0xff]
  %v716 = vld [vmem:[%s3 + $0x12c8] sm:$0xff]
  %v717 = vld [vmem:[%s3 + $0x12d0] sm:$0xff]
  %v718 = vld [vmem:[%s3 + $0x12d8] sm:$0xff]
  %v719 = vld [vmem:[%s3 + $0x12e0] sm:$0xff]
  %v720 = vld [vmem:[%s3 + $0x12e8] sm:$0xff]
  %v721 = vld [vmem:[%s3 + $0x12f0] sm:$0xff]
  %v722 = vld [vmem:[%s3 + $0x12f8] sm:$0xff]
  %v723 = vld [vmem:[%s3 + $0x1300] sm:$0xff]
  %v724 = vld [vmem:[%s3 + $0x1308] sm:$0xff]
  %v725 = vld [vmem:[%s3 + $0x1310] sm:$0xff]
  %v726 = vld [vmem:[%s3 + $0x1318] sm:$0xff]
  %v727 = vld [vmem:[%s3 + $0x1320] sm:$0xff]
  %v728 = vld [vmem:[%s3 + $0x1328] sm:$0xff]
  %v729 = vld [vmem:[%s3 + $0x1330] sm:$0xff]
  %v730 = vld [vmem:[%s3 + $0x1338] sm:$0xff]
  %v731 = vld [vmem:[%s3 + $0x1340] sm:$0xff]
  %v732 = vld [vmem:[%s3 + $0x1348] sm:$0xff]
  %v733 = vld [vmem:[%s3 + $0x1350] sm:$0xff]
  %v734 = vld [vmem:[%s3 + $0x1358] sm:$0xff]
  %v735 = vld [vmem:[%s3 + $0x1360] sm:$0xff]
  %v736 = vld [vmem:[%s3 + $0x1368] sm:$0xff]
  %v737 = vld [vmem:[%s3 + $0x1370] sm:$0xff]
  %v738 = vld [vmem:[%s3 + $0x1378] sm:$0xff]
  %v739 = vld [vmem:[%s3 + $0x1380] sm:$0xff]
  %v740 = vld [vmem:[%s3 + $0x1388] sm:$0xff]
  %v741 = vld [vmem:[%s3 + $0x1390] sm:$0xff]
  %v742 = vld [vmem:[%s3 + $0x1398] sm:$0xff]
  %v743 = vld [vmem:[%s3 + $0x13a0] sm:$0xff]
  %v744 = vld [vmem:[%s3 + $0x13a8] sm:$0xff]
  %v745 = vld [vmem:[%s3 + $0x13b0] sm:$0xff]
  %v746 = vld [vmem:[%s3 + $0x13b8] sm:$0xff]
  %v747 = vld [vmem:[%s3 + $0x13c0] sm:$0xff]
  %v748 = vld [vmem:[%s3 + $0x13c8] sm:$0xff]
  %v749 = vld [vmem:[%s3 + $0x13d0] sm:$0xff]
  %v750 = vld [vmem:[%s3 + $0x13d8] sm:$0xff]
  %v751 = vld [vmem:[%s3 + $0x13e0] sm:$0xff]
  %v752 = vld [vmem:[%s3 + $0x13e8] sm:$0xff]
  %v753 = vld [vmem:[%s3 + $0x13f0] sm:$0xff]
  %v754 = vld [vmem:[%s3 + $0x13f8] sm:$0xff]
  %v1395 = vunpack.c.l.b16 %v115
  %v1396 = vunpack.c.h.b16 %v115
  %v1397 = vunpack.c.l.b16 %v116
  %v1398 = vunpack.c.h.b16 %v116
  %v1399 = vunpack.c.l.b16 %v117
  %v1400 = vunpack.c.h.b16 %v117
  %v1401 = vunpack.c.l.b16 %v118
  %v1402 = vunpack.c.h.b16 %v118
  %v1403 = vunpack.c.l.b16 %v119
  %v1404 = vunpack.c.h.b16 %v119
  %v1405 = vunpack.c.l.b16 %v120
  %v1406 = vunpack.c.h.b16 %v120
  %v1407 = vunpack.c.l.b16 %v121
  %v1408 = vunpack.c.h.b16 %v121
  %v1409 = vunpack.c.l.b16 %v122
  %v1410 = vunpack.c.h.b16 %v122
  %v1411 = vunpack.c.l.b16 %v123
  %v1412 = vunpack.c.h.b16 %v123
  %v1413 = vunpack.c.l.b16 %v124
  %v1414 = vunpack.c.h.b16 %v124
  %v1415 = vunpack.c.l.b16 %v125
  %v1416 = vunpack.c.h.b16 %v125
  %v1417 = vunpack.c.l.b16 %v126
  %v1418 = vunpack.c.h.b16 %v126
  %v1419 = vunpack.c.l.b16 %v127
  %v1420 = vunpack.c.h.b16 %v127
  %v1421 = vunpack.c.l.b16 %v128
  %v1422 = vunpack.c.h.b16 %v128
  %v1423 = vunpack.c.l.b16 %v129
  %v1424 = vunpack.c.h.b16 %v129
  %v1425 = vunpack.c.l.b16 %v130
  %v1426 = vunpack.c.h.b16 %v130
  %v1427 = vunpack.c.l.b16 %v131
  %v1428 = vunpack.c.h.b16 %v131
  %v1429 = vunpack.c.l.b16 %v132
  %v1430 = vunpack.c.h.b16 %v132
  %v1431 = vunpack.c.l.b16 %v133
  %v1432 = vunpack.c.h.b16 %v133
  %v1433 = vunpack.c.l.b16 %v134
  %v1434 = vunpack.c.h.b16 %v134
  %v1435 = vunpack.c.l.b16 %v135
  %v1436 = vunpack.c.h.b16 %v135
  %v1437 = vunpack.c.l.b16 %v136
  %v1438 = vunpack.c.h.b16 %v136
  %v1439 = vunpack.c.l.b16 %v137
  %v1440 = vunpack.c.h.b16 %v137
  %v1441 = vunpack.c.l.b16 %v138
  %v1442 = vunpack.c.h.b16 %v138
  %v1443 = vunpack.c.l.b16 %v139
  %v1444 = vunpack.c.h.b16 %v139
  %v1445 = vunpack.c.l.b16 %v140
  %v1446 = vunpack.c.h.b16 %v140
  %v1447 = vunpack.c.l.b16 %v141
  %v1448 = vunpack.c.h.b16 %v141
  %v1449 = vunpack.c.l.b16 %v142
  %v1450 = vunpack.c.h.b16 %v142
  %v1451 = vunpack.c.l.b16 %v143
  %v1452 = vunpack.c.h.b16 %v143
  %v1453 = vunpack.c.l.b16 %v144
  %v1454 = vunpack.c.h.b16 %v144
  %v1455 = vunpack.c.l.b16 %v145
  %v1456 = vunpack.c.h.b16 %v145
  %v1457 = vunpack.c.l.b16 %v146
  %v1458 = vunpack.c.h.b16 %v146
  %v1459 = vunpack.c.l.b16 %v147
  %v1460 = vunpack.c.h.b16 %v147
  %v1461 = vunpack.c.l.b16 %v148
  %v1462 = vunpack.c.h.b16 %v148
  %v1463 = vunpack.c.l.b16 %v149
  %v1464 = vunpack.c.h.b16 %v149
  %v1465 = vunpack.c.l.b16 %v150
  %v1466 = vunpack.c.h.b16 %v150
  %v1467 = vunpack.c.l.b16 %v151
  %v1468 = vunpack.c.h.b16 %v151
  %v1469 = vunpack.c.l.b16 %v152
  %v1470 = vunpack.c.h.b16 %v152
  %v1471 = vunpack.c.l.b16 %v153
  %v1472 = vunpack.c.h.b16 %v153
  %v1473 = vunpack.c.l.b16 %v154
  %v1474 = vunpack.c.h.b16 %v154
  %v1475 = vunpack.c.l.b16 %v155
  %v1476 = vunpack.c.h.b16 %v155
  %v1477 = vunpack.c.l.b16 %v156
  %v1478 = vunpack.c.h.b16 %v156
  %v1479 = vunpack.c.l.b16 %v157
  %v1480 = vunpack.c.h.b16 %v157
  %v1481 = vunpack.c.l.b16 %v158
  %v1482 = vunpack.c.h.b16 %v158
  %v1483 = vunpack.c.l.b16 %v159
  %v1484 = vunpack.c.h.b16 %v159
  %v1485 = vunpack.c.l.b16 %v160
  %v1486 = vunpack.c.h.b16 %v160
  %v1487 = vunpack.c.l.b16 %v161
  %v1488 = vunpack.c.h.b16 %v161
  %v1489 = vunpack.c.l.b16 %v162
  %v1490 = vunpack.c.h.b16 %v162
  %v1491 = vunpack.c.l.b16 %v163
  %v1492 = vunpack.c.h.b16 %v163
  %v1493 = vunpack.c.l.b16 %v164
  %v1494 = vunpack.c.h.b16 %v164
  %v1495 = vunpack.c.l.b16 %v165
  %v1496 = vunpack.c.h.b16 %v165
  %v1497 = vunpack.c.l.b16 %v166
  %v1498 = vunpack.c.h.b16 %v166
  %v1499 = vunpack.c.l.b16 %v167
  %v1500 = vunpack.c.h.b16 %v167
  %v1501 = vunpack.c.l.b16 %v168
  %v1502 = vunpack.c.h.b16 %v168
  %v1503 = vunpack.c.l.b16 %v169
  %v1504 = vunpack.c.h.b16 %v169
  %v1505 = vunpack.c.l.b16 %v170
  %v1506 = vunpack.c.h.b16 %v170
  %v1507 = vunpack.c.l.b16 %v171
  %v1508 = vunpack.c.h.b16 %v171
  %v1509 = vunpack.c.l.b16 %v172
  %v1510 = vunpack.c.h.b16 %v172
  %v1511 = vunpack.c.l.b16 %v173
  %v1512 = vunpack.c.h.b16 %v173
  %v1513 = vunpack.c.l.b16 %v174
  %v1514 = vunpack.c.h.b16 %v174
  %v1515 = vunpack.c.l.b16 %v175
  %v1516 = vunpack.c.h.b16 %v175
  %v1517 = vunpack.c.l.b16 %v176
  %v1518 = vunpack.c.h.b16 %v176
  %v1519 = vunpack.c.l.b16 %v177
  %v1520 = vunpack.c.h.b16 %v177
  %v1521 = vunpack.c.l.b16 %v178
  %v1522 = vunpack.c.h.b16 %v178
  %v1523 = vunpack.c.l.b16 %v179
  %v1524 = vunpack.c.h.b16 %v179
  %v1525 = vunpack.c.l.b16 %v180
  %v1526 = vunpack.c.h.b16 %v180
  %v1527 = vunpack.c.l.b16 %v181
  %v1528 = vunpack.c.h.b16 %v181
  %v1529 = vunpack.c.l.b16 %v182
  %v1530 = vunpack.c.h.b16 %v182
  %v1531 = vunpack.c.l.b16 %v183
  %v1532 = vunpack.c.h.b16 %v183
  %v1533 = vunpack.c.l.b16 %v184
  %v1534 = vunpack.c.h.b16 %v184
  %v1535 = vunpack.c.l.b16 %v185
  %v1536 = vunpack.c.h.b16 %v185
  %v1537 = vunpack.c.l.b16 %v186
  %v1538 = vunpack.c.h.b16 %v186
  %v1539 = vunpack.c.l.b16 %v187
  %v1540 = vunpack.c.h.b16 %v187
  %v1541 = vunpack.c.l.b16 %v188
  %v1542 = vunpack.c.h.b16 %v188
  %v1543 = vunpack.c.l.b16 %v189
  %v1544 = vunpack.c.h.b16 %v189
  %v1545 = vunpack.c.l.b16 %v190
  %v1546 = vunpack.c.h.b16 %v190
  %v1547 = vunpack.c.l.b16 %v191
  %v1548 = vunpack.c.h.b16 %v191
  %v1549 = vunpack.c.l.b16 %v192
  %v1550 = vunpack.c.h.b16 %v192
  %v1551 = vunpack.c.l.b16 %v193
  %v1552 = vunpack.c.h.b16 %v193
  %v1553 = vunpack.c.l.b16 %v194
  %v1554 = vunpack.c.h.b16 %v194
  %v1555 = vunpack.c.l.b16 %v195
  %v1556 = vunpack.c.h.b16 %v195
  %v1557 = vunpack.c.l.b16 %v196
  %v1558 = vunpack.c.h.b16 %v196
  %v1559 = vunpack.c.l.b16 %v197
  %v1560 = vunpack.c.h.b16 %v197
  %v1561 = vunpack.c.l.b16 %v198
  %v1562 = vunpack.c.h.b16 %v198
  %v1563 = vunpack.c.l.b16 %v199
  %v1564 = vunpack.c.h.b16 %v199
  %v1565 = vunpack.c.l.b16 %v200
  %v1566 = vunpack.c.h.b16 %v200
  %v1567 = vunpack.c.l.b16 %v201
  %v1568 = vunpack.c.h.b16 %v201
  %v1569 = vunpack.c.l.b16 %v202
  %v1570 = vunpack.c.h.b16 %v202
  %v1571 = vunpack.c.l.b16 %v203
  %v1572 = vunpack.c.h.b16 %v203
  %v1573 = vunpack.c.l.b16 %v204
  %v1574 = vunpack.c.h.b16 %v204
  %v1575 = vunpack.c.l.b16 %v205
  %v1576 = vunpack.c.h.b16 %v205
  %v1577 = vunpack.c.l.b16 %v206
  %v1578 = vunpack.c.h.b16 %v206
  %v1579 = vunpack.c.l.b16 %v207
  %v1580 = vunpack.c.h.b16 %v207
  %v1581 = vunpack.c.l.b16 %v208
  %v1582 = vunpack.c.h.b16 %v208
  %v1583 = vunpack.c.l.b16 %v209
  %v1584 = vunpack.c.h.b16 %v209
  %v1585 = vunpack.c.l.b16 %v210
  %v1586 = vunpack.c.h.b16 %v210
  %v1587 = vunpack.c.l.b16 %v211
  %v1588 = vunpack.c.h.b16 %v211
  %v1589 = vunpack.c.l.b16 %v212
  %v1590 = vunpack.c.h.b16 %v212
  %v1591 = vunpack.c.l.b16 %v213
  %v1592 = vunpack.c.h.b16 %v213
  %v1593 = vunpack.c.l.b16 %v214
  %v1594 = vunpack.c.h.b16 %v214
  %v1595 = vunpack.c.l.b16 %v215
  %v1596 = vunpack.c.h.b16 %v215
  %v1597 = vunpack.c.l.b16 %v216
  %v1598 = vunpack.c.h.b16 %v216
  %v1599 = vunpack.c.l.b16 %v217
  %v1600 = vunpack.c.h.b16 %v217
  %v1601 = vunpack.c.l.b16 %v218
  %v1602 = vunpack.c.h.b16 %v218
  %v1603 = vunpack.c.l.b16 %v219
  %v1604 = vunpack.c.h.b16 %v219
  %v1605 = vunpack.c.l.b16 %v220
  %v1606 = vunpack.c.h.b16 %v220
  %v1607 = vunpack.c.l.b16 %v221
  %v1608 = vunpack.c.h.b16 %v221
  %v1609 = vunpack.c.l.b16 %v222
  %v1610 = vunpack.c.h.b16 %v222
  %v1611 = vunpack.c.l.b16 %v223
  %v1612 = vunpack.c.h.b16 %v223
  %v1613 = vunpack.c.l.b16 %v224
  %v1614 = vunpack.c.h.b16 %v224
  %v1615 = vunpack.c.l.b16 %v225
  %v1616 = vunpack.c.h.b16 %v225
  %v1617 = vunpack.c.l.b16 %v226
  %v1618 = vunpack.c.h.b16 %v226
  %v1619 = vunpack.c.l.b16 %v227
  %v1620 = vunpack.c.h.b16 %v227
  %v1621 = vunpack.c.l.b16 %v228
  %v1622 = vunpack.c.h.b16 %v228
  %v1623 = vunpack.c.l.b16 %v229
  %v1624 = vunpack.c.h.b16 %v229
  %v1625 = vunpack.c.l.b16 %v230
  %v1626 = vunpack.c.h.b16 %v230
  %v1627 = vunpack.c.l.b16 %v231
  %v1628 = vunpack.c.h.b16 %v231
  %v1629 = vunpack.c.l.b16 %v232
  %v1630 = vunpack.c.h.b16 %v232
  %v1631 = vunpack.c.l.b16 %v233
  %v1632 = vunpack.c.h.b16 %v233
  %v1633 = vunpack.c.l.b16 %v234
  %v1634 = vunpack.c.h.b16 %v234
  %v1635 = vunpack.c.l.b16 %v235
  %v1636 = vunpack.c.h.b16 %v235
  %v1637 = vunpack.c.l.b16 %v236
  %v1638 = vunpack.c.h.b16 %v236
  %v1639 = vunpack.c.l.b16 %v237
  %v1640 = vunpack.c.h.b16 %v237
  %v1641 = vunpack.c.l.b16 %v238
  %v1642 = vunpack.c.h.b16 %v238
  %v1643 = vunpack.c.l.b16 %v239
  %v1644 = vunpack.c.h.b16 %v239
  %v1645 = vunpack.c.l.b16 %v240
  %v1646 = vunpack.c.h.b16 %v240
  %v1647 = vunpack.c.l.b16 %v241
  %v1648 = vunpack.c.h.b16 %v241
  %v1649 = vunpack.c.l.b16 %v242
  %v1650 = vunpack.c.h.b16 %v242
  %v1651 = vunpack.c.l.b16 %v243
  %v1652 = vunpack.c.h.b16 %v243
  %v1653 = vunpack.c.l.b16 %v244
  %v1654 = vunpack.c.h.b16 %v244
  %v1655 = vunpack.c.l.b16 %v245
  %v1656 = vunpack.c.h.b16 %v245
  %v1657 = vunpack.c.l.b16 %v246
  %v1658 = vunpack.c.h.b16 %v246
  %v1659 = vunpack.c.l.b16 %v247
  %v1660 = vunpack.c.h.b16 %v247
  %v1661 = vunpack.c.l.b16 %v248
  %v1662 = vunpack.c.h.b16 %v248
  %v1663 = vunpack.c.l.b16 %v249
  %v1664 = vunpack.c.h.b16 %v249
  %v1665 = vunpack.c.l.b16 %v250
  %v1666 = vunpack.c.h.b16 %v250
  %v1667 = vunpack.c.l.b16 %v251
  %v1668 = vunpack.c.h.b16 %v251
  %v1669 = vunpack.c.l.b16 %v252
  %v1670 = vunpack.c.h.b16 %v252
  %v1671 = vunpack.c.l.b16 %v253
  %v1672 = vunpack.c.h.b16 %v253
  %v1673 = vunpack.c.l.b16 %v254
  %v1674 = vunpack.c.h.b16 %v254
  %v1675 = vunpack.c.l.b16 %v255
  %v1676 = vunpack.c.h.b16 %v255
  %v1677 = vunpack.c.l.b16 %v256
  %v1678 = vunpack.c.h.b16 %v256
  %v1679 = vunpack.c.l.b16 %v257
  %v1680 = vunpack.c.h.b16 %v257
  %v1681 = vunpack.c.l.b16 %v258
  %v1682 = vunpack.c.h.b16 %v258
  %v1683 = vunpack.c.l.b16 %v259
  %v1684 = vunpack.c.h.b16 %v259
  %v1685 = vunpack.c.l.b16 %v260
  %v1686 = vunpack.c.h.b16 %v260
  %v1687 = vunpack.c.l.b16 %v261
  %v1688 = vunpack.c.h.b16 %v261
  %v1689 = vunpack.c.l.b16 %v262
  %v1690 = vunpack.c.h.b16 %v262
  %v1691 = vunpack.c.l.b16 %v263
  %v1692 = vunpack.c.h.b16 %v263
  %v1693 = vunpack.c.l.b16 %v264
  %v1694 = vunpack.c.h.b16 %v264
  %v1695 = vunpack.c.l.b16 %v265
  %v1696 = vunpack.c.h.b16 %v265
  %v1697 = vunpack.c.l.b16 %v266
  %v1698 = vunpack.c.h.b16 %v266
  %v1699 = vunpack.c.l.b16 %v267
  %v1700 = vunpack.c.h.b16 %v267
  %v1701 = vunpack.c.l.b16 %v268
  %v1702 = vunpack.c.h.b16 %v268
  %v1703 = vunpack.c.l.b16 %v269
  %v1704 = vunpack.c.h.b16 %v269
  %v1705 = vunpack.c.l.b16 %v270
  %v1706 = vunpack.c.h.b16 %v270
  %v1707 = vunpack.c.l.b16 %v271
  %v1708 = vunpack.c.h.b16 %v271
  %v1709 = vunpack.c.l.b16 %v272
  %v1710 = vunpack.c.h.b16 %v272
  %v1711 = vunpack.c.l.b16 %v273
  %v1712 = vunpack.c.h.b16 %v273
  %v1713 = vunpack.c.l.b16 %v274
  %v1714 = vunpack.c.h.b16 %v274
  %v1715 = vunpack.c.l.b16 %v275
  %v1716 = vunpack.c.h.b16 %v275
  %v1717 = vunpack.c.l.b16 %v276
  %v1718 = vunpack.c.h.b16 %v276
  %v1719 = vunpack.c.l.b16 %v277
  %v1720 = vunpack.c.h.b16 %v277
  %v1721 = vunpack.c.l.b16 %v278
  %v1722 = vunpack.c.h.b16 %v278
  %v1723 = vunpack.c.l.b16 %v279
  %v1724 = vunpack.c.h.b16 %v279
  %v1725 = vunpack.c.l.b16 %v280
  %v1726 = vunpack.c.h.b16 %v280
  %v1727 = vunpack.c.l.b16 %v281
  %v1728 = vunpack.c.h.b16 %v281
  %v1729 = vunpack.c.l.b16 %v282
  %v1730 = vunpack.c.h.b16 %v282
  %v1731 = vunpack.c.l.b16 %v283
  %v1732 = vunpack.c.h.b16 %v283
  %v1733 = vunpack.c.l.b16 %v284
  %v1734 = vunpack.c.h.b16 %v284
  %v1735 = vunpack.c.l.b16 %v285
  %v1736 = vunpack.c.h.b16 %v285
  %v1737 = vunpack.c.l.b16 %v286
  %v1738 = vunpack.c.h.b16 %v286
  %v1739 = vunpack.c.l.b16 %v287
  %v1740 = vunpack.c.h.b16 %v287
  %v1741 = vunpack.c.l.b16 %v288
  %v1742 = vunpack.c.h.b16 %v288
  %v1743 = vunpack.c.l.b16 %v289
  %v1744 = vunpack.c.h.b16 %v289
  %v1745 = vunpack.c.l.b16 %v290
  %v1746 = vunpack.c.h.b16 %v290
  %v1747 = vunpack.c.l.b16 %v291
  %v1748 = vunpack.c.h.b16 %v291
  %v1749 = vunpack.c.l.b16 %v292
  %v1750 = vunpack.c.h.b16 %v292
  %v1751 = vunpack.c.l.b16 %v293
  %v1752 = vunpack.c.h.b16 %v293
  %v1753 = vunpack.c.l.b16 %v294
  %v1754 = vunpack.c.h.b16 %v294
  %v1755 = vunpack.c.l.b16 %v295
  %v1756 = vunpack.c.h.b16 %v295
  %v1757 = vunpack.c.l.b16 %v296
  %v1758 = vunpack.c.h.b16 %v296
  %v1759 = vunpack.c.l.b16 %v297
  %v1760 = vunpack.c.h.b16 %v297
  %v1761 = vunpack.c.l.b16 %v298
  %v1762 = vunpack.c.h.b16 %v298
  %v1763 = vunpack.c.l.b16 %v299
  %v1764 = vunpack.c.h.b16 %v299
  %v1765 = vunpack.c.l.b16 %v300
  %v1766 = vunpack.c.h.b16 %v300
  %v1767 = vunpack.c.l.b16 %v301
  %v1768 = vunpack.c.h.b16 %v301
  %v1769 = vunpack.c.l.b16 %v302
  %v1770 = vunpack.c.h.b16 %v302
  %v1771 = vunpack.c.l.b16 %v303
  %v1772 = vunpack.c.h.b16 %v303
  %v1773 = vunpack.c.l.b16 %v304
  %v1774 = vunpack.c.h.b16 %v304
  %v1775 = vunpack.c.l.b16 %v305
  %v1776 = vunpack.c.h.b16 %v305
  %v1777 = vunpack.c.l.b16 %v306
  %v1778 = vunpack.c.h.b16 %v306
  %v1779 = vunpack.c.l.b16 %v307
  %v1780 = vunpack.c.h.b16 %v307
  %v1781 = vunpack.c.l.b16 %v308
  %v1782 = vunpack.c.h.b16 %v308
  %v1783 = vunpack.c.l.b16 %v309
  %v1784 = vunpack.c.h.b16 %v309
  %v1785 = vunpack.c.l.b16 %v310
  %v1786 = vunpack.c.h.b16 %v310
  %v1787 = vunpack.c.l.b16 %v311
  %v1788 = vunpack.c.h.b16 %v311
  %v1789 = vunpack.c.l.b16 %v312
  %v1790 = vunpack.c.h.b16 %v312
  %v1791 = vunpack.c.l.b16 %v313
  %v1792 = vunpack.c.h.b16 %v313
  %v1793 = vunpack.c.l.b16 %v314
  %v1794 = vunpack.c.h.b16 %v314
  %v1795 = vunpack.c.l.b16 %v315
  %v1796 = vunpack.c.h.b16 %v315
  %v1797 = vunpack.c.l.b16 %v316
  %v1798 = vunpack.c.h.b16 %v316
  %v1799 = vunpack.c.l.b16 %v317
  %v1800 = vunpack.c.h.b16 %v317
  %v1801 = vunpack.c.l.b16 %v318
  %v1802 = vunpack.c.h.b16 %v318
  %v1803 = vunpack.c.l.b16 %v319
  %v1804 = vunpack.c.h.b16 %v319
  %v1805 = vunpack.c.l.b16 %v320
  %v1806 = vunpack.c.h.b16 %v320
  %v1807 = vunpack.c.l.b16 %v321
  %v1808 = vunpack.c.h.b16 %v321
  %v1809 = vunpack.c.l.b16 %v322
  %v1810 = vunpack.c.h.b16 %v322
  %v1811 = vunpack.c.l.b16 %v323
  %v1812 = vunpack.c.h.b16 %v323
  %v1813 = vunpack.c.l.b16 %v324
  %v1814 = vunpack.c.h.b16 %v324
  %v1815 = vunpack.c.l.b16 %v325
  %v1816 = vunpack.c.h.b16 %v325
  %v1817 = vunpack.c.l.b16 %v326
  %v1818 = vunpack.c.h.b16 %v326
  %v1819 = vunpack.c.l.b16 %v327
  %v1820 = vunpack.c.h.b16 %v327
  %v1821 = vunpack.c.l.b16 %v328
  %v1822 = vunpack.c.h.b16 %v328
  %v1823 = vunpack.c.l.b16 %v329
  %v1824 = vunpack.c.h.b16 %v329
  %v1825 = vunpack.c.l.b16 %v330
  %v1826 = vunpack.c.h.b16 %v330
  %v1827 = vunpack.c.l.b16 %v331
  %v1828 = vunpack.c.h.b16 %v331
  %v1829 = vunpack.c.l.b16 %v332
  %v1830 = vunpack.c.h.b16 %v332
  %v1831 = vunpack.c.l.b16 %v333
  %v1832 = vunpack.c.h.b16 %v333
  %v1833 = vunpack.c.l.b16 %v334
  %v1834 = vunpack.c.h.b16 %v334
  %v1835 = vunpack.c.l.b16 %v335
  %v1836 = vunpack.c.h.b16 %v335
  %v1837 = vunpack.c.l.b16 %v336
  %v1838 = vunpack.c.h.b16 %v336
  %v1839 = vunpack.c.l.b16 %v337
  %v1840 = vunpack.c.h.b16 %v337
  %v1841 = vunpack.c.l.b16 %v338
  %v1842 = vunpack.c.h.b16 %v338
  %v1843 = vunpack.c.l.b16 %v339
  %v1844 = vunpack.c.h.b16 %v339
  %v1845 = vunpack.c.l.b16 %v340
  %v1846 = vunpack.c.h.b16 %v340
  %v1847 = vunpack.c.l.b16 %v341
  %v1848 = vunpack.c.h.b16 %v341
  %v1849 = vunpack.c.l.b16 %v342
  %v1850 = vunpack.c.h.b16 %v342
  %v1851 = vunpack.c.l.b16 %v343
  %v1852 = vunpack.c.h.b16 %v343
  %v1853 = vunpack.c.l.b16 %v344
  %v1854 = vunpack.c.h.b16 %v344
  %v1855 = vunpack.c.l.b16 %v345
  %v1856 = vunpack.c.h.b16 %v345
  %v1857 = vunpack.c.l.b16 %v346
  %v1858 = vunpack.c.h.b16 %v346
  %v1859 = vunpack.c.l.b16 %v347
  %v1860 = vunpack.c.h.b16 %v347
  %v1861 = vunpack.c.l.b16 %v348
  %v1862 = vunpack.c.h.b16 %v348
  %v1863 = vunpack.c.l.b16 %v349
  %v1864 = vunpack.c.h.b16 %v349
  %v1865 = vunpack.c.l.b16 %v350
  %v1866 = vunpack.c.h.b16 %v350
  %v1867 = vunpack.c.l.b16 %v351
  %v1868 = vunpack.c.h.b16 %v351
  %v1869 = vunpack.c.l.b16 %v352
  %v1870 = vunpack.c.h.b16 %v352
  %v1871 = vunpack.c.l.b16 %v353
  %v1872 = vunpack.c.h.b16 %v353
  %v1873 = vunpack.c.l.b16 %v354
  %v1874 = vunpack.c.h.b16 %v354
  %v1875 = vunpack.c.l.b16 %v355
  %v1876 = vunpack.c.h.b16 %v355
  %v1877 = vunpack.c.l.b16 %v356
  %v1878 = vunpack.c.h.b16 %v356
  %v1879 = vunpack.c.l.b16 %v357
  %v1880 = vunpack.c.h.b16 %v357
  %v1881 = vunpack.c.l.b16 %v358
  %v1882 = vunpack.c.h.b16 %v358
  %v1883 = vunpack.c.l.b16 %v359
  %v1884 = vunpack.c.h.b16 %v359
  %v1885 = vunpack.c.l.b16 %v360
  %v1886 = vunpack.c.h.b16 %v360
  %v1887 = vunpack.c.l.b16 %v361
  %v1888 = vunpack.c.h.b16 %v361
  %v1889 = vunpack.c.l.b16 %v362
  %v1890 = vunpack.c.h.b16 %v362
  %v1891 = vunpack.c.l.b16 %v363
  %v1892 = vunpack.c.h.b16 %v363
  %v1893 = vunpack.c.l.b16 %v364
  %v1894 = vunpack.c.h.b16 %v364
  %v1895 = vunpack.c.l.b16 %v365
  %v1896 = vunpack.c.h.b16 %v365
  %v1897 = vunpack.c.l.b16 %v366
  %v1898 = vunpack.c.h.b16 %v366
  %v1899 = vunpack.c.l.b16 %v367
  %v1900 = vunpack.c.h.b16 %v367
  %v1901 = vunpack.c.l.b16 %v368
  %v1902 = vunpack.c.h.b16 %v368
  %v1903 = vunpack.c.l.b16 %v369
  %v1904 = vunpack.c.h.b16 %v369
  %v1905 = vunpack.c.l.b16 %v370
  %v1906 = vunpack.c.h.b16 %v370
  %v1907 = vunpack.c.l.b16 %v371
  %v1908 = vunpack.c.h.b16 %v371
  %v1909 = vunpack.c.l.b16 %v372
  %v1910 = vunpack.c.h.b16 %v372
  %v1911 = vunpack.c.l.b16 %v373
  %v1912 = vunpack.c.h.b16 %v373
  %v1913 = vunpack.c.l.b16 %v374
  %v1914 = vunpack.c.h.b16 %v374
  %v1915 = vunpack.c.l.b16 %v375
  %v1916 = vunpack.c.h.b16 %v375
  %v1917 = vunpack.c.l.b16 %v376
  %v1918 = vunpack.c.h.b16 %v376
  %v1919 = vunpack.c.l.b16 %v377
  %v1920 = vunpack.c.h.b16 %v377
  %v1921 = vunpack.c.l.b16 %v378
  %v1922 = vunpack.c.h.b16 %v378
  %v1923 = vunpack.c.l.b16 %v379
  %v1924 = vunpack.c.h.b16 %v379
  %v1925 = vunpack.c.l.b16 %v380
  %v1926 = vunpack.c.h.b16 %v380
  %v1927 = vunpack.c.l.b16 %v381
  %v1928 = vunpack.c.h.b16 %v381
  %v1929 = vunpack.c.l.b16 %v382
  %v1930 = vunpack.c.h.b16 %v382
  %v1931 = vunpack.c.l.b16 %v383
  %v1932 = vunpack.c.h.b16 %v383
  %v1933 = vunpack.c.l.b16 %v384
  %v1934 = vunpack.c.h.b16 %v384
  %v1935 = vunpack.c.l.b16 %v385
  %v1936 = vunpack.c.h.b16 %v385
  %v1937 = vunpack.c.l.b16 %v386
  %v1938 = vunpack.c.h.b16 %v386
  %v1939 = vunpack.c.l.b16 %v387
  %v1940 = vunpack.c.h.b16 %v387
  %v1941 = vunpack.c.l.b16 %v388
  %v1942 = vunpack.c.h.b16 %v388
  %v1943 = vunpack.c.l.b16 %v389
  %v1944 = vunpack.c.h.b16 %v389
  %v1945 = vunpack.c.l.b16 %v390
  %v1946 = vunpack.c.h.b16 %v390
  %v1947 = vunpack.c.l.b16 %v391
  %v1948 = vunpack.c.h.b16 %v391
  %v1949 = vunpack.c.l.b16 %v392
  %v1950 = vunpack.c.h.b16 %v392
  %v1951 = vunpack.c.l.b16 %v393
  %v1952 = vunpack.c.h.b16 %v393
  %v1953 = vunpack.c.l.b16 %v394
  %v1954 = vunpack.c.h.b16 %v394
  %v1955 = vunpack.c.l.b16 %v395
  %v1956 = vunpack.c.h.b16 %v395
  %v1957 = vunpack.c.l.b16 %v396
  %v1958 = vunpack.c.h.b16 %v396
  %v1959 = vunpack.c.l.b16 %v397
  %v1960 = vunpack.c.h.b16 %v397
  %v1961 = vunpack.c.l.b16 %v398
  %v1962 = vunpack.c.h.b16 %v398
  %v1963 = vunpack.c.l.b16 %v399
  %v1964 = vunpack.c.h.b16 %v399
  %v1965 = vunpack.c.l.b16 %v400
  %v1966 = vunpack.c.h.b16 %v400
  %v1967 = vunpack.c.l.b16 %v401
  %v1968 = vunpack.c.h.b16 %v401
  %v1969 = vunpack.c.l.b16 %v402
  %v1970 = vunpack.c.h.b16 %v402
  %v1971 = vunpack.c.l.b16 %v403
  %v1972 = vunpack.c.h.b16 %v403
  %v1973 = vunpack.c.l.b16 %v404
  %v1974 = vunpack.c.h.b16 %v404
  %v1975 = vunpack.c.l.b16 %v405
  %v1976 = vunpack.c.h.b16 %v405
  %v1977 = vunpack.c.l.b16 %v406
  %v1978 = vunpack.c.h.b16 %v406
  %v1979 = vunpack.c.l.b16 %v407
  %v1980 = vunpack.c.h.b16 %v407
  %v1981 = vunpack.c.l.b16 %v408
  %v1982 = vunpack.c.h.b16 %v408
  %v1983 = vunpack.c.l.b16 %v409
  %v1984 = vunpack.c.h.b16 %v409
  %v1985 = vunpack.c.l.b16 %v410
  %v1986 = vunpack.c.h.b16 %v410
  %v1987 = vunpack.c.l.b16 %v411
  %v1988 = vunpack.c.h.b16 %v411
  %v1989 = vunpack.c.l.b16 %v412
  %v1990 = vunpack.c.h.b16 %v412
  %v1991 = vunpack.c.l.b16 %v413
  %v1992 = vunpack.c.h.b16 %v413
  %v1993 = vunpack.c.l.b16 %v414
  %v1994 = vunpack.c.h.b16 %v414
  %v1995 = vunpack.c.l.b16 %v415
  %v1996 = vunpack.c.h.b16 %v415
  %v1997 = vunpack.c.l.b16 %v416
  %v1998 = vunpack.c.h.b16 %v416
  %v1999 = vunpack.c.l.b16 %v417
  %v2000 = vunpack.c.h.b16 %v417
  %v2001 = vunpack.c.l.b16 %v418
  %v2002 = vunpack.c.h.b16 %v418
  %v2003 = vunpack.c.l.b16 %v419
  %v2004 = vunpack.c.h.b16 %v419
  %v2005 = vunpack.c.l.b16 %v420
  %v2006 = vunpack.c.h.b16 %v420
  %v2007 = vunpack.c.l.b16 %v421
  %v2008 = vunpack.c.h.b16 %v421
  %v2009 = vunpack.c.l.b16 %v422
  %v2010 = vunpack.c.h.b16 %v422
  %v2011 = vunpack.c.l.b16 %v423
  %v2012 = vunpack.c.h.b16 %v423
  %v2013 = vunpack.c.l.b16 %v424
  %v2014 = vunpack.c.h.b16 %v424
  %v2015 = vunpack.c.l.b16 %v425
  %v2016 = vunpack.c.h.b16 %v425
  %v2017 = vunpack.c.l.b16 %v426
  %v2018 = vunpack.c.h.b16 %v426
  %v2019 = vunpack.c.l.b16 %v427
  %v2020 = vunpack.c.h.b16 %v427
  %v2021 = vunpack.c.l.b16 %v428
  %v2022 = vunpack.c.h.b16 %v428
  %v2023 = vunpack.c.l.b16 %v429
  %v2024 = vunpack.c.h.b16 %v429
  %v2025 = vunpack.c.l.b16 %v430
  %v2026 = vunpack.c.h.b16 %v430
  %v2027 = vunpack.c.l.b16 %v431
  %v2028 = vunpack.c.h.b16 %v431
  %v2029 = vunpack.c.l.b16 %v432
  %v2030 = vunpack.c.h.b16 %v432
  %v2031 = vunpack.c.l.b16 %v433
  %v2032 = vunpack.c.h.b16 %v433
  %v2033 = vunpack.c.l.b16 %v434
  %v2034 = vunpack.c.h.b16 %v434
  %v2035 = vunpack.c.l.b16 %v435
  %v2036 = vunpack.c.h.b16 %v435
  %v2037 = vunpack.c.l.b16 %v436
  %v2038 = vunpack.c.h.b16 %v436
  %v2039 = vunpack.c.l.b16 %v437
  %v2040 = vunpack.c.h.b16 %v437
  %v2041 = vunpack.c.l.b16 %v438
  %v2042 = vunpack.c.h.b16 %v438
  %v2043 = vunpack.c.l.b16 %v439
  %v2044 = vunpack.c.h.b16 %v439
  %v2045 = vunpack.c.l.b16 %v440
  %v2046 = vunpack.c.h.b16 %v440
  %v2047 = vunpack.c.l.b16 %v441
  %v2048 = vunpack.c.h.b16 %v441
  %v2049 = vunpack.c.l.b16 %v442
  %v2050 = vunpack.c.h.b16 %v442
  %v2051 = vunpack.c.l.b16 %v443
  %v2052 = vunpack.c.h.b16 %v443
  %v2053 = vunpack.c.l.b16 %v444
  %v2054 = vunpack.c.h.b16 %v444
  %v2055 = vunpack.c.l.b16 %v445
  %v2056 = vunpack.c.h.b16 %v445
  %v2057 = vunpack.c.l.b16 %v446
  %v2058 = vunpack.c.h.b16 %v446
  %v2059 = vunpack.c.l.b16 %v447
  %v2060 = vunpack.c.h.b16 %v447
  %v2061 = vunpack.c.l.b16 %v448
  %v2062 = vunpack.c.h.b16 %v448
  %v2063 = vunpack.c.l.b16 %v449
  %v2064 = vunpack.c.h.b16 %v449
  %v2065 = vunpack.c.l.b16 %v450
  %v2066 = vunpack.c.h.b16 %v450
  %v2067 = vunpack.c.l.b16 %v451
  %v2068 = vunpack.c.h.b16 %v451
  %v2069 = vunpack.c.l.b16 %v452
  %v2070 = vunpack.c.h.b16 %v452
  %v2071 = vunpack.c.l.b16 %v453
  %v2072 = vunpack.c.h.b16 %v453
  %v2073 = vunpack.c.l.b16 %v454
  %v2074 = vunpack.c.h.b16 %v454
  %v2075 = vunpack.c.l.b16 %v455
  %v2076 = vunpack.c.h.b16 %v455
  %v2077 = vunpack.c.l.b16 %v456
  %v2078 = vunpack.c.h.b16 %v456
  %v2079 = vunpack.c.l.b16 %v457
  %v2080 = vunpack.c.h.b16 %v457
  %v2081 = vunpack.c.l.b16 %v458
  %v2082 = vunpack.c.h.b16 %v458
  %v2083 = vunpack.c.l.b16 %v459
  %v2084 = vunpack.c.h.b16 %v459
  %v2085 = vunpack.c.l.b16 %v460
  %v2086 = vunpack.c.h.b16 %v460
  %v2087 = vunpack.c.l.b16 %v461
  %v2088 = vunpack.c.h.b16 %v461
  %v2089 = vunpack.c.l.b16 %v462
  %v2090 = vunpack.c.h.b16 %v462
  %v2091 = vunpack.c.l.b16 %v463
  %v2092 = vunpack.c.h.b16 %v463
  %v2093 = vunpack.c.l.b16 %v464
  %v2094 = vunpack.c.h.b16 %v464
  %v2095 = vunpack.c.l.b16 %v465
  %v2096 = vunpack.c.h.b16 %v465
  %v2097 = vunpack.c.l.b16 %v466
  %v2098 = vunpack.c.h.b16 %v466
  %v2099 = vunpack.c.l.b16 %v467
  %v2100 = vunpack.c.h.b16 %v467
  %v2101 = vunpack.c.l.b16 %v468
  %v2102 = vunpack.c.h.b16 %v468
  %v2103 = vunpack.c.l.b16 %v469
  %v2104 = vunpack.c.h.b16 %v469
  %v2105 = vunpack.c.l.b16 %v470
  %v2106 = vunpack.c.h.b16 %v470
  %v2107 = vunpack.c.l.b16 %v471
  %v2108 = vunpack.c.h.b16 %v471
  %v2109 = vunpack.c.l.b16 %v472
  %v2110 = vunpack.c.h.b16 %v472
  %v2111 = vunpack.c.l.b16 %v473
  %v2112 = vunpack.c.h.b16 %v473
  %v2113 = vunpack.c.l.b16 %v474
  %v2114 = vunpack.c.h.b16 %v474
  %v2115 = vunpack.c.l.b16 %v475
  %v2116 = vunpack.c.h.b16 %v475
  %v2117 = vunpack.c.l.b16 %v476
  %v2118 = vunpack.c.h.b16 %v476
  %v2119 = vunpack.c.l.b16 %v477
  %v2120 = vunpack.c.h.b16 %v477
  %v2121 = vunpack.c.l.b16 %v478
  %v2122 = vunpack.c.h.b16 %v478
  %v2123 = vunpack.c.l.b16 %v479
  %v2124 = vunpack.c.h.b16 %v479
  %v2125 = vunpack.c.l.b16 %v480
  %v2126 = vunpack.c.h.b16 %v480
  %v2127 = vunpack.c.l.b16 %v481
  %v2128 = vunpack.c.h.b16 %v481
  %v2129 = vunpack.c.l.b16 %v482
  %v2130 = vunpack.c.h.b16 %v482
  %v2131 = vunpack.c.l.b16 %v483
  %v2132 = vunpack.c.h.b16 %v483
  %v2133 = vunpack.c.l.b16 %v484
  %v2134 = vunpack.c.h.b16 %v484
  %v2135 = vunpack.c.l.b16 %v485
  %v2136 = vunpack.c.h.b16 %v485
  %v2137 = vunpack.c.l.b16 %v486
  %v2138 = vunpack.c.h.b16 %v486
  %v2139 = vunpack.c.l.b16 %v487
  %v2140 = vunpack.c.h.b16 %v487
  %v2141 = vunpack.c.l.b16 %v488
  %v2142 = vunpack.c.h.b16 %v488
  %v2143 = vunpack.c.l.b16 %v489
  %v2144 = vunpack.c.h.b16 %v489
  %v2145 = vunpack.c.l.b16 %v490
  %v2146 = vunpack.c.h.b16 %v490
  %v2147 = vunpack.c.l.b16 %v491
  %v2148 = vunpack.c.h.b16 %v491
  %v2149 = vunpack.c.l.b16 %v492
  %v2150 = vunpack.c.h.b16 %v492
  %v2151 = vunpack.c.l.b16 %v493
  %v2152 = vunpack.c.h.b16 %v493
  %v2153 = vunpack.c.l.b16 %v494
  %v2154 = vunpack.c.h.b16 %v494
  %v2155 = vunpack.c.l.b16 %v495
  %v2156 = vunpack.c.h.b16 %v495
  %v2157 = vunpack.c.l.b16 %v496
  %v2158 = vunpack.c.h.b16 %v496
  %v2159 = vunpack.c.l.b16 %v497
  %v2160 = vunpack.c.h.b16 %v497
  %v2161 = vunpack.c.l.b16 %v498
  %v2162 = vunpack.c.h.b16 %v498
  %v2163 = vunpack.c.l.b16 %v499
  %v2164 = vunpack.c.h.b16 %v499
  %v2165 = vunpack.c.l.b16 %v500
  %v2166 = vunpack.c.h.b16 %v500
  %v2167 = vunpack.c.l.b16 %v501
  %v2168 = vunpack.c.h.b16 %v501
  %v2169 = vunpack.c.l.b16 %v502
  %v2170 = vunpack.c.h.b16 %v502
  %v2171 = vunpack.c.l.b16 %v503
  %v2172 = vunpack.c.h.b16 %v503
  %v2173 = vunpack.c.l.b16 %v504
  %v2174 = vunpack.c.h.b16 %v504
  %v2175 = vunpack.c.l.b16 %v505
  %v2176 = vunpack.c.h.b16 %v505
  %v2177 = vunpack.c.l.b16 %v506
  %v2178 = vunpack.c.h.b16 %v506
  %v2179 = vunpack.c.l.b16 %v507
  %v2180 = vunpack.c.h.b16 %v507
  %v2181 = vunpack.c.l.b16 %v508
  %v2182 = vunpack.c.h.b16 %v508
  %v2183 = vunpack.c.l.b16 %v509
  %v2184 = vunpack.c.h.b16 %v509
  %v2185 = vunpack.c.l.b16 %v510
  %v2186 = vunpack.c.h.b16 %v510
  %v2187 = vunpack.c.l.b16 %v511
  %v2188 = vunpack.c.h.b16 %v511
  %v2189 = vunpack.c.l.b16 %v512
  %v2190 = vunpack.c.h.b16 %v512
  %v2191 = vunpack.c.l.b16 %v513
  %v2192 = vunpack.c.h.b16 %v513
  %v2193 = vunpack.c.l.b16 %v514
  %v2194 = vunpack.c.h.b16 %v514
  %v2195 = vunpack.c.l.b16 %v515
  %v2196 = vunpack.c.h.b16 %v515
  %v2197 = vunpack.c.l.b16 %v516
  %v2198 = vunpack.c.h.b16 %v516
  %v2199 = vunpack.c.l.b16 %v517
  %v2200 = vunpack.c.h.b16 %v517
  %v2201 = vunpack.c.l.b16 %v518
  %v2202 = vunpack.c.h.b16 %v518
  %v2203 = vunpack.c.l.b16 %v519
  %v2204 = vunpack.c.h.b16 %v519
  %v2205 = vunpack.c.l.b16 %v520
  %v2206 = vunpack.c.h.b16 %v520
  %v2207 = vunpack.c.l.b16 %v521
  %v2208 = vunpack.c.h.b16 %v521
  %v2209 = vunpack.c.l.b16 %v522
  %v2210 = vunpack.c.h.b16 %v522
  %v2211 = vunpack.c.l.b16 %v523
  %v2212 = vunpack.c.h.b16 %v523
  %v2213 = vunpack.c.l.b16 %v524
  %v2214 = vunpack.c.h.b16 %v524
  %v2215 = vunpack.c.l.b16 %v525
  %v2216 = vunpack.c.h.b16 %v525
  %v2217 = vunpack.c.l.b16 %v526
  %v2218 = vunpack.c.h.b16 %v526
  %v2219 = vunpack.c.l.b16 %v527
  %v2220 = vunpack.c.h.b16 %v527
  %v2221 = vunpack.c.l.b16 %v528
  %v2222 = vunpack.c.h.b16 %v528
  %v2223 = vunpack.c.l.b16 %v529
  %v2224 = vunpack.c.h.b16 %v529
  %v2225 = vunpack.c.l.b16 %v530
  %v2226 = vunpack.c.h.b16 %v530
  %v2227 = vunpack.c.l.b16 %v531
  %v2228 = vunpack.c.h.b16 %v531
  %v2229 = vunpack.c.l.b16 %v532
  %v2230 = vunpack.c.h.b16 %v532
  %v2231 = vunpack.c.l.b16 %v533
  %v2232 = vunpack.c.h.b16 %v533
  %v2233 = vunpack.c.l.b16 %v534
  %v2234 = vunpack.c.h.b16 %v534
  %v2235 = vunpack.c.l.b16 %v535
  %v2236 = vunpack.c.h.b16 %v535
  %v2237 = vunpack.c.l.b16 %v536
  %v2238 = vunpack.c.h.b16 %v536
  %v2239 = vunpack.c.l.b16 %v537
  %v2240 = vunpack.c.h.b16 %v537
  %v2241 = vunpack.c.l.b16 %v538
  %v2242 = vunpack.c.h.b16 %v538
  %v2243 = vunpack.c.l.b16 %v539
  %v2244 = vunpack.c.h.b16 %v539
  %v2245 = vunpack.c.l.b16 %v540
  %v2246 = vunpack.c.h.b16 %v540
  %v2247 = vunpack.c.l.b16 %v541
  %v2248 = vunpack.c.h.b16 %v541
  %v2249 = vunpack.c.l.b16 %v542
  %v2250 = vunpack.c.h.b16 %v542
  %v2251 = vunpack.c.l.b16 %v543
  %v2252 = vunpack.c.h.b16 %v543
  %v2253 = vunpack.c.l.b16 %v544
  %v2254 = vunpack.c.h.b16 %v544
  %v2255 = vunpack.c.l.b16 %v545
  %v2256 = vunpack.c.h.b16 %v545
  %v2257 = vunpack.c.l.b16 %v546
  %v2258 = vunpack.c.h.b16 %v546
  %v2259 = vunpack.c.l.b16 %v547
  %v2260 = vunpack.c.h.b16 %v547
  %v2261 = vunpack.c.l.b16 %v548
  %v2262 = vunpack.c.h.b16 %v548
  %v2263 = vunpack.c.l.b16 %v549
  %v2264 = vunpack.c.h.b16 %v549
  %v2265 = vunpack.c.l.b16 %v550
  %v2266 = vunpack.c.h.b16 %v550
  %v2267 = vunpack.c.l.b16 %v551
  %v2268 = vunpack.c.h.b16 %v551
  %v2269 = vunpack.c.l.b16 %v552
  %v2270 = vunpack.c.h.b16 %v552
  %v2271 = vunpack.c.l.b16 %v553
  %v2272 = vunpack.c.h.b16 %v553
  %v2273 = vunpack.c.l.b16 %v554
  %v2274 = vunpack.c.h.b16 %v554
  %v2275 = vunpack.c.l.b16 %v555
  %v2276 = vunpack.c.h.b16 %v555
  %v2277 = vunpack.c.l.b16 %v556
  %v2278 = vunpack.c.h.b16 %v556
  %v2279 = vunpack.c.l.b16 %v557
  %v2280 = vunpack.c.h.b16 %v557
  %v2281 = vunpack.c.l.b16 %v558
  %v2282 = vunpack.c.h.b16 %v558
  %v2283 = vunpack.c.l.b16 %v559
  %v2284 = vunpack.c.h.b16 %v559
  %v2285 = vunpack.c.l.b16 %v560
  %v2286 = vunpack.c.h.b16 %v560
  %v2287 = vunpack.c.l.b16 %v561
  %v2288 = vunpack.c.h.b16 %v561
  %v2289 = vunpack.c.l.b16 %v562
  %v2290 = vunpack.c.h.b16 %v562
  %v2291 = vunpack.c.l.b16 %v563
  %v2292 = vunpack.c.h.b16 %v563
  %v2293 = vunpack.c.l.b16 %v564
  %v2294 = vunpack.c.h.b16 %v564
  %v2295 = vunpack.c.l.b16 %v565
  %v2296 = vunpack.c.h.b16 %v565
  %v2297 = vunpack.c.l.b16 %v566
  %v2298 = vunpack.c.h.b16 %v566
  %v2299 = vunpack.c.l.b16 %v567
  %v2300 = vunpack.c.h.b16 %v567
  %v2301 = vunpack.c.l.b16 %v568
  %v2302 = vunpack.c.h.b16 %v568
  %v2303 = vunpack.c.l.b16 %v569
  %v2304 = vunpack.c.h.b16 %v569
  %v2305 = vunpack.c.l.b16 %v570
  %v2306 = vunpack.c.h.b16 %v570
  %v2307 = vunpack.c.l.b16 %v571
  %v2308 = vunpack.c.h.b16 %v571
  %v2309 = vunpack.c.l.b16 %v572
  %v2310 = vunpack.c.h.b16 %v572
  %v2311 = vunpack.c.l.b16 %v573
  %v2312 = vunpack.c.h.b16 %v573
  %v2313 = vunpack.c.l.b16 %v574
  %v2314 = vunpack.c.h.b16 %v574
  %v2315 = vunpack.c.l.b16 %v575
  %v2316 = vunpack.c.h.b16 %v575
  %v2317 = vunpack.c.l.b16 %v576
  %v2318 = vunpack.c.h.b16 %v576
  %v2319 = vunpack.c.l.b16 %v577
  %v2320 = vunpack.c.h.b16 %v577
  %v2321 = vunpack.c.l.b16 %v578
  %v2322 = vunpack.c.h.b16 %v578
  %v2323 = vunpack.c.l.b16 %v579
  %v2324 = vunpack.c.h.b16 %v579
  %v2325 = vunpack.c.l.b16 %v580
  %v2326 = vunpack.c.h.b16 %v580
  %v2327 = vunpack.c.l.b16 %v581
  %v2328 = vunpack.c.h.b16 %v581
  %v2329 = vunpack.c.l.b16 %v582
  %v2330 = vunpack.c.h.b16 %v582
  %v2331 = vunpack.c.l.b16 %v583
  %v2332 = vunpack.c.h.b16 %v583
  %v2333 = vunpack.c.l.b16 %v584
  %v2334 = vunpack.c.h.b16 %v584
  %v2335 = vunpack.c.l.b16 %v585
  %v2336 = vunpack.c.h.b16 %v585
  %v2337 = vunpack.c.l.b16 %v586
  %v2338 = vunpack.c.h.b16 %v586
  %v2339 = vunpack.c.l.b16 %v587
  %v2340 = vunpack.c.h.b16 %v587
  %v2341 = vunpack.c.l.b16 %v588
  %v2342 = vunpack.c.h.b16 %v588
  %v2343 = vunpack.c.l.b16 %v589
  %v2344 = vunpack.c.h.b16 %v589
  %v2345 = vunpack.c.l.b16 %v590
  %v2346 = vunpack.c.h.b16 %v590
  %v2347 = vunpack.c.l.b16 %v591
  %v2348 = vunpack.c.h.b16 %v591
  %v2349 = vunpack.c.l.b16 %v592
  %v2350 = vunpack.c.h.b16 %v592
  %v2351 = vunpack.c.l.b16 %v593
  %v2352 = vunpack.c.h.b16 %v593
  %v2353 = vunpack.c.l.b16 %v594
  %v2354 = vunpack.c.h.b16 %v594
  %v2355 = vunpack.c.l.b16 %v595
  %v2356 = vunpack.c.h.b16 %v595
  %v2357 = vunpack.c.l.b16 %v596
  %v2358 = vunpack.c.h.b16 %v596
  %v2359 = vunpack.c.l.b16 %v597
  %v2360 = vunpack.c.h.b16 %v597
  %v2361 = vunpack.c.l.b16 %v598
  %v2362 = vunpack.c.h.b16 %v598
  %v2363 = vunpack.c.l.b16 %v599
  %v2364 = vunpack.c.h.b16 %v599
  %v2365 = vunpack.c.l.b16 %v600
  %v2366 = vunpack.c.h.b16 %v600
  %v2367 = vunpack.c.l.b16 %v601
  %v2368 = vunpack.c.h.b16 %v601
  %v2369 = vunpack.c.l.b16 %v602
  %v2370 = vunpack.c.h.b16 %v602
  %v2371 = vunpack.c.l.b16 %v603
  %v2372 = vunpack.c.h.b16 %v603
  %v2373 = vunpack.c.l.b16 %v604
  %v2374 = vunpack.c.h.b16 %v604
  %v2375 = vunpack.c.l.b16 %v605
  %v2376 = vunpack.c.h.b16 %v605
  %v2377 = vunpack.c.l.b16 %v606
  %v2378 = vunpack.c.h.b16 %v606
  %v2379 = vunpack.c.l.b16 %v607
  %v2380 = vunpack.c.h.b16 %v607
  %v2381 = vunpack.c.l.b16 %v608
  %v2382 = vunpack.c.h.b16 %v608
  %v2383 = vunpack.c.l.b16 %v609
  %v2384 = vunpack.c.h.b16 %v609
  %v2385 = vunpack.c.l.b16 %v610
  %v2386 = vunpack.c.h.b16 %v610
  %v2387 = vunpack.c.l.b16 %v611
  %v2388 = vunpack.c.h.b16 %v611
  %v2389 = vunpack.c.l.b16 %v612
  %v2390 = vunpack.c.h.b16 %v612
  %v2391 = vunpack.c.l.b16 %v613
  %v2392 = vunpack.c.h.b16 %v613
  %v2393 = vunpack.c.l.b16 %v614
  %v2394 = vunpack.c.h.b16 %v614
  %v2395 = vunpack.c.l.b16 %v615
  %v2396 = vunpack.c.h.b16 %v615
  %v2397 = vunpack.c.l.b16 %v616
  %v2398 = vunpack.c.h.b16 %v616
  %v2399 = vunpack.c.l.b16 %v617
  %v2400 = vunpack.c.h.b16 %v617
  %v2401 = vunpack.c.l.b16 %v618
  %v2402 = vunpack.c.h.b16 %v618
  %v2403 = vunpack.c.l.b16 %v619
  %v2404 = vunpack.c.h.b16 %v619
  %v2405 = vunpack.c.l.b16 %v620
  %v2406 = vunpack.c.h.b16 %v620
  %v2407 = vunpack.c.l.b16 %v621
  %v2408 = vunpack.c.h.b16 %v621
  %v2409 = vunpack.c.l.b16 %v622
  %v2410 = vunpack.c.h.b16 %v622
  %v2411 = vunpack.c.l.b16 %v623
  %v2412 = vunpack.c.h.b16 %v623
  %v2413 = vunpack.c.l.b16 %v624
  %v2414 = vunpack.c.h.b16 %v624
  %v2415 = vunpack.c.l.b16 %v625
  %v2416 = vunpack.c.h.b16 %v625
  %v2417 = vunpack.c.l.b16 %v626
  %v2418 = vunpack.c.h.b16 %v626
  %v2419 = vunpack.c.l.b16 %v627
  %v2420 = vunpack.c.h.b16 %v627
  %v2421 = vunpack.c.l.b16 %v628
  %v2422 = vunpack.c.h.b16 %v628
  %v2423 = vunpack.c.l.b16 %v629
  %v2424 = vunpack.c.h.b16 %v629
  %v2425 = vunpack.c.l.b16 %v630
  %v2426 = vunpack.c.h.b16 %v630
  %v2427 = vunpack.c.l.b16 %v631
  %v2428 = vunpack.c.h.b16 %v631
  %v2429 = vunpack.c.l.b16 %v632
  %v2430 = vunpack.c.h.b16 %v632
  %v2431 = vunpack.c.l.b16 %v633
  %v2432 = vunpack.c.h.b16 %v633
  %v2433 = vunpack.c.l.b16 %v634
  %v2434 = vunpack.c.h.b16 %v634
  %v2435 = vunpack.c.l.b16 %v635
  %v2436 = vunpack.c.h.b16 %v635
  %v2437 = vunpack.c.l.b16 %v636
  %v2438 = vunpack.c.h.b16 %v636
  %v2439 = vunpack.c.l.b16 %v637
  %v2440 = vunpack.c.h.b16 %v637
  %v2441 = vunpack.c.l.b16 %v638
  %v2442 = vunpack.c.h.b16 %v638
  %v2443 = vunpack.c.l.b16 %v639
  %v2444 = vunpack.c.h.b16 %v639
  %v2445 = vunpack.c.l.b16 %v640
  %v2446 = vunpack.c.h.b16 %v640
  %v2447 = vunpack.c.l.b16 %v641
  %v2448 = vunpack.c.h.b16 %v641
  %v2449 = vunpack.c.l.b16 %v642
  %v2450 = vunpack.c.h.b16 %v642
  %v2451 = vunpack.c.l.b16 %v643
  %v2452 = vunpack.c.h.b16 %v643
  %v2453 = vunpack.c.l.b16 %v644
  %v2454 = vunpack.c.h.b16 %v644
  %v2455 = vunpack.c.l.b16 %v645
  %v2456 = vunpack.c.h.b16 %v645
  %v2457 = vunpack.c.l.b16 %v646
  %v2458 = vunpack.c.h.b16 %v646
  %v2459 = vunpack.c.l.b16 %v647
  %v2460 = vunpack.c.h.b16 %v647
  %v2461 = vunpack.c.l.b16 %v648
  %v2462 = vunpack.c.h.b16 %v648
  %v2463 = vunpack.c.l.b16 %v649
  %v2464 = vunpack.c.h.b16 %v649
  %v2465 = vunpack.c.l.b16 %v650
  %v2466 = vunpack.c.h.b16 %v650
  %v2467 = vunpack.c.l.b16 %v651
  %v2468 = vunpack.c.h.b16 %v651
  %v2469 = vunpack.c.l.b16 %v652
  %v2470 = vunpack.c.h.b16 %v652
  %v2471 = vunpack.c.l.b16 %v653
  %v2472 = vunpack.c.h.b16 %v653
  %v2473 = vunpack.c.l.b16 %v654
  %v2474 = vunpack.c.h.b16 %v654
  %v2475 = vunpack.c.l.b16 %v655
  %v2476 = vunpack.c.h.b16 %v655
  %v2477 = vunpack.c.l.b16 %v656
  %v2478 = vunpack.c.h.b16 %v656
  %v2479 = vunpack.c.l.b16 %v657
  %v2480 = vunpack.c.h.b16 %v657
  %v2481 = vunpack.c.l.b16 %v658
  %v2482 = vunpack.c.h.b16 %v658
  %v2483 = vunpack.c.l.b16 %v659
  %v2484 = vunpack.c.h.b16 %v659
  %v2485 = vunpack.c.l.b16 %v660
  %v2486 = vunpack.c.h.b16 %v660
  %v2487 = vunpack.c.l.b16 %v661
  %v2488 = vunpack.c.h.b16 %v661
  %v2489 = vunpack.c.l.b16 %v662
  %v2490 = vunpack.c.h.b16 %v662
  %v2491 = vunpack.c.l.b16 %v663
  %v2492 = vunpack.c.h.b16 %v663
  %v2493 = vunpack.c.l.b16 %v664
  %v2494 = vunpack.c.h.b16 %v664
  %v2495 = vunpack.c.l.b16 %v665
  %v2496 = vunpack.c.h.b16 %v665
  %v2497 = vunpack.c.l.b16 %v666
  %v2498 = vunpack.c.h.b16 %v666
  %v2499 = vunpack.c.l.b16 %v667
  %v2500 = vunpack.c.h.b16 %v667
  %v2501 = vunpack.c.l.b16 %v668
  %v2502 = vunpack.c.h.b16 %v668
  %v2503 = vunpack.c.l.b16 %v669
  %v2504 = vunpack.c.h.b16 %v669
  %v2505 = vunpack.c.l.b16 %v670
  %v2506 = vunpack.c.h.b16 %v670
  %v2507 = vunpack.c.l.b16 %v671
  %v2508 = vunpack.c.h.b16 %v671
  %v2509 = vunpack.c.l.b16 %v672
  %v2510 = vunpack.c.h.b16 %v672
  %v2511 = vunpack.c.l.b16 %v673
  %v2512 = vunpack.c.h.b16 %v673
  %v2513 = vunpack.c.l.b16 %v674
  %v2514 = vunpack.c.h.b16 %v674
  %v2515 = vunpack.c.l.b16 %v675
  %v2516 = vunpack.c.h.b16 %v675
  %v2517 = vunpack.c.l.b16 %v676
  %v2518 = vunpack.c.h.b16 %v676
  %v2519 = vunpack.c.l.b16 %v677
  %v2520 = vunpack.c.h.b16 %v677
  %v2521 = vunpack.c.l.b16 %v678
  %v2522 = vunpack.c.h.b16 %v678
  %v2523 = vunpack.c.l.b16 %v679
  %v2524 = vunpack.c.h.b16 %v679
  %v2525 = vunpack.c.l.b16 %v680
  %v2526 = vunpack.c.h.b16 %v680
  %v2527 = vunpack.c.l.b16 %v681
  %v2528 = vunpack.c.h.b16 %v681
  %v2529 = vunpack.c.l.b16 %v682
  %v2530 = vunpack.c.h.b16 %v682
  %v2531 = vunpack.c.l.b16 %v683
  %v2532 = vunpack.c.h.b16 %v683
  %v2533 = vunpack.c.l.b16 %v684
  %v2534 = vunpack.c.h.b16 %v684
  %v2535 = vunpack.c.l.b16 %v685
  %v2536 = vunpack.c.h.b16 %v685
  %v2537 = vunpack.c.l.b16 %v686
  %v2538 = vunpack.c.h.b16 %v686
  %v2539 = vunpack.c.l.b16 %v687
  %v2540 = vunpack.c.h.b16 %v687
  %v2541 = vunpack.c.l.b16 %v688
  %v2542 = vunpack.c.h.b16 %v688
  %v2543 = vunpack.c.l.b16 %v689
  %v2544 = vunpack.c.h.b16 %v689
  %v2545 = vunpack.c.l.b16 %v690
  %v2546 = vunpack.c.h.b16 %v690
  %v2547 = vunpack.c.l.b16 %v691
  %v2548 = vunpack.c.h.b16 %v691
  %v2549 = vunpack.c.l.b16 %v692
  %v2550 = vunpack.c.h.b16 %v692
  %v2551 = vunpack.c.l.b16 %v693
  %v2552 = vunpack.c.h.b16 %v693
  %v2553 = vunpack.c.l.b16 %v694
  %v2554 = vunpack.c.h.b16 %v694
  %v2555 = vunpack.c.l.b16 %v695
  %v2556 = vunpack.c.h.b16 %v695
  %v2557 = vunpack.c.l.b16 %v696
  %v2558 = vunpack.c.h.b16 %v696
  %v2559 = vunpack.c.l.b16 %v697
  %v2560 = vunpack.c.h.b16 %v697
  %v2561 = vunpack.c.l.b16 %v698
  %v2562 = vunpack.c.h.b16 %v698
  %v2563 = vunpack.c.l.b16 %v699
  %v2564 = vunpack.c.h.b16 %v699
  %v2565 = vunpack.c.l.b16 %v700
  %v2566 = vunpack.c.h.b16 %v700
  %v2567 = vunpack.c.l.b16 %v701
  %v2568 = vunpack.c.h.b16 %v701
  %v2569 = vunpack.c.l.b16 %v702
  %v2570 = vunpack.c.h.b16 %v702
  %v2571 = vunpack.c.l.b16 %v703
  %v2572 = vunpack.c.h.b16 %v703
  %v2573 = vunpack.c.l.b16 %v704
  %v2574 = vunpack.c.h.b16 %v704
  %v2575 = vunpack.c.l.b16 %v705
  %v2576 = vunpack.c.h.b16 %v705
  %v2577 = vunpack.c.l.b16 %v706
  %v2578 = vunpack.c.h.b16 %v706
  %v2579 = vunpack.c.l.b16 %v707
  %v2580 = vunpack.c.h.b16 %v707
  %v2581 = vunpack.c.l.b16 %v708
  %v2582 = vunpack.c.h.b16 %v708
  %v2583 = vunpack.c.l.b16 %v709
  %v2584 = vunpack.c.h.b16 %v709
  %v2585 = vunpack.c.l.b16 %v710
  %v2586 = vunpack.c.h.b16 %v710
  %v2587 = vunpack.c.l.b16 %v711
  %v2588 = vunpack.c.h.b16 %v711
  %v2589 = vunpack.c.l.b16 %v712
  %v2590 = vunpack.c.h.b16 %v712
  %v2591 = vunpack.c.l.b16 %v713
  %v2592 = vunpack.c.h.b16 %v713
  %v2593 = vunpack.c.l.b16 %v714
  %v2594 = vunpack.c.h.b16 %v714
  %v2595 = vunpack.c.l.b16 %v715
  %v2596 = vunpack.c.h.b16 %v715
  %v2597 = vunpack.c.l.b16 %v716
  %v2598 = vunpack.c.h.b16 %v716
  %v2599 = vunpack.c.l.b16 %v717
  %v2600 = vunpack.c.h.b16 %v717
  %v2601 = vunpack.c.l.b16 %v718
  %v2602 = vunpack.c.h.b16 %v718
  %v2603 = vunpack.c.l.b16 %v719
  %v2604 = vunpack.c.h.b16 %v719
  %v2605 = vunpack.c.l.b16 %v720
  %v2606 = vunpack.c.h.b16 %v720
  %v2607 = vunpack.c.l.b16 %v721
  %v2608 = vunpack.c.h.b16 %v721
  %v2609 = vunpack.c.l.b16 %v722
  %v2610 = vunpack.c.h.b16 %v722
  %v2611 = vunpack.c.l.b16 %v723
  %v2612 = vunpack.c.h.b16 %v723
  %v2613 = vunpack.c.l.b16 %v724
  %v2614 = vunpack.c.h.b16 %v724
  %v2615 = vunpack.c.l.b16 %v725
  %v2616 = vunpack.c.h.b16 %v725
  %v2617 = vunpack.c.l.b16 %v726
  %v2618 = vunpack.c.h.b16 %v726
  %v2619 = vunpack.c.l.b16 %v727
  %v2620 = vunpack.c.h.b16 %v727
  %v2621 = vunpack.c.l.b16 %v728
  %v2622 = vunpack.c.h.b16 %v728
  %v2623 = vunpack.c.l.b16 %v729
  %v2624 = vunpack.c.h.b16 %v729
  %v2625 = vunpack.c.l.b16 %v730
  %v2626 = vunpack.c.h.b16 %v730
  %v2627 = vunpack.c.l.b16 %v731
  %v2628 = vunpack.c.h.b16 %v731
  %v2629 = vunpack.c.l.b16 %v732
  %v2630 = vunpack.c.h.b16 %v732
  %v2631 = vunpack.c.l.b16 %v733
  %v2632 = vunpack.c.h.b16 %v733
  %v2633 = vunpack.c.l.b16 %v734
  %v2634 = vunpack.c.h.b16 %v734
  %v2635 = vunpack.c.l.b16 %v735
  %v2636 = vunpack.c.h.b16 %v735
  %v2637 = vunpack.c.l.b16 %v736
  %v2638 = vunpack.c.h.b16 %v736
  %v2639 = vunpack.c.l.b16 %v737
  %v2640 = vunpack.c.h.b16 %v737
  %v2641 = vunpack.c.l.b16 %v738
  %v2642 = vunpack.c.h.b16 %v738
  %v2643 = vunpack.c.l.b16 %v739
  %v2644 = vunpack.c.h.b16 %v739
  %v2645 = vunpack.c.l.b16 %v740
  %v2646 = vunpack.c.h.b16 %v740
  %v2647 = vunpack.c.l.b16 %v741
  %v2648 = vunpack.c.h.b16 %v741
  %v2649 = vunpack.c.l.b16 %v742
  %v2650 = vunpack.c.h.b16 %v742
  %v2651 = vunpack.c.l.b16 %v743
  %v2652 = vunpack.c.h.b16 %v743
  %v2653 = vunpack.c.l.b16 %v744
  %v2654 = vunpack.c.h.b16 %v744
  %v2655 = vunpack.c.l.b16 %v745
  %v2656 = vunpack.c.h.b16 %v745
  %v2657 = vunpack.c.l.b16 %v746
  %v2658 = vunpack.c.h.b16 %v746
  %v2659 = vunpack.c.l.b16 %v747
  %v2660 = vunpack.c.h.b16 %v747
  %v2661 = vunpack.c.l.b16 %v748
  %v2662 = vunpack.c.h.b16 %v748
  %v2663 = vunpack.c.l.b16 %v749
  %v2664 = vunpack.c.h.b16 %v749
  %v2665 = vunpack.c.l.b16 %v750
  %v2666 = vunpack.c.h.b16 %v750
  %v2667 = vunpack.c.l.b16 %v751
  %v2668 = vunpack.c.h.b16 %v751
  %v2669 = vunpack.c.l.b16 %v752
  %v2670 = vunpack.c.h.b16 %v752
  %v2671 = vunpack.c.l.b16 %v753
  %v2672 = vunpack.c.h.b16 %v753
  %v2673 = vunpack.c.l.b16 %v754
  %v2674 = vunpack.c.h.b16 %v754
  %v2675 = vpack.c.b16 %v1403, %v1395
  %v2676 = vpack.c.b16 %v1404, %v1396
  %v2677 = vpack.c.b16 %v1405, %v1397
  %v2678 = vpack.c.b16 %v1406, %v1398
  %v2679 = vpack.c.b16 %v1407, %v1399
  %v2680 = vpack.c.b16 %v1408, %v1400
  %v2681 = vpack.c.b16 %v1409, %v1401
  %v2682 = vpack.c.b16 %v1410, %v1402
  %v2683 = vpack.c.b16 %v1419, %v1411
  %v2684 = vpack.c.b16 %v1420, %v1412
  %v2685 = vpack.c.b16 %v1421, %v1413
  %v2686 = vpack.c.b16 %v1422, %v1414
  %v2687 = vpack.c.b16 %v1423, %v1415
  %v2688 = vpack.c.b16 %v1424, %v1416
  %v2689 = vpack.c.b16 %v1425, %v1417
  %v2690 = vpack.c.b16 %v1426, %v1418
  %v2691 = vpack.c.b16 %v1435, %v1427
  %v2692 = vpack.c.b16 %v1436, %v1428
  %v2693 = vpack.c.b16 %v1437, %v1429
  %v2694 = vpack.c.b16 %v1438, %v1430
  %v2695 = vpack.c.b16 %v1439, %v1431
  %v2696 = vpack.c.b16 %v1440, %v1432
  %v2697 = vpack.c.b16 %v1441, %v1433
  %v2698 = vpack.c.b16 %v1442, %v1434
  %v2699 = vpack.c.b16 %v1451, %v1443
  %v2700 = vpack.c.b16 %v1452, %v1444
  %v2701 = vpack.c.b16 %v1453, %v1445
  %v2702 = vpack.c.b16 %v1454, %v1446
  %v2703 = vpack.c.b16 %v1455, %v1447
  %v2704 = vpack.c.b16 %v1456, %v1448
  %v2705 = vpack.c.b16 %v1457, %v1449
  %v2706 = vpack.c.b16 %v1458, %v1450
  %v2707 = vpack.c.b16 %v1467, %v1459
  %v2708 = vpack.c.b16 %v1468, %v1460
  %v2709 = vpack.c.b16 %v1469, %v1461
  %v2710 = vpack.c.b16 %v1470, %v1462
  %v2711 = vpack.c.b16 %v1471, %v1463
  %v2712 = vpack.c.b16 %v1472, %v1464
  %v2713 = vpack.c.b16 %v1473, %v1465
  %v2714 = vpack.c.b16 %v1474, %v1466
  %v2715 = vpack.c.b16 %v1483, %v1475
  %v2716 = vpack.c.b16 %v1484, %v1476
  %v2717 = vpack.c.b16 %v1485, %v1477
  %v2718 = vpack.c.b16 %v1486, %v1478
  %v2719 = vpack.c.b16 %v1487, %v1479
  %v2720 = vpack.c.b16 %v1488, %v1480
  %v2721 = vpack.c.b16 %v1489, %v1481
  %v2722 = vpack.c.b16 %v1490, %v1482
  %v2723 = vpack.c.b16 %v1499, %v1491
  %v2724 = vpack.c.b16 %v1500, %v1492
  %v2725 = vpack.c.b16 %v1501, %v1493
  %v2726 = vpack.c.b16 %v1502, %v1494
  %v2727 = vpack.c.b16 %v1503, %v1495
  %v2728 = vpack.c.b16 %v1504, %v1496
  %v2729 = vpack.c.b16 %v1505, %v1497
  %v2730 = vpack.c.b16 %v1506, %v1498
  %v2731 = vpack.c.b16 %v1515, %v1507
  %v2732 = vpack.c.b16 %v1516, %v1508
  %v2733 = vpack.c.b16 %v1517, %v1509
  %v2734 = vpack.c.b16 %v1518, %v1510
  %v2735 = vpack.c.b16 %v1519, %v1511
  %v2736 = vpack.c.b16 %v1520, %v1512
  %v2737 = vpack.c.b16 %v1521, %v1513
  %v2738 = vpack.c.b16 %v1522, %v1514
  %v2739 = vpack.c.b16 %v1531, %v1523
  %v2740 = vpack.c.b16 %v1532, %v1524
  %v2741 = vpack.c.b16 %v1533, %v1525
  %v2742 = vpack.c.b16 %v1534, %v1526
  %v2743 = vpack.c.b16 %v1535, %v1527
  %v2744 = vpack.c.b16 %v1536, %v1528
  %v2745 = vpack.c.b16 %v1537, %v1529
  %v2746 = vpack.c.b16 %v1538, %v1530
  %v2747 = vpack.c.b16 %v1547, %v1539
  %v2748 = vpack.c.b16 %v1548, %v1540
  %v2749 = vpack.c.b16 %v1549, %v1541
  %v2750 = vpack.c.b16 %v1550, %v1542
  %v2751 = vpack.c.b16 %v1551, %v1543
  %v2752 = vpack.c.b16 %v1552, %v1544
  %v2753 = vpack.c.b16 %v1553, %v1545
  %v2754 = vpack.c.b16 %v1554, %v1546
  %v2755 = vpack.c.b16 %v1563, %v1555
  %v2756 = vpack.c.b16 %v1564, %v1556
  %v2757 = vpack.c.b16 %v1565, %v1557
  %v2758 = vpack.c.b16 %v1566, %v1558
  %v2759 = vpack.c.b16 %v1567, %v1559
  %v2760 = vpack.c.b16 %v1568, %v1560
  %v2761 = vpack.c.b16 %v1569, %v1561
  %v2762 = vpack.c.b16 %v1570, %v1562
  %v2763 = vpack.c.b16 %v1579, %v1571
  %v2764 = vpack.c.b16 %v1580, %v1572
  %v2765 = vpack.c.b16 %v1581, %v1573
  %v2766 = vpack.c.b16 %v1582, %v1574
  %v2767 = vpack.c.b16 %v1583, %v1575
  %v2768 = vpack.c.b16 %v1584, %v1576
  %v2769 = vpack.c.b16 %v1585, %v1577
  %v2770 = vpack.c.b16 %v1586, %v1578
  %v2771 = vpack.c.b16 %v1595, %v1587
  %v2772 = vpack.c.b16 %v1596, %v1588
  %v2773 = vpack.c.b16 %v1597, %v1589
  %v2774 = vpack.c.b16 %v1598, %v1590
  %v2775 = vpack.c.b16 %v1599, %v1591
  %v2776 = vpack.c.b16 %v1600, %v1592
  %v2777 = vpack.c.b16 %v1601, %v1593
  %v2778 = vpack.c.b16 %v1602, %v1594
  %v2779 = vpack.c.b16 %v1611, %v1603
  %v2780 = vpack.c.b16 %v1612, %v1604
  %v2781 = vpack.c.b16 %v1613, %v1605
  %v2782 = vpack.c.b16 %v1614, %v1606
  %v2783 = vpack.c.b16 %v1615, %v1607
  %v2784 = vpack.c.b16 %v1616, %v1608
  %v2785 = vpack.c.b16 %v1617, %v1609
  %v2786 = vpack.c.b16 %v1618, %v1610
  %v2787 = vpack.c.b16 %v1627, %v1619
  %v2788 = vpack.c.b16 %v1628, %v1620
  %v2789 = vpack.c.b16 %v1629, %v1621
  %v2790 = vpack.c.b16 %v1630, %v1622
  %v2791 = vpack.c.b16 %v1631, %v1623
  %v2792 = vpack.c.b16 %v1632, %v1624
  %v2793 = vpack.c.b16 %v1633, %v1625
  %v2794 = vpack.c.b16 %v1634, %v1626
  %v2795 = vpack.c.b16 %v1643, %v1635
  %v2796 = vpack.c.b16 %v1644, %v1636
  %v2797 = vpack.c.b16 %v1645, %v1637
  %v2798 = vpack.c.b16 %v1646, %v1638
  %v2799 = vpack.c.b16 %v1647, %v1639
  %v2800 = vpack.c.b16 %v1648, %v1640
  %v2801 = vpack.c.b16 %v1649, %v1641
  %v2802 = vpack.c.b16 %v1650, %v1642
  %v2803 = vpack.c.b16 %v1659, %v1651
  %v2804 = vpack.c.b16 %v1660, %v1652
  %v2805 = vpack.c.b16 %v1661, %v1653
  %v2806 = vpack.c.b16 %v1662, %v1654
  %v2807 = vpack.c.b16 %v1663, %v1655
  %v2808 = vpack.c.b16 %v1664, %v1656
  %v2809 = vpack.c.b16 %v1665, %v1657
  %v2810 = vpack.c.b16 %v1666, %v1658
  %v2811 = vpack.c.b16 %v1675, %v1667
  %v2812 = vpack.c.b16 %v1676, %v1668
  %v2813 = vpack.c.b16 %v1677, %v1669
  %v2814 = vpack.c.b16 %v1678, %v1670
  %v2815 = vpack.c.b16 %v1679, %v1671
  %v2816 = vpack.c.b16 %v1680, %v1672
  %v2817 = vpack.c.b16 %v1681, %v1673
  %v2818 = vpack.c.b16 %v1682, %v1674
  %v2819 = vpack.c.b16 %v1691, %v1683
  %v2820 = vpack.c.b16 %v1692, %v1684
  %v2821 = vpack.c.b16 %v1693, %v1685
  %v2822 = vpack.c.b16 %v1694, %v1686
  %v2823 = vpack.c.b16 %v1695, %v1687
  %v2824 = vpack.c.b16 %v1696, %v1688
  %v2825 = vpack.c.b16 %v1697, %v1689
  %v2826 = vpack.c.b16 %v1698, %v1690
  %v2827 = vpack.c.b16 %v1707, %v1699
  %v2828 = vpack.c.b16 %v1708, %v1700
  %v2829 = vpack.c.b16 %v1709, %v1701
  %v2830 = vpack.c.b16 %v1710, %v1702
  %v2831 = vpack.c.b16 %v1711, %v1703
  %v2832 = vpack.c.b16 %v1712, %v1704
  %v2833 = vpack.c.b16 %v1713, %v1705
  %v2834 = vpack.c.b16 %v1714, %v1706
  %v2835 = vpack.c.b16 %v1723, %v1715
  %v2836 = vpack.c.b16 %v1724, %v1716
  %v2837 = vpack.c.b16 %v1725, %v1717
  %v2838 = vpack.c.b16 %v1726, %v1718
  %v2839 = vpack.c.b16 %v1727, %v1719
  %v2840 = vpack.c.b16 %v1728, %v1720
  %v2841 = vpack.c.b16 %v1729, %v1721
  %v2842 = vpack.c.b16 %v1730, %v1722
  %v2843 = vpack.c.b16 %v1739, %v1731
  %v2844 = vpack.c.b16 %v1740, %v1732
  %v2845 = vpack.c.b16 %v1741, %v1733
  %v2846 = vpack.c.b16 %v1742, %v1734
  %v2847 = vpack.c.b16 %v1743, %v1735
  %v2848 = vpack.c.b16 %v1744, %v1736
  %v2849 = vpack.c.b16 %v1745, %v1737
  %v2850 = vpack.c.b16 %v1746, %v1738
  %v2851 = vpack.c.b16 %v1755, %v1747
  %v2852 = vpack.c.b16 %v1756, %v1748
  %v2853 = vpack.c.b16 %v1757, %v1749
  %v2854 = vpack.c.b16 %v1758, %v1750
  %v2855 = vpack.c.b16 %v1759, %v1751
  %v2856 = vpack.c.b16 %v1760, %v1752
  %v2857 = vpack.c.b16 %v1761, %v1753
  %v2858 = vpack.c.b16 %v1762, %v1754
  %v2859 = vpack.c.b16 %v1771, %v1763
  %v2860 = vpack.c.b16 %v1772, %v1764
  %v2861 = vpack.c.b16 %v1773, %v1765
  %v2862 = vpack.c.b16 %v1774, %v1766
  %v2863 = vpack.c.b16 %v1775, %v1767
  %v2864 = vpack.c.b16 %v1776, %v1768
  %v2865 = vpack.c.b16 %v1777, %v1769
  %v2866 = vpack.c.b16 %v1778, %v1770
  %v2867 = vpack.c.b16 %v1787, %v1779
  %v2868 = vpack.c.b16 %v1788, %v1780
  %v2869 = vpack.c.b16 %v1789, %v1781
  %v2870 = vpack.c.b16 %v1790, %v1782
  %v2871 = vpack.c.b16 %v1791, %v1783
  %v2872 = vpack.c.b16 %v1792, %v1784
  %v2873 = vpack.c.b16 %v1793, %v1785
  %v2874 = vpack.c.b16 %v1794, %v1786
  %v2875 = vpack.c.b16 %v1803, %v1795
  %v2876 = vpack.c.b16 %v1804, %v1796
  %v2877 = vpack.c.b16 %v1805, %v1797
  %v2878 = vpack.c.b16 %v1806, %v1798
  %v2879 = vpack.c.b16 %v1807, %v1799
  %v2880 = vpack.c.b16 %v1808, %v1800
  %v2881 = vpack.c.b16 %v1809, %v1801
  %v2882 = vpack.c.b16 %v1810, %v1802
  %v2883 = vpack.c.b16 %v1819, %v1811
  %v2884 = vpack.c.b16 %v1820, %v1812
  %v2885 = vpack.c.b16 %v1821, %v1813
  %v2886 = vpack.c.b16 %v1822, %v1814
  %v2887 = vpack.c.b16 %v1823, %v1815
  %v2888 = vpack.c.b16 %v1824, %v1816
  %v2889 = vpack.c.b16 %v1825, %v1817
  %v2890 = vpack.c.b16 %v1826, %v1818
  %v2891 = vpack.c.b16 %v1835, %v1827
  %v2892 = vpack.c.b16 %v1836, %v1828
  %v2893 = vpack.c.b16 %v1837, %v1829
  %v2894 = vpack.c.b16 %v1838, %v1830
  %v2895 = vpack.c.b16 %v1839, %v1831
  %v2896 = vpack.c.b16 %v1840, %v1832
  %v2897 = vpack.c.b16 %v1841, %v1833
  %v2898 = vpack.c.b16 %v1842, %v1834
  %v2899 = vpack.c.b16 %v1851, %v1843
  %v2900 = vpack.c.b16 %v1852, %v1844
  %v2901 = vpack.c.b16 %v1853, %v1845
  %v2902 = vpack.c.b16 %v1854, %v1846
  %v2903 = vpack.c.b16 %v1855, %v1847
  %v2904 = vpack.c.b16 %v1856, %v1848
  %v2905 = vpack.c.b16 %v1857, %v1849
  %v2906 = vpack.c.b16 %v1858, %v1850
  %v2907 = vpack.c.b16 %v1867, %v1859
  %v2908 = vpack.c.b16 %v1868, %v1860
  %v2909 = vpack.c.b16 %v1869, %v1861
  %v2910 = vpack.c.b16 %v1870, %v1862
  %v2911 = vpack.c.b16 %v1871, %v1863
  %v2912 = vpack.c.b16 %v1872, %v1864
  %v2913 = vpack.c.b16 %v1873, %v1865
  %v2914 = vpack.c.b16 %v1874, %v1866
  %v2915 = vpack.c.b16 %v1883, %v1875
  %v2916 = vpack.c.b16 %v1884, %v1876
  %v2917 = vpack.c.b16 %v1885, %v1877
  %v2918 = vpack.c.b16 %v1886, %v1878
  %v2919 = vpack.c.b16 %v1887, %v1879
  %v2920 = vpack.c.b16 %v1888, %v1880
  %v2921 = vpack.c.b16 %v1889, %v1881
  %v2922 = vpack.c.b16 %v1890, %v1882
  %v2923 = vpack.c.b16 %v1899, %v1891
  %v2924 = vpack.c.b16 %v1900, %v1892
  %v2925 = vpack.c.b16 %v1901, %v1893
  %v2926 = vpack.c.b16 %v1902, %v1894
  %v2927 = vpack.c.b16 %v1903, %v1895
  %v2928 = vpack.c.b16 %v1904, %v1896
  %v2929 = vpack.c.b16 %v1905, %v1897
  %v2930 = vpack.c.b16 %v1906, %v1898
  %v2931 = vpack.c.b16 %v1915, %v1907
  %v2932 = vpack.c.b16 %v1916, %v1908
  %v2933 = vpack.c.b16 %v1917, %v1909
  %v2934 = vpack.c.b16 %v1918, %v1910
  %v2935 = vpack.c.b16 %v1919, %v1911
  %v2936 = vpack.c.b16 %v1920, %v1912
  %v2937 = vpack.c.b16 %v1921, %v1913
  %v2938 = vpack.c.b16 %v1922, %v1914
  %v2939 = vpack.c.b16 %v1931, %v1923
  %v2940 = vpack.c.b16 %v1932, %v1924
  %v2941 = vpack.c.b16 %v1933, %v1925
  %v2942 = vpack.c.b16 %v1934, %v1926
  %v2943 = vpack.c.b16 %v1935, %v1927
  %v2944 = vpack.c.b16 %v1936, %v1928
  %v2945 = vpack.c.b16 %v1937, %v1929
  %v2946 = vpack.c.b16 %v1938, %v1930
  %v2947 = vpack.c.b16 %v1947, %v1939
  %v2948 = vpack.c.b16 %v1948, %v1940
  %v2949 = vpack.c.b16 %v1949, %v1941
  %v2950 = vpack.c.b16 %v1950, %v1942
  %v2951 = vpack.c.b16 %v1951, %v1943
  %v2952 = vpack.c.b16 %v1952, %v1944
  %v2953 = vpack.c.b16 %v1953, %v1945
  %v2954 = vpack.c.b16 %v1954, %v1946
  %v2955 = vpack.c.b16 %v1963, %v1955
  %v2956 = vpack.c.b16 %v1964, %v1956
  %v2957 = vpack.c.b16 %v1965, %v1957
  %v2958 = vpack.c.b16 %v1966, %v1958
  %v2959 = vpack.c.b16 %v1967, %v1959
  %v2960 = vpack.c.b16 %v1968, %v1960
  %v2961 = vpack.c.b16 %v1969, %v1961
  %v2962 = vpack.c.b16 %v1970, %v1962
  %v2963 = vpack.c.b16 %v1979, %v1971
  %v2964 = vpack.c.b16 %v1980, %v1972
  %v2965 = vpack.c.b16 %v1981, %v1973
  %v2966 = vpack.c.b16 %v1982, %v1974
  %v2967 = vpack.c.b16 %v1983, %v1975
  %v2968 = vpack.c.b16 %v1984, %v1976
  %v2969 = vpack.c.b16 %v1985, %v1977
  %v2970 = vpack.c.b16 %v1986, %v1978
  %v2971 = vpack.c.b16 %v1995, %v1987
  %v2972 = vpack.c.b16 %v1996, %v1988
  %v2973 = vpack.c.b16 %v1997, %v1989
  %v2974 = vpack.c.b16 %v1998, %v1990
  %v2975 = vpack.c.b16 %v1999, %v1991
  %v2976 = vpack.c.b16 %v2000, %v1992
  %v2977 = vpack.c.b16 %v2001, %v1993
  %v2978 = vpack.c.b16 %v2002, %v1994
  %v2979 = vpack.c.b16 %v2011, %v2003
  %v2980 = vpack.c.b16 %v2012, %v2004
  %v2981 = vpack.c.b16 %v2013, %v2005
  %v2982 = vpack.c.b16 %v2014, %v2006
  %v2983 = vpack.c.b16 %v2015, %v2007
  %v2984 = vpack.c.b16 %v2016, %v2008
  %v2985 = vpack.c.b16 %v2017, %v2009
  %v2986 = vpack.c.b16 %v2018, %v2010
  %v2987 = vpack.c.b16 %v2027, %v2019
  %v2988 = vpack.c.b16 %v2028, %v2020
  %v2989 = vpack.c.b16 %v2029, %v2021
  %v2990 = vpack.c.b16 %v2030, %v2022
  %v2991 = vpack.c.b16 %v2031, %v2023
  %v2992 = vpack.c.b16 %v2032, %v2024
  %v2993 = vpack.c.b16 %v2033, %v2025
  %v2994 = vpack.c.b16 %v2034, %v2026
  %v2995 = vpack.c.b16 %v2043, %v2035
  %v2996 = vpack.c.b16 %v2044, %v2036
  %v2997 = vpack.c.b16 %v2045, %v2037
  %v2998 = vpack.c.b16 %v2046, %v2038
  %v2999 = vpack.c.b16 %v2047, %v2039
  %v3000 = vpack.c.b16 %v2048, %v2040
  %v3001 = vpack.c.b16 %v2049, %v2041
  %v3002 = vpack.c.b16 %v2050, %v2042
  %v3003 = vpack.c.b16 %v2059, %v2051
  %v3004 = vpack.c.b16 %v2060, %v2052
  %v3005 = vpack.c.b16 %v2061, %v2053
  %v3006 = vpack.c.b16 %v2062, %v2054
  %v3007 = vpack.c.b16 %v2063, %v2055
  %v3008 = vpack.c.b16 %v2064, %v2056
  %v3009 = vpack.c.b16 %v2065, %v2057
  %v3010 = vpack.c.b16 %v2066, %v2058
  %v3011 = vpack.c.b16 %v2075, %v2067
  %v3012 = vpack.c.b16 %v2076, %v2068
  %v3013 = vpack.c.b16 %v2077, %v2069
  %v3014 = vpack.c.b16 %v2078, %v2070
  %v3015 = vpack.c.b16 %v2079, %v2071
  %v3016 = vpack.c.b16 %v2080, %v2072
  %v3017 = vpack.c.b16 %v2081, %v2073
  %v3018 = vpack.c.b16 %v2082, %v2074
  %v3019 = vpack.c.b16 %v2091, %v2083
  %v3020 = vpack.c.b16 %v2092, %v2084
  %v3021 = vpack.c.b16 %v2093, %v2085
  %v3022 = vpack.c.b16 %v2094, %v2086
  %v3023 = vpack.c.b16 %v2095, %v2087
  %v3024 = vpack.c.b16 %v2096, %v2088
  %v3025 = vpack.c.b16 %v2097, %v2089
  %v3026 = vpack.c.b16 %v2098, %v2090
  %v3027 = vpack.c.b16 %v2107, %v2099
  %v3028 = vpack.c.b16 %v2108, %v2100
  %v3029 = vpack.c.b16 %v2109, %v2101
  %v3030 = vpack.c.b16 %v2110, %v2102
  %v3031 = vpack.c.b16 %v2111, %v2103
  %v3032 = vpack.c.b16 %v2112, %v2104
  %v3033 = vpack.c.b16 %v2113, %v2105
  %v3034 = vpack.c.b16 %v2114, %v2106
  %v3035 = vpack.c.b16 %v2123, %v2115
  %v3036 = vpack.c.b16 %v2124, %v2116
  %v3037 = vpack.c.b16 %v2125, %v2117
  %v3038 = vpack.c.b16 %v2126, %v2118
  %v3039 = vpack.c.b16 %v2127, %v2119
  %v3040 = vpack.c.b16 %v2128, %v2120
  %v3041 = vpack.c.b16 %v2129, %v2121
  %v3042 = vpack.c.b16 %v2130, %v2122
  %v3043 = vpack.c.b16 %v2139, %v2131
  %v3044 = vpack.c.b16 %v2140, %v2132
  %v3045 = vpack.c.b16 %v2141, %v2133
  %v3046 = vpack.c.b16 %v2142, %v2134
  %v3047 = vpack.c.b16 %v2143, %v2135
  %v3048 = vpack.c.b16 %v2144, %v2136
  %v3049 = vpack.c.b16 %v2145, %v2137
  %v3050 = vpack.c.b16 %v2146, %v2138
  %v3051 = vpack.c.b16 %v2155, %v2147
  %v3052 = vpack.c.b16 %v2156, %v2148
  %v3053 = vpack.c.b16 %v2157, %v2149
  %v3054 = vpack.c.b16 %v2158, %v2150
  %v3055 = vpack.c.b16 %v2159, %v2151
  %v3056 = vpack.c.b16 %v2160, %v2152
  %v3057 = vpack.c.b16 %v2161, %v2153
  %v3058 = vpack.c.b16 %v2162, %v2154
  %v3059 = vpack.c.b16 %v2171, %v2163
  %v3060 = vpack.c.b16 %v2172, %v2164
  %v3061 = vpack.c.b16 %v2173, %v2165
  %v3062 = vpack.c.b16 %v2174, %v2166
  %v3063 = vpack.c.b16 %v2175, %v2167
  %v3064 = vpack.c.b16 %v2176, %v2168
  %v3065 = vpack.c.b16 %v2177, %v2169
  %v3066 = vpack.c.b16 %v2178, %v2170
  %v3067 = vpack.c.b16 %v2187, %v2179
  %v3068 = vpack.c.b16 %v2188, %v2180
  %v3069 = vpack.c.b16 %v2189, %v2181
  %v3070 = vpack.c.b16 %v2190, %v2182
  %v3071 = vpack.c.b16 %v2191, %v2183
  %v3072 = vpack.c.b16 %v2192, %v2184
  %v3073 = vpack.c.b16 %v2193, %v2185
  %v3074 = vpack.c.b16 %v2194, %v2186
  %v3075 = vpack.c.b16 %v2203, %v2195
  %v3076 = vpack.c.b16 %v2204, %v2196
  %v3077 = vpack.c.b16 %v2205, %v2197
  %v3078 = vpack.c.b16 %v2206, %v2198
  %v3079 = vpack.c.b16 %v2207, %v2199
  %v3080 = vpack.c.b16 %v2208, %v2200
  %v3081 = vpack.c.b16 %v2209, %v2201
  %v3082 = vpack.c.b16 %v2210, %v2202
  %v3083 = vpack.c.b16 %v2219, %v2211
  %v3084 = vpack.c.b16 %v2220, %v2212
  %v3085 = vpack.c.b16 %v2221, %v2213
  %v3086 = vpack.c.b16 %v2222, %v2214
  %v3087 = vpack.c.b16 %v2223, %v2215
  %v3088 = vpack.c.b16 %v2224, %v2216
  %v3089 = vpack.c.b16 %v2225, %v2217
  %v3090 = vpack.c.b16 %v2226, %v2218
  %v3091 = vpack.c.b16 %v2235, %v2227
  %v3092 = vpack.c.b16 %v2236, %v2228
  %v3093 = vpack.c.b16 %v2237, %v2229
  %v3094 = vpack.c.b16 %v2238, %v2230
  %v3095 = vpack.c.b16 %v2239, %v2231
  %v3096 = vpack.c.b16 %v2240, %v2232
  %v3097 = vpack.c.b16 %v2241, %v2233
  %v3098 = vpack.c.b16 %v2242, %v2234
  %v3099 = vpack.c.b16 %v2251, %v2243
  %v3100 = vpack.c.b16 %v2252, %v2244
  %v3101 = vpack.c.b16 %v2253, %v2245
  %v3102 = vpack.c.b16 %v2254, %v2246
  %v3103 = vpack.c.b16 %v2255, %v2247
  %v3104 = vpack.c.b16 %v2256, %v2248
  %v3105 = vpack.c.b16 %v2257, %v2249
  %v3106 = vpack.c.b16 %v2258, %v2250
  %v3107 = vpack.c.b16 %v2267, %v2259
  %v3108 = vpack.c.b16 %v2268, %v2260
  %v3109 = vpack.c.b16 %v2269, %v2261
  %v3110 = vpack.c.b16 %v2270, %v2262
  %v3111 = vpack.c.b16 %v2271, %v2263
  %v3112 = vpack.c.b16 %v2272, %v2264
  %v3113 = vpack.c.b16 %v2273, %v2265
  %v3114 = vpack.c.b16 %v2274, %v2266
  %v3115 = vpack.c.b16 %v2283, %v2275
  %v3116 = vpack.c.b16 %v2284, %v2276
  %v3117 = vpack.c.b16 %v2285, %v2277
  %v3118 = vpack.c.b16 %v2286, %v2278
  %v3119 = vpack.c.b16 %v2287, %v2279
  %v3120 = vpack.c.b16 %v2288, %v2280
  %v3121 = vpack.c.b16 %v2289, %v2281
  %v3122 = vpack.c.b16 %v2290, %v2282
  %v3123 = vpack.c.b16 %v2299, %v2291
  %v3124 = vpack.c.b16 %v2300, %v2292
  %v3125 = vpack.c.b16 %v2301, %v2293
  %v3126 = vpack.c.b16 %v2302, %v2294
  %v3127 = vpack.c.b16 %v2303, %v2295
  %v3128 = vpack.c.b16 %v2304, %v2296
  %v3129 = vpack.c.b16 %v2305, %v2297
  %v3130 = vpack.c.b16 %v2306, %v2298
  %v3131 = vpack.c.b16 %v2315, %v2307
  %v3132 = vpack.c.b16 %v2316, %v2308
  %v3133 = vpack.c.b16 %v2317, %v2309
  %v3134 = vpack.c.b16 %v2318, %v2310
  %v3135 = vpack.c.b16 %v2319, %v2311
  %v3136 = vpack.c.b16 %v2320, %v2312
  %v3137 = vpack.c.b16 %v2321, %v2313
  %v3138 = vpack.c.b16 %v2322, %v2314
  %v3139 = vpack.c.b16 %v2331, %v2323
  %v3140 = vpack.c.b16 %v2332, %v2324
  %v3141 = vpack.c.b16 %v2333, %v2325
  %v3142 = vpack.c.b16 %v2334, %v2326
  %v3143 = vpack.c.b16 %v2335, %v2327
  %v3144 = vpack.c.b16 %v2336, %v2328
  %v3145 = vpack.c.b16 %v2337, %v2329
  %v3146 = vpack.c.b16 %v2338, %v2330
  %v3147 = vpack.c.b16 %v2347, %v2339
  %v3148 = vpack.c.b16 %v2348, %v2340
  %v3149 = vpack.c.b16 %v2349, %v2341
  %v3150 = vpack.c.b16 %v2350, %v2342
  %v3151 = vpack.c.b16 %v2351, %v2343
  %v3152 = vpack.c.b16 %v2352, %v2344
  %v3153 = vpack.c.b16 %v2353, %v2345
  %v3154 = vpack.c.b16 %v2354, %v2346
  %v3155 = vpack.c.b16 %v2363, %v2355
  %v3156 = vpack.c.b16 %v2364, %v2356
  %v3157 = vpack.c.b16 %v2365, %v2357
  %v3158 = vpack.c.b16 %v2366, %v2358
  %v3159 = vpack.c.b16 %v2367, %v2359
  %v3160 = vpack.c.b16 %v2368, %v2360
  %v3161 = vpack.c.b16 %v2369, %v2361
  %v3162 = vpack.c.b16 %v2370, %v2362
  %v3163 = vpack.c.b16 %v2379, %v2371
  %v3164 = vpack.c.b16 %v2380, %v2372
  %v3165 = vpack.c.b16 %v2381, %v2373
  %v3166 = vpack.c.b16 %v2382, %v2374
  %v3167 = vpack.c.b16 %v2383, %v2375
  %v3168 = vpack.c.b16 %v2384, %v2376
  %v3169 = vpack.c.b16 %v2385, %v2377
  %v3170 = vpack.c.b16 %v2386, %v2378
  %v3171 = vpack.c.b16 %v2395, %v2387
  %v3172 = vpack.c.b16 %v2396, %v2388
  %v3173 = vpack.c.b16 %v2397, %v2389
  %v3174 = vpack.c.b16 %v2398, %v2390
  %v3175 = vpack.c.b16 %v2399, %v2391
  %v3176 = vpack.c.b16 %v2400, %v2392
  %v3177 = vpack.c.b16 %v2401, %v2393
  %v3178 = vpack.c.b16 %v2402, %v2394
  %v3179 = vpack.c.b16 %v2411, %v2403
  %v3180 = vpack.c.b16 %v2412, %v2404
  %v3181 = vpack.c.b16 %v2413, %v2405
  %v3182 = vpack.c.b16 %v2414, %v2406
  %v3183 = vpack.c.b16 %v2415, %v2407
  %v3184 = vpack.c.b16 %v2416, %v2408
  %v3185 = vpack.c.b16 %v2417, %v2409
  %v3186 = vpack.c.b16 %v2418, %v2410
  %v3187 = vpack.c.b16 %v2427, %v2419
  %v3188 = vpack.c.b16 %v2428, %v2420
  %v3189 = vpack.c.b16 %v2429, %v2421
  %v3190 = vpack.c.b16 %v2430, %v2422
  %v3191 = vpack.c.b16 %v2431, %v2423
  %v3192 = vpack.c.b16 %v2432, %v2424
  %v3193 = vpack.c.b16 %v2433, %v2425
  %v3194 = vpack.c.b16 %v2434, %v2426
  %v3195 = vpack.c.b16 %v2443, %v2435
  %v3196 = vpack.c.b16 %v2444, %v2436
  %v3197 = vpack.c.b16 %v2445, %v2437
  %v3198 = vpack.c.b16 %v2446, %v2438
  %v3199 = vpack.c.b16 %v2447, %v2439
  %v3200 = vpack.c.b16 %v2448, %v2440
  %v3201 = vpack.c.b16 %v2449, %v2441
  %v3202 = vpack.c.b16 %v2450, %v2442
  %v3203 = vpack.c.b16 %v2459, %v2451
  %v3204 = vpack.c.b16 %v2460, %v2452
  %v3205 = vpack.c.b16 %v2461, %v2453
  %v3206 = vpack.c.b16 %v2462, %v2454
  %v3207 = vpack.c.b16 %v2463, %v2455
  %v3208 = vpack.c.b16 %v2464, %v2456
  %v3209 = vpack.c.b16 %v2465, %v2457
  %v3210 = vpack.c.b16 %v2466, %v2458
  %v3211 = vpack.c.b16 %v2475, %v2467
  %v3212 = vpack.c.b16 %v2476, %v2468
  %v3213 = vpack.c.b16 %v2477, %v2469
  %v3214 = vpack.c.b16 %v2478, %v2470
  %v3215 = vpack.c.b16 %v2479, %v2471
  %v3216 = vpack.c.b16 %v2480, %v2472
  %v3217 = vpack.c.b16 %v2481, %v2473
  %v3218 = vpack.c.b16 %v2482, %v2474
  %v3219 = vpack.c.b16 %v2491, %v2483
  %v3220 = vpack.c.b16 %v2492, %v2484
  %v3221 = vpack.c.b16 %v2493, %v2485
  %v3222 = vpack.c.b16 %v2494, %v2486
  %v3223 = vpack.c.b16 %v2495, %v2487
  %v3224 = vpack.c.b16 %v2496, %v2488
  %v3225 = vpack.c.b16 %v2497, %v2489
  %v3226 = vpack.c.b16 %v2498, %v2490
  %v3227 = vpack.c.b16 %v2507, %v2499
  %v3228 = vpack.c.b16 %v2508, %v2500
  %v3229 = vpack.c.b16 %v2509, %v2501
  %v3230 = vpack.c.b16 %v2510, %v2502
  %v3231 = vpack.c.b16 %v2511, %v2503
  %v3232 = vpack.c.b16 %v2512, %v2504
  %v3233 = vpack.c.b16 %v2513, %v2505
  %v3234 = vpack.c.b16 %v2514, %v2506
  %v3235 = vpack.c.b16 %v2523, %v2515
  %v3236 = vpack.c.b16 %v2524, %v2516
  %v3237 = vpack.c.b16 %v2525, %v2517
  %v3238 = vpack.c.b16 %v2526, %v2518
  %v3239 = vpack.c.b16 %v2527, %v2519
  %v3240 = vpack.c.b16 %v2528, %v2520
  %v3241 = vpack.c.b16 %v2529, %v2521
  %v3242 = vpack.c.b16 %v2530, %v2522
  %v3243 = vpack.c.b16 %v2539, %v2531
  %v3244 = vpack.c.b16 %v2540, %v2532
  %v3245 = vpack.c.b16 %v2541, %v2533
  %v3246 = vpack.c.b16 %v2542, %v2534
  %v3247 = vpack.c.b16 %v2543, %v2535
  %v3248 = vpack.c.b16 %v2544, %v2536
  %v3249 = vpack.c.b16 %v2545, %v2537
  %v3250 = vpack.c.b16 %v2546, %v2538
  %v3251 = vpack.c.b16 %v2555, %v2547
  %v3252 = vpack.c.b16 %v2556, %v2548
  %v3253 = vpack.c.b16 %v2557, %v2549
  %v3254 = vpack.c.b16 %v2558, %v2550
  %v3255 = vpack.c.b16 %v2559, %v2551
  %v3256 = vpack.c.b16 %v2560, %v2552
  %v3257 = vpack.c.b16 %v2561, %v2553
  %v3258 = vpack.c.b16 %v2562, %v2554
  %v3259 = vpack.c.b16 %v2571, %v2563
  %v3260 = vpack.c.b16 %v2572, %v2564
  %v3261 = vpack.c.b16 %v2573, %v2565
  %v3262 = vpack.c.b16 %v2574, %v2566
  %v3263 = vpack.c.b16 %v2575, %v2567
  %v3264 = vpack.c.b16 %v2576, %v2568
  %v3265 = vpack.c.b16 %v2577, %v2569
  %v3266 = vpack.c.b16 %v2578, %v2570
  %v3267 = vpack.c.b16 %v2587, %v2579
  %v3268 = vpack.c.b16 %v2588, %v2580
  %v3269 = vpack.c.b16 %v2589, %v2581
  %v3270 = vpack.c.b16 %v2590, %v2582
  %v3271 = vpack.c.b16 %v2591, %v2583
  %v3272 = vpack.c.b16 %v2592, %v2584
  %v3273 = vpack.c.b16 %v2593, %v2585
  %v3274 = vpack.c.b16 %v2594, %v2586
  %v3275 = vpack.c.b16 %v2603, %v2595
  %v3276 = vpack.c.b16 %v2604, %v2596
  %v3277 = vpack.c.b16 %v2605, %v2597
  %v3278 = vpack.c.b16 %v2606, %v2598
  %v3279 = vpack.c.b16 %v2607, %v2599
  %v3280 = vpack.c.b16 %v2608, %v2600
  %v3281 = vpack.c.b16 %v2609, %v2601
  %v3282 = vpack.c.b16 %v2610, %v2602
  %v3283 = vpack.c.b16 %v2619, %v2611
  %v3284 = vpack.c.b16 %v2620, %v2612
  %v3285 = vpack.c.b16 %v2621, %v2613
  %v3286 = vpack.c.b16 %v2622, %v2614
  %v3287 = vpack.c.b16 %v2623, %v2615
  %v3288 = vpack.c.b16 %v2624, %v2616
  %v3289 = vpack.c.b16 %v2625, %v2617
  %v3290 = vpack.c.b16 %v2626, %v2618
  %v3291 = vpack.c.b16 %v2635, %v2627
  %v3292 = vpack.c.b16 %v2636, %v2628
  %v3293 = vpack.c.b16 %v2637, %v2629
  %v3294 = vpack.c.b16 %v2638, %v2630
  %v3295 = vpack.c.b16 %v2639, %v2631
  %v3296 = vpack.c.b16 %v2640, %v2632
  %v3297 = vpack.c.b16 %v2641, %v2633
  %v3298 = vpack.c.b16 %v2642, %v2634
  %v3299 = vpack.c.b16 %v2651, %v2643
  %v3300 = vpack.c.b16 %v2652, %v2644
  %v3301 = vpack.c.b16 %v2653, %v2645
  %v3302 = vpack.c.b16 %v2654, %v2646
  %v3303 = vpack.c.b16 %v2655, %v2647
  %v3304 = vpack.c.b16 %v2656, %v2648
  %v3305 = vpack.c.b16 %v2657, %v2649
  %v3306 = vpack.c.b16 %v2658, %v2650
  %v3307 = vpack.c.b16 %v2667, %v2659
  %v3308 = vpack.c.b16 %v2668, %v2660
  %v3309 = vpack.c.b16 %v2669, %v2661
  %v3310 = vpack.c.b16 %v2670, %v2662
  %v3311 = vpack.c.b16 %v2671, %v2663
  %v3312 = vpack.c.b16 %v2672, %v2664
  %v3313 = vpack.c.b16 %v2673, %v2665
  %v3314 = vpack.c.b16 %v2674, %v2666
  %3955 = vmatprep.subr.bf16.mxu0 %v2732
  %3956 = vmatpush1.bf16.msra.mxu0 %v2731
  %3957 = vmatprep.subr.bf16.mxu0 %v2724
  %3958 = vmatpush1.bf16.msra.mxu0 %v2723
  %3959 = vmatprep.subr.bf16.mxu0 %v2716
  %3960 = vmatpush1.bf16.msra.mxu0 %v2715
  %3961 = vmatprep.subr.bf16.mxu0 %v2708
  %3962 = vmatpush1.bf16.msra.mxu0 %v2707
  %3963 = vmatprep.subr.bf16.mxu0 %v2700
  %3964 = vmatpush1.bf16.msra.mxu0 %v2699
  %3965 = vmatprep.subr.bf16.mxu0 %v2692
  %3966 = vmatpush1.bf16.msra.mxu0 %v2691
  %3967 = vmatprep.subr.bf16.mxu0 %v2684
  %3968 = vmatpush1.bf16.msra.mxu0 %v2683
  %3969 = vmatprep.subr.bf16.mxu0 %v2676
  %3970 = vmatpush1.bf16.msra.mxu0 %v2675
  %3971 = vmatprep.subr.bf16.mxu0 %v2796
  %3972 = vmatpush2.bf16.msra.mxu0 %v2795
  %3973 = vmatprep.subr.bf16.mxu0 %v2788
  %3974 = vmatpush2.bf16.msra.mxu0 %v2787
  %3975 = vmatprep.subr.bf16.mxu0 %v2780
  %3976 = vmatpush2.bf16.msra.mxu0 %v2779
  %3977 = vmatprep.subr.bf16.mxu0 %v2772
  %3978 = vmatpush2.bf16.msra.mxu0 %v2771
  %3979 = vmatprep.subr.bf16.mxu0 %v2764
  %3980 = vmatpush2.bf16.msra.mxu0 %v2763
  %3981 = vmatprep.subr.bf16.mxu0 %v2756
  %3982 = vmatpush2.bf16.msra.mxu0 %v2755
  %3983 = vmatprep.subr.bf16.mxu0 %v2748
  %3984 = vmatpush2.bf16.msra.mxu0 %v2747
  %3985 = vmatprep.subr.bf16.mxu0 %v2740
  %3986 = vmatpush2.bf16.msra.mxu0 %v2739
  %3987 = vmatprep.mubr.bf16.mxu0 %v66
  %3988 = vmatmul.mubr.bf16.gmra.mxu0 %v65
  %v3989 = vpop.f32.mrf.mxu0
  %v3990 = vadd.f32 0.0, %v3989
  %v3991 = vpop.f32.mrf.mxu0
  %v3992 = vadd.f32 0.0, %v3991
  %v3993 = vpop.f32.mrf.mxu0
  %v3994 = vadd.f32 0.0, %v3993
  %v3995 = vpop.f32.mrf.mxu0
  %v3996 = vadd.f32 0.0, %v3995
  %3997 = vmatprep.mubr.bf16.mxu0 %v71
  %3998 = vmatmul.mubr.bf16.gmra.mxu0 %v70
  %v3999 = vpop.f32.mrf.mxu0
  %v4000 = vadd.f32 0.0, %v3999
  %v4001 = vpop.f32.mrf.mxu0
  %v4002 = vadd.f32 0.0, %v4001
  %v4003 = vpop.f32.mrf.mxu0
  %v4004 = vpop.f32.mrf.mxu0
  %4005 = vdwg.mxu0
  %4006 = vmatprep.subr.bf16.mxu0 %v2860
  %4007 = vmatpush1.bf16.msra.mxu0 %v2859
  %4008 = vmatprep.subr.bf16.mxu0 %v2852
  %4009 = vmatpush1.bf16.msra.mxu0 %v2851
  %4010 = vmatprep.subr.bf16.mxu0 %v2844
  %4011 = vmatpush1.bf16.msra.mxu0 %v2843
  %4012 = vmatprep.subr.bf16.mxu0 %v2836
  %4013 = vmatpush1.bf16.msra.mxu0 %v2835
  %4014 = vmatprep.subr.bf16.mxu0 %v2828
  %4015 = vmatpush1.bf16.msra.mxu0 %v2827
  %4016 = vmatprep.subr.bf16.mxu0 %v2820
  %4017 = vmatpush1.bf16.msra.mxu0 %v2819
  %4018 = vmatprep.subr.bf16.mxu0 %v2812
  %4019 = vmatpush1.bf16.msra.mxu0 %v2811
  %4020 = vmatprep.subr.bf16.mxu0 %v2804
  %4021 = vmatpush1.bf16.msra.mxu0 %v2803
  %4022 = vmatprep.subr.bf16.mxu0 %v2924
  %4023 = vmatpush2.bf16.msra.mxu0 %v2923
  %4024 = vmatprep.subr.bf16.mxu0 %v2916
  %4025 = vmatpush2.bf16.msra.mxu0 %v2915
  %4026 = vmatprep.subr.bf16.mxu0 %v2908
  %4027 = vmatpush2.bf16.msra.mxu0 %v2907
  %4028 = vmatprep.subr.bf16.mxu0 %v2900
  %4029 = vmatpush2.bf16.msra.mxu0 %v2899
  %4030 = vmatprep.subr.bf16.mxu0 %v2892
  %4031 = vmatpush2.bf16.msra.mxu0 %v2891
  %4032 = vmatprep.subr.bf16.mxu0 %v2884
  %4033 = vmatpush2.bf16.msra.mxu0 %v2883
  %4034 = vmatprep.subr.bf16.mxu0 %v2876
  %4035 = vmatpush2.bf16.msra.mxu0 %v2875
  %4036 = vmatprep.subr.bf16.mxu0 %v2868
  %4037 = vmatpush2.bf16.msra.mxu0 %v2867
  %4038 = vmatprep.mubr.bf16.mxu0 %v68
  %4039 = vmatmul.mubr.bf16.gmra.mxu0 %v67
  %v4040 = vpop.f32.mrf.mxu0
  %v4041 = vadd.f32 %v3990, %v4040
  %v4042 = vpop.f32.mrf.mxu0
  %v4043 = vadd.f32 %v3992, %v4042
  %v4044 = vpop.f32.mrf.mxu0
  %v4045 = vadd.f32 %v3994, %v4044
  %v4046 = vpop.f32.mrf.mxu0
  %v4047 = vadd.f32 %v3996, %v4046
  %4048 = vmatprep.mubr.bf16.mxu0 %v73
  %4049 = vmatmul.mubr.bf16.gmra.mxu0 %v72
  %v4050 = vpop.f32.mrf.mxu0
  %v4051 = vadd.f32 %v4000, %v4050
  %v4052 = vpop.f32.mrf.mxu0
  %v4053 = vadd.f32 %v4002, %v4052
  %v4054 = vpop.f32.mrf.mxu0
  %v4055 = vpop.f32.mrf.mxu0
  %4056 = vdwg.mxu0
  %4057 = vmatprep.subr.bf16.mxu0 %v2988
  %4058 = vmatpush1.bf16.msra.mxu0 %v2987
  %4059 = vmatprep.subr.bf16.mxu0 %v2980
  %4060 = vmatpush1.bf16.msra.mxu0 %v2979
  %4061 = vmatprep.subr.bf16.mxu0 %v2972
  %4062 = vmatpush1.bf16.msra.mxu0 %v2971
  %4063 = vmatprep.subr.bf16.mxu0 %v2964
  %4064 = vmatpush1.bf16.msra.mxu0 %v2963
  %4065 = vmatprep.subr.bf16.mxu0 %v2956
  %4066 = vmatpush1.bf16.msra.mxu0 %v2955
  %4067 = vmatprep.subr.bf16.mxu0 %v2948
  %4068 = vmatpush1.bf16.msra.mxu0 %v2947
  %4069 = vmatprep.subr.bf16.mxu0 %v2940
  %4070 = vmatpush1.bf16.msra.mxu0 %v2939
  %4071 = vmatprep.subr.bf16.mxu0 %v2932
  %4072 = vmatpush1.bf16.msra.mxu0 %v2931
  %4073 = vmatprep.subr.bf16.mxu0 %v3052
  %4074 = vmatpush2.bf16.msra.mxu0 %v3051
  %4075 = vmatprep.subr.bf16.mxu0 %v3044
  %4076 = vmatpush2.bf16.msra.mxu0 %v3043
  %4077 = vmatprep.subr.bf16.mxu0 %v3036
  %4078 = vmatpush2.bf16.msra.mxu0 %v3035
  %4079 = vmatprep.subr.bf16.mxu0 %v3028
  %4080 = vmatpush2.bf16.msra.mxu0 %v3027
  %4081 = vmatprep.subr.bf16.mxu0 %v3020
  %4082 = vmatpush2.bf16.msra.mxu0 %v3019
  %4083 = vmatprep.subr.bf16.mxu0 %v3012
  %4084 = vmatpush2.bf16.msra.mxu0 %v3011
  %4085 = vmatprep.subr.bf16.mxu0 %v3004
  %4086 = vmatpush2.bf16.msra.mxu0 %v3003
  %4087 = vmatprep.subr.bf16.mxu0 %v2996
  %4088 = vmatpush2.bf16.msra.mxu0 %v2995
  %4089 = vmatprep.mubr.bf16.mxu0 %v105
  %4090 = vmatmul.mubr.bf16.gmra.mxu0 %v69
  %v4091 = vpop.f32.mrf.mxu0
  %v4092 = vadd.f32 %v4041, %v4091
  %v4093 = vpop.f32.mrf.mxu0
  %v4094 = vadd.f32 %v4043, %v4093
  %v4095 = vpop.f32.mrf.mxu0
  %v4096 = vadd.f32 %v4045, %v4095
  %v4097 = vpop.f32.mrf.mxu0
  %v4098 = vadd.f32 %v4047, %v4097
  %4099 = vmatprep.mubr.bf16.mxu0 %v110
  %4100 = vmatmul.mubr.bf16.gmra.mxu0 %v74
  %v4101 = vpop.f32.mrf.mxu0
  %v4102 = vadd.f32 %v4051, %v4101
  %v4103 = vpop.f32.mrf.mxu0
  %v4104 = vadd.f32 %v4053, %v4103
  %v4105 = vpop.f32.mrf.mxu0
  %v4106 = vpop.f32.mrf.mxu0
  %4107 = vdwg.mxu0
  %4108 = vmatprep.subr.bf16.mxu0 %v3116
  %4109 = vmatpush1.bf16.msra.mxu0 %v3115
  %4110 = vmatprep.subr.bf16.mxu0 %v3108
  %4111 = vmatpush1.bf16.msra.mxu0 %v3107
  %4112 = vmatprep.subr.bf16.mxu0 %v3100
  %4113 = vmatpush1.bf16.msra.mxu0 %v3099
  %4114 = vmatprep.subr.bf16.mxu0 %v3092
  %4115 = vmatpush1.bf16.msra.mxu0 %v3091
  %4116 = vmatprep.subr.bf16.mxu0 %v3084
  %4117 = vmatpush1.bf16.msra.mxu0 %v3083
  %4118 = vmatprep.subr.bf16.mxu0 %v3076
  %4119 = vmatpush1.bf16.msra.mxu0 %v3075
  %4120 = vmatprep.subr.bf16.mxu0 %v3068
  %4121 = vmatpush1.bf16.msra.mxu0 %v3067
  %4122 = vmatprep.subr.bf16.mxu0 %v3060
  %4123 = vmatpush1.bf16.msra.mxu0 %v3059
  %4124 = vmatprep.subr.bf16.mxu0 %v3180
  %4125 = vmatpush2.bf16.msra.mxu0 %v3179
  %4126 = vmatprep.subr.bf16.mxu0 %v3172
  %4127 = vmatpush2.bf16.msra.mxu0 %v3171
  %4128 = vmatprep.subr.bf16.mxu0 %v3164
  %4129 = vmatpush2.bf16.msra.mxu0 %v3163
  %4130 = vmatprep.subr.bf16.mxu0 %v3156
  %4131 = vmatpush2.bf16.msra.mxu0 %v3155
  %4132 = vmatprep.subr.bf16.mxu0 %v3148
  %4133 = vmatpush2.bf16.msra.mxu0 %v3147
  %4134 = vmatprep.subr.bf16.mxu0 %v3140
  %4135 = vmatpush2.bf16.msra.mxu0 %v3139
  %4136 = vmatprep.subr.bf16.mxu0 %v3132
  %4137 = vmatpush2.bf16.msra.mxu0 %v3131
  %4138 = vmatprep.subr.bf16.mxu0 %v3124
  %4139 = vmatpush2.bf16.msra.mxu0 %v3123
  %4140 = vmatprep.mubr.bf16.mxu0 %v107
  %4141 = vmatmul.mubr.bf16.gmra.mxu0 %v106
  %v4142 = vpop.f32.mrf.mxu0
  %v4143 = vadd.f32 %v4092, %v4142
  %v4144 = vpop.f32.mrf.mxu0
  %v4145 = vadd.f32 %v4094, %v4144
  %v4146 = vpop.f32.mrf.mxu0
  %v4147 = vadd.f32 %v4096, %v4146
  %v4148 = vpop.f32.mrf.mxu0
  %v4149 = vadd.f32 %v4098, %v4148
  %4150 = vmatprep.mubr.bf16.mxu0 %v112
  %4151 = vmatmul.mubr.bf16.gmra.mxu0 %v111
  %v4152 = vpop.f32.mrf.mxu0
  %v4153 = vadd.f32 %v4102, %v4152
  %v4154 = vpop.f32.mrf.mxu0
  %v4155 = vadd.f32 %v4104, %v4154
  %v4156 = vpop.f32.mrf.mxu0
  %v4157 = vpop.f32.mrf.mxu0
  %4158 = vdwg.mxu0
  %4159 = vmatprep.subr.bf16.mxu0 %v3244
  %4160 = vmatpush1.bf16.msra.mxu0 %v3243
  %4161 = vmatprep.subr.bf16.mxu0 %v3236
  %4162 = vmatpush1.bf16.msra.mxu0 %v3235
  %4163 = vmatprep.subr.bf16.mxu0 %v3228
  %4164 = vmatpush1.bf16.msra.mxu0 %v3227
  %4165 = vmatprep.subr.bf16.mxu0 %v3220
  %4166 = vmatpush1.bf16.msra.mxu0 %v3219
  %4167 = vmatprep.subr.bf16.mxu0 %v3212
  %4168 = vmatpush1.bf16.msra.mxu0 %v3211
  %4169 = vmatprep.subr.bf16.mxu0 %v3204
  %4170 = vmatpush1.bf16.msra.mxu0 %v3203
  %4171 = vmatprep.subr.bf16.mxu0 %v3196
  %4172 = vmatpush1.bf16.msra.mxu0 %v3195
  %4173 = vmatprep.subr.bf16.mxu0 %v3188
  %4174 = vmatpush1.bf16.msra.mxu0 %v3187
  %4175 = vmatprep.subr.bf16.mxu0 %v3308
  %4176 = vmatpush2.bf16.msra.mxu0 %v3307
  %4177 = vmatprep.subr.bf16.mxu0 %v3300
  %4178 = vmatpush2.bf16.msra.mxu0 %v3299
  %4179 = vmatprep.subr.bf16.mxu0 %v3292
  %4180 = vmatpush2.bf16.msra.mxu0 %v3291
  %4181 = vmatprep.subr.bf16.mxu0 %v3284
  %4182 = vmatpush2.bf16.msra.mxu0 %v3283
  %4183 = vmatprep.subr.bf16.mxu0 %v3276
  %4184 = vmatpush2.bf16.msra.mxu0 %v3275
  %4185 = vmatprep.subr.bf16.mxu0 %v3268
  %4186 = vmatpush2.bf16.msra.mxu0 %v3267
  %4187 = vmatprep.subr.bf16.mxu0 %v3260
  %4188 = vmatpush2.bf16.msra.mxu0 %v3259
  %4189 = vmatprep.subr.bf16.mxu0 %v3252
  %4190 = vmatpush2.bf16.msra.mxu0 %v3251
  %4191 = vmatprep.mubr.bf16.mxu0 %v109
  %4192 = vmatmul.mubr.bf16.gmra.mxu0 %v108
  %v4193 = vpop.f32.mrf.mxu0
  %v4194 = vadd.f32 %v4143, %v4193
  %v4195 = vpop.f32.mrf.mxu0
  %v4196 = vadd.f32 %v4145, %v4195
  %v4197 = vpop.f32.mrf.mxu0
  %v4198 = vadd.f32 %v4147, %v4197
  %v4199 = vpop.f32.mrf.mxu0
  %v4200 = vadd.f32 %v4149, %v4199
  %4201 = vmatprep.mubr.bf16.mxu0 %v114
  %4202 = vmatmul.mubr.bf16.gmra.mxu0 %v113
  %v4203 = vpop.f32.mrf.mxu0
  %v4204 = vadd.f32 %v4153, %v4203
  %v4205 = vpop.f32.mrf.mxu0
  %v4206 = vadd.f32 %v4155, %v4205
  %v4207 = vpop.f32.mrf.mxu0
  %v4208 = vpop.f32.mrf.mxu0
  %4209 = vdwg.mxu0
  %4210 = vmatprep.subr.bf16.mxu0 %v2734
  %4211 = vmatpush1.bf16.msra.mxu0 %v2733
  %4212 = vmatprep.subr.bf16.mxu0 %v2726
  %4213 = vmatpush1.bf16.msra.mxu0 %v2725
  %4214 = vmatprep.subr.bf16.mxu0 %v2718
  %4215 = vmatpush1.bf16.msra.mxu0 %v2717
  %4216 = vmatprep.subr.bf16.mxu0 %v2710
  %4217 = vmatpush1.bf16.msra.mxu0 %v2709
  %4218 = vmatprep.subr.bf16.mxu0 %v2702
  %4219 = vmatpush1.bf16.msra.mxu0 %v2701
  %4220 = vmatprep.subr.bf16.mxu0 %v2694
  %4221 = vmatpush1.bf16.msra.mxu0 %v2693
  %4222 = vmatprep.subr.bf16.mxu0 %v2686
  %4223 = vmatpush1.bf16.msra.mxu0 %v2685
  %4224 = vmatprep.subr.bf16.mxu0 %v2678
  %4225 = vmatpush1.bf16.msra.mxu0 %v2677
  %4226 = vmatprep.subr.bf16.mxu0 %v2798
  %4227 = vmatpush2.bf16.msra.mxu0 %v2797
  %4228 = vmatprep.subr.bf16.mxu0 %v2790
  %4229 = vmatpush2.bf16.msra.mxu0 %v2789
  %4230 = vmatprep.subr.bf16.mxu0 %v2782
  %4231 = vmatpush2.bf16.msra.mxu0 %v2781
  %4232 = vmatprep.subr.bf16.mxu0 %v2774
  %4233 = vmatpush2.bf16.msra.mxu0 %v2773
  %4234 = vmatprep.subr.bf16.mxu0 %v2766
  %4235 = vmatpush2.bf16.msra.mxu0 %v2765
  %4236 = vmatprep.subr.bf16.mxu0 %v2758
  %4237 = vmatpush2.bf16.msra.mxu0 %v2757
  %4238 = vmatprep.subr.bf16.mxu0 %v2750
  %4239 = vmatpush2.bf16.msra.mxu0 %v2749
  %4240 = vmatprep.subr.bf16.mxu0 %v2742
  %4241 = vmatpush2.bf16.msra.mxu0 %v2741
  %4242 = vmatprep.mubr.bf16.mxu0 %v66
  %4243 = vmatmul.mubr.bf16.gmra.mxu0 %v65
  %v4244 = vpop.f32.mrf.mxu0
  %v4245 = vadd.f32 0.0, %v4244
  %v4246 = vpop.f32.mrf.mxu0
  %v4247 = vadd.f32 0.0, %v4246
  %v4248 = vpop.f32.mrf.mxu0
  %v4249 = vadd.f32 0.0, %v4248
  %v4250 = vpop.f32.mrf.mxu0
  %v4251 = vadd.f32 0.0, %v4250
  %4252 = vmatprep.mubr.bf16.mxu0 %v71
  %4253 = vmatmul.mubr.bf16.gmra.mxu0 %v70
  %v4254 = vpop.f32.mrf.mxu0
  %v4255 = vadd.f32 0.0, %v4254
  %v4256 = vpop.f32.mrf.mxu0
  %v4257 = vadd.f32 0.0, %v4256
  %v4258 = vpop.f32.mrf.mxu0
  %v4259 = vpop.f32.mrf.mxu0
  %4260 = vdwg.mxu0
  %4261 = vmatprep.subr.bf16.mxu0 %v2862
  %4262 = vmatpush1.bf16.msra.mxu0 %v2861
  %4263 = vmatprep.subr.bf16.mxu0 %v2854
  %4264 = vmatpush1.bf16.msra.mxu0 %v2853
  %4265 = vmatprep.subr.bf16.mxu0 %v2846
  %4266 = vmatpush1.bf16.msra.mxu0 %v2845
  %4267 = vmatprep.subr.bf16.mxu0 %v2838
  %4268 = vmatpush1.bf16.msra.mxu0 %v2837
  %4269 = vmatprep.subr.bf16.mxu0 %v2830
  %4270 = vmatpush1.bf16.msra.mxu0 %v2829
  %4271 = vmatprep.subr.bf16.mxu0 %v2822
  %4272 = vmatpush1.bf16.msra.mxu0 %v2821
  %4273 = vmatprep.subr.bf16.mxu0 %v2814
  %4274 = vmatpush1.bf16.msra.mxu0 %v2813
  %4275 = vmatprep.subr.bf16.mxu0 %v2806
  %4276 = vmatpush1.bf16.msra.mxu0 %v2805
  %4277 = vmatprep.subr.bf16.mxu0 %v2926
  %4278 = vmatpush2.bf16.msra.mxu0 %v2925
  %4279 = vmatprep.subr.bf16.mxu0 %v2918
  %4280 = vmatpush2.bf16.msra.mxu0 %v2917
  %4281 = vmatprep.subr.bf16.mxu0 %v2910
  %4282 = vmatpush2.bf16.msra.mxu0 %v2909
  %4283 = vmatprep.subr.bf16.mxu0 %v2902
  %4284 = vmatpush2.bf16.msra.mxu0 %v2901
  %4285 = vmatprep.subr.bf16.mxu0 %v2894
  %4286 = vmatpush2.bf16.msra.mxu0 %v2893
  %4287 = vmatprep.subr.bf16.mxu0 %v2886
  %4288 = vmatpush2.bf16.msra.mxu0 %v2885
  %4289 = vmatprep.subr.bf16.mxu0 %v2878
  %4290 = vmatpush2.bf16.msra.mxu0 %v2877
  %4291 = vmatprep.subr.bf16.mxu0 %v2870
  %4292 = vmatpush2.bf16.msra.mxu0 %v2869
  %4293 = vmatprep.mubr.bf16.mxu0 %v68
  %4294 = vmatmul.mubr.bf16.gmra.mxu0 %v67
  %v4295 = vpop.f32.mrf.mxu0
  %v4296 = vadd.f32 %v4245, %v4295
  %v4297 = vpop.f32.mrf.mxu0
  %v4298 = vadd.f32 %v4247, %v4297
  %v4299 = vpop.f32.mrf.mxu0
  %v4300 = vadd.f32 %v4249, %v4299
  %v4301 = vpop.f32.mrf.mxu0
  %v4302 = vadd.f32 %v4251, %v4301
  %4303 = vmatprep.mubr.bf16.mxu0 %v73
  %4304 = vmatmul.mubr.bf16.gmra.mxu0 %v72
  %v4305 = vpop.f32.mrf.mxu0
  %v4306 = vadd.f32 %v4255, %v4305
  %v4307 = vpop.f32.mrf.mxu0
  %v4308 = vadd.f32 %v4257, %v4307
  %v4309 = vpop.f32.mrf.mxu0
  %v4310 = vpop.f32.mrf.mxu0
  %4311 = vdwg.mxu0
  %4312 = vmatprep.subr.bf16.mxu0 %v2990
  %4313 = vmatpush1.bf16.msra.mxu0 %v2989
  %4314 = vmatprep.subr.bf16.mxu0 %v2982
  %4315 = vmatpush1.bf16.msra.mxu0 %v2981
  %4316 = vmatprep.subr.bf16.mxu0 %v2974
  %4317 = vmatpush1.bf16.msra.mxu0 %v2973
  %4318 = vmatprep.subr.bf16.mxu0 %v2966
  %4319 = vmatpush1.bf16.msra.mxu0 %v2965
  %4320 = vmatprep.subr.bf16.mxu0 %v2958
  %4321 = vmatpush1.bf16.msra.mxu0 %v2957
  %4322 = vmatprep.subr.bf16.mxu0 %v2950
  %4323 = vmatpush1.bf16.msra.mxu0 %v2949
  %4324 = vmatprep.subr.bf16.mxu0 %v2942
  %4325 = vmatpush1.bf16.msra.mxu0 %v2941
  %4326 = vmatprep.subr.bf16.mxu0 %v2934
  %4327 = vmatpush1.bf16.msra.mxu0 %v2933
  %4328 = vmatprep.subr.bf16.mxu0 %v3054
  %4329 = vmatpush2.bf16.msra.mxu0 %v3053
  %4330 = vmatprep.subr.bf16.mxu0 %v3046
  %4331 = vmatpush2.bf16.msra.mxu0 %v3045
  %4332 = vmatprep.subr.bf16.mxu0 %v3038
  %4333 = vmatpush2.bf16.msra.mxu0 %v3037
  %4334 = vmatprep.subr.bf16.mxu0 %v3030
  %4335 = vmatpush2.bf16.msra.mxu0 %v3029
  %4336 = vmatprep.subr.bf16.mxu0 %v3022
  %4337 = vmatpush2.bf16.msra.mxu0 %v3021
  %4338 = vmatprep.subr.bf16.mxu0 %v3014
  %4339 = vmatpush2.bf16.msra.mxu0 %v3013
  %4340 = vmatprep.subr.bf16.mxu0 %v3006
  %4341 = vmatpush2.bf16.msra.mxu0 %v3005
  %4342 = vmatprep.subr.bf16.mxu0 %v2998
  %4343 = vmatpush2.bf16.msra.mxu0 %v2997
  %4344 = vmatprep.mubr.bf16.mxu0 %v105
  %4345 = vmatmul.mubr.bf16.gmra.mxu0 %v69
  %v4346 = vpop.f32.mrf.mxu0
  %v4347 = vadd.f32 %v4296, %v4346
  %v4348 = vpop.f32.mrf.mxu0
  %v4349 = vadd.f32 %v4298, %v4348
  %v4350 = vpop.f32.mrf.mxu0
  %v4351 = vadd.f32 %v4300, %v4350
  %v4352 = vpop.f32.mrf.mxu0
  %v4353 = vadd.f32 %v4302, %v4352
  %4354 = vmatprep.mubr.bf16.mxu0 %v110
  %4355 = vmatmul.mubr.bf16.gmra.mxu0 %v74
  %v4356 = vpop.f32.mrf.mxu0
  %v4357 = vadd.f32 %v4306, %v4356
  %v4358 = vpop.f32.mrf.mxu0
  %v4359 = vadd.f32 %v4308, %v4358
  %v4360 = vpop.f32.mrf.mxu0
  %v4361 = vpop.f32.mrf.mxu0
  %4362 = vdwg.mxu0
  %4363 = vmatprep.subr.bf16.mxu0 %v3118
  %4364 = vmatpush1.bf16.msra.mxu0 %v3117
  %4365 = vmatprep.subr.bf16.mxu0 %v3110
  %4366 = vmatpush1.bf16.msra.mxu0 %v3109
  %4367 = vmatprep.subr.bf16.mxu0 %v3102
  %4368 = vmatpush1.bf16.msra.mxu0 %v3101
  %4369 = vmatprep.subr.bf16.mxu0 %v3094
  %4370 = vmatpush1.bf16.msra.mxu0 %v3093
  %4371 = vmatprep.subr.bf16.mxu0 %v3086
  %4372 = vmatpush1.bf16.msra.mxu0 %v3085
  %4373 = vmatprep.subr.bf16.mxu0 %v3078
  %4374 = vmatpush1.bf16.msra.mxu0 %v3077
  %4375 = vmatprep.subr.bf16.mxu0 %v3070
  %4376 = vmatpush1.bf16.msra.mxu0 %v3069
  %4377 = vmatprep.subr.bf16.mxu0 %v3062
  %4378 = vmatpush1.bf16.msra.mxu0 %v3061
  %4379 = vmatprep.subr.bf16.mxu0 %v3182
  %4380 = vmatpush2.bf16.msra.mxu0 %v3181
  %4381 = vmatprep.subr.bf16.mxu0 %v3174
  %4382 = vmatpush2.bf16.msra.mxu0 %v3173
  %4383 = vmatprep.subr.bf16.mxu0 %v3166
  %4384 = vmatpush2.bf16.msra.mxu0 %v3165
  %4385 = vmatprep.subr.bf16.mxu0 %v3158
  %4386 = vmatpush2.bf16.msra.mxu0 %v3157
  %4387 = vmatprep.subr.bf16.mxu0 %v3150
  %4388 = vmatpush2.bf16.msra.mxu0 %v3149
  %4389 = vmatprep.subr.bf16.mxu0 %v3142
  %4390 = vmatpush2.bf16.msra.mxu0 %v3141
  %4391 = vmatprep.subr.bf16.mxu0 %v3134
  %4392 = vmatpush2.bf16.msra.mxu0 %v3133
  %4393 = vmatprep.subr.bf16.mxu0 %v3126
  %4394 = vmatpush2.bf16.msra.mxu0 %v3125
  %4395 = vmatprep.mubr.bf16.mxu0 %v107
  %4396 = vmatmul.mubr.bf16.gmra.mxu0 %v106
  %v4397 = vpop.f32.mrf.mxu0
  %v4398 = vadd.f32 %v4347, %v4397
  %v4399 = vpop.f32.mrf.mxu0
  %v4400 = vadd.f32 %v4349, %v4399
  %v4401 = vpop.f32.mrf.mxu0
  %v4402 = vadd.f32 %v4351, %v4401
  %v4403 = vpop.f32.mrf.mxu0
  %v4404 = vadd.f32 %v4353, %v4403
  %4405 = vmatprep.mubr.bf16.mxu0 %v112
  %4406 = vmatmul.mubr.bf16.gmra.mxu0 %v111
  %v4407 = vpop.f32.mrf.mxu0
  %v4408 = vadd.f32 %v4357, %v4407
  %v4409 = vpop.f32.mrf.mxu0
  %v4410 = vadd.f32 %v4359, %v4409
  %v4411 = vpop.f32.mrf.mxu0
  %v4412 = vpop.f32.mrf.mxu0
  %4413 = vdwg.mxu0
  %4414 = vmatprep.subr.bf16.mxu0 %v3246
  %4415 = vmatpush1.bf16.msra.mxu0 %v3245
  %4416 = vmatprep.subr.bf16.mxu0 %v3238
  %4417 = vmatpush1.bf16.msra.mxu0 %v3237
  %4418 = vmatprep.subr.bf16.mxu0 %v3230
  %4419 = vmatpush1.bf16.msra.mxu0 %v3229
  %4420 = vmatprep.subr.bf16.mxu0 %v3222
  %4421 = vmatpush1.bf16.msra.mxu0 %v3221
  %4422 = vmatprep.subr.bf16.mxu0 %v3214
  %4423 = vmatpush1.bf16.msra.mxu0 %v3213
  %4424 = vmatprep.subr.bf16.mxu0 %v3206
  %4425 = vmatpush1.bf16.msra.mxu0 %v3205
  %4426 = vmatprep.subr.bf16.mxu0 %v3198
  %4427 = vmatpush1.bf16.msra.mxu0 %v3197
  %4428 = vmatprep.subr.bf16.mxu0 %v3190
  %4429 = vmatpush1.bf16.msra.mxu0 %v3189
  %4430 = vmatprep.subr.bf16.mxu0 %v3310
  %4431 = vmatpush2.bf16.msra.mxu0 %v3309
  %4432 = vmatprep.subr.bf16.mxu0 %v3302
  %4433 = vmatpush2.bf16.msra.mxu0 %v3301
  %4434 = vmatprep.subr.bf16.mxu0 %v3294
  %4435 = vmatpush2.bf16.msra.mxu0 %v3293
  %4436 = vmatprep.subr.bf16.mxu0 %v3286
  %4437 = vmatpush2.bf16.msra.mxu0 %v3285
  %4438 = vmatprep.subr.bf16.mxu0 %v3278
  %4439 = vmatpush2.bf16.msra.mxu0 %v3277
  %4440 = vmatprep.subr.bf16.mxu0 %v3270
  %4441 = vmatpush2.bf16.msra.mxu0 %v3269
  %4442 = vmatprep.subr.bf16.mxu0 %v3262
  %4443 = vmatpush2.bf16.msra.mxu0 %v3261
  %4444 = vmatprep.subr.bf16.mxu0 %v3254
  %4445 = vmatpush2.bf16.msra.mxu0 %v3253
  %4446 = vmatprep.mubr.bf16.mxu0 %v109
  %4447 = vmatmul.mubr.bf16.gmra.mxu0 %v108
  %v4448 = vpop.f32.mrf.mxu0
  %v4449 = vadd.f32 %v4398, %v4448
  %v4450 = vpop.f32.mrf.mxu0
  %v4451 = vadd.f32 %v4400, %v4450
  %v4452 = vpop.f32.mrf.mxu0
  %v4453 = vadd.f32 %v4402, %v4452
  %v4454 = vpop.f32.mrf.mxu0
  %v4455 = vadd.f32 %v4404, %v4454
  %4456 = vmatprep.mubr.bf16.mxu0 %v114
  %4457 = vmatmul.mubr.bf16.gmra.mxu0 %v113
  %v4458 = vpop.f32.mrf.mxu0
  %v4459 = vadd.f32 %v4408, %v4458
  %v4460 = vpop.f32.mrf.mxu0
  %v4461 = vadd.f32 %v4410, %v4460
  %v4462 = vpop.f32.mrf.mxu0
  %v4463 = vpop.f32.mrf.mxu0
  %4464 = vdwg.mxu0
  %4465 = vmatprep.subr.bf16.mxu0 %v2736
  %4466 = vmatpush1.bf16.msra.mxu0 %v2735
  %4467 = vmatprep.subr.bf16.mxu0 %v2728
  %4468 = vmatpush1.bf16.msra.mxu0 %v2727
  %4469 = vmatprep.subr.bf16.mxu0 %v2720
  %4470 = vmatpush1.bf16.msra.mxu0 %v2719
  %4471 = vmatprep.subr.bf16.mxu0 %v2712
  %4472 = vmatpush1.bf16.msra.mxu0 %v2711
  %4473 = vmatprep.subr.bf16.mxu0 %v2704
  %4474 = vmatpush1.bf16.msra.mxu0 %v2703
  %4475 = vmatprep.subr.bf16.mxu0 %v2696
  %4476 = vmatpush1.bf16.msra.mxu0 %v2695
  %4477 = vmatprep.subr.bf16.mxu0 %v2688
  %4478 = vmatpush1.bf16.msra.mxu0 %v2687
  %4479 = vmatprep.subr.bf16.mxu0 %v2680
  %4480 = vmatpush1.bf16.msra.mxu0 %v2679
  %4481 = vmatprep.subr.bf16.mxu0 %v2800
  %4482 = vmatpush2.bf16.msra.mxu0 %v2799
  %4483 = vmatprep.subr.bf16.mxu0 %v2792
  %4484 = vmatpush2.bf16.msra.mxu0 %v2791
  %4485 = vmatprep.subr.bf16.mxu0 %v2784
  %4486 = vmatpush2.bf16.msra.mxu0 %v2783
  %4487 = vmatprep.subr.bf16.mxu0 %v2776
  %4488 = vmatpush2.bf16.msra.mxu0 %v2775
  %4489 = vmatprep.subr.bf16.mxu0 %v2768
  %4490 = vmatpush2.bf16.msra.mxu0 %v2767
  %4491 = vmatprep.subr.bf16.mxu0 %v2760
  %4492 = vmatpush2.bf16.msra.mxu0 %v2759
  %4493 = vmatprep.subr.bf16.mxu0 %v2752
  %4494 = vmatpush2.bf16.msra.mxu0 %v2751
  %4495 = vmatprep.subr.bf16.mxu0 %v2744
  %4496 = vmatpush2.bf16.msra.mxu0 %v2743
  %4497 = vmatprep.mubr.bf16.mxu0 %v66
  %4498 = vmatmul.mubr.bf16.gmra.mxu0 %v65
  %v4499 = vpop.f32.mrf.mxu0
  %v4500 = vadd.f32 0.0, %v4499
  %v4501 = vpop.f32.mrf.mxu0
  %v4502 = vadd.f32 0.0, %v4501
  %v4503 = vpop.f32.mrf.mxu0
  %v4504 = vadd.f32 0.0, %v4503
  %v4505 = vpop.f32.mrf.mxu0
  %v4506 = vadd.f32 0.0, %v4505
  %4507 = vmatprep.mubr.bf16.mxu0 %v71
  %4508 = vmatmul.mubr.bf16.gmra.mxu0 %v70
  %v4509 = vpop.f32.mrf.mxu0
  %v4510 = vadd.f32 0.0, %v4509
  %v4511 = vpop.f32.mrf.mxu0
  %v4512 = vadd.f32 0.0, %v4511
  %v4513 = vpop.f32.mrf.mxu0
  %v4514 = vpop.f32.mrf.mxu0
  %4515 = vdwg.mxu0
  %4516 = vmatprep.subr.bf16.mxu0 %v2864
  %4517 = vmatpush1.bf16.msra.mxu0 %v2863
  %4518 = vmatprep.subr.bf16.mxu0 %v2856
  %4519 = vmatpush1.bf16.msra.mxu0 %v2855
  %4520 = vmatprep.subr.bf16.mxu0 %v2848
  %4521 = vmatpush1.bf16.msra.mxu0 %v2847
  %4522 = vmatprep.subr.bf16.mxu0 %v2840
  %4523 = vmatpush1.bf16.msra.mxu0 %v2839
  %4524 = vmatprep.subr.bf16.mxu0 %v2832
  %4525 = vmatpush1.bf16.msra.mxu0 %v2831
  %4526 = vmatprep.subr.bf16.mxu0 %v2824
  %4527 = vmatpush1.bf16.msra.mxu0 %v2823
  %4528 = vmatprep.subr.bf16.mxu0 %v2816
  %4529 = vmatpush1.bf16.msra.mxu0 %v2815
  %4530 = vmatprep.subr.bf16.mxu0 %v2808
  %4531 = vmatpush1.bf16.msra.mxu0 %v2807
  %4532 = vmatprep.subr.bf16.mxu0 %v2928
  %4533 = vmatpush2.bf16.msra.mxu0 %v2927
  %4534 = vmatprep.subr.bf16.mxu0 %v2920
  %4535 = vmatpush2.bf16.msra.mxu0 %v2919
  %4536 = vmatprep.subr.bf16.mxu0 %v2912
  %4537 = vmatpush2.bf16.msra.mxu0 %v2911
  %4538 = vmatprep.subr.bf16.mxu0 %v2904
  %4539 = vmatpush2.bf16.msra.mxu0 %v2903
  %4540 = vmatprep.subr.bf16.mxu0 %v2896
  %4541 = vmatpush2.bf16.msra.mxu0 %v2895
  %4542 = vmatprep.subr.bf16.mxu0 %v2888
  %4543 = vmatpush2.bf16.msra.mxu0 %v2887
  %4544 = vmatprep.subr.bf16.mxu0 %v2880
  %4545 = vmatpush2.bf16.msra.mxu0 %v2879
  %4546 = vmatprep.subr.bf16.mxu0 %v2872
  %4547 = vmatpush2.bf16.msra.mxu0 %v2871
  %4548 = vmatprep.mubr.bf16.mxu0 %v68
  %4549 = vmatmul.mubr.bf16.gmra.mxu0 %v67
  %v4550 = vpop.f32.mrf.mxu0
  %v4551 = vadd.f32 %v4500, %v4550
  %v4552 = vpop.f32.mrf.mxu0
  %v4553 = vadd.f32 %v4502, %v4552
  %v4554 = vpop.f32.mrf.mxu0
  %v4555 = vadd.f32 %v4504, %v4554
  %v4556 = vpop.f32.mrf.mxu0
  %v4557 = vadd.f32 %v4506, %v4556
  %4558 = vmatprep.mubr.bf16.mxu0 %v73
  %4559 = vmatmul.mubr.bf16.gmra.mxu0 %v72
  %v4560 = vpop.f32.mrf.mxu0
  %v4561 = vadd.f32 %v4510, %v4560
  %v4562 = vpop.f32.mrf.mxu0
  %v4563 = vadd.f32 %v4512, %v4562
  %v4564 = vpop.f32.mrf.mxu0
  %v4565 = vpop.f32.mrf.mxu0
  %4566 = vdwg.mxu0
  %4567 = vmatprep.subr.bf16.mxu0 %v2992
  %4568 = vmatpush1.bf16.msra.mxu0 %v2991
  %4569 = vmatprep.subr.bf16.mxu0 %v2984
  %4570 = vmatpush1.bf16.msra.mxu0 %v2983
  %4571 = vmatprep.subr.bf16.mxu0 %v2976
  %4572 = vmatpush1.bf16.msra.mxu0 %v2975
  %4573 = vmatprep.subr.bf16.mxu0 %v2968
  %4574 = vmatpush1.bf16.msra.mxu0 %v2967
  %4575 = vmatprep.subr.bf16.mxu0 %v2960
  %4576 = vmatpush1.bf16.msra.mxu0 %v2959
  %4577 = vmatprep.subr.bf16.mxu0 %v2952
  %4578 = vmatpush1.bf16.msra.mxu0 %v2951
  %4579 = vmatprep.subr.bf16.mxu0 %v2944
  %4580 = vmatpush1.bf16.msra.mxu0 %v2943
  %4581 = vmatprep.subr.bf16.mxu0 %v2936
  %4582 = vmatpush1.bf16.msra.mxu0 %v2935
  %4583 = vmatprep.subr.bf16.mxu0 %v3056
  %4584 = vmatpush2.bf16.msra.mxu0 %v3055
  %4585 = vmatprep.subr.bf16.mxu0 %v3048
  %4586 = vmatpush2.bf16.msra.mxu0 %v3047
  %4587 = vmatprep.subr.bf16.mxu0 %v3040
  %4588 = vmatpush2.bf16.msra.mxu0 %v3039
  %4589 = vmatprep.subr.bf16.mxu0 %v3032
  %4590 = vmatpush2.bf16.msra.mxu0 %v3031
  %4591 = vmatprep.subr.bf16.mxu0 %v3024
  %4592 = vmatpush2.bf16.msra.mxu0 %v3023
  %4593 = vmatprep.subr.bf16.mxu0 %v3016
  %4594 = vmatpush2.bf16.msra.mxu0 %v3015
  %4595 = vmatprep.subr.bf16.mxu0 %v3008
  %4596 = vmatpush2.bf16.msra.mxu0 %v3007
  %4597 = vmatprep.subr.bf16.mxu0 %v3000
  %4598 = vmatpush2.bf16.msra.mxu0 %v2999
  %4599 = vmatprep.mubr.bf16.mxu0 %v105
  %4600 = vmatmul.mubr.bf16.gmra.mxu0 %v69
  %v4601 = vpop.f32.mrf.mxu0
  %v4602 = vadd.f32 %v4551, %v4601
  %v4603 = vpop.f32.mrf.mxu0
  %v4604 = vadd.f32 %v4553, %v4603
  %v4605 = vpop.f32.mrf.mxu0
  %v4606 = vadd.f32 %v4555, %v4605
  %v4607 = vpop.f32.mrf.mxu0
  %v4608 = vadd.f32 %v4557, %v4607
  %4609 = vmatprep.mubr.bf16.mxu0 %v110
  %4610 = vmatmul.mubr.bf16.gmra.mxu0 %v74
  %v4611 = vpop.f32.mrf.mxu0
  %v4612 = vadd.f32 %v4561, %v4611
  %v4613 = vpop.f32.mrf.mxu0
  %v4614 = vadd.f32 %v4563, %v4613
  %v4615 = vpop.f32.mrf.mxu0
  %v4616 = vpop.f32.mrf.mxu0
  %4617 = vdwg.mxu0
  %4618 = vmatprep.subr.bf16.mxu0 %v3120
  %4619 = vmatpush1.bf16.msra.mxu0 %v3119
  %4620 = vmatprep.subr.bf16.mxu0 %v3112
  %4621 = vmatpush1.bf16.msra.mxu0 %v3111
  %4622 = vmatprep.subr.bf16.mxu0 %v3104
  %4623 = vmatpush1.bf16.msra.mxu0 %v3103
  %4624 = vmatprep.subr.bf16.mxu0 %v3096
  %4625 = vmatpush1.bf16.msra.mxu0 %v3095
  %4626 = vmatprep.subr.bf16.mxu0 %v3088
  %4627 = vmatpush1.bf16.msra.mxu0 %v3087
  %4628 = vmatprep.subr.bf16.mxu0 %v3080
  %4629 = vmatpush1.bf16.msra.mxu0 %v3079
  %4630 = vmatprep.subr.bf16.mxu0 %v3072
  %4631 = vmatpush1.bf16.msra.mxu0 %v3071
  %4632 = vmatprep.subr.bf16.mxu0 %v3064
  %4633 = vmatpush1.bf16.msra.mxu0 %v3063
  %4634 = vmatprep.subr.bf16.mxu0 %v3184
  %4635 = vmatpush2.bf16.msra.mxu0 %v3183
  %4636 = vmatprep.subr.bf16.mxu0 %v3176
  %4637 = vmatpush2.bf16.msra.mxu0 %v3175
  %4638 = vmatprep.subr.bf16.mxu0 %v3168
  %4639 = vmatpush2.bf16.msra.mxu0 %v3167
  %4640 = vmatprep.subr.bf16.mxu0 %v3160
  %4641 = vmatpush2.bf16.msra.mxu0 %v3159
  %4642 = vmatprep.subr.bf16.mxu0 %v3152
  %4643 = vmatpush2.bf16.msra.mxu0 %v3151
  %4644 = vmatprep.subr.bf16.mxu0 %v3144
  %4645 = vmatpush2.bf16.msra.mxu0 %v3143
  %4646 = vmatprep.subr.bf16.mxu0 %v3136
  %4647 = vmatpush2.bf16.msra.mxu0 %v3135
  %4648 = vmatprep.subr.bf16.mxu0 %v3128
  %4649 = vmatpush2.bf16.msra.mxu0 %v3127
  %4650 = vmatprep.mubr.bf16.mxu0 %v107
  %4651 = vmatmul.mubr.bf16.gmra.mxu0 %v106
  %v4652 = vpop.f32.mrf.mxu0
  %v4653 = vadd.f32 %v4602, %v4652
  %v4654 = vpop.f32.mrf.mxu0
  %v4655 = vadd.f32 %v4604, %v4654
  %v4656 = vpop.f32.mrf.mxu0
  %v4657 = vadd.f32 %v4606, %v4656
  %v4658 = vpop.f32.mrf.mxu0
  %v4659 = vadd.f32 %v4608, %v4658
  %4660 = vmatprep.mubr.bf16.mxu0 %v112
  %4661 = vmatmul.mubr.bf16.gmra.mxu0 %v111
  %v4662 = vpop.f32.mrf.mxu0
  %v4663 = vadd.f32 %v4612, %v4662
  %v4664 = vpop.f32.mrf.mxu0
  %v4665 = vadd.f32 %v4614, %v4664
  %v4666 = vpop.f32.mrf.mxu0
  %v4667 = vpop.f32.mrf.mxu0
  %4668 = vdwg.mxu0
  %4669 = vmatprep.subr.bf16.mxu0 %v3248
  %4670 = vmatpush1.bf16.msra.mxu0 %v3247
  %4671 = vmatprep.subr.bf16.mxu0 %v3240
  %4672 = vmatpush1.bf16.msra.mxu0 %v3239
  %4673 = vmatprep.subr.bf16.mxu0 %v3232
  %4674 = vmatpush1.bf16.msra.mxu0 %v3231
  %4675 = vmatprep.subr.bf16.mxu0 %v3224
  %4676 = vmatpush1.bf16.msra.mxu0 %v3223
  %4677 = vmatprep.subr.bf16.mxu0 %v3216
  %4678 = vmatpush1.bf16.msra.mxu0 %v3215
  %4679 = vmatprep.subr.bf16.mxu0 %v3208
  %4680 = vmatpush1.bf16.msra.mxu0 %v3207
  %4681 = vmatprep.subr.bf16.mxu0 %v3200
  %4682 = vmatpush1.bf16.msra.mxu0 %v3199
  %4683 = vmatprep.subr.bf16.mxu0 %v3192
  %4684 = vmatpush1.bf16.msra.mxu0 %v3191
  %4685 = vmatprep.subr.bf16.mxu0 %v3312
  %4686 = vmatpush2.bf16.msra.mxu0 %v3311
  %4687 = vmatprep.subr.bf16.mxu0 %v3304
  %4688 = vmatpush2.bf16.msra.mxu0 %v3303
  %4689 = vmatprep.subr.bf16.mxu0 %v3296
  %4690 = vmatpush2.bf16.msra.mxu0 %v3295
  %4691 = vmatprep.subr.bf16.mxu0 %v3288
  %4692 = vmatpush2.bf16.msra.mxu0 %v3287
  %4693 = vmatprep.subr.bf16.mxu0 %v3280
  %4694 = vmatpush2.bf16.msra.mxu0 %v3279
  %4695 = vmatprep.subr.bf16.mxu0 %v3272
  %4696 = vmatpush2.bf16.msra.mxu0 %v3271
  %4697 = vmatprep.subr.bf16.mxu0 %v3264
  %4698 = vmatpush2.bf16.msra.mxu0 %v3263
  %4699 = vmatprep.subr.bf16.mxu0 %v3256
  %4700 = vmatpush2.bf16.msra.mxu0 %v3255
  %4701 = vmatprep.mubr.bf16.mxu0 %v109
  %4702 = vmatmul.mubr.bf16.gmra.mxu0 %v108
  %v4703 = vpop.f32.mrf.mxu0
  %v4704 = vadd.f32 %v4653, %v4703
  %v4705 = vpop.f32.mrf.mxu0
  %v4706 = vadd.f32 %v4655, %v4705
  %v4707 = vpop.f32.mrf.mxu0
  %v4708 = vadd.f32 %v4657, %v4707
  %v4709 = vpop.f32.mrf.mxu0
  %v4710 = vadd.f32 %v4659, %v4709
  %4711 = vmatprep.mubr.bf16.mxu0 %v114
  %4712 = vmatmul.mubr.bf16.gmra.mxu0 %v113
  %v4713 = vpop.f32.mrf.mxu0
  %v4714 = vadd.f32 %v4663, %v4713
  %v4715 = vpop.f32.mrf.mxu0
  %v4716 = vadd.f32 %v4665, %v4715
  %v4717 = vpop.f32.mrf.mxu0
  %v4718 = vpop.f32.mrf.mxu0
  %4719 = vdwg.mxu0
  %4720 = vmatprep.subr.bf16.mxu0 %v2738
  %4721 = vmatpush1.bf16.msra.mxu0 %v2737
  %4722 = vmatprep.subr.bf16.mxu0 %v2730
  %4723 = vmatpush1.bf16.msra.mxu0 %v2729
  %4724 = vmatprep.subr.bf16.mxu0 %v2722
  %4725 = vmatpush1.bf16.msra.mxu0 %v2721
  %4726 = vmatprep.subr.bf16.mxu0 %v2714
  %4727 = vmatpush1.bf16.msra.mxu0 %v2713
  %4728 = vmatprep.subr.bf16.mxu0 %v2706
  %4729 = vmatpush1.bf16.msra.mxu0 %v2705
  %4730 = vmatprep.subr.bf16.mxu0 %v2698
  %4731 = vmatpush1.bf16.msra.mxu0 %v2697
  %4732 = vmatprep.subr.bf16.mxu0 %v2690
  %4733 = vmatpush1.bf16.msra.mxu0 %v2689
  %4734 = vmatprep.subr.bf16.mxu0 %v2682
  %4735 = vmatpush1.bf16.msra.mxu0 %v2681
  %4736 = vmatprep.subr.bf16.mxu0 %v2802
  %4737 = vmatpush2.bf16.msra.mxu0 %v2801
  %4738 = vmatprep.subr.bf16.mxu0 %v2794
  %4739 = vmatpush2.bf16.msra.mxu0 %v2793
  %4740 = vmatprep.subr.bf16.mxu0 %v2786
  %4741 = vmatpush2.bf16.msra.mxu0 %v2785
  %4742 = vmatprep.subr.bf16.mxu0 %v2778
  %4743 = vmatpush2.bf16.msra.mxu0 %v2777
  %4744 = vmatprep.subr.bf16.mxu0 %v2770
  %4745 = vmatpush2.bf16.msra.mxu0 %v2769
  %4746 = vmatprep.subr.bf16.mxu0 %v2762
  %4747 = vmatpush2.bf16.msra.mxu0 %v2761
  %4748 = vmatprep.subr.bf16.mxu0 %v2754
  %4749 = vmatpush2.bf16.msra.mxu0 %v2753
  %4750 = vmatprep.subr.bf16.mxu0 %v2746
  %4751 = vmatpush2.bf16.msra.mxu0 %v2745
  %4752 = vmatprep.mubr.bf16.mxu0 %v66
  %4753 = vmatmul.mubr.bf16.gmra.mxu0 %v65
  %v4754 = vpop.f32.mrf.mxu0
  %v4755 = vadd.f32 0.0, %v4754
  %v4756 = vpop.f32.mrf.mxu0
  %v4757 = vadd.f32 0.0, %v4756
  %v4758 = vpop.f32.mrf.mxu0
  %v4759 = vadd.f32 0.0, %v4758
  %v4760 = vpop.f32.mrf.mxu0
  %v4761 = vadd.f32 0.0, %v4760
  %4762 = vmatprep.mubr.bf16.mxu0 %v71
  %4763 = vmatmul.mubr.bf16.gmra.mxu0 %v70
  %v4764 = vpop.f32.mrf.mxu0
  %v4765 = vadd.f32 0.0, %v4764
  %v4766 = vpop.f32.mrf.mxu0
  %v4767 = vadd.f32 0.0, %v4766
  %v4768 = vpop.f32.mrf.mxu0
  %v4769 = vpop.f32.mrf.mxu0
  %4770 = vdwg.mxu0
  %4771 = vmatprep.subr.bf16.mxu0 %v2866
  %4772 = vmatpush1.bf16.msra.mxu0 %v2865
  %4773 = vmatprep.subr.bf16.mxu0 %v2858
  %4774 = vmatpush1.bf16.msra.mxu0 %v2857
  %4775 = vmatprep.subr.bf16.mxu0 %v2850
  %4776 = vmatpush1.bf16.msra.mxu0 %v2849
  %4777 = vmatprep.subr.bf16.mxu0 %v2842
  %4778 = vmatpush1.bf16.msra.mxu0 %v2841
  %4779 = vmatprep.subr.bf16.mxu0 %v2834
  %4780 = vmatpush1.bf16.msra.mxu0 %v2833
  %4781 = vmatprep.subr.bf16.mxu0 %v2826
  %4782 = vmatpush1.bf16.msra.mxu0 %v2825
  %4783 = vmatprep.subr.bf16.mxu0 %v2818
  %4784 = vmatpush1.bf16.msra.mxu0 %v2817
  %4785 = vmatprep.subr.bf16.mxu0 %v2810
  %4786 = vmatpush1.bf16.msra.mxu0 %v2809
  %4787 = vmatprep.subr.bf16.mxu0 %v2930
  %4788 = vmatpush2.bf16.msra.mxu0 %v2929
  %4789 = vmatprep.subr.bf16.mxu0 %v2922
  %4790 = vmatpush2.bf16.msra.mxu0 %v2921
  %4791 = vmatprep.subr.bf16.mxu0 %v2914
  %4792 = vmatpush2.bf16.msra.mxu0 %v2913
  %4793 = vmatprep.subr.bf16.mxu0 %v2906
  %4794 = vmatpush2.bf16.msra.mxu0 %v2905
  %4795 = vmatprep.subr.bf16.mxu0 %v2898
  %4796 = vmatpush2.bf16.msra.mxu0 %v2897
  %4797 = vmatprep.subr.bf16.mxu0 %v2890
  %4798 = vmatpush2.bf16.msra.mxu0 %v2889
  %4799 = vmatprep.subr.bf16.mxu0 %v2882
  %4800 = vmatpush2.bf16.msra.mxu0 %v2881
  %4801 = vmatprep.subr.bf16.mxu0 %v2874
  %4802 = vmatpush2.bf16.msra.mxu0 %v2873
  %4803 = vmatprep.mubr.bf16.mxu0 %v68
  %4804 = vmatmul.mubr.bf16.gmra.mxu0 %v67
  %v4805 = vpop.f32.mrf.mxu0
  %v4806 = vadd.f32 %v4755, %v4805
  %v4807 = vpop.f32.mrf.mxu0
  %v4808 = vadd.f32 %v4757, %v4807
  %v4809 = vpop.f32.mrf.mxu0
  %v4810 = vadd.f32 %v4759, %v4809
  %v4811 = vpop.f32.mrf.mxu0
  %v4812 = vadd.f32 %v4761, %v4811
  %4813 = vmatprep.mubr.bf16.mxu0 %v73
  %4814 = vmatmul.mubr.bf16.gmra.mxu0 %v72
  %v4815 = vpop.f32.mrf.mxu0
  %v4816 = vadd.f32 %v4765, %v4815
  %v4817 = vpop.f32.mrf.mxu0
  %v4818 = vadd.f32 %v4767, %v4817
  %v4819 = vpop.f32.mrf.mxu0
  %v4820 = vpop.f32.mrf.mxu0
  %4821 = vdwg.mxu0
  %4822 = vmatprep.subr.bf16.mxu0 %v2994
  %4823 = vmatpush1.bf16.msra.mxu0 %v2993
  %4824 = vmatprep.subr.bf16.mxu0 %v2986
  %4825 = vmatpush1.bf16.msra.mxu0 %v2985
  %4826 = vmatprep.subr.bf16.mxu0 %v2978
  %4827 = vmatpush1.bf16.msra.mxu0 %v2977
  %4828 = vmatprep.subr.bf16.mxu0 %v2970
  %4829 = vmatpush1.bf16.msra.mxu0 %v2969
  %4830 = vmatprep.subr.bf16.mxu0 %v2962
  %4831 = vmatpush1.bf16.msra.mxu0 %v2961
  %4832 = vmatprep.subr.bf16.mxu0 %v2954
  %4833 = vmatpush1.bf16.msra.mxu0 %v2953
  %4834 = vmatprep.subr.bf16.mxu0 %v2946
  %4835 = vmatpush1.bf16.msra.mxu0 %v2945
  %4836 = vmatprep.subr.bf16.mxu0 %v2938
  %4837 = vmatpush1.bf16.msra.mxu0 %v2937
  %4838 = vmatprep.subr.bf16.mxu0 %v3058
  %4839 = vmatpush2.bf16.msra.mxu0 %v3057
  %4840 = vmatprep.subr.bf16.mxu0 %v3050
  %4841 = vmatpush2.bf16.msra.mxu0 %v3049
  %4842 = vmatprep.subr.bf16.mxu0 %v3042
  %4843 = vmatpush2.bf16.msra.mxu0 %v3041
  %4844 = vmatprep.subr.bf16.mxu0 %v3034
  %4845 = vmatpush2.bf16.msra.mxu0 %v3033
  %4846 = vmatprep.subr.bf16.mxu0 %v3026
  %4847 = vmatpush2.bf16.msra.mxu0 %v3025
  %4848 = vmatprep.subr.bf16.mxu0 %v3018
  %4849 = vmatpush2.bf16.msra.mxu0 %v3017
  %4850 = vmatprep.subr.bf16.mxu0 %v3010
  %4851 = vmatpush2.bf16.msra.mxu0 %v3009
  %4852 = vmatprep.subr.bf16.mxu0 %v3002
  %4853 = vmatpush2.bf16.msra.mxu0 %v3001
  %4854 = vmatprep.mubr.bf16.mxu0 %v105
  %4855 = vmatmul.mubr.bf16.gmra.mxu0 %v69
  %v4856 = vpop.f32.mrf.mxu0
  %v4857 = vadd.f32 %v4806, %v4856
  %v4858 = vpop.f32.mrf.mxu0
  %v4859 = vadd.f32 %v4808, %v4858
  %v4860 = vpop.f32.mrf.mxu0
  %v4861 = vadd.f32 %v4810, %v4860
  %v4862 = vpop.f32.mrf.mxu0
  %v4863 = vadd.f32 %v4812, %v4862
  %4864 = vmatprep.mubr.bf16.mxu0 %v110
  %4865 = vmatmul.mubr.bf16.gmra.mxu0 %v74
  %v4866 = vpop.f32.mrf.mxu0
  %v4867 = vadd.f32 %v4816, %v4866
  %v4868 = vpop.f32.mrf.mxu0
  %v4869 = vadd.f32 %v4818, %v4868
  %v4870 = vpop.f32.mrf.mxu0
  %v4871 = vpop.f32.mrf.mxu0
  %4872 = vdwg.mxu0
  %4873 = vmatprep.subr.bf16.mxu0 %v3122
  %4874 = vmatpush1.bf16.msra.mxu0 %v3121
  %4875 = vmatprep.subr.bf16.mxu0 %v3114
  %4876 = vmatpush1.bf16.msra.mxu0 %v3113
  %4877 = vmatprep.subr.bf16.mxu0 %v3106
  %4878 = vmatpush1.bf16.msra.mxu0 %v3105
  %4879 = vmatprep.subr.bf16.mxu0 %v3098
  %4880 = vmatpush1.bf16.msra.mxu0 %v3097
  %4881 = vmatprep.subr.bf16.mxu0 %v3090
  %4882 = vmatpush1.bf16.msra.mxu0 %v3089
  %4883 = vmatprep.subr.bf16.mxu0 %v3082
  %4884 = vmatpush1.bf16.msra.mxu0 %v3081
  %4885 = vmatprep.subr.bf16.mxu0 %v3074
  %4886 = vmatpush1.bf16.msra.mxu0 %v3073
  %4887 = vmatprep.subr.bf16.mxu0 %v3066
  %4888 = vmatpush1.bf16.msra.mxu0 %v3065
  %4889 = vmatprep.subr.bf16.mxu0 %v3186
  %4890 = vmatpush2.bf16.msra.mxu0 %v3185
  %4891 = vmatprep.subr.bf16.mxu0 %v3178
  %4892 = vmatpush2.bf16.msra.mxu0 %v3177
  %4893 = vmatprep.subr.bf16.mxu0 %v3170
  %4894 = vmatpush2.bf16.msra.mxu0 %v3169
  %4895 = vmatprep.subr.bf16.mxu0 %v3162
  %4896 = vmatpush2.bf16.msra.mxu0 %v3161
  %4897 = vmatprep.subr.bf16.mxu0 %v3154
  %4898 = vmatpush2.bf16.msra.mxu0 %v3153
  %4899 = vmatprep.subr.bf16.mxu0 %v3146
  %4900 = vmatpush2.bf16.msra.mxu0 %v3145
  %4901 = vmatprep.subr.bf16.mxu0 %v3138
  %4902 = vmatpush2.bf16.msra.mxu0 %v3137
  %4903 = vmatprep.subr.bf16.mxu0 %v3130
  %4904 = vmatpush2.bf16.msra.mxu0 %v3129
  %4905 = vmatprep.mubr.bf16.mxu0 %v107
  %4906 = vmatmul.mubr.bf16.gmra.mxu0 %v106
  %v4907 = vpop.f32.mrf.mxu0
  %v4908 = vadd.f32 %v4857, %v4907
  %v4909 = vpop.f32.mrf.mxu0
  %v4910 = vadd.f32 %v4859, %v4909
  %v4911 = vpop.f32.mrf.mxu0
  %v4912 = vadd.f32 %v4861, %v4911
  %v4913 = vpop.f32.mrf.mxu0
  %v4914 = vadd.f32 %v4863, %v4913
  %4915 = vmatprep.mubr.bf16.mxu0 %v112
  %4916 = vmatmul.mubr.bf16.gmra.mxu0 %v111
  %v4917 = vpop.f32.mrf.mxu0
  %v4918 = vadd.f32 %v4867, %v4917
  %v4919 = vpop.f32.mrf.mxu0
  %v4920 = vadd.f32 %v4869, %v4919
  %v4921 = vpop.f32.mrf.mxu0
  %v4922 = vpop.f32.mrf.mxu0
  %4923 = vdwg.mxu0
  %4924 = vmatprep.subr.bf16.mxu0 %v3250
  %4925 = vmatpush1.bf16.msra.mxu0 %v3249
  %4926 = vmatprep.subr.bf16.mxu0 %v3242
  %4927 = vmatpush1.bf16.msra.mxu0 %v3241
  %4928 = vmatprep.subr.bf16.mxu0 %v3234
  %4929 = vmatpush1.bf16.msra.mxu0 %v3233
  %4930 = vmatprep.subr.bf16.mxu0 %v3226
  %4931 = vmatpush1.bf16.msra.mxu0 %v3225
  %4932 = vmatprep.subr.bf16.mxu0 %v3218
  %4933 = vmatpush1.bf16.msra.mxu0 %v3217
  %4934 = vmatprep.subr.bf16.mxu0 %v3210
  %4935 = vmatpush1.bf16.msra.mxu0 %v3209
  %4936 = vmatprep.subr.bf16.mxu0 %v3202
  %4937 = vmatpush1.bf16.msra.mxu0 %v3201
  %4938 = vmatprep.subr.bf16.mxu0 %v3194
  %4939 = vmatpush1.bf16.msra.mxu0 %v3193
  %4940 = vmatprep.subr.bf16.mxu0 %v3314
  %4941 = vmatpush2.bf16.msra.mxu0 %v3313
  %4942 = vmatprep.subr.bf16.mxu0 %v3306
  %4943 = vmatpush2.bf16.msra.mxu0 %v3305
  %4944 = vmatprep.subr.bf16.mxu0 %v3298
  %4945 = vmatpush2.bf16.msra.mxu0 %v3297
  %4946 = vmatprep.subr.bf16.mxu0 %v3290
  %4947 = vmatpush2.bf16.msra.mxu0 %v3289
  %4948 = vmatprep.subr.bf16.mxu0 %v3282
  %4949 = vmatpush2.bf16.msra.mxu0 %v3281
  %4950 = vmatprep.subr.bf16.mxu0 %v3274
  %4951 = vmatpush2.bf16.msra.mxu0 %v3273
  %4952 = vmatprep.subr.bf16.mxu0 %v3266
  %4953 = vmatpush2.bf16.msra.mxu0 %v3265
  %4954 = vmatprep.subr.bf16.mxu0 %v3258
  %4955 = vmatpush2.bf16.msra.mxu0 %v3257
  %4956 = vmatprep.mubr.bf16.mxu0 %v109
  %4957 = vmatmul.mubr.bf16.gmra.mxu0 %v108
  %v4958 = vpop.f32.mrf.mxu0
  %v4959 = vadd.f32 %v4908, %v4958
  %v4960 = vpop.f32.mrf.mxu0
  %v4961 = vadd.f32 %v4910, %v4960
  %v4962 = vpop.f32.mrf.mxu0
  %v4963 = vadd.f32 %v4912, %v4962
  %v4964 = vpop.f32.mrf.mxu0
  %v4965 = vadd.f32 %v4914, %v4964
  %4966 = vmatprep.mubr.bf16.mxu0 %v114
  %4967 = vmatmul.mubr.bf16.gmra.mxu0 %v113
  %v4968 = vpop.f32.mrf.mxu0
  %v4969 = vadd.f32 %v4918, %v4968
  %v4970 = vpop.f32.mrf.mxu0
  %v4971 = vadd.f32 %v4920, %v4970
  %v4972 = vpop.f32.mrf.mxu0
  %v4973 = vpop.f32.mrf.mxu0
  %4974 = vdwg.mxu0
  %v4975 = vld [vmem:[%s4] sm:$0xff]
  %v4977 = vlaneseq
  %v4978 = vshrl.u32 %v4977, 7
  %v4979 = vsub.s32 0, %v4978
  %v4980 = vrot.slane %v4975, %v4979
  %v4981 = vlaneseq
  %v4982 = vshrl.u32 %v4981, 7
  %v4983 = vsub.s32 1, %v4982
  %v4984 = vrot.slane %v4975, %v4983
  %v4985 = vlaneseq
  %v4986 = vshrl.u32 %v4985, 7
  %v4987 = vsub.s32 2, %v4986
  %v4988 = vrot.slane %v4975, %v4987
  %v4989 = vlaneseq
  %v4990 = vshrl.u32 %v4989, 7
  %v4991 = vsub.s32 3, %v4990
  %v4992 = vrot.slane %v4975, %v4991
  %v4993 = vlaneseq
  %v4994 = vshrl.u32 %v4993, 7
  %v4995 = vsub.s32 4, %v4994
  %v4996 = vrot.slane %v4975, %v4995
  %v4997 = vlaneseq
  %v4998 = vshrl.u32 %v4997, 7
  %v4999 = vsub.s32 5, %v4998
  %v5000 = vrot.slane %v4975, %v4999
  %v5001 = vlaneseq
  %v5002 = vshrl.u32 %v5001, 7
  %v5003 = vsub.s32 6, %v5002
  %v5004 = vrot.slane %v4975, %v5003
  %v5005 = vlaneseq
  %v5006 = vshrl.u32 %v5005, 7
  %v5007 = vsub.s32 7, %v5006
  %v5008 = vrot.slane %v4975, %v5007
  %v5017 = vmul.f32 %v4194, %v4980
  %v5018 = vmul.f32 %v4196, %v4984
  %v5019 = vmul.f32 %v4449, %v4988
  %v5020 = vmul.f32 %v4451, %v4992
  %v5021 = vmul.f32 %v4704, %v4996
  %v5022 = vmul.f32 %v4706, %v5000
  %v5023 = vmul.f32 %v4959, %v5004
  %v5024 = vmul.f32 %v4961, %v5008
  %v5025 = vmul.f32 %v4198, %v4980
  %v5026 = vmul.f32 %v4200, %v4984
  %v5027 = vmul.f32 %v4453, %v4988
  %v5028 = vmul.f32 %v4455, %v4992
  %v5029 = vmul.f32 %v4708, %v4996
  %v5030 = vmul.f32 %v4710, %v5000
  %v5031 = vmul.f32 %v4963, %v5004
  %v5032 = vmul.f32 %v4965, %v5008
  %v5033 = vmul.f32 %v4204, %v4980
  %v5034 = vmul.f32 %v4206, %v4984
  %v5035 = vmul.f32 %v4459, %v4988
  %v5036 = vmul.f32 %v4461, %v4992
  %v5037 = vmul.f32 %v4714, %v4996
  %v5038 = vmul.f32 %v4716, %v5000
  %v5039 = vmul.f32 %v4969, %v5004
  %v5040 = vmul.f32 %v4971, %v5008
  %5041 = vst [vmem:[%s5] sm:$0xff] %v5017
  %5042 = vst [vmem:[%s5 + $0x8] sm:$0xff] %v5018
  %5043 = vst [vmem:[%s5 + $0x10] sm:$0xff] %v5019
  %5044 = vst [vmem:[%s5 + $0x18] sm:$0xff] %v5020
  %5045 = vst [vmem:[%s5 + $0x20] sm:$0xff] %v5021
  %5046 = vst [vmem:[%s5 + $0x28] sm:$0xff] %v5022
  %5047 = vst [vmem:[%s5 + $0x30] sm:$0xff] %v5023
  %5048 = vst [vmem:[%s5 + $0x38] sm:$0xff] %v5024
  %5049 = vst [vmem:[%s5 + $0x40] sm:$0xff] %v5025
  %5050 = vst [vmem:[%s5 + $0x48] sm:$0xff] %v5026
  %5051 = vst [vmem:[%s5 + $0x50] sm:$0xff] %v5027
  %5052 = vst [vmem:[%s5 + $0x58] sm:$0xff] %v5028
  %5053 = vst [vmem:[%s5 + $0x60] sm:$0xff] %v5029
  %5054 = vst [vmem:[%s5 + $0x68] sm:$0xff] %v5030
  %5055 = vst [vmem:[%s5 + $0x70] sm:$0xff] %v5031
  %5056 = vst [vmem:[%s5 + $0x78] sm:$0xff] %v5032
  %5057 = vst [vmem:[%s5 + $0x80] sm:$0xff] %v5033
  %5058 = vst [vmem:[%s5 + $0x88] sm:$0xff] %v5034
  %5059 = vst [vmem:[%s5 + $0x90] sm:$0xff] %v5035
  %5060 = vst [vmem:[%s5 + $0x98] sm:$0xff] %v5036
  %5061 = vst [vmem:[%s5 + $0xa0] sm:$0xff] %v5037
  %5062 = vst [vmem:[%s5 + $0xa8] sm:$0xff] %v5038
  %5063 = vst [vmem:[%s5 + $0xb0] sm:$0xff] %v5039
  %5064 = vst [vmem:[%s5 + $0xb8] sm:$0xff] %v5040
  // Predicated region
  $region22: #{_lambda_.8} parent=0 // pred_check
    _
  $region23: #{_lambda_.8} parent=0 // pred_check_branch
    %5066 = sbr.rel (0) target = $region25
  $region24: #{_lambda_.8} parent=0 // pred_region
    _
  $region25: #{_lambda_.8} parent=0 // pred_fallthru
    _
  // Predicated region
  $region26: #{_lambda_.8} parent=0 // pred_check
    _
  $region27: #{_lambda_.8} parent=0 // pred_check_branch
    %5068 = sbr.rel (0) target = $region29
  $region28: #{_lambda_.8} parent=0 // pred_region
    _
  $region29: #{_lambda_.8} parent=0 // pred_fallthru
    _

// kernel: _lambda_.6
$region0: #{_lambda_.6}
  #allocation0 [shape = 'u32[]', space=smem, size = 0x4, offset = 0x4, fixed_abs, tag = 'smem constant byte address 0x4 - core index']
  #allocation1 [shape = 'u32[144,128]{1,0:T(1,128)}', space=vmem, size = 0x12000, scoped, tag = 'internal scratch']
  %s0 = inlined_call_operand.vmem [shape: f32[24,1024], index: 0, kind: input, shape index: {}]
  %s1 = inlined_call_operand.vmem [shape: f32[1,1024], index: 1, kind: input, shape index: {}]
  %s2 = inlined_call_operand.vmem [shape: bf16[1024,1280], index: 2, kind: input, shape index: {}]
  %s3 = inlined_call_operand.vmem [shape: f32[24,640], index: 3, kind: output, shape index: {0}]
  %s4 = inlined_call_operand.vmem [shape: f32[24,640], index: 4, kind: output, shape index: {1}]
  %5 = xla_tuple %s3, %s4
  %s6 = sld [smem:[#allocation0]]
  $region30: #{_lambda_.6} parent=0
    _
  %s8 = ssub.s32 1, %s6
  %s9 = scalar_select 0, %s8, %s6
  // Predicated region
  $region2: #{_lambda_.6} parent=0 // pred_check
    _
  $region3: #{_lambda_.6} parent=0 // pred_check_branch
    %11 = sbr.rel (0) target = $region5
  $region4: #{_lambda_.6} parent=0 // pred_region
    _
  $region5: #{_lambda_.6} parent=0 // pred_fallthru
    _
  // Predicated region
  $region6: #{_lambda_.6} parent=0 // pred_check
    _
  $region7: #{_lambda_.6} parent=0 // pred_check_branch
    %13 = sbr.rel (0) target = $region9
  $region8: #{_lambda_.6} parent=0 // pred_region
    _
  $region9: #{_lambda_.6} parent=0 // pred_fallthru
    _
  // Predicated region
  $region10: #{_lambda_.6} parent=0 // pred_check
    _
  $region11: #{_lambda_.6} parent=0 // pred_check_branch
    %15 = sbr.rel (0) target = $region13
  $region12: #{_lambda_.6} parent=0 // pred_region
    _
  $region13: #{_lambda_.6} parent=0 // pred_fallthru
    _
  %v16 = vld [vmem:[%s0] sm:$0xff]
  %v17 = vld [vmem:[%s0 + $0x8] sm:$0xff]
  %v18 = vld [vmem:[%s0 + $0x10] sm:$0xff]
  %v19 = vld [vmem:[%s0 + $0x18] sm:$0xff]
  %v20 = vld [vmem:[%s0 + $0x20] sm:$0xff]
  %v21 = vld [vmem:[%s0 + $0x28] sm:$0xff]
  %v22 = vld [vmem:[%s0 + $0x30] sm:$0xff]
  %v23 = vld [vmem:[%s0 + $0x38] sm:$0xff]
  %v24 = vld [vmem:[%s0 + $0x40] sm:$0xff]
  %v25 = vld [vmem:[%s0 + $0x48] sm:$0xff]
  %v26 = vld [vmem:[%s0 + $0x50] sm:$0xff]
  %v27 = vld [vmem:[%s0 + $0x58] sm:$0xff]
  %v28 = vld [vmem:[%s0 + $0x60] sm:$0xff]
  %v29 = vld [vmem:[%s0 + $0x68] sm:$0xff]
  %v30 = vld [vmem:[%s0 + $0x70] sm:$0xff]
  %v31 = vld [vmem:[%s0 + $0x78] sm:$0xff]
  %v32 = vld [vmem:[%s0 + $0x80] sm:$0xff]
  %v33 = vld [vmem:[%s0 + $0x88] sm:$0xff]
  %v34 = vld [vmem:[%s0 + $0x90] sm:$0xff]
  %v35 = vld [vmem:[%s0 + $0x98] sm:$0xff]
  %v36 = vld [vmem:[%s0 + $0xa0] sm:$0xff]
  %v37 = vld [vmem:[%s0 + $0xa8] sm:$0xff]
  %v38 = vld [vmem:[%s0 + $0xb0] sm:$0xff]
  %v39 = vld [vmem:[%s0 + $0xb8] sm:$0xff]
  %v40 = vld [vmem:[%s1] sm:$0xff]
  %v42 = vlaneseq
  %v43 = vshrl.u32 %v42, 7
  %v44 = vsub.s32 0, %v43
  %v45 = vrot.slane %v40, %v44
  %v46 = vlaneseq
  %v47 = vshrl.u32 %v46, 7
  %v48 = vsub.s32 1, %v47
  %v49 = vrot.slane %v40, %v48
  %v50 = vlaneseq
  %v51 = vshrl.u32 %v50, 7
  %v52 = vsub.s32 2, %v51
  %v53 = vrot.slane %v40, %v52
  %v54 = vlaneseq
  %v55 = vshrl.u32 %v54, 7
  %v56 = vsub.s32 3, %v55
  %v57 = vrot.slane %v40, %v56
  %v58 = vlaneseq
  %v59 = vshrl.u32 %v58, 7
  %v60 = vsub.s32 4, %v59
  %v61 = vrot.slane %v40, %v60
  %v62 = vlaneseq
  %v63 = vshrl.u32 %v62, 7
  %v64 = vsub.s32 5, %v63
  %v65 = vrot.slane %v40, %v64
  %v66 = vlaneseq
  %v67 = vshrl.u32 %v66, 7
  %v68 = vsub.s32 6, %v67
  %v69 = vrot.slane %v40, %v68
  %v70 = vlaneseq
  %v71 = vshrl.u32 %v70, 7
  %v72 = vsub.s32 7, %v71
  %v73 = vrot.slane %v40, %v72
  %v82 = vmul.f32 %v16, %v45
  %v83 = vmul.f32 %v17, %v49
  %v84 = vmul.f32 %v18, %v53
  %v85 = vmul.f32 %v19, %v57
  %v86 = vmul.f32 %v20, %v61
  %v87 = vmul.f32 %v21, %v65
  %v88 = vmul.f32 %v22, %v69
  %v89 = vmul.f32 %v23, %v73
  %v90 = vmul.f32 %v24, %v45
  %v91 = vmul.f32 %v25, %v49
  %v92 = vmul.f32 %v26, %v53
  %v93 = vmul.f32 %v27, %v57
  %v94 = vmul.f32 %v28, %v61
  %v95 = vmul.f32 %v29, %v65
  %v96 = vmul.f32 %v30, %v69
  %v97 = vmul.f32 %v31, %v73
  %v98 = vmul.f32 %v32, %v45
  %v99 = vmul.f32 %v33, %v49
  %v100 = vmul.f32 %v34, %v53
  %v101 = vmul.f32 %v35, %v57
  %v102 = vmul.f32 %v36, %v61
  %v103 = vmul.f32 %v37, %v65
  %v104 = vmul.f32 %v38, %v69
  %v105 = vmul.f32 %v39, %v73
  %v106 = vpack.c.bf16 %v90, %v82
  %v107 = vpack.c.bf16 %v91, %v83
  %v108 = vpack.c.bf16 %v92, %v84
  %v109 = vpack.c.bf16 %v93, %v85
  %v110 = vpack.c.bf16 %v94, %v86
  %v111 = vpack.c.bf16 %v95, %v87
  %v112 = vpack.c.bf16 %v96, %v88
  %v113 = vpack.c.bf16 %v97, %v89
  %v114 = vpack.c.bf16 %v98, %v98
  %v115 = vpack.c.bf16 %v99, %v99
  %v116 = vpack.c.bf16 %v100, %v100
  %v117 = vpack.c.bf16 %v101, %v101
  %v118 = vpack.c.bf16 %v102, %v102
  %v119 = vpack.c.bf16 %v103, %v103
  %v120 = vpack.c.bf16 %v104, %v104
  %v121 = vpack.c.bf16 %v105, %v105
  %v122 = vld [vmem:[%s2] sm:$0xff]
  %v123 = vld [vmem:[%s2 + $0x8] sm:$0xff]
  %v124 = vld [vmem:[%s2 + $0x10] sm:$0xff]
  %v125 = vld [vmem:[%s2 + $0x18] sm:$0xff]
  %v126 = vld [vmem:[%s2 + $0x20] sm:$0xff]
  %v127 = vld [vmem:[%s2 + $0x28] sm:$0xff]
  %v128 = vld [vmem:[%s2 + $0x30] sm:$0xff]
  %v129 = vld [vmem:[%s2 + $0x38] sm:$0xff]
  %v130 = vld [vmem:[%s2 + $0x40] sm:$0xff]
  %v131 = vld [vmem:[%s2 + $0x48] sm:$0xff]
  %v132 = vld [vmem:[%s2 + $0x50] sm:$0xff]
  %v133 = vld [vmem:[%s2 + $0x58] sm:$0xff]
  %v134 = vld [vmem:[%s2 + $0x60] sm:$0xff]
  %v135 = vld [vmem:[%s2 + $0x68] sm:$0xff]
  %v136 = vld [vmem:[%s2 + $0x70] sm:$0xff]
  %v137 = vld [vmem:[%s2 + $0x78] sm:$0xff]
  %v138 = vld [vmem:[%s2 + $0x80] sm:$0xff]
  %v139 = vld [vmem:[%s2 + $0x88] sm:$0xff]
  %v140 = vld [vmem:[%s2 + $0x90] sm:$0xff]
  %v141 = vld [vmem:[%s2 + $0x98] sm:$0xff]
  %v142 = vld [vmem:[%s2 + $0xa0] sm:$0xff]
  %v143 = vld [vmem:[%s2 + $0xa8] sm:$0xff]
  %v144 = vld [vmem:[%s2 + $0xb0] sm:$0xff]
  %v145 = vld [vmem:[%s2 + $0xb8] sm:$0xff]
  %v146 = vld [vmem:[%s2 + $0xc0] sm:$0xff]
  %v147 = vld [vmem:[%s2 + $0xc8] sm:$0xff]
  %v148 = vld [vmem:[%s2 + $0xd0] sm:$0xff]
  %v149 = vld [vmem:[%s2 + $0xd8] sm:$0xff]
  %v150 = vld [vmem:[%s2 + $0xe0] sm:$0xff]
  %v151 = vld [vmem:[%s2 + $0xe8] sm:$0xff]
  %v152 = vld [vmem:[%s2 + $0xf0] sm:$0xff]
  %v153 = vld [vmem:[%s2 + $0xf8] sm:$0xff]
  %v154 = vld [vmem:[%s2 + $0x100] sm:$0xff]
  %v155 = vld [vmem:[%s2 + $0x108] sm:$0xff]
  %v156 = vld [vmem:[%s2 + $0x110] sm:$0xff]
  %v157 = vld [vmem:[%s2 + $0x118] sm:$0xff]
  %v158 = vld [vmem:[%s2 + $0x120] sm:$0xff]
  %v159 = vld [vmem:[%s2 + $0x128] sm:$0xff]
  %v160 = vld [vmem:[%s2 + $0x130] sm:$0xff]
  %v161 = vld [vmem:[%s2 + $0x138] sm:$0xff]
  %v162 = vld [vmem:[%s2 + $0x140] sm:$0xff]
  %v163 = vld [vmem:[%s2 + $0x148] sm:$0xff]
  %v164 = vld [vmem:[%s2 + $0x150] sm:$0xff]
  %v165 = vld [vmem:[%s2 + $0x158] sm:$0xff]
  %v166 = vld [vmem:[%s2 + $0x160] sm:$0xff]
  %v167 = vld [vmem:[%s2 + $0x168] sm:$0xff]
  %v168 = vld [vmem:[%s2 + $0x170] sm:$0xff]
  %v169 = vld [vmem:[%s2 + $0x178] sm:$0xff]
  %v170 = vld [vmem:[%s2 + $0x180] sm:$0xff]
  %v171 = vld [vmem:[%s2 + $0x188] sm:$0xff]
  %v172 = vld [vmem:[%s2 + $0x190] sm:$0xff]
  %v173 = vld [vmem:[%s2 + $0x198] sm:$0xff]
  %v174 = vld [vmem:[%s2 + $0x1a0] sm:$0xff]
  %v175 = vld [vmem:[%s2 + $0x1a8] sm:$0xff]
  %v176 = vld [vmem:[%s2 + $0x1b0] sm:$0xff]
  %v177 = vld [vmem:[%s2 + $0x1b8] sm:$0xff]
  %v178 = vld [vmem:[%s2 + $0x1c0] sm:$0xff]
  %v179 = vld [vmem:[%s2 + $0x1c8] sm:$0xff]
  %v180 = vld [vmem:[%s2 + $0x1d0] sm:$0xff]
  %v181 = vld [vmem:[%s2 + $0x1d8] sm:$0xff]
  %v182 = vld [vmem:[%s2 + $0x1e0] sm:$0xff]
  %v183 = vld [vmem:[%s2 + $0x1e8] sm:$0xff]
  %v184 = vld [vmem:[%s2 + $0x1f0] sm:$0xff]
  %v185 = vld [vmem:[%s2 + $0x1f8] sm:$0xff]
  %v186 = vld [vmem:[%s2 + $0x200] sm:$0xff]
  %v187 = vld [vmem:[%s2 + $0x208] sm:$0xff]
  %v188 = vld [vmem:[%s2 + $0x210] sm:$0xff]
  %v189 = vld [vmem:[%s2 + $0x218] sm:$0xff]
  %v190 = vld [vmem:[%s2 + $0x220] sm:$0xff]
  %v191 = vld [vmem:[%s2 + $0x228] sm:$0xff]
  %v192 = vld [vmem:[%s2 + $0x230] sm:$0xff]
  %v193 = vld [vmem:[%s2 + $0x238] sm:$0xff]
  %v194 = vld [vmem:[%s2 + $0x240] sm:$0xff]
  %v195 = vld [vmem:[%s2 + $0x248] sm:$0xff]
  %v196 = vld [vmem:[%s2 + $0x250] sm:$0xff]
  %v197 = vld [vmem:[%s2 + $0x258] sm:$0xff]
  %v198 = vld [vmem:[%s2 + $0x260] sm:$0xff]
  %v199 = vld [vmem:[%s2 + $0x268] sm:$0xff]
  %v200 = vld [vmem:[%s2 + $0x270] sm:$0xff]
  %v201 = vld [vmem:[%s2 + $0x278] sm:$0xff]
  %v202 = vld [vmem:[%s2 + $0x280] sm:$0xff]
  %v203 = vld [vmem:[%s2 + $0x288] sm:$0xff]
  %v204 = vld [vmem:[%s2 + $0x290] sm:$0xff]
  %v205 = vld [vmem:[%s2 + $0x298] sm:$0xff]
  %v206 = vld [vmem:[%s2 + $0x2a0] sm:$0xff]
  %v207 = vld [vmem:[%s2 + $0x2a8] sm:$0xff]
  %v208 = vld [vmem:[%s2 + $0x2b0] sm:$0xff]
  %v209 = vld [vmem:[%s2 + $0x2b8] sm:$0xff]
  %v210 = vld [vmem:[%s2 + $0x2c0] sm:$0xff]
  %v211 = vld [vmem:[%s2 + $0x2c8] sm:$0xff]
  %v212 = vld [vmem:[%s2 + $0x2d0] sm:$0xff]
  %v213 = vld [vmem:[%s2 + $0x2d8] sm:$0xff]
  %v214 = vld [vmem:[%s2 + $0x2e0] sm:$0xff]
  %v215 = vld [vmem:[%s2 + $0x2e8] sm:$0xff]
  %v216 = vld [vmem:[%s2 + $0x2f0] sm:$0xff]
  %v217 = vld [vmem:[%s2 + $0x2f8] sm:$0xff]
  %v218 = vld [vmem:[%s2 + $0x300] sm:$0xff]
  %v219 = vld [vmem:[%s2 + $0x308] sm:$0xff]
  %v220 = vld [vmem:[%s2 + $0x310] sm:$0xff]
  %v221 = vld [vmem:[%s2 + $0x318] sm:$0xff]
  %v222 = vld [vmem:[%s2 + $0x320] sm:$0xff]
  %v223 = vld [vmem:[%s2 + $0x328] sm:$0xff]
  %v224 = vld [vmem:[%s2 + $0x330] sm:$0xff]
  %v225 = vld [vmem:[%s2 + $0x338] sm:$0xff]
  %v226 = vld [vmem:[%s2 + $0x340] sm:$0xff]
  %v227 = vld [vmem:[%s2 + $0x348] sm:$0xff]
  %v228 = vld [vmem:[%s2 + $0x350] sm:$0xff]
  %v229 = vld [vmem:[%s2 + $0x358] sm:$0xff]
  %v230 = vld [vmem:[%s2 + $0x360] sm:$0xff]
  %v231 = vld [vmem:[%s2 + $0x368] sm:$0xff]
  %v232 = vld [vmem:[%s2 + $0x370] sm:$0xff]
  %v233 = vld [vmem:[%s2 + $0x378] sm:$0xff]
  %v234 = vld [vmem:[%s2 + $0x380] sm:$0xff]
  %v235 = vld [vmem:[%s2 + $0x388] sm:$0xff]
  %v236 = vld [vmem:[%s2 + $0x390] sm:$0xff]
  %v237 = vld [vmem:[%s2 + $0x398] sm:$0xff]
  %v238 = vld [vmem:[%s2 + $0x3a0] sm:$0xff]
  %v239 = vld [vmem:[%s2 + $0x3a8] sm:$0xff]
  %v240 = vld [vmem:[%s2 + $0x3b0] sm:$0xff]
  %v241 = vld [vmem:[%s2 + $0x3b8] sm:$0xff]
  %v242 = vld [vmem:[%s2 + $0x3c0] sm:$0xff]
  %v243 = vld [vmem:[%s2 + $0x3c8] sm:$0xff]
  %v244 = vld [vmem:[%s2 + $0x3d0] sm:$0xff]
  %v245 = vld [vmem:[%s2 + $0x3d8] sm:$0xff]
  %v246 = vld [vmem:[%s2 + $0x3e0] sm:$0xff]
  %v247 = vld [vmem:[%s2 + $0x3e8] sm:$0xff]
  %v248 = vld [vmem:[%s2 + $0x3f0] sm:$0xff]
  %v249 = vld [vmem:[%s2 + $0x3f8] sm:$0xff]
  %v250 = vld [vmem:[%s2 + $0x400] sm:$0xff]
  %v251 = vld [vmem:[%s2 + $0x408] sm:$0xff]
  %v252 = vld [vmem:[%s2 + $0x410] sm:$0xff]
  %v253 = vld [vmem:[%s2 + $0x418] sm:$0xff]
  %v254 = vld [vmem:[%s2 + $0x420] sm:$0xff]
  %v255 = vld [vmem:[%s2 + $0x428] sm:$0xff]
  %v256 = vld [vmem:[%s2 + $0x430] sm:$0xff]
  %v257 = vld [vmem:[%s2 + $0x438] sm:$0xff]
  %v258 = vld [vmem:[%s2 + $0x440] sm:$0xff]
  %v259 = vld [vmem:[%s2 + $0x448] sm:$0xff]
  %v260 = vld [vmem:[%s2 + $0x450] sm:$0xff]
  %v261 = vld [vmem:[%s2 + $0x458] sm:$0xff]
  %v262 = vld [vmem:[%s2 + $0x460] sm:$0xff]
  %v263 = vld [vmem:[%s2 + $0x468] sm:$0xff]
  %v264 = vld [vmem:[%s2 + $0x470] sm:$0xff]
  %v265 = vld [vmem:[%s2 + $0x478] sm:$0xff]
  %v266 = vld [vmem:[%s2 + $0x480] sm:$0xff]
  %v267 = vld [vmem:[%s2 + $0x488] sm:$0xff]
  %v268 = vld [vmem:[%s2 + $0x490] sm:$0xff]
  %v269 = vld [vmem:[%s2 + $0x498] sm:$0xff]
  %v270 = vld [vmem:[%s2 + $0x4a0] sm:$0xff]
  %v271 = vld [vmem:[%s2 + $0x4a8] sm:$0xff]
  %v272 = vld [vmem:[%s2 + $0x4b0] sm:$0xff]
  %v273 = vld [vmem:[%s2 + $0x4b8] sm:$0xff]
  %v274 = vld [vmem:[%s2 + $0x4c0] sm:$0xff]
  %v275 = vld [vmem:[%s2 + $0x4c8] sm:$0xff]
  %v276 = vld [vmem:[%s2 + $0x4d0] sm:$0xff]
  %v277 = vld [vmem:[%s2 + $0x4d8] sm:$0xff]
  %v278 = vld [vmem:[%s2 + $0x4e0] sm:$0xff]
  %v279 = vld [vmem:[%s2 + $0x4e8] sm:$0xff]
  %v280 = vld [vmem:[%s2 + $0x4f0] sm:$0xff]
  %v281 = vld [vmem:[%s2 + $0x4f8] sm:$0xff]
  %v282 = vld [vmem:[%s2 + $0x500] sm:$0xff]
  %v283 = vld [vmem:[%s2 + $0x508] sm:$0xff]
  %v284 = vld [vmem:[%s2 + $0x510] sm:$0xff]
  %v285 = vld [vmem:[%s2 + $0x518] sm:$0xff]
  %v286 = vld [vmem:[%s2 + $0x520] sm:$0xff]
  %v287 = vld [vmem:[%s2 + $0x528] sm:$0xff]
  %v288 = vld [vmem:[%s2 + $0x530] sm:$0xff]
  %v289 = vld [vmem:[%s2 + $0x538] sm:$0xff]
  %v290 = vld [vmem:[%s2 + $0x540] sm:$0xff]
  %v291 = vld [vmem:[%s2 + $0x548] sm:$0xff]
  %v292 = vld [vmem:[%s2 + $0x550] sm:$0xff]
  %v293 = vld [vmem:[%s2 + $0x558] sm:$0xff]
  %v294 = vld [vmem:[%s2 + $0x560] sm:$0xff]
  %v295 = vld [vmem:[%s2 + $0x568] sm:$0xff]
  %v296 = vld [vmem:[%s2 + $0x570] sm:$0xff]
  %v297 = vld [vmem:[%s2 + $0x578] sm:$0xff]
  %v298 = vld [vmem:[%s2 + $0x580] sm:$0xff]
  %v299 = vld [vmem:[%s2 + $0x588] sm:$0xff]
  %v300 = vld [vmem:[%s2 + $0x590] sm:$0xff]
  %v301 = vld [vmem:[%s2 + $0x598] sm:$0xff]
  %v302 = vld [vmem:[%s2 + $0x5a0] sm:$0xff]
  %v303 = vld [vmem:[%s2 + $0x5a8] sm:$0xff]
  %v304 = vld [vmem:[%s2 + $0x5b0] sm:$0xff]
  %v305 = vld [vmem:[%s2 + $0x5b8] sm:$0xff]
  %v306 = vld [vmem:[%s2 + $0x5c0] sm:$0xff]
  %v307 = vld [vmem:[%s2 + $0x5c8] sm:$0xff]
  %v308 = vld [vmem:[%s2 + $0x5d0] sm:$0xff]
  %v309 = vld [vmem:[%s2 + $0x5d8] sm:$0xff]
  %v310 = vld [vmem:[%s2 + $0x5e0] sm:$0xff]
  %v311 = vld [vmem:[%s2 + $0x5e8] sm:$0xff]
  %v312 = vld [vmem:[%s2 + $0x5f0] sm:$0xff]
  %v313 = vld [vmem:[%s2 + $0x5f8] sm:$0xff]
  %v314 = vld [vmem:[%s2 + $0x600] sm:$0xff]
  %v315 = vld [vmem:[%s2 + $0x608] sm:$0xff]
  %v316 = vld [vmem:[%s2 + $0x610] sm:$0xff]
  %v317 = vld [vmem:[%s2 + $0x618] sm:$0xff]
  %v318 = vld [vmem:[%s2 + $0x620] sm:$0xff]
  %v319 = vld [vmem:[%s2 + $0x628] sm:$0xff]
  %v320 = vld [vmem:[%s2 + $0x630] sm:$0xff]
  %v321 = vld [vmem:[%s2 + $0x638] sm:$0xff]
  %v322 = vld [vmem:[%s2 + $0x640] sm:$0xff]
  %v323 = vld [vmem:[%s2 + $0x648] sm:$0xff]
  %v324 = vld [vmem:[%s2 + $0x650] sm:$0xff]
  %v325 = vld [vmem:[%s2 + $0x658] sm:$0xff]
  %v326 = vld [vmem:[%s2 + $0x660] sm:$0xff]
  %v327 = vld [vmem:[%s2 + $0x668] sm:$0xff]
  %v328 = vld [vmem:[%s2 + $0x670] sm:$0xff]
  %v329 = vld [vmem:[%s2 + $0x678] sm:$0xff]
  %v330 = vld [vmem:[%s2 + $0x680] sm:$0xff]
  %v331 = vld [vmem:[%s2 + $0x688] sm:$0xff]
  %v332 = vld [vmem:[%s2 + $0x690] sm:$0xff]
  %v333 = vld [vmem:[%s2 + $0x698] sm:$0xff]
  %v334 = vld [vmem:[%s2 + $0x6a0] sm:$0xff]
  %v335 = vld [vmem:[%s2 + $0x6a8] sm:$0xff]
  %v336 = vld [vmem:[%s2 + $0x6b0] sm:$0xff]
  %v337 = vld [vmem:[%s2 + $0x6b8] sm:$0xff]
  %v338 = vld [vmem:[%s2 + $0x6c0] sm:$0xff]
  %v339 = vld [vmem:[%s2 + $0x6c8] sm:$0xff]
  %v340 = vld [vmem:[%s2 + $0x6d0] sm:$0xff]
  %v341 = vld [vmem:[%s2 + $0x6d8] sm:$0xff]
  %v342 = vld [vmem:[%s2 + $0x6e0] sm:$0xff]
  %v343 = vld [vmem:[%s2 + $0x6e8] sm:$0xff]
  %v344 = vld [vmem:[%s2 + $0x6f0] sm:$0xff]
  %v345 = vld [vmem:[%s2 + $0x6f8] sm:$0xff]
  %v346 = vld [vmem:[%s2 + $0x700] sm:$0xff]
  %v347 = vld [vmem:[%s2 + $0x708] sm:$0xff]
  %v348 = vld [vmem:[%s2 + $0x710] sm:$0xff]
  %v349 = vld [vmem:[%s2 + $0x718] sm:$0xff]
  %v350 = vld [vmem:[%s2 + $0x720] sm:$0xff]
  %v351 = vld [vmem:[%s2 + $0x728] sm:$0xff]
  %v352 = vld [vmem:[%s2 + $0x730] sm:$0xff]
  %v353 = vld [vmem:[%s2 + $0x738] sm:$0xff]
  %v354 = vld [vmem:[%s2 + $0x740] sm:$0xff]
  %v355 = vld [vmem:[%s2 + $0x748] sm:$0xff]
  %v356 = vld [vmem:[%s2 + $0x750] sm:$0xff]
  %v357 = vld [vmem:[%s2 + $0x758] sm:$0xff]
  %v358 = vld [vmem:[%s2 + $0x760] sm:$0xff]
  %v359 = vld [vmem:[%s2 + $0x768] sm:$0xff]
  %v360 = vld [vmem:[%s2 + $0x770] sm:$0xff]
  %v361 = vld [vmem:[%s2 + $0x778] sm:$0xff]
  %v362 = vld [vmem:[%s2 + $0x780] sm:$0xff]
  %v363 = vld [vmem:[%s2 + $0x788] sm:$0xff]
  %v364 = vld [vmem:[%s2 + $0x790] sm:$0xff]
  %v365 = vld [vmem:[%s2 + $0x798] sm:$0xff]
  %v366 = vld [vmem:[%s2 + $0x7a0] sm:$0xff]
  %v367 = vld [vmem:[%s2 + $0x7a8] sm:$0xff]
  %v368 = vld [vmem:[%s2 + $0x7b0] sm:$0xff]
  %v369 = vld [vmem:[%s2 + $0x7b8] sm:$0xff]
  %v370 = vld [vmem:[%s2 + $0x7c0] sm:$0xff]
  %v371 = vld [vmem:[%s2 + $0x7c8] sm:$0xff]
  %v372 = vld [vmem:[%s2 + $0x7d0] sm:$0xff]
  %v373 = vld [vmem:[%s2 + $0x7d8] sm:$0xff]
  %v374 = vld [vmem:[%s2 + $0x7e0] sm:$0xff]
  %v375 = vld [vmem:[%s2 + $0x7e8] sm:$0xff]
  %v376 = vld [vmem:[%s2 + $0x7f0] sm:$0xff]
  %v377 = vld [vmem:[%s2 + $0x7f8] sm:$0xff]
  %v378 = vld [vmem:[%s2 + $0x800] sm:$0xff]
  %v379 = vld [vmem:[%s2 + $0x808] sm:$0xff]
  %v380 = vld [vmem:[%s2 + $0x810] sm:$0xff]
  %v381 = vld [vmem:[%s2 + $0x818] sm:$0xff]
  %v382 = vld [vmem:[%s2 + $0x820] sm:$0xff]
  %v383 = vld [vmem:[%s2 + $0x828] sm:$0xff]
  %v384 = vld [vmem:[%s2 + $0x830] sm:$0xff]
  %v385 = vld [vmem:[%s2 + $0x838] sm:$0xff]
  %v386 = vld [vmem:[%s2 + $0x840] sm:$0xff]
  %v387 = vld [vmem:[%s2 + $0x848] sm:$0xff]
  %v388 = vld [vmem:[%s2 + $0x850] sm:$0xff]
  %v389 = vld [vmem:[%s2 + $0x858] sm:$0xff]
  %v390 = vld [vmem:[%s2 + $0x860] sm:$0xff]
  %v391 = vld [vmem:[%s2 + $0x868] sm:$0xff]
  %v392 = vld [vmem:[%s2 + $0x870] sm:$0xff]
  %v393 = vld [vmem:[%s2 + $0x878] sm:$0xff]
  %v394 = vld [vmem:[%s2 + $0x880] sm:$0xff]
  %v395 = vld [vmem:[%s2 + $0x888] sm:$0xff]
  %v396 = vld [vmem:[%s2 + $0x890] sm:$0xff]
  %v397 = vld [vmem:[%s2 + $0x898] sm:$0xff]
  %v398 = vld [vmem:[%s2 + $0x8a0] sm:$0xff]
  %v399 = vld [vmem:[%s2 + $0x8a8] sm:$0xff]
  %v400 = vld [vmem:[%s2 + $0x8b0] sm:$0xff]
  %v401 = vld [vmem:[%s2 + $0x8b8] sm:$0xff]
  %v402 = vld [vmem:[%s2 + $0x8c0] sm:$0xff]
  %v403 = vld [vmem:[%s2 + $0x8c8] sm:$0xff]
  %v404 = vld [vmem:[%s2 + $0x8d0] sm:$0xff]
  %v405 = vld [vmem:[%s2 + $0x8d8] sm:$0xff]
  %v406 = vld [vmem:[%s2 + $0x8e0] sm:$0xff]
  %v407 = vld [vmem:[%s2 + $0x8e8] sm:$0xff]
  %v408 = vld [vmem:[%s2 + $0x8f0] sm:$0xff]
  %v409 = vld [vmem:[%s2 + $0x8f8] sm:$0xff]
  %v410 = vld [vmem:[%s2 + $0x900] sm:$0xff]
  %v411 = vld [vmem:[%s2 + $0x908] sm:$0xff]
  %v412 = vld [vmem:[%s2 + $0x910] sm:$0xff]
  %v413 = vld [vmem:[%s2 + $0x918] sm:$0xff]
  %v414 = vld [vmem:[%s2 + $0x920] sm:$0xff]
  %v415 = vld [vmem:[%s2 + $0x928] sm:$0xff]
  %v416 = vld [vmem:[%s2 + $0x930] sm:$0xff]
  %v417 = vld [vmem:[%s2 + $0x938] sm:$0xff]
  %v418 = vld [vmem:[%s2 + $0x940] sm:$0xff]
  %v419 = vld [vmem:[%s2 + $0x948] sm:$0xff]
  %v420 = vld [vmem:[%s2 + $0x950] sm:$0xff]
  %v421 = vld [vmem:[%s2 + $0x958] sm:$0xff]
  %v422 = vld [vmem:[%s2 + $0x960] sm:$0xff]
  %v423 = vld [vmem:[%s2 + $0x968] sm:$0xff]
  %v424 = vld [vmem:[%s2 + $0x970] sm:$0xff]
  %v425 = vld [vmem:[%s2 + $0x978] sm:$0xff]
  %v426 = vld [vmem:[%s2 + $0x980] sm:$0xff]
  %v427 = vld [vmem:[%s2 + $0x988] sm:$0xff]
  %v428 = vld [vmem:[%s2 + $0x990] sm:$0xff]
  %v429 = vld [vmem:[%s2 + $0x998] sm:$0xff]
  %v430 = vld [vmem:[%s2 + $0x9a0] sm:$0xff]
  %v431 = vld [vmem:[%s2 + $0x9a8] sm:$0xff]
  %v432 = vld [vmem:[%s2 + $0x9b0] sm:$0xff]
  %v433 = vld [vmem:[%s2 + $0x9b8] sm:$0xff]
  %v434 = vld [vmem:[%s2 + $0x9c0] sm:$0xff]
  %v435 = vld [vmem:[%s2 + $0x9c8] sm:$0xff]
  %v436 = vld [vmem:[%s2 + $0x9d0] sm:$0xff]
  %v437 = vld [vmem:[%s2 + $0x9d8] sm:$0xff]
  %v438 = vld [vmem:[%s2 + $0x9e0] sm:$0xff]
  %v439 = vld [vmem:[%s2 + $0x9e8] sm:$0xff]
  %v440 = vld [vmem:[%s2 + $0x9f0] sm:$0xff]
  %v441 = vld [vmem:[%s2 + $0x9f8] sm:$0xff]
  %v442 = vld [vmem:[%s2 + $0xa00] sm:$0xff]
  %v443 = vld [vmem:[%s2 + $0xa08] sm:$0xff]
  %v444 = vld [vmem:[%s2 + $0xa10] sm:$0xff]
  %v445 = vld [vmem:[%s2 + $0xa18] sm:$0xff]
  %v446 = vld [vmem:[%s2 + $0xa20] sm:$0xff]
  %v447 = vld [vmem:[%s2 + $0xa28] sm:$0xff]
  %v448 = vld [vmem:[%s2 + $0xa30] sm:$0xff]
  %v449 = vld [vmem:[%s2 + $0xa38] sm:$0xff]
  %v450 = vld [vmem:[%s2 + $0xa40] sm:$0xff]
  %v451 = vld [vmem:[%s2 + $0xa48] sm:$0xff]
  %v452 = vld [vmem:[%s2 + $0xa50] sm:$0xff]
  %v453 = vld [vmem:[%s2 + $0xa58] sm:$0xff]
  %v454 = vld [vmem:[%s2 + $0xa60] sm:$0xff]
  %v455 = vld [vmem:[%s2 + $0xa68] sm:$0xff]
  %v456 = vld [vmem:[%s2 + $0xa70] sm:$0xff]
  %v457 = vld [vmem:[%s2 + $0xa78] sm:$0xff]
  %v458 = vld [vmem:[%s2 + $0xa80] sm:$0xff]
  %v459 = vld [vmem:[%s2 + $0xa88] sm:$0xff]
  %v460 = vld [vmem:[%s2 + $0xa90] sm:$0xff]
  %v461 = vld [vmem:[%s2 + $0xa98] sm:$0xff]
  %v462 = vld [vmem:[%s2 + $0xaa0] sm:$0xff]
  %v463 = vld [vmem:[%s2 + $0xaa8] sm:$0xff]
  %v464 = vld [vmem:[%s2 + $0xab0] sm:$0xff]
  %v465 = vld [vmem:[%s2 + $0xab8] sm:$0xff]
  %v466 = vld [vmem:[%s2 + $0xac0] sm:$0xff]
  %v467 = vld [vmem:[%s2 + $0xac8] sm:$0xff]
  %v468 = vld [vmem:[%s2 + $0xad0] sm:$0xff]
  %v469 = vld [vmem:[%s2 + $0xad8] sm:$0xff]
  %v470 = vld [vmem:[%s2 + $0xae0] sm:$0xff]
  %v471 = vld [vmem:[%s2 + $0xae8] sm:$0xff]
  %v472 = vld [vmem:[%s2 + $0xaf0] sm:$0xff]
  %v473 = vld [vmem:[%s2 + $0xaf8] sm:$0xff]
  %v474 = vld [vmem:[%s2 + $0xb00] sm:$0xff]
  %v475 = vld [vmem:[%s2 + $0xb08] sm:$0xff]
  %v476 = vld [vmem:[%s2 + $0xb10] sm:$0xff]
  %v477 = vld [vmem:[%s2 + $0xb18] sm:$0xff]
  %v478 = vld [vmem:[%s2 + $0xb20] sm:$0xff]
  %v479 = vld [vmem:[%s2 + $0xb28] sm:$0xff]
  %v480 = vld [vmem:[%s2 + $0xb30] sm:$0xff]
  %v481 = vld [vmem:[%s2 + $0xb38] sm:$0xff]
  %v482 = vld [vmem:[%s2 + $0xb40] sm:$0xff]
  %v483 = vld [vmem:[%s2 + $0xb48] sm:$0xff]
  %v484 = vld [vmem:[%s2 + $0xb50] sm:$0xff]
  %v485 = vld [vmem:[%s2 + $0xb58] sm:$0xff]
  %v486 = vld [vmem:[%s2 + $0xb60] sm:$0xff]
  %v487 = vld [vmem:[%s2 + $0xb68] sm:$0xff]
  %v488 = vld [vmem:[%s2 + $0xb70] sm:$0xff]
  %v489 = vld [vmem:[%s2 + $0xb78] sm:$0xff]
  %v490 = vld [vmem:[%s2 + $0xb80] sm:$0xff]
  %v491 = vld [vmem:[%s2 + $0xb88] sm:$0xff]
  %v492 = vld [vmem:[%s2 + $0xb90] sm:$0xff]
  %v493 = vld [vmem:[%s2 + $0xb98] sm:$0xff]
  %v494 = vld [vmem:[%s2 + $0xba0] sm:$0xff]
  %v495 = vld [vmem:[%s2 + $0xba8] sm:$0xff]
  %v496 = vld [vmem:[%s2 + $0xbb0] sm:$0xff]
  %v497 = vld [vmem:[%s2 + $0xbb8] sm:$0xff]
  %v498 = vld [vmem:[%s2 + $0xbc0] sm:$0xff]
  %v499 = vld [vmem:[%s2 + $0xbc8] sm:$0xff]
  %v500 = vld [vmem:[%s2 + $0xbd0] sm:$0xff]
  %v501 = vld [vmem:[%s2 + $0xbd8] sm:$0xff]
  %v502 = vld [vmem:[%s2 + $0xbe0] sm:$0xff]
  %v503 = vld [vmem:[%s2 + $0xbe8] sm:$0xff]
  %v504 = vld [vmem:[%s2 + $0xbf0] sm:$0xff]
  %v505 = vld [vmem:[%s2 + $0xbf8] sm:$0xff]
  %v506 = vld [vmem:[%s2 + $0xc00] sm:$0xff]
  %v507 = vld [vmem:[%s2 + $0xc08] sm:$0xff]
  %v508 = vld [vmem:[%s2 + $0xc10] sm:$0xff]
  %v509 = vld [vmem:[%s2 + $0xc18] sm:$0xff]
  %v510 = vld [vmem:[%s2 + $0xc20] sm:$0xff]
  %v511 = vld [vmem:[%s2 + $0xc28] sm:$0xff]
  %v512 = vld [vmem:[%s2 + $0xc30] sm:$0xff]
  %v513 = vld [vmem:[%s2 + $0xc38] sm:$0xff]
  %v514 = vld [vmem:[%s2 + $0xc40] sm:$0xff]
  %v515 = vld [vmem:[%s2 + $0xc48] sm:$0xff]
  %v516 = vld [vmem:[%s2 + $0xc50] sm:$0xff]
  %v517 = vld [vmem:[%s2 + $0xc58] sm:$0xff]
  %v518 = vld [vmem:[%s2 + $0xc60] sm:$0xff]
  %v519 = vld [vmem:[%s2 + $0xc68] sm:$0xff]
  %v520 = vld [vmem:[%s2 + $0xc70] sm:$0xff]
  %v521 = vld [vmem:[%s2 + $0xc78] sm:$0xff]
  %v522 = vld [vmem:[%s2 + $0xc80] sm:$0xff]
  %v523 = vld [vmem:[%s2 + $0xc88] sm:$0xff]
  %v524 = vld [vmem:[%s2 + $0xc90] sm:$0xff]
  %v525 = vld [vmem:[%s2 + $0xc98] sm:$0xff]
  %v526 = vld [vmem:[%s2 + $0xca0] sm:$0xff]
  %v527 = vld [vmem:[%s2 + $0xca8] sm:$0xff]
  %v528 = vld [vmem:[%s2 + $0xcb0] sm:$0xff]
  %v529 = vld [vmem:[%s2 + $0xcb8] sm:$0xff]
  %v530 = vld [vmem:[%s2 + $0xcc0] sm:$0xff]
  %v531 = vld [vmem:[%s2 + $0xcc8] sm:$0xff]
  %v532 = vld [vmem:[%s2 + $0xcd0] sm:$0xff]
  %v533 = vld [vmem:[%s2 + $0xcd8] sm:$0xff]
  %v534 = vld [vmem:[%s2 + $0xce0] sm:$0xff]
  %v535 = vld [vmem:[%s2 + $0xce8] sm:$0xff]
  %v536 = vld [vmem:[%s2 + $0xcf0] sm:$0xff]
  %v537 = vld [vmem:[%s2 + $0xcf8] sm:$0xff]
  %v538 = vld [vmem:[%s2 + $0xd00] sm:$0xff]
  %v539 = vld [vmem:[%s2 + $0xd08] sm:$0xff]
  %v540 = vld [vmem:[%s2 + $0xd10] sm:$0xff]
  %v541 = vld [vmem:[%s2 + $0xd18] sm:$0xff]
  %v542 = vld [vmem:[%s2 + $0xd20] sm:$0xff]
  %v543 = vld [vmem:[%s2 + $0xd28] sm:$0xff]
  %v544 = vld [vmem:[%s2 + $0xd30] sm:$0xff]
  %v545 = vld [vmem:[%s2 + $0xd38] sm:$0xff]
  %v546 = vld [vmem:[%s2 + $0xd40] sm:$0xff]
  %v547 = vld [vmem:[%s2 + $0xd48] sm:$0xff]
  %v548 = vld [vmem:[%s2 + $0xd50] sm:$0xff]
  %v549 = vld [vmem:[%s2 + $0xd58] sm:$0xff]
  %v550 = vld [vmem:[%s2 + $0xd60] sm:$0xff]
  %v551 = vld [vmem:[%s2 + $0xd68] sm:$0xff]
  %v552 = vld [vmem:[%s2 + $0xd70] sm:$0xff]
  %v553 = vld [vmem:[%s2 + $0xd78] sm:$0xff]
  %v554 = vld [vmem:[%s2 + $0xd80] sm:$0xff]
  %v555 = vld [vmem:[%s2 + $0xd88] sm:$0xff]
  %v556 = vld [vmem:[%s2 + $0xd90] sm:$0xff]
  %v557 = vld [vmem:[%s2 + $0xd98] sm:$0xff]
  %v558 = vld [vmem:[%s2 + $0xda0] sm:$0xff]
  %v559 = vld [vmem:[%s2 + $0xda8] sm:$0xff]
  %v560 = vld [vmem:[%s2 + $0xdb0] sm:$0xff]
  %v561 = vld [vmem:[%s2 + $0xdb8] sm:$0xff]
  %v562 = vld [vmem:[%s2 + $0xdc0] sm:$0xff]
  %v563 = vld [vmem:[%s2 + $0xdc8] sm:$0xff]
  %v564 = vld [vmem:[%s2 + $0xdd0] sm:$0xff]
  %v565 = vld [vmem:[%s2 + $0xdd8] sm:$0xff]
  %v566 = vld [vmem:[%s2 + $0xde0] sm:$0xff]
  %v567 = vld [vmem:[%s2 + $0xde8] sm:$0xff]
  %v568 = vld [vmem:[%s2 + $0xdf0] sm:$0xff]
  %v569 = vld [vmem:[%s2 + $0xdf8] sm:$0xff]
  %v570 = vld [vmem:[%s2 + $0xe00] sm:$0xff]
  %v571 = vld [vmem:[%s2 + $0xe08] sm:$0xff]
  %v572 = vld [vmem:[%s2 + $0xe10] sm:$0xff]
  %v573 = vld [vmem:[%s2 + $0xe18] sm:$0xff]
  %v574 = vld [vmem:[%s2 + $0xe20] sm:$0xff]
  %v575 = vld [vmem:[%s2 + $0xe28] sm:$0xff]
  %v576 = vld [vmem:[%s2 + $0xe30] sm:$0xff]
  %v577 = vld [vmem:[%s2 + $0xe38] sm:$0xff]
  %v578 = vld [vmem:[%s2 + $0xe40] sm:$0xff]
  %v579 = vld [vmem:[%s2 + $0xe48] sm:$0xff]
  %v580 = vld [vmem:[%s2 + $0xe50] sm:$0xff]
  %v581 = vld [vmem:[%s2 + $0xe58] sm:$0xff]
  %v582 = vld [vmem:[%s2 + $0xe60] sm:$0xff]
  %v583 = vld [vmem:[%s2 + $0xe68] sm:$0xff]
  %v584 = vld [vmem:[%s2 + $0xe70] sm:$0xff]
  %v585 = vld [vmem:[%s2 + $0xe78] sm:$0xff]
  %v586 = vld [vmem:[%s2 + $0xe80] sm:$0xff]
  %v587 = vld [vmem:[%s2 + $0xe88] sm:$0xff]
  %v588 = vld [vmem:[%s2 + $0xe90] sm:$0xff]
  %v589 = vld [vmem:[%s2 + $0xe98] sm:$0xff]
  %v590 = vld [vmem:[%s2 + $0xea0] sm:$0xff]
  %v591 = vld [vmem:[%s2 + $0xea8] sm:$0xff]
  %v592 = vld [vmem:[%s2 + $0xeb0] sm:$0xff]
  %v593 = vld [vmem:[%s2 + $0xeb8] sm:$0xff]
  %v594 = vld [vmem:[%s2 + $0xec0] sm:$0xff]
  %v595 = vld [vmem:[%s2 + $0xec8] sm:$0xff]
  %v596 = vld [vmem:[%s2 + $0xed0] sm:$0xff]
  %v597 = vld [vmem:[%s2 + $0xed8] sm:$0xff]
  %v598 = vld [vmem:[%s2 + $0xee0] sm:$0xff]
  %v599 = vld [vmem:[%s2 + $0xee8] sm:$0xff]
  %v600 = vld [vmem:[%s2 + $0xef0] sm:$0xff]
  %v601 = vld [vmem:[%s2 + $0xef8] sm:$0xff]
  %v602 = vld [vmem:[%s2 + $0xf00] sm:$0xff]
  %v603 = vld [vmem:[%s2 + $0xf08] sm:$0xff]
  %v604 = vld [vmem:[%s2 + $0xf10] sm:$0xff]
  %v605 = vld [vmem:[%s2 + $0xf18] sm:$0xff]
  %v606 = vld [vmem:[%s2 + $0xf20] sm:$0xff]
  %v607 = vld [vmem:[%s2 + $0xf28] sm:$0xff]
  %v608 = vld [vmem:[%s2 + $0xf30] sm:$0xff]
  %v609 = vld [vmem:[%s2 + $0xf38] sm:$0xff]
  %v610 = vld [vmem:[%s2 + $0xf40] sm:$0xff]
  %v611 = vld [vmem:[%s2 + $0xf48] sm:$0xff]
  %v612 = vld [vmem:[%s2 + $0xf50] sm:$0xff]
  %v613 = vld [vmem:[%s2 + $0xf58] sm:$0xff]
  %v614 = vld [vmem:[%s2 + $0xf60] sm:$0xff]
  %v615 = vld [vmem:[%s2 + $0xf68] sm:$0xff]
  %v616 = vld [vmem:[%s2 + $0xf70] sm:$0xff]
  %v617 = vld [vmem:[%s2 + $0xf78] sm:$0xff]
  %v618 = vld [vmem:[%s2 + $0xf80] sm:$0xff]
  %v619 = vld [vmem:[%s2 + $0xf88] sm:$0xff]
  %v620 = vld [vmem:[%s2 + $0xf90] sm:$0xff]
  %v621 = vld [vmem:[%s2 + $0xf98] sm:$0xff]
  %v622 = vld [vmem:[%s2 + $0xfa0] sm:$0xff]
  %v623 = vld [vmem:[%s2 + $0xfa8] sm:$0xff]
  %v624 = vld [vmem:[%s2 + $0xfb0] sm:$0xff]
  %v625 = vld [vmem:[%s2 + $0xfb8] sm:$0xff]
  %v626 = vld [vmem:[%s2 + $0xfc0] sm:$0xff]
  %v627 = vld [vmem:[%s2 + $0xfc8] sm:$0xff]
  %v628 = vld [vmem:[%s2 + $0xfd0] sm:$0xff]
  %v629 = vld [vmem:[%s2 + $0xfd8] sm:$0xff]
  %v630 = vld [vmem:[%s2 + $0xfe0] sm:$0xff]
  %v631 = vld [vmem:[%s2 + $0xfe8] sm:$0xff]
  %v632 = vld [vmem:[%s2 + $0xff0] sm:$0xff]
  %v633 = vld [vmem:[%s2 + $0xff8] sm:$0xff]
  %v634 = vld [vmem:[%s2 + $0x1000] sm:$0xff]
  %v635 = vld [vmem:[%s2 + $0x1008] sm:$0xff]
  %v636 = vld [vmem:[%s2 + $0x1010] sm:$0xff]
  %v637 = vld [vmem:[%s2 + $0x1018] sm:$0xff]
  %v638 = vld [vmem:[%s2 + $0x1020] sm:$0xff]
  %v639 = vld [vmem:[%s2 + $0x1028] sm:$0xff]
  %v640 = vld [vmem:[%s2 + $0x1030] sm:$0xff]
  %v641 = vld [vmem:[%s2 + $0x1038] sm:$0xff]
  %v642 = vld [vmem:[%s2 + $0x1040] sm:$0xff]
  %v643 = vld [vmem:[%s2 + $0x1048] sm:$0xff]
  %v644 = vld [vmem:[%s2 + $0x1050] sm:$0xff]
  %v645 = vld [vmem:[%s2 + $0x1058] sm:$0xff]
  %v646 = vld [vmem:[%s2 + $0x1060] sm:$0xff]
  %v647 = vld [vmem:[%s2 + $0x1068] sm:$0xff]
  %v648 = vld [vmem:[%s2 + $0x1070] sm:$0xff]
  %v649 = vld [vmem:[%s2 + $0x1078] sm:$0xff]
  %v650 = vld [vmem:[%s2 + $0x1080] sm:$0xff]
  %v651 = vld [vmem:[%s2 + $0x1088] sm:$0xff]
  %v652 = vld [vmem:[%s2 + $0x1090] sm:$0xff]
  %v653 = vld [vmem:[%s2 + $0x1098] sm:$0xff]
  %v654 = vld [vmem:[%s2 + $0x10a0] sm:$0xff]
  %v655 = vld [vmem:[%s2 + $0x10a8] sm:$0xff]
  %v656 = vld [vmem:[%s2 + $0x10b0] sm:$0xff]
  %v657 = vld [vmem:[%s2 + $0x10b8] sm:$0xff]
  %v658 = vld [vmem:[%s2 + $0x10c0] sm:$0xff]
  %v659 = vld [vmem:[%s2 + $0x10c8] sm:$0xff]
  %v660 = vld [vmem:[%s2 + $0x10d0] sm:$0xff]
  %v661 = vld [vmem:[%s2 + $0x10d8] sm:$0xff]
  %v662 = vld [vmem:[%s2 + $0x10e0] sm:$0xff]
  %v663 = vld [vmem:[%s2 + $0x10e8] sm:$0xff]
  %v664 = vld [vmem:[%s2 + $0x10f0] sm:$0xff]
  %v665 = vld [vmem:[%s2 + $0x10f8] sm:$0xff]
  %v666 = vld [vmem:[%s2 + $0x1100] sm:$0xff]
  %v667 = vld [vmem:[%s2 + $0x1108] sm:$0xff]
  %v668 = vld [vmem:[%s2 + $0x1110] sm:$0xff]
  %v669 = vld [vmem:[%s2 + $0x1118] sm:$0xff]
  %v670 = vld [vmem:[%s2 + $0x1120] sm:$0xff]
  %v671 = vld [vmem:[%s2 + $0x1128] sm:$0xff]
  %v672 = vld [vmem:[%s2 + $0x1130] sm:$0xff]
  %v673 = vld [vmem:[%s2 + $0x1138] sm:$0xff]
  %v674 = vld [vmem:[%s2 + $0x1140] sm:$0xff]
  %v675 = vld [vmem:[%s2 + $0x1148] sm:$0xff]
  %v676 = vld [vmem:[%s2 + $0x1150] sm:$0xff]
  %v677 = vld [vmem:[%s2 + $0x1158] sm:$0xff]
  %v678 = vld [vmem:[%s2 + $0x1160] sm:$0xff]
  %v679 = vld [vmem:[%s2 + $0x1168] sm:$0xff]
  %v680 = vld [vmem:[%s2 + $0x1170] sm:$0xff]
  %v681 = vld [vmem:[%s2 + $0x1178] sm:$0xff]
  %v682 = vld [vmem:[%s2 + $0x1180] sm:$0xff]
  %v683 = vld [vmem:[%s2 + $0x1188] sm:$0xff]
  %v684 = vld [vmem:[%s2 + $0x1190] sm:$0xff]
  %v685 = vld [vmem:[%s2 + $0x1198] sm:$0xff]
  %v686 = vld [vmem:[%s2 + $0x11a0] sm:$0xff]
  %v687 = vld [vmem:[%s2 + $0x11a8] sm:$0xff]
  %v688 = vld [vmem:[%s2 + $0x11b0] sm:$0xff]
  %v689 = vld [vmem:[%s2 + $0x11b8] sm:$0xff]
  %v690 = vld [vmem:[%s2 + $0x11c0] sm:$0xff]
  %v691 = vld [vmem:[%s2 + $0x11c8] sm:$0xff]
  %v692 = vld [vmem:[%s2 + $0x11d0] sm:$0xff]
  %v693 = vld [vmem:[%s2 + $0x11d8] sm:$0xff]
  %v694 = vld [vmem:[%s2 + $0x11e0] sm:$0xff]
  %v695 = vld [vmem:[%s2 + $0x11e8] sm:$0xff]
  %v696 = vld [vmem:[%s2 + $0x11f0] sm:$0xff]
  %v697 = vld [vmem:[%s2 + $0x11f8] sm:$0xff]
  %v698 = vld [vmem:[%s2 + $0x1200] sm:$0xff]
  %v699 = vld [vmem:[%s2 + $0x1208] sm:$0xff]
  %v700 = vld [vmem:[%s2 + $0x1210] sm:$0xff]
  %v701 = vld [vmem:[%s2 + $0x1218] sm:$0xff]
  %v702 = vld [vmem:[%s2 + $0x1220] sm:$0xff]
  %v703 = vld [vmem:[%s2 + $0x1228] sm:$0xff]
  %v704 = vld [vmem:[%s2 + $0x1230] sm:$0xff]
  %v705 = vld [vmem:[%s2 + $0x1238] sm:$0xff]
  %v706 = vld [vmem:[%s2 + $0x1240] sm:$0xff]
  %v707 = vld [vmem:[%s2 + $0x1248] sm:$0xff]
  %v708 = vld [vmem:[%s2 + $0x1250] sm:$0xff]
  %v709 = vld [vmem:[%s2 + $0x1258] sm:$0xff]
  %v710 = vld [vmem:[%s2 + $0x1260] sm:$0xff]
  %v711 = vld [vmem:[%s2 + $0x1268] sm:$0xff]
  %v712 = vld [vmem:[%s2 + $0x1270] sm:$0xff]
  %v713 = vld [vmem:[%s2 + $0x1278] sm:$0xff]
  %v714 = vld [vmem:[%s2 + $0x1280] sm:$0xff]
  %v715 = vld [vmem:[%s2 + $0x1288] sm:$0xff]
  %v716 = vld [vmem:[%s2 + $0x1290] sm:$0xff]
  %v717 = vld [vmem:[%s2 + $0x1298] sm:$0xff]
  %v718 = vld [vmem:[%s2 + $0x12a0] sm:$0xff]
  %v719 = vld [vmem:[%s2 + $0x12a8] sm:$0xff]
  %v720 = vld [vmem:[%s2 + $0x12b0] sm:$0xff]
  %v721 = vld [vmem:[%s2 + $0x12b8] sm:$0xff]
  %v722 = vld [vmem:[%s2 + $0x12c0] sm:$0xff]
  %v723 = vld [vmem:[%s2 + $0x12c8] sm:$0xff]
  %v724 = vld [vmem:[%s2 + $0x12d0] sm:$0xff]
  %v725 = vld [vmem:[%s2 + $0x12d8] sm:$0xff]
  %v726 = vld [vmem:[%s2 + $0x12e0] sm:$0xff]
  %v727 = vld [vmem:[%s2 + $0x12e8] sm:$0xff]
  %v728 = vld [vmem:[%s2 + $0x12f0] sm:$0xff]
  %v729 = vld [vmem:[%s2 + $0x12f8] sm:$0xff]
  %v730 = vld [vmem:[%s2 + $0x1300] sm:$0xff]
  %v731 = vld [vmem:[%s2 + $0x1308] sm:$0xff]
  %v732 = vld [vmem:[%s2 + $0x1310] sm:$0xff]
  %v733 = vld [vmem:[%s2 + $0x1318] sm:$0xff]
  %v734 = vld [vmem:[%s2 + $0x1320] sm:$0xff]
  %v735 = vld [vmem:[%s2 + $0x1328] sm:$0xff]
  %v736 = vld [vmem:[%s2 + $0x1330] sm:$0xff]
  %v737 = vld [vmem:[%s2 + $0x1338] sm:$0xff]
  %v738 = vld [vmem:[%s2 + $0x1340] sm:$0xff]
  %v739 = vld [vmem:[%s2 + $0x1348] sm:$0xff]
  %v740 = vld [vmem:[%s2 + $0x1350] sm:$0xff]
  %v741 = vld [vmem:[%s2 + $0x1358] sm:$0xff]
  %v742 = vld [vmem:[%s2 + $0x1360] sm:$0xff]
  %v743 = vld [vmem:[%s2 + $0x1368] sm:$0xff]
  %v744 = vld [vmem:[%s2 + $0x1370] sm:$0xff]
  %v745 = vld [vmem:[%s2 + $0x1378] sm:$0xff]
  %v746 = vld [vmem:[%s2 + $0x1380] sm:$0xff]
  %v747 = vld [vmem:[%s2 + $0x1388] sm:$0xff]
  %v748 = vld [vmem:[%s2 + $0x1390] sm:$0xff]
  %v749 = vld [vmem:[%s2 + $0x1398] sm:$0xff]
  %v750 = vld [vmem:[%s2 + $0x13a0] sm:$0xff]
  %v751 = vld [vmem:[%s2 + $0x13a8] sm:$0xff]
  %v752 = vld [vmem:[%s2 + $0x13b0] sm:$0xff]
  %v753 = vld [vmem:[%s2 + $0x13b8] sm:$0xff]
  %v754 = vld [vmem:[%s2 + $0x13c0] sm:$0xff]
  %v755 = vld [vmem:[%s2 + $0x13c8] sm:$0xff]
  %v756 = vld [vmem:[%s2 + $0x13d0] sm:$0xff]
  %v757 = vld [vmem:[%s2 + $0x13d8] sm:$0xff]
  %v758 = vld [vmem:[%s2 + $0x13e0] sm:$0xff]
  %v759 = vld [vmem:[%s2 + $0x13e8] sm:$0xff]
  %v760 = vld [vmem:[%s2 + $0x13f0] sm:$0xff]
  %v761 = vld [vmem:[%s2 + $0x13f8] sm:$0xff]
  %v1402 = vunpack.c.l.b16 %v122
  %v1403 = vunpack.c.h.b16 %v122
  %v1404 = vunpack.c.l.b16 %v123
  %v1405 = vunpack.c.h.b16 %v123
  %v1406 = vunpack.c.l.b16 %v124
  %v1407 = vunpack.c.h.b16 %v124
  %v1408 = vunpack.c.l.b16 %v125
  %v1409 = vunpack.c.h.b16 %v125
  %v1410 = vunpack.c.l.b16 %v126
  %v1411 = vunpack.c.h.b16 %v126
  %v1412 = vunpack.c.l.b16 %v127
  %v1413 = vunpack.c.h.b16 %v127
  %v1414 = vunpack.c.l.b16 %v128
  %v1415 = vunpack.c.h.b16 %v128
  %v1416 = vunpack.c.l.b16 %v129
  %v1417 = vunpack.c.h.b16 %v129
  %v1418 = vunpack.c.l.b16 %v130
  %v1419 = vunpack.c.h.b16 %v130
  %v1420 = vunpack.c.l.b16 %v131
  %v1421 = vunpack.c.h.b16 %v131
  %v1422 = vunpack.c.l.b16 %v132
  %v1423 = vunpack.c.h.b16 %v132
  %v1424 = vunpack.c.l.b16 %v133
  %v1425 = vunpack.c.h.b16 %v133
  %v1426 = vunpack.c.l.b16 %v134
  %v1427 = vunpack.c.h.b16 %v134
  %v1428 = vunpack.c.l.b16 %v135
  %v1429 = vunpack.c.h.b16 %v135
  %v1430 = vunpack.c.l.b16 %v136
  %v1431 = vunpack.c.h.b16 %v136
  %v1432 = vunpack.c.l.b16 %v137
  %v1433 = vunpack.c.h.b16 %v137
  %v1434 = vunpack.c.l.b16 %v138
  %v1435 = vunpack.c.h.b16 %v138
  %v1436 = vunpack.c.l.b16 %v139
  %v1437 = vunpack.c.h.b16 %v139
  %v1438 = vunpack.c.l.b16 %v140
  %v1439 = vunpack.c.h.b16 %v140
  %v1440 = vunpack.c.l.b16 %v141
  %v1441 = vunpack.c.h.b16 %v141
  %v1442 = vunpack.c.l.b16 %v142
  %v1443 = vunpack.c.h.b16 %v142
  %v1444 = vunpack.c.l.b16 %v143
  %v1445 = vunpack.c.h.b16 %v143
  %v1446 = vunpack.c.l.b16 %v144
  %v1447 = vunpack.c.h.b16 %v144
  %v1448 = vunpack.c.l.b16 %v145
  %v1449 = vunpack.c.h.b16 %v145
  %v1450 = vunpack.c.l.b16 %v146
  %v1451 = vunpack.c.h.b16 %v146
  %v1452 = vunpack.c.l.b16 %v147
  %v1453 = vunpack.c.h.b16 %v147
  %v1454 = vunpack.c.l.b16 %v148
  %v1455 = vunpack.c.h.b16 %v148
  %v1456 = vunpack.c.l.b16 %v149
  %v1457 = vunpack.c.h.b16 %v149
  %v1458 = vunpack.c.l.b16 %v150
  %v1459 = vunpack.c.h.b16 %v150
  %v1460 = vunpack.c.l.b16 %v151
  %v1461 = vunpack.c.h.b16 %v151
  %v1462 = vunpack.c.l.b16 %v152
  %v1463 = vunpack.c.h.b16 %v152
  %v1464 = vunpack.c.l.b16 %v153
  %v1465 = vunpack.c.h.b16 %v153
  %v1466 = vunpack.c.l.b16 %v154
  %v1467 = vunpack.c.h.b16 %v154
  %v1468 = vunpack.c.l.b16 %v155
  %v1469 = vunpack.c.h.b16 %v155
  %v1470 = vunpack.c.l.b16 %v156
  %v1471 = vunpack.c.h.b16 %v156
  %v1472 = vunpack.c.l.b16 %v157
  %v1473 = vunpack.c.h.b16 %v157
  %v1474 = vunpack.c.l.b16 %v158
  %v1475 = vunpack.c.h.b16 %v158
  %v1476 = vunpack.c.l.b16 %v159
  %v1477 = vunpack.c.h.b16 %v159
  %v1478 = vunpack.c.l.b16 %v160
  %v1479 = vunpack.c.h.b16 %v160
  %v1480 = vunpack.c.l.b16 %v161
  %v1481 = vunpack.c.h.b16 %v161
  %v1482 = vunpack.c.l.b16 %v162
  %v1483 = vunpack.c.h.b16 %v162
  %v1484 = vunpack.c.l.b16 %v163
  %v1485 = vunpack.c.h.b16 %v163
  %v1486 = vunpack.c.l.b16 %v164
  %v1487 = vunpack.c.h.b16 %v164
  %v1488 = vunpack.c.l.b16 %v165
  %v1489 = vunpack.c.h.b16 %v165
  %v1490 = vunpack.c.l.b16 %v166
  %v1491 = vunpack.c.h.b16 %v166
  %v1492 = vunpack.c.l.b16 %v167
  %v1493 = vunpack.c.h.b16 %v167
  %v1494 = vunpack.c.l.b16 %v168
  %v1495 = vunpack.c.h.b16 %v168
  %v1496 = vunpack.c.l.b16 %v169
  %v1497 = vunpack.c.h.b16 %v169
  %v1498 = vunpack.c.l.b16 %v170
  %v1499 = vunpack.c.h.b16 %v170
  %v1500 = vunpack.c.l.b16 %v171
  %v1501 = vunpack.c.h.b16 %v171
  %v1502 = vunpack.c.l.b16 %v172
  %v1503 = vunpack.c.h.b16 %v172
  %v1504 = vunpack.c.l.b16 %v173
  %v1505 = vunpack.c.h.b16 %v173
  %v1506 = vunpack.c.l.b16 %v174
  %v1507 = vunpack.c.h.b16 %v174
  %v1508 = vunpack.c.l.b16 %v175
  %v1509 = vunpack.c.h.b16 %v175
  %v1510 = vunpack.c.l.b16 %v176
  %v1511 = vunpack.c.h.b16 %v176
  %v1512 = vunpack.c.l.b16 %v177
  %v1513 = vunpack.c.h.b16 %v177
  %v1514 = vunpack.c.l.b16 %v178
  %v1515 = vunpack.c.h.b16 %v178
  %v1516 = vunpack.c.l.b16 %v179
  %v1517 = vunpack.c.h.b16 %v179
  %v1518 = vunpack.c.l.b16 %v180
  %v1519 = vunpack.c.h.b16 %v180
  %v1520 = vunpack.c.l.b16 %v181
  %v1521 = vunpack.c.h.b16 %v181
  %v1522 = vunpack.c.l.b16 %v182
  %v1523 = vunpack.c.h.b16 %v182
  %v1524 = vunpack.c.l.b16 %v183
  %v1525 = vunpack.c.h.b16 %v183
  %v1526 = vunpack.c.l.b16 %v184
  %v1527 = vunpack.c.h.b16 %v184
  %v1528 = vunpack.c.l.b16 %v185
  %v1529 = vunpack.c.h.b16 %v185
  %v1530 = vunpack.c.l.b16 %v186
  %v1531 = vunpack.c.h.b16 %v186
  %v1532 = vunpack.c.l.b16 %v187
  %v1533 = vunpack.c.h.b16 %v187
  %v1534 = vunpack.c.l.b16 %v188
  %v1535 = vunpack.c.h.b16 %v188
  %v1536 = vunpack.c.l.b16 %v189
  %v1537 = vunpack.c.h.b16 %v189
  %v1538 = vunpack.c.l.b16 %v190
  %v1539 = vunpack.c.h.b16 %v190
  %v1540 = vunpack.c.l.b16 %v191
  %v1541 = vunpack.c.h.b16 %v191
  %v1542 = vunpack.c.l.b16 %v192
  %v1543 = vunpack.c.h.b16 %v192
  %v1544 = vunpack.c.l.b16 %v193
  %v1545 = vunpack.c.h.b16 %v193
  %v1546 = vunpack.c.l.b16 %v194
  %v1547 = vunpack.c.h.b16 %v194
  %v1548 = vunpack.c.l.b16 %v195
  %v1549 = vunpack.c.h.b16 %v195
  %v1550 = vunpack.c.l.b16 %v196
  %v1551 = vunpack.c.h.b16 %v196
  %v1552 = vunpack.c.l.b16 %v197
  %v1553 = vunpack.c.h.b16 %v197
  %v1554 = vunpack.c.l.b16 %v198
  %v1555 = vunpack.c.h.b16 %v198
  %v1556 = vunpack.c.l.b16 %v199
  %v1557 = vunpack.c.h.b16 %v199
  %v1558 = vunpack.c.l.b16 %v200
  %v1559 = vunpack.c.h.b16 %v200
  %v1560 = vunpack.c.l.b16 %v201
  %v1561 = vunpack.c.h.b16 %v201
  %v1562 = vunpack.c.l.b16 %v202
  %v1563 = vunpack.c.h.b16 %v202
  %v1564 = vunpack.c.l.b16 %v203
  %v1565 = vunpack.c.h.b16 %v203
  %v1566 = vunpack.c.l.b16 %v204
  %v1567 = vunpack.c.h.b16 %v204
  %v1568 = vunpack.c.l.b16 %v205
  %v1569 = vunpack.c.h.b16 %v205
  %v1570 = vunpack.c.l.b16 %v206
  %v1571 = vunpack.c.h.b16 %v206
  %v1572 = vunpack.c.l.b16 %v207
  %v1573 = vunpack.c.h.b16 %v207
  %v1574 = vunpack.c.l.b16 %v208
  %v1575 = vunpack.c.h.b16 %v208
  %v1576 = vunpack.c.l.b16 %v209
  %v1577 = vunpack.c.h.b16 %v209
  %v1578 = vunpack.c.l.b16 %v210
  %v1579 = vunpack.c.h.b16 %v210
  %v1580 = vunpack.c.l.b16 %v211
  %v1581 = vunpack.c.h.b16 %v211
  %v1582 = vunpack.c.l.b16 %v212
  %v1583 = vunpack.c.h.b16 %v212
  %v1584 = vunpack.c.l.b16 %v213
  %v1585 = vunpack.c.h.b16 %v213
  %v1586 = vunpack.c.l.b16 %v214
  %v1587 = vunpack.c.h.b16 %v214
  %v1588 = vunpack.c.l.b16 %v215
  %v1589 = vunpack.c.h.b16 %v215
  %v1590 = vunpack.c.l.b16 %v216
  %v1591 = vunpack.c.h.b16 %v216
  %v1592 = vunpack.c.l.b16 %v217
  %v1593 = vunpack.c.h.b16 %v217
  %v1594 = vunpack.c.l.b16 %v218
  %v1595 = vunpack.c.h.b16 %v218
  %v1596 = vunpack.c.l.b16 %v219
  %v1597 = vunpack.c.h.b16 %v219
  %v1598 = vunpack.c.l.b16 %v220
  %v1599 = vunpack.c.h.b16 %v220
  %v1600 = vunpack.c.l.b16 %v221
  %v1601 = vunpack.c.h.b16 %v221
  %v1602 = vunpack.c.l.b16 %v222
  %v1603 = vunpack.c.h.b16 %v222
  %v1604 = vunpack.c.l.b16 %v223
  %v1605 = vunpack.c.h.b16 %v223
  %v1606 = vunpack.c.l.b16 %v224
  %v1607 = vunpack.c.h.b16 %v224
  %v1608 = vunpack.c.l.b16 %v225
  %v1609 = vunpack.c.h.b16 %v225
  %v1610 = vunpack.c.l.b16 %v226
  %v1611 = vunpack.c.h.b16 %v226
  %v1612 = vunpack.c.l.b16 %v227
  %v1613 = vunpack.c.h.b16 %v227
  %v1614 = vunpack.c.l.b16 %v228
  %v1615 = vunpack.c.h.b16 %v228
  %v1616 = vunpack.c.l.b16 %v229
  %v1617 = vunpack.c.h.b16 %v229
  %v1618 = vunpack.c.l.b16 %v230
  %v1619 = vunpack.c.h.b16 %v230
  %v1620 = vunpack.c.l.b16 %v231
  %v1621 = vunpack.c.h.b16 %v231
  %v1622 = vunpack.c.l.b16 %v232
  %v1623 = vunpack.c.h.b16 %v232
  %v1624 = vunpack.c.l.b16 %v233
  %v1625 = vunpack.c.h.b16 %v233
  %v1626 = vunpack.c.l.b16 %v234
  %v1627 = vunpack.c.h.b16 %v234
  %v1628 = vunpack.c.l.b16 %v235
  %v1629 = vunpack.c.h.b16 %v235
  %v1630 = vunpack.c.l.b16 %v236
  %v1631 = vunpack.c.h.b16 %v236
  %v1632 = vunpack.c.l.b16 %v237
  %v1633 = vunpack.c.h.b16 %v237
  %v1634 = vunpack.c.l.b16 %v238
  %v1635 = vunpack.c.h.b16 %v238
  %v1636 = vunpack.c.l.b16 %v239
  %v1637 = vunpack.c.h.b16 %v239
  %v1638 = vunpack.c.l.b16 %v240
  %v1639 = vunpack.c.h.b16 %v240
  %v1640 = vunpack.c.l.b16 %v241
  %v1641 = vunpack.c.h.b16 %v241
  %v1642 = vunpack.c.l.b16 %v242
  %v1643 = vunpack.c.h.b16 %v242
  %v1644 = vunpack.c.l.b16 %v243
  %v1645 = vunpack.c.h.b16 %v243
  %v1646 = vunpack.c.l.b16 %v244
  %v1647 = vunpack.c.h.b16 %v244
  %v1648 = vunpack.c.l.b16 %v245
  %v1649 = vunpack.c.h.b16 %v245
  %v1650 = vunpack.c.l.b16 %v246
  %v1651 = vunpack.c.h.b16 %v246
  %v1652 = vunpack.c.l.b16 %v247
  %v1653 = vunpack.c.h.b16 %v247
  %v1654 = vunpack.c.l.b16 %v248
  %v1655 = vunpack.c.h.b16 %v248
  %v1656 = vunpack.c.l.b16 %v249
  %v1657 = vunpack.c.h.b16 %v249
  %v1658 = vunpack.c.l.b16 %v250
  %v1659 = vunpack.c.h.b16 %v250
  %v1660 = vunpack.c.l.b16 %v251
  %v1661 = vunpack.c.h.b16 %v251
  %v1662 = vunpack.c.l.b16 %v252
  %v1663 = vunpack.c.h.b16 %v252
  %v1664 = vunpack.c.l.b16 %v253
  %v1665 = vunpack.c.h.b16 %v253
  %v1666 = vunpack.c.l.b16 %v254
  %v1667 = vunpack.c.h.b16 %v254
  %v1668 = vunpack.c.l.b16 %v255
  %v1669 = vunpack.c.h.b16 %v255
  %v1670 = vunpack.c.l.b16 %v256
  %v1671 = vunpack.c.h.b16 %v256
  %v1672 = vunpack.c.l.b16 %v257
  %v1673 = vunpack.c.h.b16 %v257
  %v1674 = vunpack.c.l.b16 %v258
  %v1675 = vunpack.c.h.b16 %v258
  %v1676 = vunpack.c.l.b16 %v259
  %v1677 = vunpack.c.h.b16 %v259
  %v1678 = vunpack.c.l.b16 %v260
  %v1679 = vunpack.c.h.b16 %v260
  %v1680 = vunpack.c.l.b16 %v261
  %v1681 = vunpack.c.h.b16 %v261
  %v1682 = vunpack.c.l.b16 %v262
  %v1683 = vunpack.c.h.b16 %v262
  %v1684 = vunpack.c.l.b16 %v263
  %v1685 = vunpack.c.h.b16 %v263
  %v1686 = vunpack.c.l.b16 %v264
  %v1687 = vunpack.c.h.b16 %v264
  %v1688 = vunpack.c.l.b16 %v265
  %v1689 = vunpack.c.h.b16 %v265
  %v1690 = vunpack.c.l.b16 %v266
  %v1691 = vunpack.c.h.b16 %v266
  %v1692 = vunpack.c.l.b16 %v267
  %v1693 = vunpack.c.h.b16 %v267
  %v1694 = vunpack.c.l.b16 %v268
  %v1695 = vunpack.c.h.b16 %v268
  %v1696 = vunpack.c.l.b16 %v269
  %v1697 = vunpack.c.h.b16 %v269
  %v1698 = vunpack.c.l.b16 %v270
  %v1699 = vunpack.c.h.b16 %v270
  %v1700 = vunpack.c.l.b16 %v271
  %v1701 = vunpack.c.h.b16 %v271
  %v1702 = vunpack.c.l.b16 %v272
  %v1703 = vunpack.c.h.b16 %v272
  %v1704 = vunpack.c.l.b16 %v273
  %v1705 = vunpack.c.h.b16 %v273
  %v1706 = vunpack.c.l.b16 %v274
  %v1707 = vunpack.c.h.b16 %v274
  %v1708 = vunpack.c.l.b16 %v275
  %v1709 = vunpack.c.h.b16 %v275
  %v1710 = vunpack.c.l.b16 %v276
  %v1711 = vunpack.c.h.b16 %v276
  %v1712 = vunpack.c.l.b16 %v277
  %v1713 = vunpack.c.h.b16 %v277
  %v1714 = vunpack.c.l.b16 %v278
  %v1715 = vunpack.c.h.b16 %v278
  %v1716 = vunpack.c.l.b16 %v279
  %v1717 = vunpack.c.h.b16 %v279
  %v1718 = vunpack.c.l.b16 %v280
  %v1719 = vunpack.c.h.b16 %v280
  %v1720 = vunpack.c.l.b16 %v281
  %v1721 = vunpack.c.h.b16 %v281
  %v1722 = vunpack.c.l.b16 %v282
  %v1723 = vunpack.c.h.b16 %v282
  %v1724 = vunpack.c.l.b16 %v283
  %v1725 = vunpack.c.h.b16 %v283
  %v1726 = vunpack.c.l.b16 %v284
  %v1727 = vunpack.c.h.b16 %v284
  %v1728 = vunpack.c.l.b16 %v285
  %v1729 = vunpack.c.h.b16 %v285
  %v1730 = vunpack.c.l.b16 %v286
  %v1731 = vunpack.c.h.b16 %v286
  %v1732 = vunpack.c.l.b16 %v287
  %v1733 = vunpack.c.h.b16 %v287
  %v1734 = vunpack.c.l.b16 %v288
  %v1735 = vunpack.c.h.b16 %v288
  %v1736 = vunpack.c.l.b16 %v289
  %v1737 = vunpack.c.h.b16 %v289
  %v1738 = vunpack.c.l.b16 %v290
  %v1739 = vunpack.c.h.b16 %v290
  %v1740 = vunpack.c.l.b16 %v291
  %v1741 = vunpack.c.h.b16 %v291
  %v1742 = vunpack.c.l.b16 %v292
  %v1743 = vunpack.c.h.b16 %v292
  %v1744 = vunpack.c.l.b16 %v293
  %v1745 = vunpack.c.h.b16 %v293
  %v1746 = vunpack.c.l.b16 %v294
  %v1747 = vunpack.c.h.b16 %v294
  %v1748 = vunpack.c.l.b16 %v295
  %v1749 = vunpack.c.h.b16 %v295
  %v1750 = vunpack.c.l.b16 %v296
  %v1751 = vunpack.c.h.b16 %v296
  %v1752 = vunpack.c.l.b16 %v297
  %v1753 = vunpack.c.h.b16 %v297
  %v1754 = vunpack.c.l.b16 %v298
  %v1755 = vunpack.c.h.b16 %v298
  %v1756 = vunpack.c.l.b16 %v299
  %v1757 = vunpack.c.h.b16 %v299
  %v1758 = vunpack.c.l.b16 %v300
  %v1759 = vunpack.c.h.b16 %v300
  %v1760 = vunpack.c.l.b16 %v301
  %v1761 = vunpack.c.h.b16 %v301
  %v1762 = vunpack.c.l.b16 %v302
  %v1763 = vunpack.c.h.b16 %v302
  %v1764 = vunpack.c.l.b16 %v303
  %v1765 = vunpack.c.h.b16 %v303
  %v1766 = vunpack.c.l.b16 %v304
  %v1767 = vunpack.c.h.b16 %v304
  %v1768 = vunpack.c.l.b16 %v305
  %v1769 = vunpack.c.h.b16 %v305
  %v1770 = vunpack.c.l.b16 %v306
  %v1771 = vunpack.c.h.b16 %v306
  %v1772 = vunpack.c.l.b16 %v307
  %v1773 = vunpack.c.h.b16 %v307
  %v1774 = vunpack.c.l.b16 %v308
  %v1775 = vunpack.c.h.b16 %v308
  %v1776 = vunpack.c.l.b16 %v309
  %v1777 = vunpack.c.h.b16 %v309
  %v1778 = vunpack.c.l.b16 %v310
  %v1779 = vunpack.c.h.b16 %v310
  %v1780 = vunpack.c.l.b16 %v311
  %v1781 = vunpack.c.h.b16 %v311
  %v1782 = vunpack.c.l.b16 %v312
  %v1783 = vunpack.c.h.b16 %v312
  %v1784 = vunpack.c.l.b16 %v313
  %v1785 = vunpack.c.h.b16 %v313
  %v1786 = vunpack.c.l.b16 %v314
  %v1787 = vunpack.c.h.b16 %v314
  %v1788 = vunpack.c.l.b16 %v315
  %v1789 = vunpack.c.h.b16 %v315
  %v1790 = vunpack.c.l.b16 %v316
  %v1791 = vunpack.c.h.b16 %v316
  %v1792 = vunpack.c.l.b16 %v317
  %v1793 = vunpack.c.h.b16 %v317
  %v1794 = vunpack.c.l.b16 %v318
  %v1795 = vunpack.c.h.b16 %v318
  %v1796 = vunpack.c.l.b16 %v319
  %v1797 = vunpack.c.h.b16 %v319
  %v1798 = vunpack.c.l.b16 %v320
  %v1799 = vunpack.c.h.b16 %v320
  %v1800 = vunpack.c.l.b16 %v321
  %v1801 = vunpack.c.h.b16 %v321
  %v1802 = vunpack.c.l.b16 %v322
  %v1803 = vunpack.c.h.b16 %v322
  %v1804 = vunpack.c.l.b16 %v323
  %v1805 = vunpack.c.h.b16 %v323
  %v1806 = vunpack.c.l.b16 %v324
  %v1807 = vunpack.c.h.b16 %v324
  %v1808 = vunpack.c.l.b16 %v325
  %v1809 = vunpack.c.h.b16 %v325
  %v1810 = vunpack.c.l.b16 %v326
  %v1811 = vunpack.c.h.b16 %v326
  %v1812 = vunpack.c.l.b16 %v327
  %v1813 = vunpack.c.h.b16 %v327
  %v1814 = vunpack.c.l.b16 %v328
  %v1815 = vunpack.c.h.b16 %v328
  %v1816 = vunpack.c.l.b16 %v329
  %v1817 = vunpack.c.h.b16 %v329
  %v1818 = vunpack.c.l.b16 %v330
  %v1819 = vunpack.c.h.b16 %v330
  %v1820 = vunpack.c.l.b16 %v331
  %v1821 = vunpack.c.h.b16 %v331
  %v1822 = vunpack.c.l.b16 %v332
  %v1823 = vunpack.c.h.b16 %v332
  %v1824 = vunpack.c.l.b16 %v333
  %v1825 = vunpack.c.h.b16 %v333
  %v1826 = vunpack.c.l.b16 %v334
  %v1827 = vunpack.c.h.b16 %v334
  %v1828 = vunpack.c.l.b16 %v335
  %v1829 = vunpack.c.h.b16 %v335
  %v1830 = vunpack.c.l.b16 %v336
  %v1831 = vunpack.c.h.b16 %v336
  %v1832 = vunpack.c.l.b16 %v337
  %v1833 = vunpack.c.h.b16 %v337
  %v1834 = vunpack.c.l.b16 %v338
  %v1835 = vunpack.c.h.b16 %v338
  %v1836 = vunpack.c.l.b16 %v339
  %v1837 = vunpack.c.h.b16 %v339
  %v1838 = vunpack.c.l.b16 %v340
  %v1839 = vunpack.c.h.b16 %v340
  %v1840 = vunpack.c.l.b16 %v341
  %v1841 = vunpack.c.h.b16 %v341
  %v1842 = vunpack.c.l.b16 %v342
  %v1843 = vunpack.c.h.b16 %v342
  %v1844 = vunpack.c.l.b16 %v343
  %v1845 = vunpack.c.h.b16 %v343
  %v1846 = vunpack.c.l.b16 %v344
  %v1847 = vunpack.c.h.b16 %v344
  %v1848 = vunpack.c.l.b16 %v345
  %v1849 = vunpack.c.h.b16 %v345
  %v1850 = vunpack.c.l.b16 %v346
  %v1851 = vunpack.c.h.b16 %v346
  %v1852 = vunpack.c.l.b16 %v347
  %v1853 = vunpack.c.h.b16 %v347
  %v1854 = vunpack.c.l.b16 %v348
  %v1855 = vunpack.c.h.b16 %v348
  %v1856 = vunpack.c.l.b16 %v349
  %v1857 = vunpack.c.h.b16 %v349
  %v1858 = vunpack.c.l.b16 %v350
  %v1859 = vunpack.c.h.b16 %v350
  %v1860 = vunpack.c.l.b16 %v351
  %v1861 = vunpack.c.h.b16 %v351
  %v1862 = vunpack.c.l.b16 %v352
  %v1863 = vunpack.c.h.b16 %v352
  %v1864 = vunpack.c.l.b16 %v353
  %v1865 = vunpack.c.h.b16 %v353
  %v1866 = vunpack.c.l.b16 %v354
  %v1867 = vunpack.c.h.b16 %v354
  %v1868 = vunpack.c.l.b16 %v355
  %v1869 = vunpack.c.h.b16 %v355
  %v1870 = vunpack.c.l.b16 %v356
  %v1871 = vunpack.c.h.b16 %v356
  %v1872 = vunpack.c.l.b16 %v357
  %v1873 = vunpack.c.h.b16 %v357
  %v1874 = vunpack.c.l.b16 %v358
  %v1875 = vunpack.c.h.b16 %v358
  %v1876 = vunpack.c.l.b16 %v359
  %v1877 = vunpack.c.h.b16 %v359
  %v1878 = vunpack.c.l.b16 %v360
  %v1879 = vunpack.c.h.b16 %v360
  %v1880 = vunpack.c.l.b16 %v361
  %v1881 = vunpack.c.h.b16 %v361
  %v1882 = vunpack.c.l.b16 %v362
  %v1883 = vunpack.c.h.b16 %v362
  %v1884 = vunpack.c.l.b16 %v363
  %v1885 = vunpack.c.h.b16 %v363
  %v1886 = vunpack.c.l.b16 %v364
  %v1887 = vunpack.c.h.b16 %v364
  %v1888 = vunpack.c.l.b16 %v365
  %v1889 = vunpack.c.h.b16 %v365
  %v1890 = vunpack.c.l.b16 %v366
  %v1891 = vunpack.c.h.b16 %v366
  %v1892 = vunpack.c.l.b16 %v367
  %v1893 = vunpack.c.h.b16 %v367
  %v1894 = vunpack.c.l.b16 %v368
  %v1895 = vunpack.c.h.b16 %v368
  %v1896 = vunpack.c.l.b16 %v369
  %v1897 = vunpack.c.h.b16 %v369
  %v1898 = vunpack.c.l.b16 %v370
  %v1899 = vunpack.c.h.b16 %v370
  %v1900 = vunpack.c.l.b16 %v371
  %v1901 = vunpack.c.h.b16 %v371
  %v1902 = vunpack.c.l.b16 %v372
  %v1903 = vunpack.c.h.b16 %v372
  %v1904 = vunpack.c.l.b16 %v373
  %v1905 = vunpack.c.h.b16 %v373
  %v1906 = vunpack.c.l.b16 %v374
  %v1907 = vunpack.c.h.b16 %v374
  %v1908 = vunpack.c.l.b16 %v375
  %v1909 = vunpack.c.h.b16 %v375
  %v1910 = vunpack.c.l.b16 %v376
  %v1911 = vunpack.c.h.b16 %v376
  %v1912 = vunpack.c.l.b16 %v377
  %v1913 = vunpack.c.h.b16 %v377
  %v1914 = vunpack.c.l.b16 %v378
  %v1915 = vunpack.c.h.b16 %v378
  %v1916 = vunpack.c.l.b16 %v379
  %v1917 = vunpack.c.h.b16 %v379
  %v1918 = vunpack.c.l.b16 %v380
  %v1919 = vunpack.c.h.b16 %v380
  %v1920 = vunpack.c.l.b16 %v381
  %v1921 = vunpack.c.h.b16 %v381
  %v1922 = vunpack.c.l.b16 %v382
  %v1923 = vunpack.c.h.b16 %v382
  %v1924 = vunpack.c.l.b16 %v383
  %v1925 = vunpack.c.h.b16 %v383
  %v1926 = vunpack.c.l.b16 %v384
  %v1927 = vunpack.c.h.b16 %v384
  %v1928 = vunpack.c.l.b16 %v385
  %v1929 = vunpack.c.h.b16 %v385
  %v1930 = vunpack.c.l.b16 %v386
  %v1931 = vunpack.c.h.b16 %v386
  %v1932 = vunpack.c.l.b16 %v387
  %v1933 = vunpack.c.h.b16 %v387
  %v1934 = vunpack.c.l.b16 %v388
  %v1935 = vunpack.c.h.b16 %v388
  %v1936 = vunpack.c.l.b16 %v389
  %v1937 = vunpack.c.h.b16 %v389
  %v1938 = vunpack.c.l.b16 %v390
  %v1939 = vunpack.c.h.b16 %v390
  %v1940 = vunpack.c.l.b16 %v391
  %v1941 = vunpack.c.h.b16 %v391
  %v1942 = vunpack.c.l.b16 %v392
  %v1943 = vunpack.c.h.b16 %v392
  %v1944 = vunpack.c.l.b16 %v393
  %v1945 = vunpack.c.h.b16 %v393
  %v1946 = vunpack.c.l.b16 %v394
  %v1947 = vunpack.c.h.b16 %v394
  %v1948 = vunpack.c.l.b16 %v395
  %v1949 = vunpack.c.h.b16 %v395
  %v1950 = vunpack.c.l.b16 %v396
  %v1951 = vunpack.c.h.b16 %v396
  %v1952 = vunpack.c.l.b16 %v397
  %v1953 = vunpack.c.h.b16 %v397
  %v1954 = vunpack.c.l.b16 %v398
  %v1955 = vunpack.c.h.b16 %v398
  %v1956 = vunpack.c.l.b16 %v399
  %v1957 = vunpack.c.h.b16 %v399
  %v1958 = vunpack.c.l.b16 %v400
  %v1959 = vunpack.c.h.b16 %v400
  %v1960 = vunpack.c.l.b16 %v401
  %v1961 = vunpack.c.h.b16 %v401
  %v1962 = vunpack.c.l.b16 %v402
  %v1963 = vunpack.c.h.b16 %v402
  %v1964 = vunpack.c.l.b16 %v403
  %v1965 = vunpack.c.h.b16 %v403
  %v1966 = vunpack.c.l.b16 %v404
  %v1967 = vunpack.c.h.b16 %v404
  %v1968 = vunpack.c.l.b16 %v405
  %v1969 = vunpack.c.h.b16 %v405
  %v1970 = vunpack.c.l.b16 %v406
  %v1971 = vunpack.c.h.b16 %v406
  %v1972 = vunpack.c.l.b16 %v407
  %v1973 = vunpack.c.h.b16 %v407
  %v1974 = vunpack.c.l.b16 %v408
  %v1975 = vunpack.c.h.b16 %v408
  %v1976 = vunpack.c.l.b16 %v409
  %v1977 = vunpack.c.h.b16 %v409
  %v1978 = vunpack.c.l.b16 %v410
  %v1979 = vunpack.c.h.b16 %v410
  %v1980 = vunpack.c.l.b16 %v411
  %v1981 = vunpack.c.h.b16 %v411
  %v1982 = vunpack.c.l.b16 %v412
  %v1983 = vunpack.c.h.b16 %v412
  %v1984 = vunpack.c.l.b16 %v413
  %v1985 = vunpack.c.h.b16 %v413
  %v1986 = vunpack.c.l.b16 %v414
  %v1987 = vunpack.c.h.b16 %v414
  %v1988 = vunpack.c.l.b16 %v415
  %v1989 = vunpack.c.h.b16 %v415
  %v1990 = vunpack.c.l.b16 %v416
  %v1991 = vunpack.c.h.b16 %v416
  %v1992 = vunpack.c.l.b16 %v417
  %v1993 = vunpack.c.h.b16 %v417
  %v1994 = vunpack.c.l.b16 %v418
  %v1995 = vunpack.c.h.b16 %v418
  %v1996 = vunpack.c.l.b16 %v419
  %v1997 = vunpack.c.h.b16 %v419
  %v1998 = vunpack.c.l.b16 %v420
  %v1999 = vunpack.c.h.b16 %v420
  %v2000 = vunpack.c.l.b16 %v421
  %v2001 = vunpack.c.h.b16 %v421
  %v2002 = vunpack.c.l.b16 %v422
  %v2003 = vunpack.c.h.b16 %v422
  %v2004 = vunpack.c.l.b16 %v423
  %v2005 = vunpack.c.h.b16 %v423
  %v2006 = vunpack.c.l.b16 %v424
  %v2007 = vunpack.c.h.b16 %v424
  %v2008 = vunpack.c.l.b16 %v425
  %v2009 = vunpack.c.h.b16 %v425
  %v2010 = vunpack.c.l.b16 %v426
  %v2011 = vunpack.c.h.b16 %v426
  %v2012 = vunpack.c.l.b16 %v427
  %v2013 = vunpack.c.h.b16 %v427
  %v2014 = vunpack.c.l.b16 %v428
  %v2015 = vunpack.c.h.b16 %v428
  %v2016 = vunpack.c.l.b16 %v429
  %v2017 = vunpack.c.h.b16 %v429
  %v2018 = vunpack.c.l.b16 %v430
  %v2019 = vunpack.c.h.b16 %v430
  %v2020 = vunpack.c.l.b16 %v431
  %v2021 = vunpack.c.h.b16 %v431
  %v2022 = vunpack.c.l.b16 %v432
  %v2023 = vunpack.c.h.b16 %v432
  %v2024 = vunpack.c.l.b16 %v433
  %v2025 = vunpack.c.h.b16 %v433
  %v2026 = vunpack.c.l.b16 %v434
  %v2027 = vunpack.c.h.b16 %v434
  %v2028 = vunpack.c.l.b16 %v435
  %v2029 = vunpack.c.h.b16 %v435
  %v2030 = vunpack.c.l.b16 %v436
  %v2031 = vunpack.c.h.b16 %v436
  %v2032 = vunpack.c.l.b16 %v437
  %v2033 = vunpack.c.h.b16 %v437
  %v2034 = vunpack.c.l.b16 %v438
  %v2035 = vunpack.c.h.b16 %v438
  %v2036 = vunpack.c.l.b16 %v439
  %v2037 = vunpack.c.h.b16 %v439
  %v2038 = vunpack.c.l.b16 %v440
  %v2039 = vunpack.c.h.b16 %v440
  %v2040 = vunpack.c.l.b16 %v441
  %v2041 = vunpack.c.h.b16 %v441
  %v2042 = vunpack.c.l.b16 %v442
  %v2043 = vunpack.c.h.b16 %v442
  %v2044 = vunpack.c.l.b16 %v443
  %v2045 = vunpack.c.h.b16 %v443
  %v2046 = vunpack.c.l.b16 %v444
  %v2047 = vunpack.c.h.b16 %v444
  %v2048 = vunpack.c.l.b16 %v445
  %v2049 = vunpack.c.h.b16 %v445
  %v2050 = vunpack.c.l.b16 %v446
  %v2051 = vunpack.c.h.b16 %v446
  %v2052 = vunpack.c.l.b16 %v447
  %v2053 = vunpack.c.h.b16 %v447
  %v2054 = vunpack.c.l.b16 %v448
  %v2055 = vunpack.c.h.b16 %v448
  %v2056 = vunpack.c.l.b16 %v449
  %v2057 = vunpack.c.h.b16 %v449
  %v2058 = vunpack.c.l.b16 %v450
  %v2059 = vunpack.c.h.b16 %v450
  %v2060 = vunpack.c.l.b16 %v451
  %v2061 = vunpack.c.h.b16 %v451
  %v2062 = vunpack.c.l.b16 %v452
  %v2063 = vunpack.c.h.b16 %v452
  %v2064 = vunpack.c.l.b16 %v453
  %v2065 = vunpack.c.h.b16 %v453
  %v2066 = vunpack.c.l.b16 %v454
  %v2067 = vunpack.c.h.b16 %v454
  %v2068 = vunpack.c.l.b16 %v455
  %v2069 = vunpack.c.h.b16 %v455
  %v2070 = vunpack.c.l.b16 %v456
  %v2071 = vunpack.c.h.b16 %v456
  %v2072 = vunpack.c.l.b16 %v457
  %v2073 = vunpack.c.h.b16 %v457
  %v2074 = vunpack.c.l.b16 %v458
  %v2075 = vunpack.c.h.b16 %v458
  %v2076 = vunpack.c.l.b16 %v459
  %v2077 = vunpack.c.h.b16 %v459
  %v2078 = vunpack.c.l.b16 %v460
  %v2079 = vunpack.c.h.b16 %v460
  %v2080 = vunpack.c.l.b16 %v461
  %v2081 = vunpack.c.h.b16 %v461
  %v2082 = vunpack.c.l.b16 %v462
  %v2083 = vunpack.c.h.b16 %v462
  %v2084 = vunpack.c.l.b16 %v463
  %v2085 = vunpack.c.h.b16 %v463
  %v2086 = vunpack.c.l.b16 %v464
  %v2087 = vunpack.c.h.b16 %v464
  %v2088 = vunpack.c.l.b16 %v465
  %v2089 = vunpack.c.h.b16 %v465
  %v2090 = vunpack.c.l.b16 %v466
  %v2091 = vunpack.c.h.b16 %v466
  %v2092 = vunpack.c.l.b16 %v467
  %v2093 = vunpack.c.h.b16 %v467
  %v2094 = vunpack.c.l.b16 %v468
  %v2095 = vunpack.c.h.b16 %v468
  %v2096 = vunpack.c.l.b16 %v469
  %v2097 = vunpack.c.h.b16 %v469
  %v2098 = vunpack.c.l.b16 %v470
  %v2099 = vunpack.c.h.b16 %v470
  %v2100 = vunpack.c.l.b16 %v471
  %v2101 = vunpack.c.h.b16 %v471
  %v2102 = vunpack.c.l.b16 %v472
  %v2103 = vunpack.c.h.b16 %v472
  %v2104 = vunpack.c.l.b16 %v473
  %v2105 = vunpack.c.h.b16 %v473
  %v2106 = vunpack.c.l.b16 %v474
  %v2107 = vunpack.c.h.b16 %v474
  %v2108 = vunpack.c.l.b16 %v475
  %v2109 = vunpack.c.h.b16 %v475
  %v2110 = vunpack.c.l.b16 %v476
  %v2111 = vunpack.c.h.b16 %v476
  %v2112 = vunpack.c.l.b16 %v477
  %v2113 = vunpack.c.h.b16 %v477
  %v2114 = vunpack.c.l.b16 %v478
  %v2115 = vunpack.c.h.b16 %v478
  %v2116 = vunpack.c.l.b16 %v479
  %v2117 = vunpack.c.h.b16 %v479
  %v2118 = vunpack.c.l.b16 %v480
  %v2119 = vunpack.c.h.b16 %v480
  %v2120 = vunpack.c.l.b16 %v481
  %v2121 = vunpack.c.h.b16 %v481
  %v2122 = vunpack.c.l.b16 %v482
  %v2123 = vunpack.c.h.b16 %v482
  %v2124 = vunpack.c.l.b16 %v483
  %v2125 = vunpack.c.h.b16 %v483
  %v2126 = vunpack.c.l.b16 %v484
  %v2127 = vunpack.c.h.b16 %v484
  %v2128 = vunpack.c.l.b16 %v485
  %v2129 = vunpack.c.h.b16 %v485
  %v2130 = vunpack.c.l.b16 %v486
  %v2131 = vunpack.c.h.b16 %v486
  %v2132 = vunpack.c.l.b16 %v487
  %v2133 = vunpack.c.h.b16 %v487
  %v2134 = vunpack.c.l.b16 %v488
  %v2135 = vunpack.c.h.b16 %v488
  %v2136 = vunpack.c.l.b16 %v489
  %v2137 = vunpack.c.h.b16 %v489
  %v2138 = vunpack.c.l.b16 %v490
  %v2139 = vunpack.c.h.b16 %v490
  %v2140 = vunpack.c.l.b16 %v491
  %v2141 = vunpack.c.h.b16 %v491
  %v2142 = vunpack.c.l.b16 %v492
  %v2143 = vunpack.c.h.b16 %v492
  %v2144 = vunpack.c.l.b16 %v493
  %v2145 = vunpack.c.h.b16 %v493
  %v2146 = vunpack.c.l.b16 %v494
  %v2147 = vunpack.c.h.b16 %v494
  %v2148 = vunpack.c.l.b16 %v495
  %v2149 = vunpack.c.h.b16 %v495
  %v2150 = vunpack.c.l.b16 %v496
  %v2151 = vunpack.c.h.b16 %v496
  %v2152 = vunpack.c.l.b16 %v497
  %v2153 = vunpack.c.h.b16 %v497
  %v2154 = vunpack.c.l.b16 %v498
  %v2155 = vunpack.c.h.b16 %v498
  %v2156 = vunpack.c.l.b16 %v499
  %v2157 = vunpack.c.h.b16 %v499
  %v2158 = vunpack.c.l.b16 %v500
  %v2159 = vunpack.c.h.b16 %v500
  %v2160 = vunpack.c.l.b16 %v501
  %v2161 = vunpack.c.h.b16 %v501
  %v2162 = vunpack.c.l.b16 %v502
  %v2163 = vunpack.c.h.b16 %v502
  %v2164 = vunpack.c.l.b16 %v503
  %v2165 = vunpack.c.h.b16 %v503
  %v2166 = vunpack.c.l.b16 %v504
  %v2167 = vunpack.c.h.b16 %v504
  %v2168 = vunpack.c.l.b16 %v505
  %v2169 = vunpack.c.h.b16 %v505
  %v2170 = vunpack.c.l.b16 %v506
  %v2171 = vunpack.c.h.b16 %v506
  %v2172 = vunpack.c.l.b16 %v507
  %v2173 = vunpack.c.h.b16 %v507
  %v2174 = vunpack.c.l.b16 %v508
  %v2175 = vunpack.c.h.b16 %v508
  %v2176 = vunpack.c.l.b16 %v509
  %v2177 = vunpack.c.h.b16 %v509
  %v2178 = vunpack.c.l.b16 %v510
  %v2179 = vunpack.c.h.b16 %v510
  %v2180 = vunpack.c.l.b16 %v511
  %v2181 = vunpack.c.h.b16 %v511
  %v2182 = vunpack.c.l.b16 %v512
  %v2183 = vunpack.c.h.b16 %v512
  %v2184 = vunpack.c.l.b16 %v513
  %v2185 = vunpack.c.h.b16 %v513
  %v2186 = vunpack.c.l.b16 %v514
  %v2187 = vunpack.c.h.b16 %v514
  %v2188 = vunpack.c.l.b16 %v515
  %v2189 = vunpack.c.h.b16 %v515
  %v2190 = vunpack.c.l.b16 %v516
  %v2191 = vunpack.c.h.b16 %v516
  %v2192 = vunpack.c.l.b16 %v517
  %v2193 = vunpack.c.h.b16 %v517
  %v2194 = vunpack.c.l.b16 %v518
  %v2195 = vunpack.c.h.b16 %v518
  %v2196 = vunpack.c.l.b16 %v519
  %v2197 = vunpack.c.h.b16 %v519
  %v2198 = vunpack.c.l.b16 %v520
  %v2199 = vunpack.c.h.b16 %v520
  %v2200 = vunpack.c.l.b16 %v521
  %v2201 = vunpack.c.h.b16 %v521
  %v2202 = vunpack.c.l.b16 %v522
  %v2203 = vunpack.c.h.b16 %v522
  %v2204 = vunpack.c.l.b16 %v523
  %v2205 = vunpack.c.h.b16 %v523
  %v2206 = vunpack.c.l.b16 %v524
  %v2207 = vunpack.c.h.b16 %v524
  %v2208 = vunpack.c.l.b16 %v525
  %v2209 = vunpack.c.h.b16 %v525
  %v2210 = vunpack.c.l.b16 %v526
  %v2211 = vunpack.c.h.b16 %v526
  %v2212 = vunpack.c.l.b16 %v527
  %v2213 = vunpack.c.h.b16 %v527
  %v2214 = vunpack.c.l.b16 %v528
  %v2215 = vunpack.c.h.b16 %v528
  %v2216 = vunpack.c.l.b16 %v529
  %v2217 = vunpack.c.h.b16 %v529
  %v2218 = vunpack.c.l.b16 %v530
  %v2219 = vunpack.c.h.b16 %v530
  %v2220 = vunpack.c.l.b16 %v531
  %v2221 = vunpack.c.h.b16 %v531
  %v2222 = vunpack.c.l.b16 %v532
  %v2223 = vunpack.c.h.b16 %v532
  %v2224 = vunpack.c.l.b16 %v533
  %v2225 = vunpack.c.h.b16 %v533
  %v2226 = vunpack.c.l.b16 %v534
  %v2227 = vunpack.c.h.b16 %v534
  %v2228 = vunpack.c.l.b16 %v535
  %v2229 = vunpack.c.h.b16 %v535
  %v2230 = vunpack.c.l.b16 %v536
  %v2231 = vunpack.c.h.b16 %v536
  %v2232 = vunpack.c.l.b16 %v537
  %v2233 = vunpack.c.h.b16 %v537
  %v2234 = vunpack.c.l.b16 %v538
  %v2235 = vunpack.c.h.b16 %v538
  %v2236 = vunpack.c.l.b16 %v539
  %v2237 = vunpack.c.h.b16 %v539
  %v2238 = vunpack.c.l.b16 %v540
  %v2239 = vunpack.c.h.b16 %v540
  %v2240 = vunpack.c.l.b16 %v541
  %v2241 = vunpack.c.h.b16 %v541
  %v2242 = vunpack.c.l.b16 %v542
  %v2243 = vunpack.c.h.b16 %v542
  %v2244 = vunpack.c.l.b16 %v543
  %v2245 = vunpack.c.h.b16 %v543
  %v2246 = vunpack.c.l.b16 %v544
  %v2247 = vunpack.c.h.b16 %v544
  %v2248 = vunpack.c.l.b16 %v545
  %v2249 = vunpack.c.h.b16 %v545
  %v2250 = vunpack.c.l.b16 %v546
  %v2251 = vunpack.c.h.b16 %v546
  %v2252 = vunpack.c.l.b16 %v547
  %v2253 = vunpack.c.h.b16 %v547
  %v2254 = vunpack.c.l.b16 %v548
  %v2255 = vunpack.c.h.b16 %v548
  %v2256 = vunpack.c.l.b16 %v549
  %v2257 = vunpack.c.h.b16 %v549
  %v2258 = vunpack.c.l.b16 %v550
  %v2259 = vunpack.c.h.b16 %v550
  %v2260 = vunpack.c.l.b16 %v551
  %v2261 = vunpack.c.h.b16 %v551
  %v2262 = vunpack.c.l.b16 %v552
  %v2263 = vunpack.c.h.b16 %v552
  %v2264 = vunpack.c.l.b16 %v553
  %v2265 = vunpack.c.h.b16 %v553
  %v2266 = vunpack.c.l.b16 %v554
  %v2267 = vunpack.c.h.b16 %v554
  %v2268 = vunpack.c.l.b16 %v555
  %v2269 = vunpack.c.h.b16 %v555
  %v2270 = vunpack.c.l.b16 %v556
  %v2271 = vunpack.c.h.b16 %v556
  %v2272 = vunpack.c.l.b16 %v557
  %v2273 = vunpack.c.h.b16 %v557
  %v2274 = vunpack.c.l.b16 %v558
  %v2275 = vunpack.c.h.b16 %v558
  %v2276 = vunpack.c.l.b16 %v559
  %v2277 = vunpack.c.h.b16 %v559
  %v2278 = vunpack.c.l.b16 %v560
  %v2279 = vunpack.c.h.b16 %v560
  %v2280 = vunpack.c.l.b16 %v561
  %v2281 = vunpack.c.h.b16 %v561
  %v2282 = vunpack.c.l.b16 %v562
  %v2283 = vunpack.c.h.b16 %v562
  %v2284 = vunpack.c.l.b16 %v563
  %v2285 = vunpack.c.h.b16 %v563
  %v2286 = vunpack.c.l.b16 %v564
  %v2287 = vunpack.c.h.b16 %v564
  %v2288 = vunpack.c.l.b16 %v565
  %v2289 = vunpack.c.h.b16 %v565
  %v2290 = vunpack.c.l.b16 %v566
  %v2291 = vunpack.c.h.b16 %v566
  %v2292 = vunpack.c.l.b16 %v567
  %v2293 = vunpack.c.h.b16 %v567
  %v2294 = vunpack.c.l.b16 %v568
  %v2295 = vunpack.c.h.b16 %v568
  %v2296 = vunpack.c.l.b16 %v569
  %v2297 = vunpack.c.h.b16 %v569
  %v2298 = vunpack.c.l.b16 %v570
  %v2299 = vunpack.c.h.b16 %v570
  %v2300 = vunpack.c.l.b16 %v571
  %v2301 = vunpack.c.h.b16 %v571
  %v2302 = vunpack.c.l.b16 %v572
  %v2303 = vunpack.c.h.b16 %v572
  %v2304 = vunpack.c.l.b16 %v573
  %v2305 = vunpack.c.h.b16 %v573
  %v2306 = vunpack.c.l.b16 %v574
  %v2307 = vunpack.c.h.b16 %v574
  %v2308 = vunpack.c.l.b16 %v575
  %v2309 = vunpack.c.h.b16 %v575
  %v2310 = vunpack.c.l.b16 %v576
  %v2311 = vunpack.c.h.b16 %v576
  %v2312 = vunpack.c.l.b16 %v577
  %v2313 = vunpack.c.h.b16 %v577
  %v2314 = vunpack.c.l.b16 %v578
  %v2315 = vunpack.c.h.b16 %v578
  %v2316 = vunpack.c.l.b16 %v579
  %v2317 = vunpack.c.h.b16 %v579
  %v2318 = vunpack.c.l.b16 %v580
  %v2319 = vunpack.c.h.b16 %v580
  %v2320 = vunpack.c.l.b16 %v581
  %v2321 = vunpack.c.h.b16 %v581
  %v2322 = vunpack.c.l.b16 %v582
  %v2323 = vunpack.c.h.b16 %v582
  %v2324 = vunpack.c.l.b16 %v583
  %v2325 = vunpack.c.h.b16 %v583
  %v2326 = vunpack.c.l.b16 %v584
  %v2327 = vunpack.c.h.b16 %v584
  %v2328 = vunpack.c.l.b16 %v585
  %v2329 = vunpack.c.h.b16 %v585
  %v2330 = vunpack.c.l.b16 %v586
  %v2331 = vunpack.c.h.b16 %v586
  %v2332 = vunpack.c.l.b16 %v587
  %v2333 = vunpack.c.h.b16 %v587
  %v2334 = vunpack.c.l.b16 %v588
  %v2335 = vunpack.c.h.b16 %v588
  %v2336 = vunpack.c.l.b16 %v589
  %v2337 = vunpack.c.h.b16 %v589
  %v2338 = vunpack.c.l.b16 %v590
  %v2339 = vunpack.c.h.b16 %v590
  %v2340 = vunpack.c.l.b16 %v591
  %v2341 = vunpack.c.h.b16 %v591
  %v2342 = vunpack.c.l.b16 %v592
  %v2343 = vunpack.c.h.b16 %v592
  %v2344 = vunpack.c.l.b16 %v593
  %v2345 = vunpack.c.h.b16 %v593
  %v2346 = vunpack.c.l.b16 %v594
  %v2347 = vunpack.c.h.b16 %v594
  %v2348 = vunpack.c.l.b16 %v595
  %v2349 = vunpack.c.h.b16 %v595
  %v2350 = vunpack.c.l.b16 %v596
  %v2351 = vunpack.c.h.b16 %v596
  %v2352 = vunpack.c.l.b16 %v597
  %v2353 = vunpack.c.h.b16 %v597
  %v2354 = vunpack.c.l.b16 %v598
  %v2355 = vunpack.c.h.b16 %v598
  %v2356 = vunpack.c.l.b16 %v599
  %v2357 = vunpack.c.h.b16 %v599
  %v2358 = vunpack.c.l.b16 %v600
  %v2359 = vunpack.c.h.b16 %v600
  %v2360 = vunpack.c.l.b16 %v601
  %v2361 = vunpack.c.h.b16 %v601
  %v2362 = vunpack.c.l.b16 %v602
  %v2363 = vunpack.c.h.b16 %v602
  %v2364 = vunpack.c.l.b16 %v603
  %v2365 = vunpack.c.h.b16 %v603
  %v2366 = vunpack.c.l.b16 %v604
  %v2367 = vunpack.c.h.b16 %v604
  %v2368 = vunpack.c.l.b16 %v605
  %v2369 = vunpack.c.h.b16 %v605
  %v2370 = vunpack.c.l.b16 %v606
  %v2371 = vunpack.c.h.b16 %v606
  %v2372 = vunpack.c.l.b16 %v607
  %v2373 = vunpack.c.h.b16 %v607
  %v2374 = vunpack.c.l.b16 %v608
  %v2375 = vunpack.c.h.b16 %v608
  %v2376 = vunpack.c.l.b16 %v609
  %v2377 = vunpack.c.h.b16 %v609
  %v2378 = vunpack.c.l.b16 %v610
  %v2379 = vunpack.c.h.b16 %v610
  %v2380 = vunpack.c.l.b16 %v611
  %v2381 = vunpack.c.h.b16 %v611
  %v2382 = vunpack.c.l.b16 %v612
  %v2383 = vunpack.c.h.b16 %v612
  %v2384 = vunpack.c.l.b16 %v613
  %v2385 = vunpack.c.h.b16 %v613
  %v2386 = vunpack.c.l.b16 %v614
  %v2387 = vunpack.c.h.b16 %v614
  %v2388 = vunpack.c.l.b16 %v615
  %v2389 = vunpack.c.h.b16 %v615
  %v2390 = vunpack.c.l.b16 %v616
  %v2391 = vunpack.c.h.b16 %v616
  %v2392 = vunpack.c.l.b16 %v617
  %v2393 = vunpack.c.h.b16 %v617
  %v2394 = vunpack.c.l.b16 %v618
  %v2395 = vunpack.c.h.b16 %v618
  %v2396 = vunpack.c.l.b16 %v619
  %v2397 = vunpack.c.h.b16 %v619
  %v2398 = vunpack.c.l.b16 %v620
  %v2399 = vunpack.c.h.b16 %v620
  %v2400 = vunpack.c.l.b16 %v621
  %v2401 = vunpack.c.h.b16 %v621
  %v2402 = vunpack.c.l.b16 %v622
  %v2403 = vunpack.c.h.b16 %v622
  %v2404 = vunpack.c.l.b16 %v623
  %v2405 = vunpack.c.h.b16 %v623
  %v2406 = vunpack.c.l.b16 %v624
  %v2407 = vunpack.c.h.b16 %v624
  %v2408 = vunpack.c.l.b16 %v625
  %v2409 = vunpack.c.h.b16 %v625
  %v2410 = vunpack.c.l.b16 %v626
  %v2411 = vunpack.c.h.b16 %v626
  %v2412 = vunpack.c.l.b16 %v627
  %v2413 = vunpack.c.h.b16 %v627
  %v2414 = vunpack.c.l.b16 %v628
  %v2415 = vunpack.c.h.b16 %v628
  %v2416 = vunpack.c.l.b16 %v629
  %v2417 = vunpack.c.h.b16 %v629
  %v2418 = vunpack.c.l.b16 %v630
  %v2419 = vunpack.c.h.b16 %v630
  %v2420 = vunpack.c.l.b16 %v631
  %v2421 = vunpack.c.h.b16 %v631
  %v2422 = vunpack.c.l.b16 %v632
  %v2423 = vunpack.c.h.b16 %v632
  %v2424 = vunpack.c.l.b16 %v633
  %v2425 = vunpack.c.h.b16 %v633
  %v2426 = vunpack.c.l.b16 %v634
  %v2427 = vunpack.c.h.b16 %v634
  %v2428 = vunpack.c.l.b16 %v635
  %v2429 = vunpack.c.h.b16 %v635
  %v2430 = vunpack.c.l.b16 %v636
  %v2431 = vunpack.c.h.b16 %v636
  %v2432 = vunpack.c.l.b16 %v637
  %v2433 = vunpack.c.h.b16 %v637
  %v2434 = vunpack.c.l.b16 %v638
  %v2435 = vunpack.c.h.b16 %v638
  %v2436 = vunpack.c.l.b16 %v639
  %v2437 = vunpack.c.h.b16 %v639
  %v2438 = vunpack.c.l.b16 %v640
  %v2439 = vunpack.c.h.b16 %v640
  %v2440 = vunpack.c.l.b16 %v641
  %v2441 = vunpack.c.h.b16 %v641
  %v2442 = vunpack.c.l.b16 %v642
  %v2443 = vunpack.c.h.b16 %v642
  %v2444 = vunpack.c.l.b16 %v643
  %v2445 = vunpack.c.h.b16 %v643
  %v2446 = vunpack.c.l.b16 %v644
  %v2447 = vunpack.c.h.b16 %v644
  %v2448 = vunpack.c.l.b16 %v645
  %v2449 = vunpack.c.h.b16 %v645
  %v2450 = vunpack.c.l.b16 %v646
  %v2451 = vunpack.c.h.b16 %v646
  %v2452 = vunpack.c.l.b16 %v647
  %v2453 = vunpack.c.h.b16 %v647
  %v2454 = vunpack.c.l.b16 %v648
  %v2455 = vunpack.c.h.b16 %v648
  %v2456 = vunpack.c.l.b16 %v649
  %v2457 = vunpack.c.h.b16 %v649
  %v2458 = vunpack.c.l.b16 %v650
  %v2459 = vunpack.c.h.b16 %v650
  %v2460 = vunpack.c.l.b16 %v651
  %v2461 = vunpack.c.h.b16 %v651
  %v2462 = vunpack.c.l.b16 %v652
  %v2463 = vunpack.c.h.b16 %v652
  %v2464 = vunpack.c.l.b16 %v653
  %v2465 = vunpack.c.h.b16 %v653
  %v2466 = vunpack.c.l.b16 %v654
  %v2467 = vunpack.c.h.b16 %v654
  %v2468 = vunpack.c.l.b16 %v655
  %v2469 = vunpack.c.h.b16 %v655
  %v2470 = vunpack.c.l.b16 %v656
  %v2471 = vunpack.c.h.b16 %v656
  %v2472 = vunpack.c.l.b16 %v657
  %v2473 = vunpack.c.h.b16 %v657
  %v2474 = vunpack.c.l.b16 %v658
  %v2475 = vunpack.c.h.b16 %v658
  %v2476 = vunpack.c.l.b16 %v659
  %v2477 = vunpack.c.h.b16 %v659
  %v2478 = vunpack.c.l.b16 %v660
  %v2479 = vunpack.c.h.b16 %v660
  %v2480 = vunpack.c.l.b16 %v661
  %v2481 = vunpack.c.h.b16 %v661
  %v2482 = vunpack.c.l.b16 %v662
  %v2483 = vunpack.c.h.b16 %v662
  %v2484 = vunpack.c.l.b16 %v663
  %v2485 = vunpack.c.h.b16 %v663
  %v2486 = vunpack.c.l.b16 %v664
  %v2487 = vunpack.c.h.b16 %v664
  %v2488 = vunpack.c.l.b16 %v665
  %v2489 = vunpack.c.h.b16 %v665
  %v2490 = vunpack.c.l.b16 %v666
  %v2491 = vunpack.c.h.b16 %v666
  %v2492 = vunpack.c.l.b16 %v667
  %v2493 = vunpack.c.h.b16 %v667
  %v2494 = vunpack.c.l.b16 %v668
  %v2495 = vunpack.c.h.b16 %v668
  %v2496 = vunpack.c.l.b16 %v669
  %v2497 = vunpack.c.h.b16 %v669
  %v2498 = vunpack.c.l.b16 %v670
  %v2499 = vunpack.c.h.b16 %v670
  %v2500 = vunpack.c.l.b16 %v671
  %v2501 = vunpack.c.h.b16 %v671
  %v2502 = vunpack.c.l.b16 %v672
  %v2503 = vunpack.c.h.b16 %v672
  %v2504 = vunpack.c.l.b16 %v673
  %v2505 = vunpack.c.h.b16 %v673
  %v2506 = vunpack.c.l.b16 %v674
  %v2507 = vunpack.c.h.b16 %v674
  %v2508 = vunpack.c.l.b16 %v675
  %v2509 = vunpack.c.h.b16 %v675
  %v2510 = vunpack.c.l.b16 %v676
  %v2511 = vunpack.c.h.b16 %v676
  %v2512 = vunpack.c.l.b16 %v677
  %v2513 = vunpack.c.h.b16 %v677
  %v2514 = vunpack.c.l.b16 %v678
  %v2515 = vunpack.c.h.b16 %v678
  %v2516 = vunpack.c.l.b16 %v679
  %v2517 = vunpack.c.h.b16 %v679
  %v2518 = vunpack.c.l.b16 %v680
  %v2519 = vunpack.c.h.b16 %v680
  %v2520 = vunpack.c.l.b16 %v681
  %v2521 = vunpack.c.h.b16 %v681
  %v2522 = vunpack.c.l.b16 %v682
  %v2523 = vunpack.c.h.b16 %v682
  %v2524 = vunpack.c.l.b16 %v683
  %v2525 = vunpack.c.h.b16 %v683
  %v2526 = vunpack.c.l.b16 %v684
  %v2527 = vunpack.c.h.b16 %v684
  %v2528 = vunpack.c.l.b16 %v685
  %v2529 = vunpack.c.h.b16 %v685
  %v2530 = vunpack.c.l.b16 %v686
  %v2531 = vunpack.c.h.b16 %v686
  %v2532 = vunpack.c.l.b16 %v687
  %v2533 = vunpack.c.h.b16 %v687
  %v2534 = vunpack.c.l.b16 %v688
  %v2535 = vunpack.c.h.b16 %v688
  %v2536 = vunpack.c.l.b16 %v689
  %v2537 = vunpack.c.h.b16 %v689
  %v2538 = vunpack.c.l.b16 %v690
  %v2539 = vunpack.c.h.b16 %v690
  %v2540 = vunpack.c.l.b16 %v691
  %v2541 = vunpack.c.h.b16 %v691
  %v2542 = vunpack.c.l.b16 %v692
  %v2543 = vunpack.c.h.b16 %v692
  %v2544 = vunpack.c.l.b16 %v693
  %v2545 = vunpack.c.h.b16 %v693
  %v2546 = vunpack.c.l.b16 %v694
  %v2547 = vunpack.c.h.b16 %v694
  %v2548 = vunpack.c.l.b16 %v695
  %v2549 = vunpack.c.h.b16 %v695
  %v2550 = vunpack.c.l.b16 %v696
  %v2551 = vunpack.c.h.b16 %v696
  %v2552 = vunpack.c.l.b16 %v697
  %v2553 = vunpack.c.h.b16 %v697
  %v2554 = vunpack.c.l.b16 %v698
  %v2555 = vunpack.c.h.b16 %v698
  %v2556 = vunpack.c.l.b16 %v699
  %v2557 = vunpack.c.h.b16 %v699
  %v2558 = vunpack.c.l.b16 %v700
  %v2559 = vunpack.c.h.b16 %v700
  %v2560 = vunpack.c.l.b16 %v701
  %v2561 = vunpack.c.h.b16 %v701
  %v2562 = vunpack.c.l.b16 %v702
  %v2563 = vunpack.c.h.b16 %v702
  %v2564 = vunpack.c.l.b16 %v703
  %v2565 = vunpack.c.h.b16 %v703
  %v2566 = vunpack.c.l.b16 %v704
  %v2567 = vunpack.c.h.b16 %v704
  %v2568 = vunpack.c.l.b16 %v705
  %v2569 = vunpack.c.h.b16 %v705
  %v2570 = vunpack.c.l.b16 %v706
  %v2571 = vunpack.c.h.b16 %v706
  %v2572 = vunpack.c.l.b16 %v707
  %v2573 = vunpack.c.h.b16 %v707
  %v2574 = vunpack.c.l.b16 %v708
  %v2575 = vunpack.c.h.b16 %v708
  %v2576 = vunpack.c.l.b16 %v709
  %v2577 = vunpack.c.h.b16 %v709
  %v2578 = vunpack.c.l.b16 %v710
  %v2579 = vunpack.c.h.b16 %v710
  %v2580 = vunpack.c.l.b16 %v711
  %v2581 = vunpack.c.h.b16 %v711
  %v2582 = vunpack.c.l.b16 %v712
  %v2583 = vunpack.c.h.b16 %v712
  %v2584 = vunpack.c.l.b16 %v713
  %v2585 = vunpack.c.h.b16 %v713
  %v2586 = vunpack.c.l.b16 %v714
  %v2587 = vunpack.c.h.b16 %v714
  %v2588 = vunpack.c.l.b16 %v715
  %v2589 = vunpack.c.h.b16 %v715
  %v2590 = vunpack.c.l.b16 %v716
  %v2591 = vunpack.c.h.b16 %v716
  %v2592 = vunpack.c.l.b16 %v717
  %v2593 = vunpack.c.h.b16 %v717
  %v2594 = vunpack.c.l.b16 %v718
  %v2595 = vunpack.c.h.b16 %v718
  %v2596 = vunpack.c.l.b16 %v719
  %v2597 = vunpack.c.h.b16 %v719
  %v2598 = vunpack.c.l.b16 %v720
  %v2599 = vunpack.c.h.b16 %v720
  %v2600 = vunpack.c.l.b16 %v721
  %v2601 = vunpack.c.h.b16 %v721
  %v2602 = vunpack.c.l.b16 %v722
  %v2603 = vunpack.c.h.b16 %v722
  %v2604 = vunpack.c.l.b16 %v723
  %v2605 = vunpack.c.h.b16 %v723
  %v2606 = vunpack.c.l.b16 %v724
  %v2607 = vunpack.c.h.b16 %v724
  %v2608 = vunpack.c.l.b16 %v725
  %v2609 = vunpack.c.h.b16 %v725
  %v2610 = vunpack.c.l.b16 %v726
  %v2611 = vunpack.c.h.b16 %v726
  %v2612 = vunpack.c.l.b16 %v727
  %v2613 = vunpack.c.h.b16 %v727
  %v2614 = vunpack.c.l.b16 %v728
  %v2615 = vunpack.c.h.b16 %v728
  %v2616 = vunpack.c.l.b16 %v729
  %v2617 = vunpack.c.h.b16 %v729
  %v2618 = vunpack.c.l.b16 %v730
  %v2619 = vunpack.c.h.b16 %v730
  %v2620 = vunpack.c.l.b16 %v731
  %v2621 = vunpack.c.h.b16 %v731
  %v2622 = vunpack.c.l.b16 %v732
  %v2623 = vunpack.c.h.b16 %v732
  %v2624 = vunpack.c.l.b16 %v733
  %v2625 = vunpack.c.h.b16 %v733
  %v2626 = vunpack.c.l.b16 %v734
  %v2627 = vunpack.c.h.b16 %v734
  %v2628 = vunpack.c.l.b16 %v735
  %v2629 = vunpack.c.h.b16 %v735
  %v2630 = vunpack.c.l.b16 %v736
  %v2631 = vunpack.c.h.b16 %v736
  %v2632 = vunpack.c.l.b16 %v737
  %v2633 = vunpack.c.h.b16 %v737
  %v2634 = vunpack.c.l.b16 %v738
  %v2635 = vunpack.c.h.b16 %v738
  %v2636 = vunpack.c.l.b16 %v739
  %v2637 = vunpack.c.h.b16 %v739
  %v2638 = vunpack.c.l.b16 %v740
  %v2639 = vunpack.c.h.b16 %v740
  %v2640 = vunpack.c.l.b16 %v741
  %v2641 = vunpack.c.h.b16 %v741
  %v2642 = vunpack.c.l.b16 %v742
  %v2643 = vunpack.c.h.b16 %v742
  %v2644 = vunpack.c.l.b16 %v743
  %v2645 = vunpack.c.h.b16 %v743
  %v2646 = vunpack.c.l.b16 %v744
  %v2647 = vunpack.c.h.b16 %v744
  %v2648 = vunpack.c.l.b16 %v745
  %v2649 = vunpack.c.h.b16 %v745
  %v2650 = vunpack.c.l.b16 %v746
  %v2651 = vunpack.c.h.b16 %v746
  %v2652 = vunpack.c.l.b16 %v747
  %v2653 = vunpack.c.h.b16 %v747
  %v2654 = vunpack.c.l.b16 %v748
  %v2655 = vunpack.c.h.b16 %v748
  %v2656 = vunpack.c.l.b16 %v749
  %v2657 = vunpack.c.h.b16 %v749
  %v2658 = vunpack.c.l.b16 %v750
  %v2659 = vunpack.c.h.b16 %v750
  %v2660 = vunpack.c.l.b16 %v751
  %v2661 = vunpack.c.h.b16 %v751
  %v2662 = vunpack.c.l.b16 %v752
  %v2663 = vunpack.c.h.b16 %v752
  %v2664 = vunpack.c.l.b16 %v753
  %v2665 = vunpack.c.h.b16 %v753
  %v2666 = vunpack.c.l.b16 %v754
  %v2667 = vunpack.c.h.b16 %v754
  %v2668 = vunpack.c.l.b16 %v755
  %v2669 = vunpack.c.h.b16 %v755
  %v2670 = vunpack.c.l.b16 %v756
  %v2671 = vunpack.c.h.b16 %v756
  %v2672 = vunpack.c.l.b16 %v757
  %v2673 = vunpack.c.h.b16 %v757
  %v2674 = vunpack.c.l.b16 %v758
  %v2675 = vunpack.c.h.b16 %v758
  %v2676 = vunpack.c.l.b16 %v759
  %v2677 = vunpack.c.h.b16 %v759
  %v2678 = vunpack.c.l.b16 %v760
  %v2679 = vunpack.c.h.b16 %v760
  %v2680 = vunpack.c.l.b16 %v761
  %v2681 = vunpack.c.h.b16 %v761
  %v2682 = vpack.c.b16 %v1412, %v1402
  %v2683 = vpack.c.b16 %v1413, %v1403
  %v2684 = vpack.c.b16 %v1414, %v1404
  %v2685 = vpack.c.b16 %v1415, %v1405
  %v2686 = vpack.c.b16 %v1416, %v1406
  %v2687 = vpack.c.b16 %v1417, %v1407
  %v2688 = vpack.c.b16 %v1418, %v1408
  %v2689 = vpack.c.b16 %v1419, %v1409
  %v2690 = vpack.c.b16 %v1420, %v1410
  %v2691 = vpack.c.b16 %v1421, %v1411
  %v2692 = vpack.c.b16 %v1432, %v1422
  %v2693 = vpack.c.b16 %v1433, %v1423
  %v2694 = vpack.c.b16 %v1434, %v1424
  %v2695 = vpack.c.b16 %v1435, %v1425
  %v2696 = vpack.c.b16 %v1436, %v1426
  %v2697 = vpack.c.b16 %v1437, %v1427
  %v2698 = vpack.c.b16 %v1438, %v1428
  %v2699 = vpack.c.b16 %v1439, %v1429
  %v2700 = vpack.c.b16 %v1440, %v1430
  %v2701 = vpack.c.b16 %v1441, %v1431
  %v2702 = vpack.c.b16 %v1452, %v1442
  %v2703 = vpack.c.b16 %v1453, %v1443
  %v2704 = vpack.c.b16 %v1454, %v1444
  %v2705 = vpack.c.b16 %v1455, %v1445
  %v2706 = vpack.c.b16 %v1456, %v1446
  %v2707 = vpack.c.b16 %v1457, %v1447
  %v2708 = vpack.c.b16 %v1458, %v1448
  %v2709 = vpack.c.b16 %v1459, %v1449
  %v2710 = vpack.c.b16 %v1460, %v1450
  %v2711 = vpack.c.b16 %v1461, %v1451
  %v2712 = vpack.c.b16 %v1472, %v1462
  %v2713 = vpack.c.b16 %v1473, %v1463
  %v2714 = vpack.c.b16 %v1474, %v1464
  %v2715 = vpack.c.b16 %v1475, %v1465
  %v2716 = vpack.c.b16 %v1476, %v1466
  %v2717 = vpack.c.b16 %v1477, %v1467
  %v2718 = vpack.c.b16 %v1478, %v1468
  %v2719 = vpack.c.b16 %v1479, %v1469
  %v2720 = vpack.c.b16 %v1480, %v1470
  %v2721 = vpack.c.b16 %v1481, %v1471
  %v2722 = vpack.c.b16 %v1492, %v1482
  %v2723 = vpack.c.b16 %v1493, %v1483
  %v2724 = vpack.c.b16 %v1494, %v1484
  %v2725 = vpack.c.b16 %v1495, %v1485
  %v2726 = vpack.c.b16 %v1496, %v1486
  %v2727 = vpack.c.b16 %v1497, %v1487
  %v2728 = vpack.c.b16 %v1498, %v1488
  %v2729 = vpack.c.b16 %v1499, %v1489
  %v2730 = vpack.c.b16 %v1500, %v1490
  %v2731 = vpack.c.b16 %v1501, %v1491
  %v2732 = vpack.c.b16 %v1512, %v1502
  %v2733 = vpack.c.b16 %v1513, %v1503
  %v2734 = vpack.c.b16 %v1514, %v1504
  %v2735 = vpack.c.b16 %v1515, %v1505
  %v2736 = vpack.c.b16 %v1516, %v1506
  %v2737 = vpack.c.b16 %v1517, %v1507
  %v2738 = vpack.c.b16 %v1518, %v1508
  %v2739 = vpack.c.b16 %v1519, %v1509
  %v2740 = vpack.c.b16 %v1520, %v1510
  %v2741 = vpack.c.b16 %v1521, %v1511
  %v2742 = vpack.c.b16 %v1532, %v1522
  %v2743 = vpack.c.b16 %v1533, %v1523
  %v2744 = vpack.c.b16 %v1534, %v1524
  %v2745 = vpack.c.b16 %v1535, %v1525
  %v2746 = vpack.c.b16 %v1536, %v1526
  %v2747 = vpack.c.b16 %v1537, %v1527
  %v2748 = vpack.c.b16 %v1538, %v1528
  %v2749 = vpack.c.b16 %v1539, %v1529
  %v2750 = vpack.c.b16 %v1540, %v1530
  %v2751 = vpack.c.b16 %v1541, %v1531
  %v2752 = vpack.c.b16 %v1552, %v1542
  %v2753 = vpack.c.b16 %v1553, %v1543
  %v2754 = vpack.c.b16 %v1554, %v1544
  %v2755 = vpack.c.b16 %v1555, %v1545
  %v2756 = vpack.c.b16 %v1556, %v1546
  %v2757 = vpack.c.b16 %v1557, %v1547
  %v2758 = vpack.c.b16 %v1558, %v1548
  %v2759 = vpack.c.b16 %v1559, %v1549
  %v2760 = vpack.c.b16 %v1560, %v1550
  %v2761 = vpack.c.b16 %v1561, %v1551
  %v2762 = vpack.c.b16 %v1572, %v1562
  %v2763 = vpack.c.b16 %v1573, %v1563
  %v2764 = vpack.c.b16 %v1574, %v1564
  %v2765 = vpack.c.b16 %v1575, %v1565
  %v2766 = vpack.c.b16 %v1576, %v1566
  %v2767 = vpack.c.b16 %v1577, %v1567
  %v2768 = vpack.c.b16 %v1578, %v1568
  %v2769 = vpack.c.b16 %v1579, %v1569
  %v2770 = vpack.c.b16 %v1580, %v1570
  %v2771 = vpack.c.b16 %v1581, %v1571
  %v2772 = vpack.c.b16 %v1592, %v1582
  %v2773 = vpack.c.b16 %v1593, %v1583
  %v2774 = vpack.c.b16 %v1594, %v1584
  %v2775 = vpack.c.b16 %v1595, %v1585
  %v2776 = vpack.c.b16 %v1596, %v1586
  %v2777 = vpack.c.b16 %v1597, %v1587
  %v2778 = vpack.c.b16 %v1598, %v1588
  %v2779 = vpack.c.b16 %v1599, %v1589
  %v2780 = vpack.c.b16 %v1600, %v1590
  %v2781 = vpack.c.b16 %v1601, %v1591
  %v2782 = vpack.c.b16 %v1612, %v1602
  %v2783 = vpack.c.b16 %v1613, %v1603
  %v2784 = vpack.c.b16 %v1614, %v1604
  %v2785 = vpack.c.b16 %v1615, %v1605
  %v2786 = vpack.c.b16 %v1616, %v1606
  %v2787 = vpack.c.b16 %v1617, %v1607
  %v2788 = vpack.c.b16 %v1618, %v1608
  %v2789 = vpack.c.b16 %v1619, %v1609
  %v2790 = vpack.c.b16 %v1620, %v1610
  %v2791 = vpack.c.b16 %v1621, %v1611
  %v2792 = vpack.c.b16 %v1632, %v1622
  %v2793 = vpack.c.b16 %v1633, %v1623
  %v2794 = vpack.c.b16 %v1634, %v1624
  %v2795 = vpack.c.b16 %v1635, %v1625
  %v2796 = vpack.c.b16 %v1636, %v1626
  %v2797 = vpack.c.b16 %v1637, %v1627
  %v2798 = vpack.c.b16 %v1638, %v1628
  %v2799 = vpack.c.b16 %v1639, %v1629
  %v2800 = vpack.c.b16 %v1640, %v1630
  %v2801 = vpack.c.b16 %v1641, %v1631
  %v2802 = vpack.c.b16 %v1652, %v1642
  %v2803 = vpack.c.b16 %v1653, %v1643
  %v2804 = vpack.c.b16 %v1654, %v1644
  %v2805 = vpack.c.b16 %v1655, %v1645
  %v2806 = vpack.c.b16 %v1656, %v1646
  %v2807 = vpack.c.b16 %v1657, %v1647
  %v2808 = vpack.c.b16 %v1658, %v1648
  %v2809 = vpack.c.b16 %v1659, %v1649
  %v2810 = vpack.c.b16 %v1660, %v1650
  %v2811 = vpack.c.b16 %v1661, %v1651
  %v2812 = vpack.c.b16 %v1672, %v1662
  %v2813 = vpack.c.b16 %v1673, %v1663
  %v2814 = vpack.c.b16 %v1674, %v1664
  %v2815 = vpack.c.b16 %v1675, %v1665
  %v2816 = vpack.c.b16 %v1676, %v1666
  %v2817 = vpack.c.b16 %v1677, %v1667
  %v2818 = vpack.c.b16 %v1678, %v1668
  %v2819 = vpack.c.b16 %v1679, %v1669
  %v2820 = vpack.c.b16 %v1680, %v1670
  %v2821 = vpack.c.b16 %v1681, %v1671
  %v2822 = vpack.c.b16 %v1692, %v1682
  %v2823 = vpack.c.b16 %v1693, %v1683
  %v2824 = vpack.c.b16 %v1694, %v1684
  %v2825 = vpack.c.b16 %v1695, %v1685
  %v2826 = vpack.c.b16 %v1696, %v1686
  %v2827 = vpack.c.b16 %v1697, %v1687
  %v2828 = vpack.c.b16 %v1698, %v1688
  %v2829 = vpack.c.b16 %v1699, %v1689
  %v2830 = vpack.c.b16 %v1700, %v1690
  %v2831 = vpack.c.b16 %v1701, %v1691
  %v2832 = vpack.c.b16 %v1712, %v1702
  %v2833 = vpack.c.b16 %v1713, %v1703
  %v2834 = vpack.c.b16 %v1714, %v1704
  %v2835 = vpack.c.b16 %v1715, %v1705
  %v2836 = vpack.c.b16 %v1716, %v1706
  %v2837 = vpack.c.b16 %v1717, %v1707
  %v2838 = vpack.c.b16 %v1718, %v1708
  %v2839 = vpack.c.b16 %v1719, %v1709
  %v2840 = vpack.c.b16 %v1720, %v1710
  %v2841 = vpack.c.b16 %v1721, %v1711
  %v2842 = vpack.c.b16 %v1732, %v1722
  %v2843 = vpack.c.b16 %v1733, %v1723
  %v2844 = vpack.c.b16 %v1734, %v1724
  %v2845 = vpack.c.b16 %v1735, %v1725
  %v2846 = vpack.c.b16 %v1736, %v1726
  %v2847 = vpack.c.b16 %v1737, %v1727
  %v2848 = vpack.c.b16 %v1738, %v1728
  %v2849 = vpack.c.b16 %v1739, %v1729
  %v2850 = vpack.c.b16 %v1740, %v1730
  %v2851 = vpack.c.b16 %v1741, %v1731
  %v2852 = vpack.c.b16 %v1752, %v1742
  %v2853 = vpack.c.b16 %v1753, %v1743
  %v2854 = vpack.c.b16 %v1754, %v1744
  %v2855 = vpack.c.b16 %v1755, %v1745
  %v2856 = vpack.c.b16 %v1756, %v1746
  %v2857 = vpack.c.b16 %v1757, %v1747
  %v2858 = vpack.c.b16 %v1758, %v1748
  %v2859 = vpack.c.b16 %v1759, %v1749
  %v2860 = vpack.c.b16 %v1760, %v1750
  %v2861 = vpack.c.b16 %v1761, %v1751
  %v2862 = vpack.c.b16 %v1772, %v1762
  %v2863 = vpack.c.b16 %v1773, %v1763
  %v2864 = vpack.c.b16 %v1774, %v1764
  %v2865 = vpack.c.b16 %v1775, %v1765
  %v2866 = vpack.c.b16 %v1776, %v1766
  %v2867 = vpack.c.b16 %v1777, %v1767
  %v2868 = vpack.c.b16 %v1778, %v1768
  %v2869 = vpack.c.b16 %v1779, %v1769
  %v2870 = vpack.c.b16 %v1780, %v1770
  %v2871 = vpack.c.b16 %v1781, %v1771
  %v2872 = vpack.c.b16 %v1792, %v1782
  %v2873 = vpack.c.b16 %v1793, %v1783
  %v2874 = vpack.c.b16 %v1794, %v1784
  %v2875 = vpack.c.b16 %v1795, %v1785
  %v2876 = vpack.c.b16 %v1796, %v1786
  %v2877 = vpack.c.b16 %v1797, %v1787
  %v2878 = vpack.c.b16 %v1798, %v1788
  %v2879 = vpack.c.b16 %v1799, %v1789
  %v2880 = vpack.c.b16 %v1800, %v1790
  %v2881 = vpack.c.b16 %v1801, %v1791
  %v2882 = vpack.c.b16 %v1812, %v1802
  %v2883 = vpack.c.b16 %v1813, %v1803
  %v2884 = vpack.c.b16 %v1814, %v1804
  %v2885 = vpack.c.b16 %v1815, %v1805
  %v2886 = vpack.c.b16 %v1816, %v1806
  %v2887 = vpack.c.b16 %v1817, %v1807
  %v2888 = vpack.c.b16 %v1818, %v1808
  %v2889 = vpack.c.b16 %v1819, %v1809
  %v2890 = vpack.c.b16 %v1820, %v1810
  %v2891 = vpack.c.b16 %v1821, %v1811
  %v2892 = vpack.c.b16 %v1832, %v1822
  %v2893 = vpack.c.b16 %v1833, %v1823
  %v2894 = vpack.c.b16 %v1834, %v1824
  %v2895 = vpack.c.b16 %v1835, %v1825
  %v2896 = vpack.c.b16 %v1836, %v1826
  %v2897 = vpack.c.b16 %v1837, %v1827
  %v2898 = vpack.c.b16 %v1838, %v1828
  %v2899 = vpack.c.b16 %v1839, %v1829
  %v2900 = vpack.c.b16 %v1840, %v1830
  %v2901 = vpack.c.b16 %v1841, %v1831
  %v2902 = vpack.c.b16 %v1852, %v1842
  %v2903 = vpack.c.b16 %v1853, %v1843
  %v2904 = vpack.c.b16 %v1854, %v1844
  %v2905 = vpack.c.b16 %v1855, %v1845
  %v2906 = vpack.c.b16 %v1856, %v1846
  %v2907 = vpack.c.b16 %v1857, %v1847
  %v2908 = vpack.c.b16 %v1858, %v1848
  %v2909 = vpack.c.b16 %v1859, %v1849
  %v2910 = vpack.c.b16 %v1860, %v1850
  %v2911 = vpack.c.b16 %v1861, %v1851
  %v2912 = vpack.c.b16 %v1872, %v1862
  %v2913 = vpack.c.b16 %v1873, %v1863
  %v2914 = vpack.c.b16 %v1874, %v1864
  %v2915 = vpack.c.b16 %v1875, %v1865
  %v2916 = vpack.c.b16 %v1876, %v1866
  %v2917 = vpack.c.b16 %v1877, %v1867
  %v2918 = vpack.c.b16 %v1878, %v1868
  %v2919 = vpack.c.b16 %v1879, %v1869
  %v2920 = vpack.c.b16 %v1880, %v1870
  %v2921 = vpack.c.b16 %v1881, %v1871
  %v2922 = vpack.c.b16 %v1892, %v1882
  %v2923 = vpack.c.b16 %v1893, %v1883
  %v2924 = vpack.c.b16 %v1894, %v1884
  %v2925 = vpack.c.b16 %v1895, %v1885
  %v2926 = vpack.c.b16 %v1896, %v1886
  %v2927 = vpack.c.b16 %v1897, %v1887
  %v2928 = vpack.c.b16 %v1898, %v1888
  %v2929 = vpack.c.b16 %v1899, %v1889
  %v2930 = vpack.c.b16 %v1900, %v1890
  %v2931 = vpack.c.b16 %v1901, %v1891
  %v2932 = vpack.c.b16 %v1912, %v1902
  %v2933 = vpack.c.b16 %v1913, %v1903
  %v2934 = vpack.c.b16 %v1914, %v1904
  %v2935 = vpack.c.b16 %v1915, %v1905
  %v2936 = vpack.c.b16 %v1916, %v1906
  %v2937 = vpack.c.b16 %v1917, %v1907
  %v2938 = vpack.c.b16 %v1918, %v1908
  %v2939 = vpack.c.b16 %v1919, %v1909
  %v2940 = vpack.c.b16 %v1920, %v1910
  %v2941 = vpack.c.b16 %v1921, %v1911
  %v2942 = vpack.c.b16 %v1932, %v1922
  %v2943 = vpack.c.b16 %v1933, %v1923
  %v2944 = vpack.c.b16 %v1934, %v1924
  %v2945 = vpack.c.b16 %v1935, %v1925
  %v2946 = vpack.c.b16 %v1936, %v1926
  %v2947 = vpack.c.b16 %v1937, %v1927
  %v2948 = vpack.c.b16 %v1938, %v1928
  %v2949 = vpack.c.b16 %v1939, %v1929
  %v2950 = vpack.c.b16 %v1940, %v1930
  %v2951 = vpack.c.b16 %v1941, %v1931
  %v2952 = vpack.c.b16 %v1952, %v1942
  %v2953 = vpack.c.b16 %v1953, %v1943
  %v2954 = vpack.c.b16 %v1954, %v1944
  %v2955 = vpack.c.b16 %v1955, %v1945
  %v2956 = vpack.c.b16 %v1956, %v1946
  %v2957 = vpack.c.b16 %v1957, %v1947
  %v2958 = vpack.c.b16 %v1958, %v1948
  %v2959 = vpack.c.b16 %v1959, %v1949
  %v2960 = vpack.c.b16 %v1960, %v1950
  %v2961 = vpack.c.b16 %v1961, %v1951
  %v2962 = vpack.c.b16 %v1972, %v1962
  %v2963 = vpack.c.b16 %v1973, %v1963
  %v2964 = vpack.c.b16 %v1974, %v1964
  %v2965 = vpack.c.b16 %v1975, %v1965
  %v2966 = vpack.c.b16 %v1976, %v1966
  %v2967 = vpack.c.b16 %v1977, %v1967
  %v2968 = vpack.c.b16 %v1978, %v1968
  %v2969 = vpack.c.b16 %v1979, %v1969
  %v2970 = vpack.c.b16 %v1980, %v1970
  %v2971 = vpack.c.b16 %v1981, %v1971
  %v2972 = vpack.c.b16 %v1992, %v1982
  %v2973 = vpack.c.b16 %v1993, %v1983
  %v2974 = vpack.c.b16 %v1994, %v1984
  %v2975 = vpack.c.b16 %v1995, %v1985
  %v2976 = vpack.c.b16 %v1996, %v1986
  %v2977 = vpack.c.b16 %v1997, %v1987
  %v2978 = vpack.c.b16 %v1998, %v1988
  %v2979 = vpack.c.b16 %v1999, %v1989
  %v2980 = vpack.c.b16 %v2000, %v1990
  %v2981 = vpack.c.b16 %v2001, %v1991
  %v2982 = vpack.c.b16 %v2012, %v2002
  %v2983 = vpack.c.b16 %v2013, %v2003
  %v2984 = vpack.c.b16 %v2014, %v2004
  %v2985 = vpack.c.b16 %v2015, %v2005
  %v2986 = vpack.c.b16 %v2016, %v2006
  %v2987 = vpack.c.b16 %v2017, %v2007
  %v2988 = vpack.c.b16 %v2018, %v2008
  %v2989 = vpack.c.b16 %v2019, %v2009
  %v2990 = vpack.c.b16 %v2020, %v2010
  %v2991 = vpack.c.b16 %v2021, %v2011
  %v2992 = vpack.c.b16 %v2032, %v2022
  %v2993 = vpack.c.b16 %v2033, %v2023
  %v2994 = vpack.c.b16 %v2034, %v2024
  %v2995 = vpack.c.b16 %v2035, %v2025
  %v2996 = vpack.c.b16 %v2036, %v2026
  %v2997 = vpack.c.b16 %v2037, %v2027
  %v2998 = vpack.c.b16 %v2038, %v2028
  %v2999 = vpack.c.b16 %v2039, %v2029
  %v3000 = vpack.c.b16 %v2040, %v2030
  %v3001 = vpack.c.b16 %v2041, %v2031
  %v3002 = vpack.c.b16 %v2052, %v2042
  %v3003 = vpack.c.b16 %v2053, %v2043
  %v3004 = vpack.c.b16 %v2054, %v2044
  %v3005 = vpack.c.b16 %v2055, %v2045
  %v3006 = vpack.c.b16 %v2056, %v2046
  %v3007 = vpack.c.b16 %v2057, %v2047
  %v3008 = vpack.c.b16 %v2058, %v2048
  %v3009 = vpack.c.b16 %v2059, %v2049
  %v3010 = vpack.c.b16 %v2060, %v2050
  %v3011 = vpack.c.b16 %v2061, %v2051
  %v3012 = vpack.c.b16 %v2072, %v2062
  %v3013 = vpack.c.b16 %v2073, %v2063
  %v3014 = vpack.c.b16 %v2074, %v2064
  %v3015 = vpack.c.b16 %v2075, %v2065
  %v3016 = vpack.c.b16 %v2076, %v2066
  %v3017 = vpack.c.b16 %v2077, %v2067
  %v3018 = vpack.c.b16 %v2078, %v2068
  %v3019 = vpack.c.b16 %v2079, %v2069
  %v3020 = vpack.c.b16 %v2080, %v2070
  %v3021 = vpack.c.b16 %v2081, %v2071
  %v3022 = vpack.c.b16 %v2092, %v2082
  %v3023 = vpack.c.b16 %v2093, %v2083
  %v3024 = vpack.c.b16 %v2094, %v2084
  %v3025 = vpack.c.b16 %v2095, %v2085
  %v3026 = vpack.c.b16 %v2096, %v2086
  %v3027 = vpack.c.b16 %v2097, %v2087
  %v3028 = vpack.c.b16 %v2098, %v2088
  %v3029 = vpack.c.b16 %v2099, %v2089
  %v3030 = vpack.c.b16 %v2100, %v2090
  %v3031 = vpack.c.b16 %v2101, %v2091
  %v3032 = vpack.c.b16 %v2112, %v2102
  %v3033 = vpack.c.b16 %v2113, %v2103
  %v3034 = vpack.c.b16 %v2114, %v2104
  %v3035 = vpack.c.b16 %v2115, %v2105
  %v3036 = vpack.c.b16 %v2116, %v2106
  %v3037 = vpack.c.b16 %v2117, %v2107
  %v3038 = vpack.c.b16 %v2118, %v2108
  %v3039 = vpack.c.b16 %v2119, %v2109
  %v3040 = vpack.c.b16 %v2120, %v2110
  %v3041 = vpack.c.b16 %v2121, %v2111
  %v3042 = vpack.c.b16 %v2132, %v2122
  %v3043 = vpack.c.b16 %v2133, %v2123
  %v3044 = vpack.c.b16 %v2134, %v2124
  %v3045 = vpack.c.b16 %v2135, %v2125
  %v3046 = vpack.c.b16 %v2136, %v2126
  %v3047 = vpack.c.b16 %v2137, %v2127
  %v3048 = vpack.c.b16 %v2138, %v2128
  %v3049 = vpack.c.b16 %v2139, %v2129
  %v3050 = vpack.c.b16 %v2140, %v2130
  %v3051 = vpack.c.b16 %v2141, %v2131
  %v3052 = vpack.c.b16 %v2152, %v2142
  %v3053 = vpack.c.b16 %v2153, %v2143
  %v3054 = vpack.c.b16 %v2154, %v2144
  %v3055 = vpack.c.b16 %v2155, %v2145
  %v3056 = vpack.c.b16 %v2156, %v2146
  %v3057 = vpack.c.b16 %v2157, %v2147
  %v3058 = vpack.c.b16 %v2158, %v2148
  %v3059 = vpack.c.b16 %v2159, %v2149
  %v3060 = vpack.c.b16 %v2160, %v2150
  %v3061 = vpack.c.b16 %v2161, %v2151
  %v3062 = vpack.c.b16 %v2172, %v2162
  %v3063 = vpack.c.b16 %v2173, %v2163
  %v3064 = vpack.c.b16 %v2174, %v2164
  %v3065 = vpack.c.b16 %v2175, %v2165
  %v3066 = vpack.c.b16 %v2176, %v2166
  %v3067 = vpack.c.b16 %v2177, %v2167
  %v3068 = vpack.c.b16 %v2178, %v2168
  %v3069 = vpack.c.b16 %v2179, %v2169
  %v3070 = vpack.c.b16 %v2180, %v2170
  %v3071 = vpack.c.b16 %v2181, %v2171
  %v3072 = vpack.c.b16 %v2192, %v2182
  %v3073 = vpack.c.b16 %v2193, %v2183
  %v3074 = vpack.c.b16 %v2194, %v2184
  %v3075 = vpack.c.b16 %v2195, %v2185
  %v3076 = vpack.c.b16 %v2196, %v2186
  %v3077 = vpack.c.b16 %v2197, %v2187
  %v3078 = vpack.c.b16 %v2198, %v2188
  %v3079 = vpack.c.b16 %v2199, %v2189
  %v3080 = vpack.c.b16 %v2200, %v2190
  %v3081 = vpack.c.b16 %v2201, %v2191
  %v3082 = vpack.c.b16 %v2212, %v2202
  %v3083 = vpack.c.b16 %v2213, %v2203
  %v3084 = vpack.c.b16 %v2214, %v2204
  %v3085 = vpack.c.b16 %v2215, %v2205
  %v3086 = vpack.c.b16 %v2216, %v2206
  %v3087 = vpack.c.b16 %v2217, %v2207
  %v3088 = vpack.c.b16 %v2218, %v2208
  %v3089 = vpack.c.b16 %v2219, %v2209
  %v3090 = vpack.c.b16 %v2220, %v2210
  %v3091 = vpack.c.b16 %v2221, %v2211
  %v3092 = vpack.c.b16 %v2232, %v2222
  %v3093 = vpack.c.b16 %v2233, %v2223
  %v3094 = vpack.c.b16 %v2234, %v2224
  %v3095 = vpack.c.b16 %v2235, %v2225
  %v3096 = vpack.c.b16 %v2236, %v2226
  %v3097 = vpack.c.b16 %v2237, %v2227
  %v3098 = vpack.c.b16 %v2238, %v2228
  %v3099 = vpack.c.b16 %v2239, %v2229
  %v3100 = vpack.c.b16 %v2240, %v2230
  %v3101 = vpack.c.b16 %v2241, %v2231
  %v3102 = vpack.c.b16 %v2252, %v2242
  %v3103 = vpack.c.b16 %v2253, %v2243
  %v3104 = vpack.c.b16 %v2254, %v2244
  %v3105 = vpack.c.b16 %v2255, %v2245
  %v3106 = vpack.c.b16 %v2256, %v2246
  %v3107 = vpack.c.b16 %v2257, %v2247
  %v3108 = vpack.c.b16 %v2258, %v2248
  %v3109 = vpack.c.b16 %v2259, %v2249
  %v3110 = vpack.c.b16 %v2260, %v2250
  %v3111 = vpack.c.b16 %v2261, %v2251
  %v3112 = vpack.c.b16 %v2272, %v2262
  %v3113 = vpack.c.b16 %v2273, %v2263
  %v3114 = vpack.c.b16 %v2274, %v2264
  %v3115 = vpack.c.b16 %v2275, %v2265
  %v3116 = vpack.c.b16 %v2276, %v2266
  %v3117 = vpack.c.b16 %v2277, %v2267
  %v3118 = vpack.c.b16 %v2278, %v2268
  %v3119 = vpack.c.b16 %v2279, %v2269
  %v3120 = vpack.c.b16 %v2280, %v2270
  %v3121 = vpack.c.b16 %v2281, %v2271
  %v3122 = vpack.c.b16 %v2292, %v2282
  %v3123 = vpack.c.b16 %v2293, %v2283
  %v3124 = vpack.c.b16 %v2294, %v2284
  %v3125 = vpack.c.b16 %v2295, %v2285
  %v3126 = vpack.c.b16 %v2296, %v2286
  %v3127 = vpack.c.b16 %v2297, %v2287
  %v3128 = vpack.c.b16 %v2298, %v2288
  %v3129 = vpack.c.b16 %v2299, %v2289
  %v3130 = vpack.c.b16 %v2300, %v2290
  %v3131 = vpack.c.b16 %v2301, %v2291
  %v3132 = vpack.c.b16 %v2312, %v2302
  %v3133 = vpack.c.b16 %v2313, %v2303
  %v3134 = vpack.c.b16 %v2314, %v2304
  %v3135 = vpack.c.b16 %v2315, %v2305
  %v3136 = vpack.c.b16 %v2316, %v2306
  %v3137 = vpack.c.b16 %v2317, %v2307
  %v3138 = vpack.c.b16 %v2318, %v2308
  %v3139 = vpack.c.b16 %v2319, %v2309
  %v3140 = vpack.c.b16 %v2320, %v2310
  %v3141 = vpack.c.b16 %v2321, %v2311
  %v3142 = vpack.c.b16 %v2332, %v2322
  %v3143 = vpack.c.b16 %v2333, %v2323
  %v3144 = vpack.c.b16 %v2334, %v2324
  %v3145 = vpack.c.b16 %v2335, %v2325
  %v3146 = vpack.c.b16 %v2336, %v2326
  %v3147 = vpack.c.b16 %v2337, %v2327
  %v3148 = vpack.c.b16 %v2338, %v2328
  %v3149 = vpack.c.b16 %v2339, %v2329
  %v3150 = vpack.c.b16 %v2340, %v2330
  %v3151 = vpack.c.b16 %v2341, %v2331
  %v3152 = vpack.c.b16 %v2352, %v2342
  %v3153 = vpack.c.b16 %v2353, %v2343
  %v3154 = vpack.c.b16 %v2354, %v2344
  %v3155 = vpack.c.b16 %v2355, %v2345
  %v3156 = vpack.c.b16 %v2356, %v2346
  %v3157 = vpack.c.b16 %v2357, %v2347
  %v3158 = vpack.c.b16 %v2358, %v2348
  %v3159 = vpack.c.b16 %v2359, %v2349
  %v3160 = vpack.c.b16 %v2360, %v2350
  %v3161 = vpack.c.b16 %v2361, %v2351
  %v3162 = vpack.c.b16 %v2372, %v2362
  %v3163 = vpack.c.b16 %v2373, %v2363
  %v3164 = vpack.c.b16 %v2374, %v2364
  %v3165 = vpack.c.b16 %v2375, %v2365
  %v3166 = vpack.c.b16 %v2376, %v2366
  %v3167 = vpack.c.b16 %v2377, %v2367
  %v3168 = vpack.c.b16 %v2378, %v2368
  %v3169 = vpack.c.b16 %v2379, %v2369
  %v3170 = vpack.c.b16 %v2380, %v2370
  %v3171 = vpack.c.b16 %v2381, %v2371
  %v3172 = vpack.c.b16 %v2392, %v2382
  %v3173 = vpack.c.b16 %v2393, %v2383
  %v3174 = vpack.c.b16 %v2394, %v2384
  %v3175 = vpack.c.b16 %v2395, %v2385
  %v3176 = vpack.c.b16 %v2396, %v2386
  %v3177 = vpack.c.b16 %v2397, %v2387
  %v3178 = vpack.c.b16 %v2398, %v2388
  %v3179 = vpack.c.b16 %v2399, %v2389
  %v3180 = vpack.c.b16 %v2400, %v2390
  %v3181 = vpack.c.b16 %v2401, %v2391
  %v3182 = vpack.c.b16 %v2412, %v2402
  %v3183 = vpack.c.b16 %v2413, %v2403
  %v3184 = vpack.c.b16 %v2414, %v2404
  %v3185 = vpack.c.b16 %v2415, %v2405
  %v3186 = vpack.c.b16 %v2416, %v2406
  %v3187 = vpack.c.b16 %v2417, %v2407
  %v3188 = vpack.c.b16 %v2418, %v2408
  %v3189 = vpack.c.b16 %v2419, %v2409
  %v3190 = vpack.c.b16 %v2420, %v2410
  %v3191 = vpack.c.b16 %v2421, %v2411
  %v3192 = vpack.c.b16 %v2432, %v2422
  %v3193 = vpack.c.b16 %v2433, %v2423
  %v3194 = vpack.c.b16 %v2434, %v2424
  %v3195 = vpack.c.b16 %v2435, %v2425
  %v3196 = vpack.c.b16 %v2436, %v2426
  %v3197 = vpack.c.b16 %v2437, %v2427
  %v3198 = vpack.c.b16 %v2438, %v2428
  %v3199 = vpack.c.b16 %v2439, %v2429
  %v3200 = vpack.c.b16 %v2440, %v2430
  %v3201 = vpack.c.b16 %v2441, %v2431
  %v3202 = vpack.c.b16 %v2452, %v2442
  %v3203 = vpack.c.b16 %v2453, %v2443
  %v3204 = vpack.c.b16 %v2454, %v2444
  %v3205 = vpack.c.b16 %v2455, %v2445
  %v3206 = vpack.c.b16 %v2456, %v2446
  %v3207 = vpack.c.b16 %v2457, %v2447
  %v3208 = vpack.c.b16 %v2458, %v2448
  %v3209 = vpack.c.b16 %v2459, %v2449
  %v3210 = vpack.c.b16 %v2460, %v2450
  %v3211 = vpack.c.b16 %v2461, %v2451
  %v3212 = vpack.c.b16 %v2472, %v2462
  %v3213 = vpack.c.b16 %v2473, %v2463
  %v3214 = vpack.c.b16 %v2474, %v2464
  %v3215 = vpack.c.b16 %v2475, %v2465
  %v3216 = vpack.c.b16 %v2476, %v2466
  %v3217 = vpack.c.b16 %v2477, %v2467
  %v3218 = vpack.c.b16 %v2478, %v2468
  %v3219 = vpack.c.b16 %v2479, %v2469
  %v3220 = vpack.c.b16 %v2480, %v2470
  %v3221 = vpack.c.b16 %v2481, %v2471
  %v3222 = vpack.c.b16 %v2492, %v2482
  %v3223 = vpack.c.b16 %v2493, %v2483
  %v3224 = vpack.c.b16 %v2494, %v2484
  %v3225 = vpack.c.b16 %v2495, %v2485
  %v3226 = vpack.c.b16 %v2496, %v2486
  %v3227 = vpack.c.b16 %v2497, %v2487
  %v3228 = vpack.c.b16 %v2498, %v2488
  %v3229 = vpack.c.b16 %v2499, %v2489
  %v3230 = vpack.c.b16 %v2500, %v2490
  %v3231 = vpack.c.b16 %v2501, %v2491
  %v3232 = vpack.c.b16 %v2512, %v2502
  %v3233 = vpack.c.b16 %v2513, %v2503
  %v3234 = vpack.c.b16 %v2514, %v2504
  %v3235 = vpack.c.b16 %v2515, %v2505
  %v3236 = vpack.c.b16 %v2516, %v2506
  %v3237 = vpack.c.b16 %v2517, %v2507
  %v3238 = vpack.c.b16 %v2518, %v2508
  %v3239 = vpack.c.b16 %v2519, %v2509
  %v3240 = vpack.c.b16 %v2520, %v2510
  %v3241 = vpack.c.b16 %v2521, %v2511
  %v3242 = vpack.c.b16 %v2532, %v2522
  %v3243 = vpack.c.b16 %v2533, %v2523
  %v3244 = vpack.c.b16 %v2534, %v2524
  %v3245 = vpack.c.b16 %v2535, %v2525
  %v3246 = vpack.c.b16 %v2536, %v2526
  %v3247 = vpack.c.b16 %v2537, %v2527
  %v3248 = vpack.c.b16 %v2538, %v2528
  %v3249 = vpack.c.b16 %v2539, %v2529
  %v3250 = vpack.c.b16 %v2540, %v2530
  %v3251 = vpack.c.b16 %v2541, %v2531
  %v3252 = vpack.c.b16 %v2552, %v2542
  %v3253 = vpack.c.b16 %v2553, %v2543
  %v3254 = vpack.c.b16 %v2554, %v2544
  %v3255 = vpack.c.b16 %v2555, %v2545
  %v3256 = vpack.c.b16 %v2556, %v2546
  %v3257 = vpack.c.b16 %v2557, %v2547
  %v3258 = vpack.c.b16 %v2558, %v2548
  %v3259 = vpack.c.b16 %v2559, %v2549
  %v3260 = vpack.c.b16 %v2560, %v2550
  %v3261 = vpack.c.b16 %v2561, %v2551
  %v3262 = vpack.c.b16 %v2572, %v2562
  %v3263 = vpack.c.b16 %v2573, %v2563
  %v3264 = vpack.c.b16 %v2574, %v2564
  %v3265 = vpack.c.b16 %v2575, %v2565
  %v3266 = vpack.c.b16 %v2576, %v2566
  %v3267 = vpack.c.b16 %v2577, %v2567
  %v3268 = vpack.c.b16 %v2578, %v2568
  %v3269 = vpack.c.b16 %v2579, %v2569
  %v3270 = vpack.c.b16 %v2580, %v2570
  %v3271 = vpack.c.b16 %v2581, %v2571
  %v3272 = vpack.c.b16 %v2592, %v2582
  %v3273 = vpack.c.b16 %v2593, %v2583
  %v3274 = vpack.c.b16 %v2594, %v2584
  %v3275 = vpack.c.b16 %v2595, %v2585
  %v3276 = vpack.c.b16 %v2596, %v2586
  %v3277 = vpack.c.b16 %v2597, %v2587
  %v3278 = vpack.c.b16 %v2598, %v2588
  %v3279 = vpack.c.b16 %v2599, %v2589
  %v3280 = vpack.c.b16 %v2600, %v2590
  %v3281 = vpack.c.b16 %v2601, %v2591
  %v3282 = vpack.c.b16 %v2612, %v2602
  %v3283 = vpack.c.b16 %v2613, %v2603
  %v3284 = vpack.c.b16 %v2614, %v2604
  %v3285 = vpack.c.b16 %v2615, %v2605
  %v3286 = vpack.c.b16 %v2616, %v2606
  %v3287 = vpack.c.b16 %v2617, %v2607
  %v3288 = vpack.c.b16 %v2618, %v2608
  %v3289 = vpack.c.b16 %v2619, %v2609
  %v3290 = vpack.c.b16 %v2620, %v2610
  %v3291 = vpack.c.b16 %v2621, %v2611
  %v3292 = vpack.c.b16 %v2632, %v2622
  %v3293 = vpack.c.b16 %v2633, %v2623
  %v3294 = vpack.c.b16 %v2634, %v2624
  %v3295 = vpack.c.b16 %v2635, %v2625
  %v3296 = vpack.c.b16 %v2636, %v2626
  %v3297 = vpack.c.b16 %v2637, %v2627
  %v3298 = vpack.c.b16 %v2638, %v2628
  %v3299 = vpack.c.b16 %v2639, %v2629
  %v3300 = vpack.c.b16 %v2640, %v2630
  %v3301 = vpack.c.b16 %v2641, %v2631
  %v3302 = vpack.c.b16 %v2652, %v2642
  %v3303 = vpack.c.b16 %v2653, %v2643
  %v3304 = vpack.c.b16 %v2654, %v2644
  %v3305 = vpack.c.b16 %v2655, %v2645
  %v3306 = vpack.c.b16 %v2656, %v2646
  %v3307 = vpack.c.b16 %v2657, %v2647
  %v3308 = vpack.c.b16 %v2658, %v2648
  %v3309 = vpack.c.b16 %v2659, %v2649
  %v3310 = vpack.c.b16 %v2660, %v2650
  %v3311 = vpack.c.b16 %v2661, %v2651
  %v3312 = vpack.c.b16 %v2672, %v2662
  %v3313 = vpack.c.b16 %v2673, %v2663
  %v3314 = vpack.c.b16 %v2674, %v2664
  %v3315 = vpack.c.b16 %v2675, %v2665
  %v3316 = vpack.c.b16 %v2676, %v2666
  %v3317 = vpack.c.b16 %v2677, %v2667
  %v3318 = vpack.c.b16 %v2678, %v2668
  %v3319 = vpack.c.b16 %v2679, %v2669
  %v3320 = vpack.c.b16 %v2680, %v2670
  %v3321 = vpack.c.b16 %v2681, %v2671
  %3962 = vmatprep.subr.bf16.mxu0 %v2753
  %3963 = vmatpush1.bf16.msra.mxu0 %v2752
  %3964 = vmatprep.subr.bf16.mxu0 %v2743
  %3965 = vmatpush1.bf16.msra.mxu0 %v2742
  %3966 = vmatprep.subr.bf16.mxu0 %v2733
  %3967 = vmatpush1.bf16.msra.mxu0 %v2732
  %3968 = vmatprep.subr.bf16.mxu0 %v2723
  %3969 = vmatpush1.bf16.msra.mxu0 %v2722
  %3970 = vmatprep.subr.bf16.mxu0 %v2713
  %3971 = vmatpush1.bf16.msra.mxu0 %v2712
  %3972 = vmatprep.subr.bf16.mxu0 %v2703
  %3973 = vmatpush1.bf16.msra.mxu0 %v2702
  %3974 = vmatprep.subr.bf16.mxu0 %v2693
  %3975 = vmatpush1.bf16.msra.mxu0 %v2692
  %3976 = vmatprep.subr.bf16.mxu0 %v2683
  %3977 = vmatpush1.bf16.msra.mxu0 %v2682
  %3978 = vmatprep.subr.bf16.mxu0 %v2833
  %3979 = vmatpush2.bf16.msra.mxu0 %v2832
  %3980 = vmatprep.subr.bf16.mxu0 %v2823
  %3981 = vmatpush2.bf16.msra.mxu0 %v2822
  %3982 = vmatprep.subr.bf16.mxu0 %v2813
  %3983 = vmatpush2.bf16.msra.mxu0 %v2812
  %3984 = vmatprep.subr.bf16.mxu0 %v2803
  %3985 = vmatpush2.bf16.msra.mxu0 %v2802
  %3986 = vmatprep.subr.bf16.mxu0 %v2793
  %3987 = vmatpush2.bf16.msra.mxu0 %v2792
  %3988 = vmatprep.subr.bf16.mxu0 %v2783
  %3989 = vmatpush2.bf16.msra.mxu0 %v2782
  %3990 = vmatprep.subr.bf16.mxu0 %v2773
  %3991 = vmatpush2.bf16.msra.mxu0 %v2772
  %3992 = vmatprep.subr.bf16.mxu0 %v2763
  %3993 = vmatpush2.bf16.msra.mxu0 %v2762
  %3994 = vmatprep.mubr.bf16.mxu0 %v107
  %3995 = vmatmul.mubr.bf16.gmra.mxu0 %v106
  %v3996 = vpop.f32.mrf.mxu0
  %v3997 = vadd.f32 0.0, %v3996
  %v3998 = vpop.f32.mrf.mxu0
  %v3999 = vadd.f32 0.0, %v3998
  %v4000 = vpop.f32.mrf.mxu0
  %v4001 = vadd.f32 0.0, %v4000
  %v4002 = vpop.f32.mrf.mxu0
  %v4003 = vadd.f32 0.0, %v4002
  %4004 = vmatprep.mubr.bf16.mxu0 %v115
  %4005 = vmatmul.mubr.bf16.gmra.mxu0 %v114
  %v4006 = vpop.f32.mrf.mxu0
  %v4007 = vadd.f32 0.0, %v4006
  %v4008 = vpop.f32.mrf.mxu0
  %v4009 = vadd.f32 0.0, %v4008
  %v4010 = vpop.f32.mrf.mxu0
  %v4011 = vpop.f32.mrf.mxu0
  %4012 = vdwg.mxu0
  %4013 = vmatprep.subr.bf16.mxu0 %v2913
  %4014 = vmatpush1.bf16.msra.mxu0 %v2912
  %4015 = vmatprep.subr.bf16.mxu0 %v2903
  %4016 = vmatpush1.bf16.msra.mxu0 %v2902
  %4017 = vmatprep.subr.bf16.mxu0 %v2893
  %4018 = vmatpush1.bf16.msra.mxu0 %v2892
  %4019 = vmatprep.subr.bf16.mxu0 %v2883
  %4020 = vmatpush1.bf16.msra.mxu0 %v2882
  %4021 = vmatprep.subr.bf16.mxu0 %v2873
  %4022 = vmatpush1.bf16.msra.mxu0 %v2872
  %4023 = vmatprep.subr.bf16.mxu0 %v2863
  %4024 = vmatpush1.bf16.msra.mxu0 %v2862
  %4025 = vmatprep.subr.bf16.mxu0 %v2853
  %4026 = vmatpush1.bf16.msra.mxu0 %v2852
  %4027 = vmatprep.subr.bf16.mxu0 %v2843
  %4028 = vmatpush1.bf16.msra.mxu0 %v2842
  %4029 = vmatprep.subr.bf16.mxu0 %v2993
  %4030 = vmatpush2.bf16.msra.mxu0 %v2992
  %4031 = vmatprep.subr.bf16.mxu0 %v2983
  %4032 = vmatpush2.bf16.msra.mxu0 %v2982
  %4033 = vmatprep.subr.bf16.mxu0 %v2973
  %4034 = vmatpush2.bf16.msra.mxu0 %v2972
  %4035 = vmatprep.subr.bf16.mxu0 %v2963
  %4036 = vmatpush2.bf16.msra.mxu0 %v2962
  %4037 = vmatprep.subr.bf16.mxu0 %v2953
  %4038 = vmatpush2.bf16.msra.mxu0 %v2952
  %4039 = vmatprep.subr.bf16.mxu0 %v2943
  %4040 = vmatpush2.bf16.msra.mxu0 %v2942
  %4041 = vmatprep.subr.bf16.mxu0 %v2933
  %4042 = vmatpush2.bf16.msra.mxu0 %v2932
  %4043 = vmatprep.subr.bf16.mxu0 %v2923
  %4044 = vmatpush2.bf16.msra.mxu0 %v2922
  %4045 = vmatprep.mubr.bf16.mxu0 %v109
  %4046 = vmatmul.mubr.bf16.gmra.mxu0 %v108
  %v4047 = vpop.f32.mrf.mxu0
  %v4048 = vadd.f32 %v3997, %v4047
  %v4049 = vpop.f32.mrf.mxu0
  %v4050 = vadd.f32 %v3999, %v4049
  %v4051 = vpop.f32.mrf.mxu0
  %v4052 = vadd.f32 %v4001, %v4051
  %v4053 = vpop.f32.mrf.mxu0
  %v4054 = vadd.f32 %v4003, %v4053
  %4055 = vmatprep.mubr.bf16.mxu0 %v117
  %4056 = vmatmul.mubr.bf16.gmra.mxu0 %v116
  %v4057 = vpop.f32.mrf.mxu0
  %v4058 = vadd.f32 %v4007, %v4057
  %v4059 = vpop.f32.mrf.mxu0
  %v4060 = vadd.f32 %v4009, %v4059
  %v4061 = vpop.f32.mrf.mxu0
  %v4062 = vpop.f32.mrf.mxu0
  %4063 = vdwg.mxu0
  %4064 = vmatprep.subr.bf16.mxu0 %v3073
  %4065 = vmatpush1.bf16.msra.mxu0 %v3072
  %4066 = vmatprep.subr.bf16.mxu0 %v3063
  %4067 = vmatpush1.bf16.msra.mxu0 %v3062
  %4068 = vmatprep.subr.bf16.mxu0 %v3053
  %4069 = vmatpush1.bf16.msra.mxu0 %v3052
  %4070 = vmatprep.subr.bf16.mxu0 %v3043
  %4071 = vmatpush1.bf16.msra.mxu0 %v3042
  %4072 = vmatprep.subr.bf16.mxu0 %v3033
  %4073 = vmatpush1.bf16.msra.mxu0 %v3032
  %4074 = vmatprep.subr.bf16.mxu0 %v3023
  %4075 = vmatpush1.bf16.msra.mxu0 %v3022
  %4076 = vmatprep.subr.bf16.mxu0 %v3013
  %4077 = vmatpush1.bf16.msra.mxu0 %v3012
  %4078 = vmatprep.subr.bf16.mxu0 %v3003
  %4079 = vmatpush1.bf16.msra.mxu0 %v3002
  %4080 = vmatprep.subr.bf16.mxu0 %v3153
  %4081 = vmatpush2.bf16.msra.mxu0 %v3152
  %4082 = vmatprep.subr.bf16.mxu0 %v3143
  %4083 = vmatpush2.bf16.msra.mxu0 %v3142
  %4084 = vmatprep.subr.bf16.mxu0 %v3133
  %4085 = vmatpush2.bf16.msra.mxu0 %v3132
  %4086 = vmatprep.subr.bf16.mxu0 %v3123
  %4087 = vmatpush2.bf16.msra.mxu0 %v3122
  %4088 = vmatprep.subr.bf16.mxu0 %v3113
  %4089 = vmatpush2.bf16.msra.mxu0 %v3112
  %4090 = vmatprep.subr.bf16.mxu0 %v3103
  %4091 = vmatpush2.bf16.msra.mxu0 %v3102
  %4092 = vmatprep.subr.bf16.mxu0 %v3093
  %4093 = vmatpush2.bf16.msra.mxu0 %v3092
  %4094 = vmatprep.subr.bf16.mxu0 %v3083
  %4095 = vmatpush2.bf16.msra.mxu0 %v3082
  %4096 = vmatprep.mubr.bf16.mxu0 %v111
  %4097 = vmatmul.mubr.bf16.gmra.mxu0 %v110
  %v4098 = vpop.f32.mrf.mxu0
  %v4099 = vadd.f32 %v4048, %v4098
  %v4100 = vpop.f32.mrf.mxu0
  %v4101 = vadd.f32 %v4050, %v4100
  %v4102 = vpop.f32.mrf.mxu0
  %v4103 = vadd.f32 %v4052, %v4102
  %v4104 = vpop.f32.mrf.mxu0
  %v4105 = vadd.f32 %v4054, %v4104
  %4106 = vmatprep.mubr.bf16.mxu0 %v119
  %4107 = vmatmul.mubr.bf16.gmra.mxu0 %v118
  %v4108 = vpop.f32.mrf.mxu0
  %v4109 = vadd.f32 %v4058, %v4108
  %v4110 = vpop.f32.mrf.mxu0
  %v4111 = vadd.f32 %v4060, %v4110
  %v4112 = vpop.f32.mrf.mxu0
  %v4113 = vpop.f32.mrf.mxu0
  %4114 = vdwg.mxu0
  %4115 = vmatprep.subr.bf16.mxu0 %v3233
  %4116 = vmatpush1.bf16.msra.mxu0 %v3232
  %4117 = vmatprep.subr.bf16.mxu0 %v3223
  %4118 = vmatpush1.bf16.msra.mxu0 %v3222
  %4119 = vmatprep.subr.bf16.mxu0 %v3213
  %4120 = vmatpush1.bf16.msra.mxu0 %v3212
  %4121 = vmatprep.subr.bf16.mxu0 %v3203
  %4122 = vmatpush1.bf16.msra.mxu0 %v3202
  %4123 = vmatprep.subr.bf16.mxu0 %v3193
  %4124 = vmatpush1.bf16.msra.mxu0 %v3192
  %4125 = vmatprep.subr.bf16.mxu0 %v3183
  %4126 = vmatpush1.bf16.msra.mxu0 %v3182
  %4127 = vmatprep.subr.bf16.mxu0 %v3173
  %4128 = vmatpush1.bf16.msra.mxu0 %v3172
  %4129 = vmatprep.subr.bf16.mxu0 %v3163
  %4130 = vmatpush1.bf16.msra.mxu0 %v3162
  %4131 = vmatprep.subr.bf16.mxu0 %v3313
  %4132 = vmatpush2.bf16.msra.mxu0 %v3312
  %4133 = vmatprep.subr.bf16.mxu0 %v3303
  %4134 = vmatpush2.bf16.msra.mxu0 %v3302
  %4135 = vmatprep.subr.bf16.mxu0 %v3293
  %4136 = vmatpush2.bf16.msra.mxu0 %v3292
  %4137 = vmatprep.subr.bf16.mxu0 %v3283
  %4138 = vmatpush2.bf16.msra.mxu0 %v3282
  %4139 = vmatprep.subr.bf16.mxu0 %v3273
  %4140 = vmatpush2.bf16.msra.mxu0 %v3272
  %4141 = vmatprep.subr.bf16.mxu0 %v3263
  %4142 = vmatpush2.bf16.msra.mxu0 %v3262
  %4143 = vmatprep.subr.bf16.mxu0 %v3253
  %4144 = vmatpush2.bf16.msra.mxu0 %v3252
  %4145 = vmatprep.subr.bf16.mxu0 %v3243
  %4146 = vmatpush2.bf16.msra.mxu0 %v3242
  %4147 = vmatprep.mubr.bf16.mxu0 %v113
  %4148 = vmatmul.mubr.bf16.gmra.mxu0 %v112
  %v4149 = vpop.f32.mrf.mxu0
  %v4150 = vadd.f32 %v4099, %v4149
  %v4151 = vpop.f32.mrf.mxu0
  %v4152 = vadd.f32 %v4101, %v4151
  %v4153 = vpop.f32.mrf.mxu0
  %v4154 = vadd.f32 %v4103, %v4153
  %v4155 = vpop.f32.mrf.mxu0
  %v4156 = vadd.f32 %v4105, %v4155
  %4157 = vmatprep.mubr.bf16.mxu0 %v121
  %4158 = vmatmul.mubr.bf16.gmra.mxu0 %v120
  %v4159 = vpop.f32.mrf.mxu0
  %v4160 = vadd.f32 %v4109, %v4159
  %v4161 = vpop.f32.mrf.mxu0
  %v4162 = vadd.f32 %v4111, %v4161
  %v4163 = vpop.f32.mrf.mxu0
  %v4164 = vpop.f32.mrf.mxu0
  %4165 = vdwg.mxu0
  %4166 = vmatprep.subr.bf16.mxu0 %v2755
  %4167 = vmatpush1.bf16.msra.mxu0 %v2754
  %4168 = vmatprep.subr.bf16.mxu0 %v2745
  %4169 = vmatpush1.bf16.msra.mxu0 %v2744
  %4170 = vmatprep.subr.bf16.mxu0 %v2735
  %4171 = vmatpush1.bf16.msra.mxu0 %v2734
  %4172 = vmatprep.subr.bf16.mxu0 %v2725
  %4173 = vmatpush1.bf16.msra.mxu0 %v2724
  %4174 = vmatprep.subr.bf16.mxu0 %v2715
  %4175 = vmatpush1.bf16.msra.mxu0 %v2714
  %4176 = vmatprep.subr.bf16.mxu0 %v2705
  %4177 = vmatpush1.bf16.msra.mxu0 %v2704
  %4178 = vmatprep.subr.bf16.mxu0 %v2695
  %4179 = vmatpush1.bf16.msra.mxu0 %v2694
  %4180 = vmatprep.subr.bf16.mxu0 %v2685
  %4181 = vmatpush1.bf16.msra.mxu0 %v2684
  %4182 = vmatprep.subr.bf16.mxu0 %v2835
  %4183 = vmatpush2.bf16.msra.mxu0 %v2834
  %4184 = vmatprep.subr.bf16.mxu0 %v2825
  %4185 = vmatpush2.bf16.msra.mxu0 %v2824
  %4186 = vmatprep.subr.bf16.mxu0 %v2815
  %4187 = vmatpush2.bf16.msra.mxu0 %v2814
  %4188 = vmatprep.subr.bf16.mxu0 %v2805
  %4189 = vmatpush2.bf16.msra.mxu0 %v2804
  %4190 = vmatprep.subr.bf16.mxu0 %v2795
  %4191 = vmatpush2.bf16.msra.mxu0 %v2794
  %4192 = vmatprep.subr.bf16.mxu0 %v2785
  %4193 = vmatpush2.bf16.msra.mxu0 %v2784
  %4194 = vmatprep.subr.bf16.mxu0 %v2775
  %4195 = vmatpush2.bf16.msra.mxu0 %v2774
  %4196 = vmatprep.subr.bf16.mxu0 %v2765
  %4197 = vmatpush2.bf16.msra.mxu0 %v2764
  %4198 = vmatprep.mubr.bf16.mxu0 %v107
  %4199 = vmatmul.mubr.bf16.gmra.mxu0 %v106
  %v4200 = vpop.f32.mrf.mxu0
  %v4201 = vadd.f32 0.0, %v4200
  %v4202 = vpop.f32.mrf.mxu0
  %v4203 = vadd.f32 0.0, %v4202
  %v4204 = vpop.f32.mrf.mxu0
  %v4205 = vadd.f32 0.0, %v4204
  %v4206 = vpop.f32.mrf.mxu0
  %v4207 = vadd.f32 0.0, %v4206
  %4208 = vmatprep.mubr.bf16.mxu0 %v115
  %4209 = vmatmul.mubr.bf16.gmra.mxu0 %v114
  %v4210 = vpop.f32.mrf.mxu0
  %v4211 = vadd.f32 0.0, %v4210
  %v4212 = vpop.f32.mrf.mxu0
  %v4213 = vadd.f32 0.0, %v4212
  %v4214 = vpop.f32.mrf.mxu0
  %v4215 = vpop.f32.mrf.mxu0
  %4216 = vdwg.mxu0
  %4217 = vmatprep.subr.bf16.mxu0 %v2915
  %4218 = vmatpush1.bf16.msra.mxu0 %v2914
  %4219 = vmatprep.subr.bf16.mxu0 %v2905
  %4220 = vmatpush1.bf16.msra.mxu0 %v2904
  %4221 = vmatprep.subr.bf16.mxu0 %v2895
  %4222 = vmatpush1.bf16.msra.mxu0 %v2894
  %4223 = vmatprep.subr.bf16.mxu0 %v2885
  %4224 = vmatpush1.bf16.msra.mxu0 %v2884
  %4225 = vmatprep.subr.bf16.mxu0 %v2875
  %4226 = vmatpush1.bf16.msra.mxu0 %v2874
  %4227 = vmatprep.subr.bf16.mxu0 %v2865
  %4228 = vmatpush1.bf16.msra.mxu0 %v2864
  %4229 = vmatprep.subr.bf16.mxu0 %v2855
  %4230 = vmatpush1.bf16.msra.mxu0 %v2854
  %4231 = vmatprep.subr.bf16.mxu0 %v2845
  %4232 = vmatpush1.bf16.msra.mxu0 %v2844
  %4233 = vmatprep.subr.bf16.mxu0 %v2995
  %4234 = vmatpush2.bf16.msra.mxu0 %v2994
  %4235 = vmatprep.subr.bf16.mxu0 %v2985
  %4236 = vmatpush2.bf16.msra.mxu0 %v2984
  %4237 = vmatprep.subr.bf16.mxu0 %v2975
  %4238 = vmatpush2.bf16.msra.mxu0 %v2974
  %4239 = vmatprep.subr.bf16.mxu0 %v2965
  %4240 = vmatpush2.bf16.msra.mxu0 %v2964
  %4241 = vmatprep.subr.bf16.mxu0 %v2955
  %4242 = vmatpush2.bf16.msra.mxu0 %v2954
  %4243 = vmatprep.subr.bf16.mxu0 %v2945
  %4244 = vmatpush2.bf16.msra.mxu0 %v2944
  %4245 = vmatprep.subr.bf16.mxu0 %v2935
  %4246 = vmatpush2.bf16.msra.mxu0 %v2934
  %4247 = vmatprep.subr.bf16.mxu0 %v2925
  %4248 = vmatpush2.bf16.msra.mxu0 %v2924
  %4249 = vmatprep.mubr.bf16.mxu0 %v109
  %4250 = vmatmul.mubr.bf16.gmra.mxu0 %v108
  %v4251 = vpop.f32.mrf.mxu0
  %v4252 = vadd.f32 %v4201, %v4251
  %v4253 = vpop.f32.mrf.mxu0
  %v4254 = vadd.f32 %v4203, %v4253
  %v4255 = vpop.f32.mrf.mxu0
  %v4256 = vadd.f32 %v4205, %v4255
  %v4257 = vpop.f32.mrf.mxu0
  %v4258 = vadd.f32 %v4207, %v4257
  %4259 = vmatprep.mubr.bf16.mxu0 %v117
  %4260 = vmatmul.mubr.bf16.gmra.mxu0 %v116
  %v4261 = vpop.f32.mrf.mxu0
  %v4262 = vadd.f32 %v4211, %v4261
  %v4263 = vpop.f32.mrf.mxu0
  %v4264 = vadd.f32 %v4213, %v4263
  %v4265 = vpop.f32.mrf.mxu0
  %v4266 = vpop.f32.mrf.mxu0
  %4267 = vdwg.mxu0
  %4268 = vmatprep.subr.bf16.mxu0 %v3075
  %4269 = vmatpush1.bf16.msra.mxu0 %v3074
  %4270 = vmatprep.subr.bf16.mxu0 %v3065
  %4271 = vmatpush1.bf16.msra.mxu0 %v3064
  %4272 = vmatprep.subr.bf16.mxu0 %v3055
  %4273 = vmatpush1.bf16.msra.mxu0 %v3054
  %4274 = vmatprep.subr.bf16.mxu0 %v3045
  %4275 = vmatpush1.bf16.msra.mxu0 %v3044
  %4276 = vmatprep.subr.bf16.mxu0 %v3035
  %4277 = vmatpush1.bf16.msra.mxu0 %v3034
  %4278 = vmatprep.subr.bf16.mxu0 %v3025
  %4279 = vmatpush1.bf16.msra.mxu0 %v3024
  %4280 = vmatprep.subr.bf16.mxu0 %v3015
  %4281 = vmatpush1.bf16.msra.mxu0 %v3014
  %4282 = vmatprep.subr.bf16.mxu0 %v3005
  %4283 = vmatpush1.bf16.msra.mxu0 %v3004
  %4284 = vmatprep.subr.bf16.mxu0 %v3155
  %4285 = vmatpush2.bf16.msra.mxu0 %v3154
  %4286 = vmatprep.subr.bf16.mxu0 %v3145
  %4287 = vmatpush2.bf16.msra.mxu0 %v3144
  %4288 = vmatprep.subr.bf16.mxu0 %v3135
  %4289 = vmatpush2.bf16.msra.mxu0 %v3134
  %4290 = vmatprep.subr.bf16.mxu0 %v3125
  %4291 = vmatpush2.bf16.msra.mxu0 %v3124
  %4292 = vmatprep.subr.bf16.mxu0 %v3115
  %4293 = vmatpush2.bf16.msra.mxu0 %v3114
  %4294 = vmatprep.subr.bf16.mxu0 %v3105
  %4295 = vmatpush2.bf16.msra.mxu0 %v3104
  %4296 = vmatprep.subr.bf16.mxu0 %v3095
  %4297 = vmatpush2.bf16.msra.mxu0 %v3094
  %4298 = vmatprep.subr.bf16.mxu0 %v3085
  %4299 = vmatpush2.bf16.msra.mxu0 %v3084
  %4300 = vmatprep.mubr.bf16.mxu0 %v111
  %4301 = vmatmul.mubr.bf16.gmra.mxu0 %v110
  %v4302 = vpop.f32.mrf.mxu0
  %v4303 = vadd.f32 %v4252, %v4302
  %v4304 = vpop.f32.mrf.mxu0
  %v4305 = vadd.f32 %v4254, %v4304
  %v4306 = vpop.f32.mrf.mxu0
  %v4307 = vadd.f32 %v4256, %v4306
  %v4308 = vpop.f32.mrf.mxu0
  %v4309 = vadd.f32 %v4258, %v4308
  %4310 = vmatprep.mubr.bf16.mxu0 %v119
  %4311 = vmatmul.mubr.bf16.gmra.mxu0 %v118
  %v4312 = vpop.f32.mrf.mxu0
  %v4313 = vadd.f32 %v4262, %v4312
  %v4314 = vpop.f32.mrf.mxu0
  %v4315 = vadd.f32 %v4264, %v4314
  %v4316 = vpop.f32.mrf.mxu0
  %v4317 = vpop.f32.mrf.mxu0
  %4318 = vdwg.mxu0
  %4319 = vmatprep.subr.bf16.mxu0 %v3235
  %4320 = vmatpush1.bf16.msra.mxu0 %v3234
  %4321 = vmatprep.subr.bf16.mxu0 %v3225
  %4322 = vmatpush1.bf16.msra.mxu0 %v3224
  %4323 = vmatprep.subr.bf16.mxu0 %v3215
  %4324 = vmatpush1.bf16.msra.mxu0 %v3214
  %4325 = vmatprep.subr.bf16.mxu0 %v3205
  %4326 = vmatpush1.bf16.msra.mxu0 %v3204
  %4327 = vmatprep.subr.bf16.mxu0 %v3195
  %4328 = vmatpush1.bf16.msra.mxu0 %v3194
  %4329 = vmatprep.subr.bf16.mxu0 %v3185
  %4330 = vmatpush1.bf16.msra.mxu0 %v3184
  %4331 = vmatprep.subr.bf16.mxu0 %v3175
  %4332 = vmatpush1.bf16.msra.mxu0 %v3174
  %4333 = vmatprep.subr.bf16.mxu0 %v3165
  %4334 = vmatpush1.bf16.msra.mxu0 %v3164
  %4335 = vmatprep.subr.bf16.mxu0 %v3315
  %4336 = vmatpush2.bf16.msra.mxu0 %v3314
  %4337 = vmatprep.subr.bf16.mxu0 %v3305
  %4338 = vmatpush2.bf16.msra.mxu0 %v3304
  %4339 = vmatprep.subr.bf16.mxu0 %v3295
  %4340 = vmatpush2.bf16.msra.mxu0 %v3294
  %4341 = vmatprep.subr.bf16.mxu0 %v3285
  %4342 = vmatpush2.bf16.msra.mxu0 %v3284
  %4343 = vmatprep.subr.bf16.mxu0 %v3275
  %4344 = vmatpush2.bf16.msra.mxu0 %v3274
  %4345 = vmatprep.subr.bf16.mxu0 %v3265
  %4346 = vmatpush2.bf16.msra.mxu0 %v3264
  %4347 = vmatprep.subr.bf16.mxu0 %v3255
  %4348 = vmatpush2.bf16.msra.mxu0 %v3254
  %4349 = vmatprep.subr.bf16.mxu0 %v3245
  %4350 = vmatpush2.bf16.msra.mxu0 %v3244
  %4351 = vmatprep.mubr.bf16.mxu0 %v113
  %4352 = vmatmul.mubr.bf16.gmra.mxu0 %v112
  %v4353 = vpop.f32.mrf.mxu0
  %v4354 = vadd.f32 %v4303, %v4353
  %v4355 = vpop.f32.mrf.mxu0
  %v4356 = vadd.f32 %v4305, %v4355
  %v4357 = vpop.f32.mrf.mxu0
  %v4358 = vadd.f32 %v4307, %v4357
  %v4359 = vpop.f32.mrf.mxu0
  %v4360 = vadd.f32 %v4309, %v4359
  %4361 = vmatprep.mubr.bf16.mxu0 %v121
  %4362 = vmatmul.mubr.bf16.gmra.mxu0 %v120
  %v4363 = vpop.f32.mrf.mxu0
  %v4364 = vadd.f32 %v4313, %v4363
  %v4365 = vpop.f32.mrf.mxu0
  %v4366 = vadd.f32 %v4315, %v4365
  %v4367 = vpop.f32.mrf.mxu0
  %v4368 = vpop.f32.mrf.mxu0
  %4369 = vdwg.mxu0
  %4370 = vmatprep.subr.bf16.mxu0 %v2757
  %4371 = vmatpush1.bf16.msra.mxu0 %v2756
  %4372 = vmatprep.subr.bf16.mxu0 %v2747
  %4373 = vmatpush1.bf16.msra.mxu0 %v2746
  %4374 = vmatprep.subr.bf16.mxu0 %v2737
  %4375 = vmatpush1.bf16.msra.mxu0 %v2736
  %4376 = vmatprep.subr.bf16.mxu0 %v2727
  %4377 = vmatpush1.bf16.msra.mxu0 %v2726
  %4378 = vmatprep.subr.bf16.mxu0 %v2717
  %4379 = vmatpush1.bf16.msra.mxu0 %v2716
  %4380 = vmatprep.subr.bf16.mxu0 %v2707
  %4381 = vmatpush1.bf16.msra.mxu0 %v2706
  %4382 = vmatprep.subr.bf16.mxu0 %v2697
  %4383 = vmatpush1.bf16.msra.mxu0 %v2696
  %4384 = vmatprep.subr.bf16.mxu0 %v2687
  %4385 = vmatpush1.bf16.msra.mxu0 %v2686
  %4386 = vmatprep.subr.bf16.mxu0 %v2837
  %4387 = vmatpush2.bf16.msra.mxu0 %v2836
  %4388 = vmatprep.subr.bf16.mxu0 %v2827
  %4389 = vmatpush2.bf16.msra.mxu0 %v2826
  %4390 = vmatprep.subr.bf16.mxu0 %v2817
  %4391 = vmatpush2.bf16.msra.mxu0 %v2816
  %4392 = vmatprep.subr.bf16.mxu0 %v2807
  %4393 = vmatpush2.bf16.msra.mxu0 %v2806
  %4394 = vmatprep.subr.bf16.mxu0 %v2797
  %4395 = vmatpush2.bf16.msra.mxu0 %v2796
  %4396 = vmatprep.subr.bf16.mxu0 %v2787
  %4397 = vmatpush2.bf16.msra.mxu0 %v2786
  %4398 = vmatprep.subr.bf16.mxu0 %v2777
  %4399 = vmatpush2.bf16.msra.mxu0 %v2776
  %4400 = vmatprep.subr.bf16.mxu0 %v2767
  %4401 = vmatpush2.bf16.msra.mxu0 %v2766
  %4402 = vmatprep.mubr.bf16.mxu0 %v107
  %4403 = vmatmul.mubr.bf16.gmra.mxu0 %v106
  %v4404 = vpop.f32.mrf.mxu0
  %v4405 = vadd.f32 0.0, %v4404
  %v4406 = vpop.f32.mrf.mxu0
  %v4407 = vadd.f32 0.0, %v4406
  %v4408 = vpop.f32.mrf.mxu0
  %v4409 = vadd.f32 0.0, %v4408
  %v4410 = vpop.f32.mrf.mxu0
  %v4411 = vadd.f32 0.0, %v4410
  %4412 = vmatprep.mubr.bf16.mxu0 %v115
  %4413 = vmatmul.mubr.bf16.gmra.mxu0 %v114
  %v4414 = vpop.f32.mrf.mxu0
  %v4415 = vadd.f32 0.0, %v4414
  %v4416 = vpop.f32.mrf.mxu0
  %v4417 = vadd.f32 0.0, %v4416
  %v4418 = vpop.f32.mrf.mxu0
  %v4419 = vpop.f32.mrf.mxu0
  %4420 = vdwg.mxu0
  %4421 = vmatprep.subr.bf16.mxu0 %v2917
  %4422 = vmatpush1.bf16.msra.mxu0 %v2916
  %4423 = vmatprep.subr.bf16.mxu0 %v2907
  %4424 = vmatpush1.bf16.msra.mxu0 %v2906
  %4425 = vmatprep.subr.bf16.mxu0 %v2897
  %4426 = vmatpush1.bf16.msra.mxu0 %v2896
  %4427 = vmatprep.subr.bf16.mxu0 %v2887
  %4428 = vmatpush1.bf16.msra.mxu0 %v2886
  %4429 = vmatprep.subr.bf16.mxu0 %v2877
  %4430 = vmatpush1.bf16.msra.mxu0 %v2876
  %4431 = vmatprep.subr.bf16.mxu0 %v2867
  %4432 = vmatpush1.bf16.msra.mxu0 %v2866
  %4433 = vmatprep.subr.bf16.mxu0 %v2857
  %4434 = vmatpush1.bf16.msra.mxu0 %v2856
  %4435 = vmatprep.subr.bf16.mxu0 %v2847
  %4436 = vmatpush1.bf16.msra.mxu0 %v2846
  %4437 = vmatprep.subr.bf16.mxu0 %v2997
  %4438 = vmatpush2.bf16.msra.mxu0 %v2996
  %4439 = vmatprep.subr.bf16.mxu0 %v2987
  %4440 = vmatpush2.bf16.msra.mxu0 %v2986
  %4441 = vmatprep.subr.bf16.mxu0 %v2977
  %4442 = vmatpush2.bf16.msra.mxu0 %v2976
  %4443 = vmatprep.subr.bf16.mxu0 %v2967
  %4444 = vmatpush2.bf16.msra.mxu0 %v2966
  %4445 = vmatprep.subr.bf16.mxu0 %v2957
  %4446 = vmatpush2.bf16.msra.mxu0 %v2956
  %4447 = vmatprep.subr.bf16.mxu0 %v2947
  %4448 = vmatpush2.bf16.msra.mxu0 %v2946
  %4449 = vmatprep.subr.bf16.mxu0 %v2937
  %4450 = vmatpush2.bf16.msra.mxu0 %v2936
  %4451 = vmatprep.subr.bf16.mxu0 %v2927
  %4452 = vmatpush2.bf16.msra.mxu0 %v2926
  %4453 = vmatprep.mubr.bf16.mxu0 %v109
  %4454 = vmatmul.mubr.bf16.gmra.mxu0 %v108
  %v4455 = vpop.f32.mrf.mxu0
  %v4456 = vadd.f32 %v4405, %v4455
  %v4457 = vpop.f32.mrf.mxu0
  %v4458 = vadd.f32 %v4407, %v4457
  %v4459 = vpop.f32.mrf.mxu0
  %v4460 = vadd.f32 %v4409, %v4459
  %v4461 = vpop.f32.mrf.mxu0
  %v4462 = vadd.f32 %v4411, %v4461
  %4463 = vmatprep.mubr.bf16.mxu0 %v117
  %4464 = vmatmul.mubr.bf16.gmra.mxu0 %v116
  %v4465 = vpop.f32.mrf.mxu0
  %v4466 = vadd.f32 %v4415, %v4465
  %v4467 = vpop.f32.mrf.mxu0
  %v4468 = vadd.f32 %v4417, %v4467
  %v4469 = vpop.f32.mrf.mxu0
  %v4470 = vpop.f32.mrf.mxu0
  %4471 = vdwg.mxu0
  %4472 = vmatprep.subr.bf16.mxu0 %v3077
  %4473 = vmatpush1.bf16.msra.mxu0 %v3076
  %4474 = vmatprep.subr.bf16.mxu0 %v3067
  %4475 = vmatpush1.bf16.msra.mxu0 %v3066
  %4476 = vmatprep.subr.bf16.mxu0 %v3057
  %4477 = vmatpush1.bf16.msra.mxu0 %v3056
  %4478 = vmatprep.subr.bf16.mxu0 %v3047
  %4479 = vmatpush1.bf16.msra.mxu0 %v3046
  %4480 = vmatprep.subr.bf16.mxu0 %v3037
  %4481 = vmatpush1.bf16.msra.mxu0 %v3036
  %4482 = vmatprep.subr.bf16.mxu0 %v3027
  %4483 = vmatpush1.bf16.msra.mxu0 %v3026
  %4484 = vmatprep.subr.bf16.mxu0 %v3017
  %4485 = vmatpush1.bf16.msra.mxu0 %v3016
  %4486 = vmatprep.subr.bf16.mxu0 %v3007
  %4487 = vmatpush1.bf16.msra.mxu0 %v3006
  %4488 = vmatprep.subr.bf16.mxu0 %v3157
  %4489 = vmatpush2.bf16.msra.mxu0 %v3156
  %4490 = vmatprep.subr.bf16.mxu0 %v3147
  %4491 = vmatpush2.bf16.msra.mxu0 %v3146
  %4492 = vmatprep.subr.bf16.mxu0 %v3137
  %4493 = vmatpush2.bf16.msra.mxu0 %v3136
  %4494 = vmatprep.subr.bf16.mxu0 %v3127
  %4495 = vmatpush2.bf16.msra.mxu0 %v3126
  %4496 = vmatprep.subr.bf16.mxu0 %v3117
  %4497 = vmatpush2.bf16.msra.mxu0 %v3116
  %4498 = vmatprep.subr.bf16.mxu0 %v3107
  %4499 = vmatpush2.bf16.msra.mxu0 %v3106
  %4500 = vmatprep.subr.bf16.mxu0 %v3097
  %4501 = vmatpush2.bf16.msra.mxu0 %v3096
  %4502 = vmatprep.subr.bf16.mxu0 %v3087
  %4503 = vmatpush2.bf16.msra.mxu0 %v3086
  %4504 = vmatprep.mubr.bf16.mxu0 %v111
  %4505 = vmatmul.mubr.bf16.gmra.mxu0 %v110
  %v4506 = vpop.f32.mrf.mxu0
  %v4507 = vadd.f32 %v4456, %v4506
  %v4508 = vpop.f32.mrf.mxu0
  %v4509 = vadd.f32 %v4458, %v4508
  %v4510 = vpop.f32.mrf.mxu0
  %v4511 = vadd.f32 %v4460, %v4510
  %v4512 = vpop.f32.mrf.mxu0
  %v4513 = vadd.f32 %v4462, %v4512
  %4514 = vmatprep.mubr.bf16.mxu0 %v119
  %4515 = vmatmul.mubr.bf16.gmra.mxu0 %v118
  %v4516 = vpop.f32.mrf.mxu0
  %v4517 = vadd.f32 %v4466, %v4516
  %v4518 = vpop.f32.mrf.mxu0
  %v4519 = vadd.f32 %v4468, %v4518
  %v4520 = vpop.f32.mrf.mxu0
  %v4521 = vpop.f32.mrf.mxu0
  %4522 = vdwg.mxu0
  %4523 = vmatprep.subr.bf16.mxu0 %v3237
  %4524 = vmatpush1.bf16.msra.mxu0 %v3236
  %4525 = vmatprep.subr.bf16.mxu0 %v3227
  %4526 = vmatpush1.bf16.msra.mxu0 %v3226
  %4527 = vmatprep.subr.bf16.mxu0 %v3217
  %4528 = vmatpush1.bf16.msra.mxu0 %v3216
  %4529 = vmatprep.subr.bf16.mxu0 %v3207
  %4530 = vmatpush1.bf16.msra.mxu0 %v3206
  %4531 = vmatprep.subr.bf16.mxu0 %v3197
  %4532 = vmatpush1.bf16.msra.mxu0 %v3196
  %4533 = vmatprep.subr.bf16.mxu0 %v3187
  %4534 = vmatpush1.bf16.msra.mxu0 %v3186
  %4535 = vmatprep.subr.bf16.mxu0 %v3177
  %4536 = vmatpush1.bf16.msra.mxu0 %v3176
  %4537 = vmatprep.subr.bf16.mxu0 %v3167
  %4538 = vmatpush1.bf16.msra.mxu0 %v3166
  %4539 = vmatprep.subr.bf16.mxu0 %v3317
  %4540 = vmatpush2.bf16.msra.mxu0 %v3316
  %4541 = vmatprep.subr.bf16.mxu0 %v3307
  %4542 = vmatpush2.bf16.msra.mxu0 %v3306
  %4543 = vmatprep.subr.bf16.mxu0 %v3297
  %4544 = vmatpush2.bf16.msra.mxu0 %v3296
  %4545 = vmatprep.subr.bf16.mxu0 %v3287
  %4546 = vmatpush2.bf16.msra.mxu0 %v3286
  %4547 = vmatprep.subr.bf16.mxu0 %v3277
  %4548 = vmatpush2.bf16.msra.mxu0 %v3276
  %4549 = vmatprep.subr.bf16.mxu0 %v3267
  %4550 = vmatpush2.bf16.msra.mxu0 %v3266
  %4551 = vmatprep.subr.bf16.mxu0 %v3257
  %4552 = vmatpush2.bf16.msra.mxu0 %v3256
  %4553 = vmatprep.subr.bf16.mxu0 %v3247
  %4554 = vmatpush2.bf16.msra.mxu0 %v3246
  %4555 = vmatprep.mubr.bf16.mxu0 %v113
  %4556 = vmatmul.mubr.bf16.gmra.mxu0 %v112
  %v4557 = vpop.f32.mrf.mxu0
  %v4558 = vadd.f32 %v4507, %v4557
  %v4559 = vpop.f32.mrf.mxu0
  %v4560 = vadd.f32 %v4509, %v4559
  %v4561 = vpop.f32.mrf.mxu0
  %v4562 = vadd.f32 %v4511, %v4561
  %v4563 = vpop.f32.mrf.mxu0
  %v4564 = vadd.f32 %v4513, %v4563
  %4565 = vmatprep.mubr.bf16.mxu0 %v121
  %4566 = vmatmul.mubr.bf16.gmra.mxu0 %v120
  %v4567 = vpop.f32.mrf.mxu0
  %v4568 = vadd.f32 %v4517, %v4567
  %v4569 = vpop.f32.mrf.mxu0
  %v4570 = vadd.f32 %v4519, %v4569
  %v4571 = vpop.f32.mrf.mxu0
  %v4572 = vpop.f32.mrf.mxu0
  %4573 = vdwg.mxu0
  %4574 = vmatprep.subr.bf16.mxu0 %v2759
  %4575 = vmatpush1.bf16.msra.mxu0 %v2758
  %4576 = vmatprep.subr.bf16.mxu0 %v2749
  %4577 = vmatpush1.bf16.msra.mxu0 %v2748
  %4578 = vmatprep.subr.bf16.mxu0 %v2739
  %4579 = vmatpush1.bf16.msra.mxu0 %v2738
  %4580 = vmatprep.subr.bf16.mxu0 %v2729
  %4581 = vmatpush1.bf16.msra.mxu0 %v2728
  %4582 = vmatprep.subr.bf16.mxu0 %v2719
  %4583 = vmatpush1.bf16.msra.mxu0 %v2718
  %4584 = vmatprep.subr.bf16.mxu0 %v2709
  %4585 = vmatpush1.bf16.msra.mxu0 %v2708
  %4586 = vmatprep.subr.bf16.mxu0 %v2699
  %4587 = vmatpush1.bf16.msra.mxu0 %v2698
  %4588 = vmatprep.subr.bf16.mxu0 %v2689
  %4589 = vmatpush1.bf16.msra.mxu0 %v2688
  %4590 = vmatprep.subr.bf16.mxu0 %v2839
  %4591 = vmatpush2.bf16.msra.mxu0 %v2838
  %4592 = vmatprep.subr.bf16.mxu0 %v2829
  %4593 = vmatpush2.bf16.msra.mxu0 %v2828
  %4594 = vmatprep.subr.bf16.mxu0 %v2819
  %4595 = vmatpush2.bf16.msra.mxu0 %v2818
  %4596 = vmatprep.subr.bf16.mxu0 %v2809
  %4597 = vmatpush2.bf16.msra.mxu0 %v2808
  %4598 = vmatprep.subr.bf16.mxu0 %v2799
  %4599 = vmatpush2.bf16.msra.mxu0 %v2798
  %4600 = vmatprep.subr.bf16.mxu0 %v2789
  %4601 = vmatpush2.bf16.msra.mxu0 %v2788
  %4602 = vmatprep.subr.bf16.mxu0 %v2779
  %4603 = vmatpush2.bf16.msra.mxu0 %v2778
  %4604 = vmatprep.subr.bf16.mxu0 %v2769
  %4605 = vmatpush2.bf16.msra.mxu0 %v2768
  %4606 = vmatprep.mubr.bf16.mxu0 %v107
  %4607 = vmatmul.mubr.bf16.gmra.mxu0 %v106
  %v4608 = vpop.f32.mrf.mxu0
  %v4609 = vadd.f32 0.0, %v4608
  %v4610 = vpop.f32.mrf.mxu0
  %v4611 = vadd.f32 0.0, %v4610
  %v4612 = vpop.f32.mrf.mxu0
  %v4613 = vadd.f32 0.0, %v4612
  %v4614 = vpop.f32.mrf.mxu0
  %v4615 = vadd.f32 0.0, %v4614
  %4616 = vmatprep.mubr.bf16.mxu0 %v115
  %4617 = vmatmul.mubr.bf16.gmra.mxu0 %v114
  %v4618 = vpop.f32.mrf.mxu0
  %v4619 = vadd.f32 0.0, %v4618
  %v4620 = vpop.f32.mrf.mxu0
  %v4621 = vadd.f32 0.0, %v4620
  %v4622 = vpop.f32.mrf.mxu0
  %v4623 = vpop.f32.mrf.mxu0
  %4624 = vdwg.mxu0
  %4625 = vmatprep.subr.bf16.mxu0 %v2919
  %4626 = vmatpush1.bf16.msra.mxu0 %v2918
  %4627 = vmatprep.subr.bf16.mxu0 %v2909
  %4628 = vmatpush1.bf16.msra.mxu0 %v2908
  %4629 = vmatprep.subr.bf16.mxu0 %v2899
  %4630 = vmatpush1.bf16.msra.mxu0 %v2898
  %4631 = vmatprep.subr.bf16.mxu0 %v2889
  %4632 = vmatpush1.bf16.msra.mxu0 %v2888
  %4633 = vmatprep.subr.bf16.mxu0 %v2879
  %4634 = vmatpush1.bf16.msra.mxu0 %v2878
  %4635 = vmatprep.subr.bf16.mxu0 %v2869
  %4636 = vmatpush1.bf16.msra.mxu0 %v2868
  %4637 = vmatprep.subr.bf16.mxu0 %v2859
  %4638 = vmatpush1.bf16.msra.mxu0 %v2858
  %4639 = vmatprep.subr.bf16.mxu0 %v2849
  %4640 = vmatpush1.bf16.msra.mxu0 %v2848
  %4641 = vmatprep.subr.bf16.mxu0 %v2999
  %4642 = vmatpush2.bf16.msra.mxu0 %v2998
  %4643 = vmatprep.subr.bf16.mxu0 %v2989
  %4644 = vmatpush2.bf16.msra.mxu0 %v2988
  %4645 = vmatprep.subr.bf16.mxu0 %v2979
  %4646 = vmatpush2.bf16.msra.mxu0 %v2978
  %4647 = vmatprep.subr.bf16.mxu0 %v2969
  %4648 = vmatpush2.bf16.msra.mxu0 %v2968
  %4649 = vmatprep.subr.bf16.mxu0 %v2959
  %4650 = vmatpush2.bf16.msra.mxu0 %v2958
  %4651 = vmatprep.subr.bf16.mxu0 %v2949
  %4652 = vmatpush2.bf16.msra.mxu0 %v2948
  %4653 = vmatprep.subr.bf16.mxu0 %v2939
  %4654 = vmatpush2.bf16.msra.mxu0 %v2938
  %4655 = vmatprep.subr.bf16.mxu0 %v2929
  %4656 = vmatpush2.bf16.msra.mxu0 %v2928
  %4657 = vmatprep.mubr.bf16.mxu0 %v109
  %4658 = vmatmul.mubr.bf16.gmra.mxu0 %v108
  %v4659 = vpop.f32.mrf.mxu0
  %v4660 = vadd.f32 %v4609, %v4659
  %v4661 = vpop.f32.mrf.mxu0
  %v4662 = vadd.f32 %v4611, %v4661
  %v4663 = vpop.f32.mrf.mxu0
  %v4664 = vadd.f32 %v4613, %v4663
  %v4665 = vpop.f32.mrf.mxu0
  %v4666 = vadd.f32 %v4615, %v4665
  %4667 = vmatprep.mubr.bf16.mxu0 %v117
  %4668 = vmatmul.mubr.bf16.gmra.mxu0 %v116
  %v4669 = vpop.f32.mrf.mxu0
  %v4670 = vadd.f32 %v4619, %v4669
  %v4671 = vpop.f32.mrf.mxu0
  %v4672 = vadd.f32 %v4621, %v4671
  %v4673 = vpop.f32.mrf.mxu0
  %v4674 = vpop.f32.mrf.mxu0
  %4675 = vdwg.mxu0
  %4676 = vmatprep.subr.bf16.mxu0 %v3079
  %4677 = vmatpush1.bf16.msra.mxu0 %v3078
  %4678 = vmatprep.subr.bf16.mxu0 %v3069
  %4679 = vmatpush1.bf16.msra.mxu0 %v3068
  %4680 = vmatprep.subr.bf16.mxu0 %v3059
  %4681 = vmatpush1.bf16.msra.mxu0 %v3058
  %4682 = vmatprep.subr.bf16.mxu0 %v3049
  %4683 = vmatpush1.bf16.msra.mxu0 %v3048
  %4684 = vmatprep.subr.bf16.mxu0 %v3039
  %4685 = vmatpush1.bf16.msra.mxu0 %v3038
  %4686 = vmatprep.subr.bf16.mxu0 %v3029
  %4687 = vmatpush1.bf16.msra.mxu0 %v3028
  %4688 = vmatprep.subr.bf16.mxu0 %v3019
  %4689 = vmatpush1.bf16.msra.mxu0 %v3018
  %4690 = vmatprep.subr.bf16.mxu0 %v3009
  %4691 = vmatpush1.bf16.msra.mxu0 %v3008
  %4692 = vmatprep.subr.bf16.mxu0 %v3159
  %4693 = vmatpush2.bf16.msra.mxu0 %v3158
  %4694 = vmatprep.subr.bf16.mxu0 %v3149
  %4695 = vmatpush2.bf16.msra.mxu0 %v3148
  %4696 = vmatprep.subr.bf16.mxu0 %v3139
  %4697 = vmatpush2.bf16.msra.mxu0 %v3138
  %4698 = vmatprep.subr.bf16.mxu0 %v3129
  %4699 = vmatpush2.bf16.msra.mxu0 %v3128
  %4700 = vmatprep.subr.bf16.mxu0 %v3119
  %4701 = vmatpush2.bf16.msra.mxu0 %v3118
  %4702 = vmatprep.subr.bf16.mxu0 %v3109
  %4703 = vmatpush2.bf16.msra.mxu0 %v3108
  %4704 = vmatprep.subr.bf16.mxu0 %v3099
  %4705 = vmatpush2.bf16.msra.mxu0 %v3098
  %4706 = vmatprep.subr.bf16.mxu0 %v3089
  %4707 = vmatpush2.bf16.msra.mxu0 %v3088
  %4708 = vmatprep.mubr.bf16.mxu0 %v111
  %4709 = vmatmul.mubr.bf16.gmra.mxu0 %v110
  %v4710 = vpop.f32.mrf.mxu0
  %v4711 = vadd.f32 %v4660, %v4710
  %v4712 = vpop.f32.mrf.mxu0
  %v4713 = vadd.f32 %v4662, %v4712
  %v4714 = vpop.f32.mrf.mxu0
  %v4715 = vadd.f32 %v4664, %v4714
  %v4716 = vpop.f32.mrf.mxu0
  %v4717 = vadd.f32 %v4666, %v4716
  %4718 = vmatprep.mubr.bf16.mxu0 %v119
  %4719 = vmatmul.mubr.bf16.gmra.mxu0 %v118
  %v4720 = vpop.f32.mrf.mxu0
  %v4721 = vadd.f32 %v4670, %v4720
  %v4722 = vpop.f32.mrf.mxu0
  %v4723 = vadd.f32 %v4672, %v4722
  %v4724 = vpop.f32.mrf.mxu0
  %v4725 = vpop.f32.mrf.mxu0
  %4726 = vdwg.mxu0
  %4727 = vmatprep.subr.bf16.mxu0 %v3239
  %4728 = vmatpush1.bf16.msra.mxu0 %v3238
  %4729 = vmatprep.subr.bf16.mxu0 %v3229
  %4730 = vmatpush1.bf16.msra.mxu0 %v3228
  %4731 = vmatprep.subr.bf16.mxu0 %v3219
  %4732 = vmatpush1.bf16.msra.mxu0 %v3218
  %4733 = vmatprep.subr.bf16.mxu0 %v3209
  %4734 = vmatpush1.bf16.msra.mxu0 %v3208
  %4735 = vmatprep.subr.bf16.mxu0 %v3199
  %4736 = vmatpush1.bf16.msra.mxu0 %v3198
  %4737 = vmatprep.subr.bf16.mxu0 %v3189
  %4738 = vmatpush1.bf16.msra.mxu0 %v3188
  %4739 = vmatprep.subr.bf16.mxu0 %v3179
  %4740 = vmatpush1.bf16.msra.mxu0 %v3178
  %4741 = vmatprep.subr.bf16.mxu0 %v3169
  %4742 = vmatpush1.bf16.msra.mxu0 %v3168
  %4743 = vmatprep.subr.bf16.mxu0 %v3319
  %4744 = vmatpush2.bf16.msra.mxu0 %v3318
  %4745 = vmatprep.subr.bf16.mxu0 %v3309
  %4746 = vmatpush2.bf16.msra.mxu0 %v3308
  %4747 = vmatprep.subr.bf16.mxu0 %v3299
  %4748 = vmatpush2.bf16.msra.mxu0 %v3298
  %4749 = vmatprep.subr.bf16.mxu0 %v3289
  %4750 = vmatpush2.bf16.msra.mxu0 %v3288
  %4751 = vmatprep.subr.bf16.mxu0 %v3279
  %4752 = vmatpush2.bf16.msra.mxu0 %v3278
  %4753 = vmatprep.subr.bf16.mxu0 %v3269
  %4754 = vmatpush2.bf16.msra.mxu0 %v3268
  %4755 = vmatprep.subr.bf16.mxu0 %v3259
  %4756 = vmatpush2.bf16.msra.mxu0 %v3258
  %4757 = vmatprep.subr.bf16.mxu0 %v3249
  %4758 = vmatpush2.bf16.msra.mxu0 %v3248
  %4759 = vmatprep.mubr.bf16.mxu0 %v113
  %4760 = vmatmul.mubr.bf16.gmra.mxu0 %v112
  %v4761 = vpop.f32.mrf.mxu0
  %v4762 = vadd.f32 %v4711, %v4761
  %v4763 = vpop.f32.mrf.mxu0
  %v4764 = vadd.f32 %v4713, %v4763
  %v4765 = vpop.f32.mrf.mxu0
  %v4766 = vadd.f32 %v4715, %v4765
  %v4767 = vpop.f32.mrf.mxu0
  %v4768 = vadd.f32 %v4717, %v4767
  %4769 = vmatprep.mubr.bf16.mxu0 %v121
  %4770 = vmatmul.mubr.bf16.gmra.mxu0 %v120
  %v4771 = vpop.f32.mrf.mxu0
  %v4772 = vadd.f32 %v4721, %v4771
  %v4773 = vpop.f32.mrf.mxu0
  %v4774 = vadd.f32 %v4723, %v4773
  %v4775 = vpop.f32.mrf.mxu0
  %v4776 = vpop.f32.mrf.mxu0
  %4777 = vdwg.mxu0
  %4778 = vmatprep.subr.bf16.mxu0 %v2761
  %4779 = vmatpush1.bf16.msra.mxu0 %v2760
  %4780 = vmatprep.subr.bf16.mxu0 %v2751
  %4781 = vmatpush1.bf16.msra.mxu0 %v2750
  %4782 = vmatprep.subr.bf16.mxu0 %v2741
  %4783 = vmatpush1.bf16.msra.mxu0 %v2740
  %4784 = vmatprep.subr.bf16.mxu0 %v2731
  %4785 = vmatpush1.bf16.msra.mxu0 %v2730
  %4786 = vmatprep.subr.bf16.mxu0 %v2721
  %4787 = vmatpush1.bf16.msra.mxu0 %v2720
  %4788 = vmatprep.subr.bf16.mxu0 %v2711
  %4789 = vmatpush1.bf16.msra.mxu0 %v2710
  %4790 = vmatprep.subr.bf16.mxu0 %v2701
  %4791 = vmatpush1.bf16.msra.mxu0 %v2700
  %4792 = vmatprep.subr.bf16.mxu0 %v2691
  %4793 = vmatpush1.bf16.msra.mxu0 %v2690
  %4794 = vmatprep.subr.bf16.mxu0 %v2841
  %4795 = vmatpush2.bf16.msra.mxu0 %v2840
  %4796 = vmatprep.subr.bf16.mxu0 %v2831
  %4797 = vmatpush2.bf16.msra.mxu0 %v2830
  %4798 = vmatprep.subr.bf16.mxu0 %v2821
  %4799 = vmatpush2.bf16.msra.mxu0 %v2820
  %4800 = vmatprep.subr.bf16.mxu0 %v2811
  %4801 = vmatpush2.bf16.msra.mxu0 %v2810
  %4802 = vmatprep.subr.bf16.mxu0 %v2801
  %4803 = vmatpush2.bf16.msra.mxu0 %v2800
  %4804 = vmatprep.subr.bf16.mxu0 %v2791
  %4805 = vmatpush2.bf16.msra.mxu0 %v2790
  %4806 = vmatprep.subr.bf16.mxu0 %v2781
  %4807 = vmatpush2.bf16.msra.mxu0 %v2780
  %4808 = vmatprep.subr.bf16.mxu0 %v2771
  %4809 = vmatpush2.bf16.msra.mxu0 %v2770
  %4810 = vmatprep.mubr.bf16.mxu0 %v107
  %4811 = vmatmul.mubr.bf16.gmra.mxu0 %v106
  %v4812 = vpop.f32.mrf.mxu0
  %v4813 = vadd.f32 0.0, %v4812
  %v4814 = vpop.f32.mrf.mxu0
  %v4815 = vadd.f32 0.0, %v4814
  %v4816 = vpop.f32.mrf.mxu0
  %v4817 = vadd.f32 0.0, %v4816
  %v4818 = vpop.f32.mrf.mxu0
  %v4819 = vadd.f32 0.0, %v4818
  %4820 = vmatprep.mubr.bf16.mxu0 %v115
  %4821 = vmatmul.mubr.bf16.gmra.mxu0 %v114
  %v4822 = vpop.f32.mrf.mxu0
  %v4823 = vadd.f32 0.0, %v4822
  %v4824 = vpop.f32.mrf.mxu0
  %v4825 = vadd.f32 0.0, %v4824
  %v4826 = vpop.f32.mrf.mxu0
  %v4827 = vpop.f32.mrf.mxu0
  %4828 = vdwg.mxu0
  %4829 = vmatprep.subr.bf16.mxu0 %v2921
  %4830 = vmatpush1.bf16.msra.mxu0 %v2920
  %4831 = vmatprep.subr.bf16.mxu0 %v2911
  %4832 = vmatpush1.bf16.msra.mxu0 %v2910
  %4833 = vmatprep.subr.bf16.mxu0 %v2901
  %4834 = vmatpush1.bf16.msra.mxu0 %v2900
  %4835 = vmatprep.subr.bf16.mxu0 %v2891
  %4836 = vmatpush1.bf16.msra.mxu0 %v2890
  %4837 = vmatprep.subr.bf16.mxu0 %v2881
  %4838 = vmatpush1.bf16.msra.mxu0 %v2880
  %4839 = vmatprep.subr.bf16.mxu0 %v2871
  %4840 = vmatpush1.bf16.msra.mxu0 %v2870
  %4841 = vmatprep.subr.bf16.mxu0 %v2861
  %4842 = vmatpush1.bf16.msra.mxu0 %v2860
  %4843 = vmatprep.subr.bf16.mxu0 %v2851
  %4844 = vmatpush1.bf16.msra.mxu0 %v2850
  %4845 = vmatprep.subr.bf16.mxu0 %v3001
  %4846 = vmatpush2.bf16.msra.mxu0 %v3000
  %4847 = vmatprep.subr.bf16.mxu0 %v2991
  %4848 = vmatpush2.bf16.msra.mxu0 %v2990
  %4849 = vmatprep.subr.bf16.mxu0 %v2981
  %4850 = vmatpush2.bf16.msra.mxu0 %v2980
  %4851 = vmatprep.subr.bf16.mxu0 %v2971
  %4852 = vmatpush2.bf16.msra.mxu0 %v2970
  %4853 = vmatprep.subr.bf16.mxu0 %v2961
  %4854 = vmatpush2.bf16.msra.mxu0 %v2960
  %4855 = vmatprep.subr.bf16.mxu0 %v2951
  %4856 = vmatpush2.bf16.msra.mxu0 %v2950
  %4857 = vmatprep.subr.bf16.mxu0 %v2941
  %4858 = vmatpush2.bf16.msra.mxu0 %v2940
  %4859 = vmatprep.subr.bf16.mxu0 %v2931
  %4860 = vmatpush2.bf16.msra.mxu0 %v2930
  %4861 = vmatprep.mubr.bf16.mxu0 %v109
  %4862 = vmatmul.mubr.bf16.gmra.mxu0 %v108
  %v4863 = vpop.f32.mrf.mxu0
  %v4864 = vadd.f32 %v4813, %v4863
  %v4865 = vpop.f32.mrf.mxu0
  %v4866 = vadd.f32 %v4815, %v4865
  %v4867 = vpop.f32.mrf.mxu0
  %v4868 = vadd.f32 %v4817, %v4867
  %v4869 = vpop.f32.mrf.mxu0
  %v4870 = vadd.f32 %v4819, %v4869
  %4871 = vmatprep.mubr.bf16.mxu0 %v117
  %4872 = vmatmul.mubr.bf16.gmra.mxu0 %v116
  %v4873 = vpop.f32.mrf.mxu0
  %v4874 = vadd.f32 %v4823, %v4873
  %v4875 = vpop.f32.mrf.mxu0
  %v4876 = vadd.f32 %v4825, %v4875
  %v4877 = vpop.f32.mrf.mxu0
  %v4878 = vpop.f32.mrf.mxu0
  %4879 = vdwg.mxu0
  %4880 = vmatprep.subr.bf16.mxu0 %v3081
  %4881 = vmatpush1.bf16.msra.mxu0 %v3080
  %4882 = vmatprep.subr.bf16.mxu0 %v3071
  %4883 = vmatpush1.bf16.msra.mxu0 %v3070
  %4884 = vmatprep.subr.bf16.mxu0 %v3061
  %4885 = vmatpush1.bf16.msra.mxu0 %v3060
  %4886 = vmatprep.subr.bf16.mxu0 %v3051
  %4887 = vmatpush1.bf16.msra.mxu0 %v3050
  %4888 = vmatprep.subr.bf16.mxu0 %v3041
  %4889 = vmatpush1.bf16.msra.mxu0 %v3040
  %4890 = vmatprep.subr.bf16.mxu0 %v3031
  %4891 = vmatpush1.bf16.msra.mxu0 %v3030
  %4892 = vmatprep.subr.bf16.mxu0 %v3021
  %4893 = vmatpush1.bf16.msra.mxu0 %v3020
  %4894 = vmatprep.subr.bf16.mxu0 %v3011
  %4895 = vmatpush1.bf16.msra.mxu0 %v3010
  %4896 = vmatprep.subr.bf16.mxu0 %v3161
  %4897 = vmatpush2.bf16.msra.mxu0 %v3160
  %4898 = vmatprep.subr.bf16.mxu0 %v3151
  %4899 = vmatpush2.bf16.msra.mxu0 %v3150
  %4900 = vmatprep.subr.bf16.mxu0 %v3141
  %4901 = vmatpush2.bf16.msra.mxu0 %v3140
  %4902 = vmatprep.subr.bf16.mxu0 %v3131
  %4903 = vmatpush2.bf16.msra.mxu0 %v3130
  %4904 = vmatprep.subr.bf16.mxu0 %v3121
  %4905 = vmatpush2.bf16.msra.mxu0 %v3120
  %4906 = vmatprep.subr.bf16.mxu0 %v3111
  %4907 = vmatpush2.bf16.msra.mxu0 %v3110
  %4908 = vmatprep.subr.bf16.mxu0 %v3101
  %4909 = vmatpush2.bf16.msra.mxu0 %v3100
  %4910 = vmatprep.subr.bf16.mxu0 %v3091
  %4911 = vmatpush2.bf16.msra.mxu0 %v3090
  %4912 = vmatprep.mubr.bf16.mxu0 %v111
  %4913 = vmatmul.mubr.bf16.gmra.mxu0 %v110
  %v4914 = vpop.f32.mrf.mxu0
  %v4915 = vadd.f32 %v4864, %v4914
  %v4916 = vpop.f32.mrf.mxu0
  %v4917 = vadd.f32 %v4866, %v4916
  %v4918 = vpop.f32.mrf.mxu0
  %v4919 = vadd.f32 %v4868, %v4918
  %v4920 = vpop.f32.mrf.mxu0
  %v4921 = vadd.f32 %v4870, %v4920
  %4922 = vmatprep.mubr.bf16.mxu0 %v119
  %4923 = vmatmul.mubr.bf16.gmra.mxu0 %v118
  %v4924 = vpop.f32.mrf.mxu0
  %v4925 = vadd.f32 %v4874, %v4924
  %v4926 = vpop.f32.mrf.mxu0
  %v4927 = vadd.f32 %v4876, %v4926
  %v4928 = vpop.f32.mrf.mxu0
  %v4929 = vpop.f32.mrf.mxu0
  %4930 = vdwg.mxu0
  %4931 = vmatprep.subr.bf16.mxu0 %v3241
  %4932 = vmatpush1.bf16.msra.mxu0 %v3240
  %4933 = vmatprep.subr.bf16.mxu0 %v3231
  %4934 = vmatpush1.bf16.msra.mxu0 %v3230
  %4935 = vmatprep.subr.bf16.mxu0 %v3221
  %4936 = vmatpush1.bf16.msra.mxu0 %v3220
  %4937 = vmatprep.subr.bf16.mxu0 %v3211
  %4938 = vmatpush1.bf16.msra.mxu0 %v3210
  %4939 = vmatprep.subr.bf16.mxu0 %v3201
  %4940 = vmatpush1.bf16.msra.mxu0 %v3200
  %4941 = vmatprep.subr.bf16.mxu0 %v3191
  %4942 = vmatpush1.bf16.msra.mxu0 %v3190
  %4943 = vmatprep.subr.bf16.mxu0 %v3181
  %4944 = vmatpush1.bf16.msra.mxu0 %v3180
  %4945 = vmatprep.subr.bf16.mxu0 %v3171
  %4946 = vmatpush1.bf16.msra.mxu0 %v3170
  %4947 = vmatprep.subr.bf16.mxu0 %v3321
  %4948 = vmatpush2.bf16.msra.mxu0 %v3320
  %4949 = vmatprep.subr.bf16.mxu0 %v3311
  %4950 = vmatpush2.bf16.msra.mxu0 %v3310
  %4951 = vmatprep.subr.bf16.mxu0 %v3301
  %4952 = vmatpush2.bf16.msra.mxu0 %v3300
  %4953 = vmatprep.subr.bf16.mxu0 %v3291
  %4954 = vmatpush2.bf16.msra.mxu0 %v3290
  %4955 = vmatprep.subr.bf16.mxu0 %v3281
  %4956 = vmatpush2.bf16.msra.mxu0 %v3280
  %4957 = vmatprep.subr.bf16.mxu0 %v3271
  %4958 = vmatpush2.bf16.msra.mxu0 %v3270
  %4959 = vmatprep.subr.bf16.mxu0 %v3261
  %4960 = vmatpush2.bf16.msra.mxu0 %v3260
  %4961 = vmatprep.subr.bf16.mxu0 %v3251
  %4962 = vmatpush2.bf16.msra.mxu0 %v3250
  %4963 = vmatprep.mubr.bf16.mxu0 %v113
  %4964 = vmatmul.mubr.bf16.gmra.mxu0 %v112
  %v4965 = vpop.f32.mrf.mxu0
  %v4966 = vadd.f32 %v4915, %v4965
  %v4967 = vpop.f32.mrf.mxu0
  %v4968 = vadd.f32 %v4917, %v4967
  %v4969 = vpop.f32.mrf.mxu0
  %v4970 = vadd.f32 %v4919, %v4969
  %v4971 = vpop.f32.mrf.mxu0
  %v4972 = vadd.f32 %v4921, %v4971
  %4973 = vmatprep.mubr.bf16.mxu0 %v121
  %4974 = vmatmul.mubr.bf16.gmra.mxu0 %v120
  %v4975 = vpop.f32.mrf.mxu0
  %v4976 = vadd.f32 %v4925, %v4975
  %v4977 = vpop.f32.mrf.mxu0
  %v4978 = vadd.f32 %v4927, %v4977
  %v4979 = vpop.f32.mrf.mxu0
  %v4980 = vpop.f32.mrf.mxu0
  %4981 = vdwg.mxu0
  %v4982 = vmul.f32 %v4150, %v4150
  %v4983 = vmul.f32 %v4152, %v4152
  %v4984 = vmul.f32 %v4354, %v4354
  %v4985 = vmul.f32 %v4356, %v4356
  %v4986 = vmul.f32 %v4558, %v4558
  %v4987 = vmul.f32 %v4154, %v4154
  %v4988 = vmul.f32 %v4156, %v4156
  %v4989 = vmul.f32 %v4358, %v4358
  %v4990 = vmul.f32 %v4360, %v4360
  %v4991 = vmul.f32 %v4562, %v4562
  %v4992 = vmul.f32 %v4160, %v4160
  %v4993 = vmul.f32 %v4162, %v4162
  %v4994 = vmul.f32 %v4364, %v4364
  %v4995 = vmul.f32 %v4366, %v4366
  %v4996 = vmul.f32 %v4568, %v4568
  %v4997 = vmul.f32 %v4560, %v4560
  %v4998 = vmul.f32 %v4762, %v4762
  %v4999 = vmul.f32 %v4764, %v4764
  %v5000 = vmul.f32 %v4966, %v4966
  %v5001 = vmul.f32 %v4968, %v4968
  %v5002 = vmul.f32 %v4564, %v4564
  %v5003 = vmul.f32 %v4766, %v4766
  %v5004 = vmul.f32 %v4768, %v4768
  %v5005 = vmul.f32 %v4970, %v4970
  %v5006 = vmul.f32 %v4972, %v4972
  %v5007 = vmul.f32 %v4570, %v4570
  %v5008 = vmul.f32 %v4772, %v4772
  %v5009 = vmul.f32 %v4774, %v4774
  %v5010 = vmul.f32 %v4976, %v4976
  %v5011 = vmul.f32 %v4978, %v4978
  %v5012 = vadd.f32 %v4982, %v4997
  %v5013 = vadd.f32 %v4983, %v4998
  %v5014 = vadd.f32 %v4984, %v4999
  %v5015 = vadd.f32 %v4985, %v5000
  %v5016 = vadd.f32 %v4986, %v5001
  %v5017 = vadd.f32 %v4987, %v5002
  %v5018 = vadd.f32 %v4988, %v5003
  %v5019 = vadd.f32 %v4989, %v5004
  %v5020 = vadd.f32 %v4990, %v5005
  %v5021 = vadd.f32 %v4991, %v5006
  %v5022 = vadd.f32 %v4992, %v5007
  %v5023 = vadd.f32 %v4993, %v5008
  %v5024 = vadd.f32 %v4994, %v5009
  %v5025 = vadd.f32 %v4995, %v5010
  %v5026 = vadd.f32 %v4996, %v5011
  %v5027 = vmax.f32 %v5012, 1e-12
  %v5028 = vmax.f32 %v5013, 1e-12
  %v5029 = vmax.f32 %v5014, 1e-12
  %v5030 = vmax.f32 %v5015, 1e-12
  %v5031 = vmax.f32 %v5016, 1e-12
  %v5032 = vmax.f32 %v5017, 1e-12
  %v5033 = vmax.f32 %v5018, 1e-12
  %v5034 = vmax.f32 %v5019, 1e-12
  %v5035 = vmax.f32 %v5020, 1e-12
  %v5036 = vmax.f32 %v5021, 1e-12
  %v5037 = vmax.f32 %v5022, 1e-12
  %v5038 = vmax.f32 %v5023, 1e-12
  %v5039 = vmax.f32 %v5024, 1e-12
  %v5040 = vmax.f32 %v5025, 1e-12
  %v5041 = vmax.f32 %v5026, 1e-12
  %v5042 = vrsqrt.pop %v5027
  %v5043 = vrsqrt.pop %v5028
  %v5044 = vrsqrt.pop %v5029
  %v5045 = vrsqrt.pop %v5030
  %v5046 = vrsqrt.pop %v5031
  %v5047 = vrsqrt.pop %v5032
  %v5048 = vrsqrt.pop %v5033
  %v5049 = vrsqrt.pop %v5034
  %v5050 = vrsqrt.pop %v5035
  %v5051 = vrsqrt.pop %v5036
  %v5052 = vrsqrt.pop %v5037
  %v5053 = vrsqrt.pop %v5038
  %v5054 = vrsqrt.pop %v5039
  %v5055 = vrsqrt.pop %v5040
  %v5056 = vrsqrt.pop %v5041
  %v5057 = vmul.f32 %v4150, %v5042
  %v5058 = vmul.f32 %v4152, %v5043
  %v5059 = vmul.f32 %v4354, %v5044
  %v5060 = vmul.f32 %v4356, %v5045
  %v5061 = vmul.f32 %v4558, %v5046
  %v5062 = vmul.f32 %v4154, %v5047
  %v5063 = vmul.f32 %v4156, %v5048
  %v5064 = vmul.f32 %v4358, %v5049
  %v5065 = vmul.f32 %v4360, %v5050
  %v5066 = vmul.f32 %v4562, %v5051
  %v5067 = vmul.f32 %v4160, %v5052
  %v5068 = vmul.f32 %v4162, %v5053
  %v5069 = vmul.f32 %v4364, %v5054
  %v5070 = vmul.f32 %v4366, %v5055
  %v5071 = vmul.f32 %v4568, %v5056
  %5072 = vst [vmem:[%s3] sm:$0xff] %v5057
  %5073 = vst [vmem:[%s3 + $0x8] sm:$0xff] %v5058
  %5074 = vst [vmem:[%s3 + $0x10] sm:$0xff] %v5059
  %5075 = vst [vmem:[%s3 + $0x18] sm:$0xff] %v5060
  %5076 = vst [vmem:[%s3 + $0x20] sm:$0xff] %v5061
  %5077 = vst [vmem:[%s3 + $0x28] sm:$0xff] %v5062
  %5078 = vst [vmem:[%s3 + $0x30] sm:$0xff] %v5063
  %5079 = vst [vmem:[%s3 + $0x38] sm:$0xff] %v5064
  %5080 = vst [vmem:[%s3 + $0x40] sm:$0xff] %v5065
  %5081 = vst [vmem:[%s3 + $0x48] sm:$0xff] %v5066
  %5082 = vst [vmem:[%s3 + $0x50] sm:$0xff] %v5067
  %5083 = vst [vmem:[%s3 + $0x58] sm:$0xff] %v5068
  %5084 = vst [vmem:[%s3 + $0x60] sm:$0xff] %v5069
  %5085 = vst [vmem:[%s3 + $0x68] sm:$0xff] %v5070
  %5086 = vst [vmem:[%s3 + $0x70] sm:$0xff] %v5071
  %v5087 = vmul.f32 %v4560, %v5042
  %v5088 = vmul.f32 %v4762, %v5043
  %v5089 = vmul.f32 %v4764, %v5044
  %v5090 = vmul.f32 %v4966, %v5045
  %v5091 = vmul.f32 %v4968, %v5046
  %v5092 = vmul.f32 %v4564, %v5047
  %v5093 = vmul.f32 %v4766, %v5048
  %v5094 = vmul.f32 %v4768, %v5049
  %v5095 = vmul.f32 %v4970, %v5050
  %v5096 = vmul.f32 %v4972, %v5051
  %v5097 = vmul.f32 %v4570, %v5052
  %v5098 = vmul.f32 %v4772, %v5053
  %v5099 = vmul.f32 %v4774, %v5054
  %v5100 = vmul.f32 %v4976, %v5055
  %v5101 = vmul.f32 %v4978, %v5056
  %5102 = vst [vmem:[%s4] sm:$0xff] %v5087
  %5103 = vst [vmem:[%s4 + $0x8] sm:$0xff] %v5088
  %5104 = vst [vmem:[%s4 + $0x10] sm:$0xff] %v5089
  %5105 = vst [vmem:[%s4 + $0x18] sm:$0xff] %v5090
  %5106 = vst [vmem:[%s4 + $0x20] sm:$0xff] %v5091
  %5107 = vst [vmem:[%s4 + $0x28] sm:$0xff] %v5092
  %5108 = vst [vmem:[%s4 + $0x30] sm:$0xff] %v5093
  %5109 = vst [vmem:[%s4 + $0x38] sm:$0xff] %v5094
  %5110 = vst [vmem:[%s4 + $0x40] sm:$0xff] %v5095
  %5111 = vst [vmem:[%s4 + $0x48] sm:$0xff] %v5096
  %5112 = vst [vmem:[%s4 + $0x50] sm:$0xff] %v5097
  %5113 = vst [vmem:[%s4 + $0x58] sm:$0xff] %v5098
  %5114 = vst [vmem:[%s4 + $0x60] sm:$0xff] %v5099
  %5115 = vst [vmem:[%s4 + $0x68] sm:$0xff] %v5100
  %5116 = vst [vmem:[%s4 + $0x70] sm:$0xff] %v5101
  // Predicated region
  $region14: #{_lambda_.6} parent=0 // pred_check
    _
  $region15: #{_lambda_.6} parent=0 // pred_check_branch
    %5118 = sbr.rel (0) target = $region17
  $region16: #{_lambda_.6} parent=0 // pred_region
    _
  $region17: #{_lambda_.6} parent=0 // pred_fallthru
    _
  // Predicated region
  $region18: #{_lambda_.6} parent=0 // pred_check
    _
  $region19: #{_lambda_.6} parent=0 // pred_check_branch
    %5120 = sbr.rel (0) target = $region21
  $region20: #{_lambda_.6} parent=0 // pred_region
    _
  $region21: #{_lambda_.6} parent=0 // pred_fallthru
    _
  // Predicated region
  $region22: #{_lambda_.6} parent=0 // pred_check
    _
  $region23: #{_lambda_.6} parent=0 // pred_check_branch
    %5122 = sbr.rel (0) target = $region25
  $region24: #{_lambda_.6} parent=0 // pred_region
    _
  $region25: #{_lambda_.6} parent=0 // pred_fallthru
    _
  // Predicated region
  $region26: #{_lambda_.6} parent=0 // pred_check
    _
  $region27: #{_lambda_.6} parent=0 // pred_check_branch
    %5124 = sbr.rel (0) target = $region29
  $region28: #{_lambda_.6} parent=0 // pred_region
    _
  $region29: #{_lambda_.6} parent=0 // pred_fallthru
    _

// kernel: _lambda_.9
$region0: #{_lambda_.9}
  #allocation0 [shape = 'u32[]', space=smem, size = 0x4, offset = 0x4, fixed_abs, tag = 'smem constant byte address 0x4 - core index']
  #allocation1 [shape = 'u32[144,128]{1,0:T(1,128)}', space=vmem, size = 0x12000, scoped, tag = 'internal scratch']
  %s0 = inlined_call_operand.vmem [shape: f32[24,128], index: 0, kind: input, shape index: {}]
  %s1 = inlined_call_operand.vmem [shape: f32[128,128], index: 1, kind: input, shape index: {}]
  %s2 = inlined_call_operand.vmem [shape: f32[1,128], index: 2, kind: input, shape index: {}]
  %s3 = inlined_call_operand.vmem [shape: f32[24,128], index: 3, kind: output, shape index: {}]
  %s4 = sld [smem:[#allocation0]]
  $region22: #{_lambda_.9} parent=0
    _
  %s6 = ssub.s32 1, %s4
  %s7 = scalar_select 0, %s6, %s4
  // Predicated region
  $region2: #{_lambda_.9} parent=0 // pred_check
    _
  $region3: #{_lambda_.9} parent=0 // pred_check_branch
    %9 = sbr.rel (0) target = $region5
  $region4: #{_lambda_.9} parent=0 // pred_region
    _
  $region5: #{_lambda_.9} parent=0 // pred_fallthru
    _
  // Predicated region
  $region6: #{_lambda_.9} parent=0 // pred_check
    _
  $region7: #{_lambda_.9} parent=0 // pred_check_branch
    %11 = sbr.rel (0) target = $region9
  $region8: #{_lambda_.9} parent=0 // pred_region
    _
  $region9: #{_lambda_.9} parent=0 // pred_fallthru
    _
  // Predicated region
  $region10: #{_lambda_.9} parent=0 // pred_check
    _
  $region11: #{_lambda_.9} parent=0 // pred_check_branch
    %13 = sbr.rel (0) target = $region13
  $region12: #{_lambda_.9} parent=0 // pred_region
    _
  $region13: #{_lambda_.9} parent=0 // pred_fallthru
    _
  %v14 = vld [vmem:[%s0] sm:$0xff]
  %v15 = vld [vmem:[%s0 + $0x8] sm:$0xff]
  %v16 = vld [vmem:[%s0 + $0x10] sm:$0xff]
  %v17 = vld [vmem:[%s1] sm:$0xff]
  %v18 = vld [vmem:[%s1 + $0x8] sm:$0xff]
  %v19 = vld [vmem:[%s1 + $0x10] sm:$0xff]
  %v20 = vld [vmem:[%s1 + $0x18] sm:$0xff]
  %v21 = vld [vmem:[%s1 + $0x20] sm:$0xff]
  %v22 = vld [vmem:[%s1 + $0x28] sm:$0xff]
  %v23 = vld [vmem:[%s1 + $0x30] sm:$0xff]
  %v24 = vld [vmem:[%s1 + $0x38] sm:$0xff]
  %v25 = vld [vmem:[%s1 + $0x40] sm:$0xff]
  %v26 = vld [vmem:[%s1 + $0x48] sm:$0xff]
  %v27 = vld [vmem:[%s1 + $0x50] sm:$0xff]
  %v28 = vld [vmem:[%s1 + $0x58] sm:$0xff]
  %v29 = vld [vmem:[%s1 + $0x60] sm:$0xff]
  %v30 = vld [vmem:[%s1 + $0x68] sm:$0xff]
  %v31 = vld [vmem:[%s1 + $0x70] sm:$0xff]
  %v32 = vld [vmem:[%s1 + $0x78] sm:$0xff]
  %v33 = vld [vmem:[%s2] sm:$0x1]
  %v35 = vlaneseq
  %v36 = vshrl.u32 %v35, 7
  %v37 = vsub.s32 0, %v36
  %v38 = vrot.slane %v33, %v37
  %40 = vmatprep.subr.mxu0 0.0
  %41 = vmatpush1.msra.mxu0 %v32
  %42 = vmatprep.subr.mxu0 0.0
  %43 = vmatpush1.msra.mxu0 %v31
  %44 = vmatprep.subr.mxu0 0.0
  %45 = vmatpush1.msra.mxu0 %v30
  %46 = vmatprep.subr.mxu0 0.0
  %47 = vmatpush1.msra.mxu0 %v29
  %48 = vmatprep.subr.mxu0 0.0
  %49 = vmatpush1.msra.mxu0 %v28
  %50 = vmatprep.subr.mxu0 0.0
  %51 = vmatpush1.msra.mxu0 %v27
  %52 = vmatprep.subr.mxu0 0.0
  %53 = vmatpush1.msra.mxu0 %v26
  %54 = vmatprep.subr.mxu0 0.0
  %55 = vmatpush1.msra.mxu0 %v25
  %56 = vmatprep.subr.mxu0 0.0
  %57 = vmatpush1.msra.mxu0 %v24
  %58 = vmatprep.subr.mxu0 0.0
  %59 = vmatpush1.msra.mxu0 %v23
  %60 = vmatprep.subr.mxu0 0.0
  %61 = vmatpush1.msra.mxu0 %v22
  %62 = vmatprep.subr.mxu0 0.0
  %63 = vmatpush1.msra.mxu0 %v21
  %64 = vmatprep.subr.mxu0 0.0
  %65 = vmatpush1.msra.mxu0 %v20
  %66 = vmatprep.subr.mxu0 0.0
  %67 = vmatpush1.msra.mxu0 %v19
  %68 = vmatprep.subr.mxu0 0.0
  %69 = vmatpush1.msra.mxu0 %v18
  %70 = vmatprep.subr.mxu0 0.0
  %71 = vmatpush1.msra.mxu0 %v17
  %72 = vmatprep.subr.mxu0 0.0
  %73 = vmatpush2.msra.mxu0 0.0
  %74 = vmatprep.subr.mxu0 0.0
  %75 = vmatpush2.msra.mxu0 0.0
  %76 = vmatprep.subr.mxu0 0.0
  %77 = vmatpush2.msra.mxu0 0.0
  %78 = vmatprep.subr.mxu0 0.0
  %79 = vmatpush2.msra.mxu0 0.0
  %80 = vmatprep.subr.mxu0 0.0
  %81 = vmatpush2.msra.mxu0 0.0
  %82 = vmatprep.subr.mxu0 0.0
  %83 = vmatpush2.msra.mxu0 0.0
  %84 = vmatprep.subr.mxu0 0.0
  %85 = vmatpush2.msra.mxu0 0.0
  %86 = vmatprep.subr.mxu0 0.0
  %87 = vmatpush2.msra.mxu0 0.0
  %88 = vmatprep.subr.mxu0 0.0
  %89 = vmatpush2.msra.mxu0 0.0
  %90 = vmatprep.subr.mxu0 0.0
  %91 = vmatpush2.msra.mxu0 0.0
  %92 = vmatprep.subr.mxu0 0.0
  %93 = vmatpush2.msra.mxu0 0.0
  %94 = vmatprep.subr.mxu0 0.0
  %95 = vmatpush2.msra.mxu0 0.0
  %96 = vmatprep.subr.mxu0 0.0
  %97 = vmatpush2.msra.mxu0 0.0
  %98 = vmatprep.subr.mxu0 0.0
  %99 = vmatpush2.msra.mxu0 0.0
  %100 = vmatprep.subr.mxu0 0.0
  %101 = vmatpush2.msra.mxu0 0.0
  %102 = vmatprep.subr.mxu0 0.0
  %103 = vmatpush2.msra.mxu0 0.0
  %104 = vmatprep.mubr.f32.mxu0 0.0
  %105 = vmatmul.mubr.f32.gmra.mxu0 %v14
  %v106 = vpop.f32.mrf.mxu0
  %v107 = vadd.f32 %v38, %v106
  %v108 = vpop.f32.mrf.mxu0
  %109 = vmatprep.mubr.f32.mxu0 0.0
  %110 = vmatmul.mubr.f32.gmra.mxu0 %v15
  %v111 = vpop.f32.mrf.mxu0
  %v112 = vadd.f32 %v38, %v111
  %v113 = vpop.f32.mrf.mxu0
  %114 = vmatprep.mubr.f32.mxu0 0.0
  %115 = vmatmul.mubr.f32.gmra.mxu0 %v16
  %v116 = vpop.f32.mrf.mxu0
  %v117 = vadd.f32 %v38, %v116
  %v118 = vpop.f32.mrf.mxu0
  %119 = vdwg.mxu0
  %v120 = vtanh.pop %v107
  %v121 = vtanh.pop %v112
  %v122 = vtanh.pop %v117
  %123 = vst [vmem:[%s3] sm:$0xff] %v120
  %124 = vst [vmem:[%s3 + $0x8] sm:$0xff] %v121
  %125 = vst [vmem:[%s3 + $0x10] sm:$0xff] %v122
  // Predicated region
  $region14: #{_lambda_.9} parent=0 // pred_check
    _
  $region15: #{_lambda_.9} parent=0 // pred_check_branch
    %127 = sbr.rel (0) target = $region17
  $region16: #{_lambda_.9} parent=0 // pred_region
    _
  $region17: #{_lambda_.9} parent=0 // pred_fallthru
    _
  // Predicated region
  $region18: #{_lambda_.9} parent=0 // pred_check
    _
  $region19: #{_lambda_.9} parent=0 // pred_check_branch
    %129 = sbr.rel (0) target = $region21
  $region20: #{_lambda_.9} parent=0 // pred_region
    _
  $region21: #{_lambda_.9} parent=0 // pred_fallthru
    _

</llo_original>
